<compile_context>
chip_gen: v7x
topology: tpu7x:2x2x1
jax: 0.10.0
libtpu: 0.0.40
codegen_flags: <defaults>
</compile_context>

<pallas_src>
import functools

import numpy as np
import jax
import jax.numpy as jnp
from jax import lax
from jax.experimental import pallas as pl
from jax.experimental.pallas import tpu as pltpu

# ---------------- small, self-consistent hyper-parameters ----------------------
WIN_LEN = 48               # multiple of WIN_INC (true for the 400/100 default too)
WIN_INC = 16
FFT_LEN = 64
KERNEL_SIZE = 5
KERNEL_NUM = [2, 16, 16, 32, 32]   # == [2] + kernel_num  (4 decoder layers)
BN_EPS = 1e-5

BATCH = 2
TIME = 8

_HIGHEST = jax.lax.Precision.HIGHEST


# ========================  the single fused Pallas kernel  =====================
def _make_fused_kernel(batch, tdim, metas):
    """metas: per-layer static dicts {"H","F","cin2","cout2","prelu"}."""

    def body(*refs):
        it = iter(refs)
        xr_ref = next(it)                          # (B*T, H0*cin2)  real part
        xi_ref = next(it)                          # (B*T, H0*cin2)  imag part
        wmask_ref = next(it)                       # (B*T, 1)  zero where t == T-1
        g_ref = next(it)                           # (T*64, L) fused iSTFT matrix
        layer_refs = []
        for m in metas:
            w_ref = next(it)                       # (4*H*cin2, 2*F*cout2)
            a_ref = next(it)                       # (1, 2*F*cout2) scale
            b_ref = next(it)                       # (1, 2*F*cout2) shift (bias+BN)
            al_ref = next(it) if m["prelu"] else None   # (1, 1) PReLU alpha
            layer_refs.append((w_ref, a_ref, b_ref, al_ref))
        out_ref = next(it)                         # (B, L)

        wmask = wmask_ref[...]
        re = xr_ref[...]
        im = xi_ref[...]

        # -------------------- 4 decoder layers, 1 matmul each --------------------
        for m, (w_ref, a_ref, b_ref, al_ref) in zip(metas, layer_refs):
            um = re - im                           # feeds the real output path
            up = re + im                           # feeds the imag output path
            zrow = jnp.zeros((1, um.shape[1]), jnp.float32)
            # x[t+1] taps (time kernel tap kw=0 after the [..., 1:] crop); the
            # mask keeps batch b from seeing batch b+1's first frame.
            um1 = jnp.concatenate([um[1:, :], zrow], axis=0) * wmask
            up1 = jnp.concatenate([up[1:, :], zrow], axis=0) * wmask
            xcat = jnp.concatenate([um, um1, up, up1], axis=1)   # (B*T, 4*H*cin2)
            y = jnp.dot(xcat, w_ref[...],
                        preferred_element_type=jnp.float32,
                        precision=_HIGHEST)                      # (B*T, 2*F*cout2)
            y = y * a_ref[...] + b_ref[...]        # folded conv bias + eval BN
            if al_ref is not None:                 # PReLU (single parameter)
                y = jnp.where(y >= 0.0, y, al_ref[...] * y)
            half = m["F"] * m["cout2"]
            re = y[:, :half]                       # columns ordered (freq, ch)
            im = y[:, half:]

        # ---- fused ConviSTFT: synthesis + overlap-add + 1/coff, one matmul ----
        spec = jnp.concatenate([re, im], axis=1)   # (B*T, 64): [re f=0..31 | im ..]
        cols = []
        for t in range(tdim):
            rows_t = jnp.concatenate(
                [spec[b * tdim + t:b * tdim + t + 1, :] for b in range(batch)],
                axis=0)                            # (B, 64) frame t of each batch
            cols.append(rows_t)
        spec_wide = jnp.concatenate(cols, axis=1)  # (B, T*64)
        out_ref[...] = jnp.dot(spec_wide, g_ref[...],
                               preferred_element_type=jnp.float32,
                               precision=_HIGHEST)               # (B, L) waveform

    return body


# ==========================  host-side weight packing  =========================
def _pack_istft_matrix(kernel_np, window_np, T):
    """Fold synthesis basis, overlap-add scatter and 1/(coff+1e-8) into one matrix."""
    nb = FFT_LEN // 2                              # 32 frequency bins per path
    # drop the zero-padded DC rows (front freq pad of F.pad(out,[0,0,1,0]))
    K2 = np.concatenate([kernel_np[1:1 + nb],
                         kernel_np[nb + 2:2 * nb + 2]], axis=0)  # (64, win_len)
    hop, wl = WIN_INC, WIN_LEN
    L = (T - 1) * hop + wl
    win2 = window_np.astype(np.float64) ** 2
    coff = np.zeros((L,), np.float64)
    for t in range(T):
        coff[t * hop:t * hop + wl] += win2
    inv = 1.0 / (coff + 1e-8)
    G = np.zeros((T * 2 * nb, L), np.float64)
    for t in range(T):
        G[t * 2 * nb:(t + 1) * 2 * nb, t * hop:t * hop + wl] = K2
    G = G * inv[None, :]
    return G.astype(np.float32)


def pack_params(params):
    """One-time packing of raw params into single-matmul-per-layer form."""
    layers_packed, metas = [], []
    H = (FFT_LEN // 2) // (2 ** (len(KERNEL_NUM) - 1))        # initial freq rows
    for lp in params["layers"]:
        wr = np.asarray(lp["wr"], np.float32)                 # (cin2, cout2, 5, 2)
        wi = np.asarray(lp["wi"], np.float32)
        cin2, cout2 = wr.shape[0], wr.shape[1]
        F = 2 * H
        K = 4 * H * cin2
        N = 2 * F * cout2
        W_big = np.zeros((K, N), np.float32)
        # out[f] = sum_h x[h] * w[kh = f - 2h + 2]  (stride 2, pad 2, out_pad 1)
        # time taps (after crop): x[t] -> kw=1 (src um/up), x[t+1] -> kw=0 (um1/up1)
        for h in range(H):
            for f in range(F):
                kh = f - 2 * h + 2
                if 0 <= kh < KERNEL_SIZE:
                    rb = [s * H * cin2 + h * cin2 for s in range(4)]
                    c_re = f * cout2
                    c_im = F * cout2 + f * cout2
                    W_big[rb[0]:rb[0] + cin2, c_re:c_re + cout2] = wr[:, :, kh, 1]
                    W_big[rb[1]:rb[1] + cin2, c_re:c_re + cout2] = wr[:, :, kh, 0]
                    W_big[rb[2]:rb[2] + cin2, c_im:c_im + cout2] = wi[:, :, kh, 1]
                    W_big[rb[3]:rb[3] + cin2, c_im:c_im + cout2] = wi[:, :, kh, 0]
        # per-column affine: real bias cancels (re = Wr*(xr-xi)); imag gets 2*bi
        bias_col = np.zeros((N,), np.float32)
        bias_col[F * cout2:] = np.tile(2.0 * np.asarray(lp["bi"], np.float32), F)
        if lp["use_bn"]:
            g = np.asarray(lp["gamma"], np.float32)
            be = np.asarray(lp["beta"], np.float32)
            mu = np.asarray(lp["mean"], np.float32)
            var = np.asarray(lp["var"], np.float32)
            sc = g / np.sqrt(var + BN_EPS)
            sh = be - mu * sc
            scale_col = np.concatenate([np.tile(sc[:cout2], F), np.tile(sc[cout2:], F)])
            shift_col = np.concatenate([np.tile(sh[:cout2], F), np.tile(sh[cout2:], F)])
            A = scale_col.astype(np.float32)
            Bvec = (bias_col * scale_col + shift_col).astype(np.float32)
            prelu = True
        else:
            A = np.ones((N,), np.float32)
            Bvec = bias_col
            prelu = False
        entry = {"W": jnp.asarray(W_big),
                 "A": jnp.asarray(A.reshape(1, N)),
                 "B": jnp.asarray(Bvec.reshape(1, N))}
        if prelu:
            entry["alpha"] = jnp.asarray(np.full((1, 1), float(lp["alpha"]), np.float32))
        layers_packed.append(entry)
        metas.append({"H": H, "F": F, "cin2": cin2, "cout2": cout2, "prelu": prelu})
        H = F
    G = _pack_istft_matrix(np.asarray(params["istft_kernel"]),
                           np.asarray(params["istft_window"]), TIME)
    packed = {"layers": layers_packed, "G": jnp.asarray(G)}
    return packed, metas


# ===============================  full forward  =================================
def dccrn_decoder_forward(packed, metas, inputs):
    # inputs: (B, channel*dim, T) — same signature as the PyTorch forward.
    B, cxd, T = inputs.shape
    channel = KERNEL_NUM[-1]
    dim = cxd // channel
    cin2 = channel // 2
    assert packed["G"].shape[0] == T * FFT_LEN, "G packed for a different TIME"

    x = inputs.reshape(B, channel, dim, T)
    # (B, cin2, dim, T) -> rows (b, t), lanes (freq, ch)
    xr = jnp.transpose(x[:, :cin2], (0, 3, 2, 1)).reshape(B * T, dim * cin2)
    xi = jnp.transpose(x[:, cin2:], (0, 3, 2, 1)).reshape(B * T, dim * cin2)
    wmask = jnp.asarray(
        (np.arange(B * T) % T != T - 1).astype(np.float32).reshape(B * T, 1))
    L = (T - 1) * WIN_INC + WIN_LEN

    args = [xr, xi, wmask, packed["G"]]
    for lp, m in zip(packed["layers"], metas):
        args += [lp["W"], lp["A"], lp["B"]]
        if m["prelu"]:
            args.append(lp["alpha"])

    vmem = functools.partial(pl.BlockSpec, memory_space=pltpu.MemorySpace.VMEM)
    wav = pl.pallas_call(
        _make_fused_kernel(B, T, metas),
        out_shape=jax.ShapeDtypeStruct((B, L), jnp.float32),
        in_specs=[vmem() for _ in args],
        out_specs=vmem(),
    )(*args)
    return wav[:, None, :]                         # (B, 1, samples)


# ==================  deterministic parameter initialisation  ===================
def _sqrt_hann(win_len):
    # get_window('hanning', win_len, fftbins=True) ** 0.5
    n = np.arange(win_len)
    return np.sqrt(0.5 - 0.5 * np.cos(2.0 * np.pi * n / win_len))


def _istft_params():
    window = _sqrt_hann(WIN_LEN)
    fourier = np.fft.rfft(np.eye(FFT_LEN))[:WIN_LEN]               # (win, fft//2+1)
    kernel = np.concatenate([fourier.real, fourier.imag], axis=1).T  # (fft+2, win)
    kernel = np.linalg.pinv(kernel).T                              # inverse basis
    kernel = kernel * window[None, :]
    return jnp.asarray(kernel, jnp.float32), jnp.asarray(window, jnp.float32)


def init_params(key):
    params = {"layers": []}
    n_layers = len(KERNEL_NUM) - 1
    for idx in range(n_layers, 0, -1):
        cin, cout = KERNEL_NUM[idx], KERNEL_NUM[idx - 1]
        cin2, cout2 = cin // 2, cout // 2
        key, k1, k2, k3, k4, k5, k6, k7, k8 = jax.random.split(key, 9)
        layer = {
            "wr": 0.05 * jax.random.normal(k1, (cin2, cout2, KERNEL_SIZE, 2), jnp.float32),
            "wi": 0.05 * jax.random.normal(k2, (cin2, cout2, KERNEL_SIZE, 2), jnp.float32),
            "br": 0.01 * jax.random.normal(k3, (cout2,), jnp.float32),
            "bi": 0.01 * jax.random.normal(k4, (cout2,), jnp.float32),
            "use_bn": idx != 1,
        }
        if layer["use_bn"]:
            layer["gamma"] = 1.0 + 0.1 * jax.random.normal(k5, (cout,), jnp.float32)
            layer["beta"] = 0.1 * jax.random.normal(k6, (cout,), jnp.float32)
            layer["mean"] = 0.1 * jax.random.normal(k7, (cout,), jnp.float32)
            layer["var"] = 1.0 + 0.1 * jnp.abs(jax.random.normal(k8, (cout,), jnp.float32))
            layer["alpha"] = jnp.float32(0.25)               # PReLU default
        params["layers"].append(layer)
    params["istft_kernel"], params["istft_window"] = _istft_params()
    return params


# ======================  pure-JAX reference (for checking)  ====================
def _ref_complex_convT(x, wr, wi, br, bi):
    cin2 = x.shape[1] // 2
    xr, xim = x[:, :cin2], x[:, cin2:]

    def ct(u, w, b):
        wk = jnp.transpose(jnp.flip(w, (2, 3)), (1, 0, 2, 3))   # OIHW, flipped
        y = lax.conv_general_dilated(
            u, wk, window_strides=(1, 1),
            padding=((2, 3), (1, 1)), lhs_dilation=(2, 1), rhs_dilation=(1, 1),
            dimension_numbers=("NCHW", "OIHW", "NCHW"), precision=_HIGHEST)
        return y + b[None, :, None, None]

    r2r, i2r = ct(xr, wr, br), ct(xim, wr, br)
    r2i, i2i = ct(xr, wi, bi), ct(xim, wi, bi)
    return jnp.concatenate([r2r - i2r, r2i + i2i], axis=1)


def reference_forward(params, inputs):
    B, cxd, T = inputs.shape
    channel = KERNEL_NUM[-1]
    dim = cxd // channel
    out = inputs.reshape(B, channel, dim, T)
    for lp in params["layers"]:
        out = _ref_complex_convT(out, lp["wr"], lp["wi"], lp["br"], lp["bi"])
        if lp["use_bn"]:
            g = lp["gamma"][None, :, None, None]
            be = lp["beta"][None, :, None, None]
            m = lp["mean"][None, :, None, None]
            v = lp["var"][None, :, None, None]
            out = (out - m) / jnp.sqrt(v + BN_EPS) * g + be
            out = jnp.where(out >= 0, out, lp["alpha"] * out)
        out = out[..., 1:]
    out = jnp.pad(out, ((0, 0), (0, 0), (1, 0), (0, 0)))
    spec = out.reshape(B, -1, T)

    K = params["istft_kernel"]
    frames = jnp.einsum("bct,cw->btw", spec, K, precision=_HIGHEST)
    L = (T - 1) * WIN_INC + WIN_LEN
    wav = jnp.zeros((B, L), jnp.float32)
    win2 = params["istft_window"] ** 2
    coff = jnp.zeros((L,), jnp.float32)
    for i in range(T):
        wav = wav.at[:, i * WIN_INC:i * WIN_INC + WIN_LEN].add(frames[:, i])
        coff = coff.at[i * WIN_INC:i * WIN_INC + WIN_LEN].add(win2)
    return (wav / (coff + 1e-8))[:, None, :]


# ===================================  main  =====================================
if __name__ == "__main__":
    key = jax.random.PRNGKey(0)
    pkey, xkey = jax.random.split(key)
    params = init_params(pkey)
    packed, metas = pack_params(params)            # one-time weight packing

    n_layers = len(KERNEL_NUM) - 1
    channel = KERNEL_NUM[-1]
    dim = (FFT_LEN // 2) // (2 ** n_layers)        # decoder ends at fft_len//2 bins
    inputs = jax.random.normal(xkey, (BATCH, channel * dim, TIME), jnp.float32)

    fwd = jax.jit(functools.partial(dccrn_decoder_forward, packed, metas))
    out = jax.block_until_ready(fwd(inputs))
    ref = jax.block_until_ready(reference_forward(params, inputs))

    expected = (BATCH, 1, (TIME - 1) * WIN_INC + WIN_LEN)
    assert out.shape == expected and ref.shape == expected, (out.shape, ref.shape)
    if not np.allclose(np.asarray(out), np.asarray(ref), rtol=1e-2, atol=1e-3):
        err = float(jnp.max(jnp.abs(out - ref)))
        raise AssertionError(f"Pallas output mismatch vs reference, max abs err={err}")
    print("KERNEL_OK")
</pallas_src>

<mosaic_0001>
module attributes {stable_mosaic.version = 11 : i64} {
  func.func @body(%arg0: memref<16x32xf32, #tpu.memory_space<vmem>>, %arg1: memref<16x32xf32, #tpu.memory_space<vmem>>, %arg2: memref<16x1xf32, #tpu.memory_space<vmem>>, %arg3: memref<512x160xf32, #tpu.memory_space<vmem>>, %arg4: memref<128x128xf32, #tpu.memory_space<vmem>>, %arg5: memref<1x128xf32, #tpu.memory_space<vmem>>, %arg6: memref<1x128xf32, #tpu.memory_space<vmem>>, %arg7: memref<1x1xf32, #tpu.memory_space<vmem>>, %arg8: memref<256x128xf32, #tpu.memory_space<vmem>>, %arg9: memref<1x128xf32, #tpu.memory_space<vmem>>, %arg10: memref<1x128xf32, #tpu.memory_space<vmem>>, %arg11: memref<1x1xf32, #tpu.memory_space<vmem>>, %arg12: memref<256x256xf32, #tpu.memory_space<vmem>>, %arg13: memref<1x256xf32, #tpu.memory_space<vmem>>, %arg14: memref<1x256xf32, #tpu.memory_space<vmem>>, %arg15: memref<1x1xf32, #tpu.memory_space<vmem>>, %arg16: memref<512x64xf32, #tpu.memory_space<vmem>>, %arg17: memref<1x64xf32, #tpu.memory_space<vmem>>, %arg18: memref<1x64xf32, #tpu.memory_space<vmem>>, %arg19: memref<2x160xf32, #tpu.memory_space<vmem>>) attributes {dimension_semantics = [], scalar_prefetch = 0 : i64, scratch_operands = 0 : i64, tpu.core_type = #tpu.core_type<tc>} {
    %c0 = arith.constant 0 : index
    %c0_0 = arith.constant 0 : index
    %0 = vector.load %arg2[%c0, %c0_0] : memref<16x1xf32, #tpu.memory_space<vmem>>, vector<16x1xf32>
    %c0_1 = arith.constant 0 : index
    %c0_2 = arith.constant 0 : index
    %1 = vector.load %arg0[%c0_1, %c0_2] : memref<16x32xf32, #tpu.memory_space<vmem>>, vector<16x32xf32>
    %c0_3 = arith.constant 0 : index
    %c0_4 = arith.constant 0 : index
    %2 = vector.load %arg1[%c0_3, %c0_4] : memref<16x32xf32, #tpu.memory_space<vmem>>, vector<16x32xf32>
    %3 = arith.subf %1, %2 : vector<16x32xf32>
    %4 = arith.addf %1, %2 : vector<16x32xf32>
    %cst = arith.constant 0.000000e+00 : f32
    %5 = vector.broadcast %cst : f32 to vector<1x32xf32>
    %6 = vector.extract_strided_slice %3 {offsets = [1, 0], sizes = [15, 32], strides = [1, 1]} : vector<16x32xf32> to vector<15x32xf32>
    %7 = tpu.concatenate %6, %5 in 0 : vector<15x32xf32>, vector<1x32xf32> -> vector<16x32xf32>
    %8 = vector.broadcast %0 : vector<16x1xf32> to vector<16x32xf32>
    %9 = arith.mulf %7, %8 : vector<16x32xf32>
    %10 = vector.extract_strided_slice %4 {offsets = [1, 0], sizes = [15, 32], strides = [1, 1]} : vector<16x32xf32> to vector<15x32xf32>
    %11 = tpu.concatenate %10, %5 in 0 : vector<15x32xf32>, vector<1x32xf32> -> vector<16x32xf32>
    %12 = vector.broadcast %0 : vector<16x1xf32> to vector<16x32xf32>
    %13 = arith.mulf %11, %12 : vector<16x32xf32>
    %14 = tpu.concatenate %3, %9, %4, %13 in 1 : vector<16x32xf32>, vector<16x32xf32>, vector<16x32xf32>, vector<16x32xf32> -> vector<16x128xf32>
    %c0_5 = arith.constant 0 : index
    %c0_6 = arith.constant 0 : index
    %15 = vector.load %arg4[%c0_5, %c0_6] : memref<128x128xf32, #tpu.memory_space<vmem>>, vector<128x128xf32>
    %cst_7 = arith.constant dense<0.000000e+00> : vector<16x128xf32>
    %16 = tpu.matmul %14, %15, %cst_7 {dimension_numbers = #tpu.dot_dimension_numbers<[1], [0], [0], [1], [0, 0, 1, 1], [], []>, precision = #tpu.contract_precision<fp32>} : vector<16x128xf32>, vector<128x128xf32>, vector<16x128xf32> -> vector<16x128xf32>
    %c0_8 = arith.constant 0 : index
    %c0_9 = arith.constant 0 : index
    %17 = vector.load %arg5[%c0_8, %c0_9] : memref<1x128xf32, #tpu.memory_space<vmem>>, vector<1x128xf32>
    %18 = vector.broadcast %17 : vector<1x128xf32> to vector<16x128xf32>
    %19 = arith.mulf %16, %18 : vector<16x128xf32>
    %c0_10 = arith.constant 0 : index
    %c0_11 = arith.constant 0 : index
    %20 = vector.load %arg6[%c0_10, %c0_11] : memref<1x128xf32, #tpu.memory_space<vmem>>, vector<1x128xf32>
    %21 = vector.broadcast %20 : vector<1x128xf32> to vector<16x128xf32>
    %22 = arith.addf %19, %21 : vector<16x128xf32>
    %cst_12 = arith.constant 0.000000e+00 : f32
    %23 = vector.broadcast %cst_12 : f32 to vector<16x128xf32>
    %24 = arith.cmpf oge, %22, %23 : vector<16x128xf32>
    %c0_13 = arith.constant 0 : index
    %c0_14 = arith.constant 0 : index
    %25 = vector.load %arg7[%c0_13, %c0_14] : memref<1x1xf32, #tpu.memory_space<vmem>>, vector<1x1xf32>
    %26 = vector.broadcast %25 : vector<1x1xf32> to vector<16x128xf32>
    %27 = arith.mulf %26, %22 : vector<16x128xf32>
    %28 = arith.select %24, %22, %27 : vector<16x128xi1>, vector<16x128xf32>
    %29 = vector.extract_strided_slice %28 {offsets = [0, 0], sizes = [16, 64], strides = [1, 1]} : vector<16x128xf32> to vector<16x64xf32>
    %30 = vector.extract_strided_slice %28 {offsets = [0, 64], sizes = [16, 64], strides = [1, 1]} : vector<16x128xf32> to vector<16x64xf32>
    %31 = arith.subf %29, %30 : vector<16x64xf32>
    %32 = arith.addf %29, %30 : vector<16x64xf32>
    %cst_15 = arith.constant 0.000000e+00 : f32
    %33 = vector.broadcast %cst_15 : f32 to vector<1x64xf32>
    %34 = vector.extract_strided_slice %31 {offsets = [1, 0], sizes = [15, 64], strides = [1, 1]} : vector<16x64xf32> to vector<15x64xf32>
    %35 = tpu.concatenate %34, %33 in 0 : vector<15x64xf32>, vector<1x64xf32> -> vector<16x64xf32>
    %36 = vector.broadcast %0 : vector<16x1xf32> to vector<16x64xf32>
    %37 = arith.mulf %35, %36 : vector<16x64xf32>
    %38 = vector.extract_strided_slice %32 {offsets = [1, 0], sizes = [15, 64], strides = [1, 1]} : vector<16x64xf32> to vector<15x64xf32>
    %39 = tpu.concatenate %38, %33 in 0 : vector<15x64xf32>, vector<1x64xf32> -> vector<16x64xf32>
    %40 = vector.broadcast %0 : vector<16x1xf32> to vector<16x64xf32>
    %41 = arith.mulf %39, %40 : vector<16x64xf32>
    %42 = tpu.concatenate %31, %37, %32, %41 in 1 : vector<16x64xf32>, vector<16x64xf32>, vector<16x64xf32>, vector<16x64xf32> -> vector<16x256xf32>
    %c0_16 = arith.constant 0 : index
    %c0_17 = arith.constant 0 : index
    %43 = vector.load %arg8[%c0_16, %c0_17] : memref<256x128xf32, #tpu.memory_space<vmem>>, vector<256x128xf32>
    %cst_18 = arith.constant dense<0.000000e+00> : vector<16x128xf32>
    %44 = tpu.matmul %42, %43, %cst_18 {dimension_numbers = #tpu.dot_dimension_numbers<[1], [0], [0], [1], [0, 0, 1, 1], [], []>, precision = #tpu.contract_precision<fp32>} : vector<16x256xf32>, vector<256x128xf32>, vector<16x128xf32> -> vector<16x128xf32>
    %c0_19 = arith.constant 0 : index
    %c0_20 = arith.constant 0 : index
    %45 = vector.load %arg9[%c0_19, %c0_20] : memref<1x128xf32, #tpu.memory_space<vmem>>, vector<1x128xf32>
    %46 = vector.broadcast %45 : vector<1x128xf32> to vector<16x128xf32>
    %47 = arith.mulf %44, %46 : vector<16x128xf32>
    %c0_21 = arith.constant 0 : index
    %c0_22 = arith.constant 0 : index
    %48 = vector.load %arg10[%c0_21, %c0_22] : memref<1x128xf32, #tpu.memory_space<vmem>>, vector<1x128xf32>
    %49 = vector.broadcast %48 : vector<1x128xf32> to vector<16x128xf32>
    %50 = arith.addf %47, %49 : vector<16x128xf32>
    %cst_23 = arith.constant 0.000000e+00 : f32
    %51 = vector.broadcast %cst_23 : f32 to vector<16x128xf32>
    %52 = arith.cmpf oge, %50, %51 : vector<16x128xf32>
    %c0_24 = arith.constant 0 : index
    %c0_25 = arith.constant 0 : index
    %53 = vector.load %arg11[%c0_24, %c0_25] : memref<1x1xf32, #tpu.memory_space<vmem>>, vector<1x1xf32>
    %54 = vector.broadcast %53 : vector<1x1xf32> to vector<16x128xf32>
    %55 = arith.mulf %54, %50 : vector<16x128xf32>
    %56 = arith.select %52, %50, %55 : vector<16x128xi1>, vector<16x128xf32>
    %57 = vector.extract_strided_slice %56 {offsets = [0, 0], sizes = [16, 64], strides = [1, 1]} : vector<16x128xf32> to vector<16x64xf32>
    %58 = vector.extract_strided_slice %56 {offsets = [0, 64], sizes = [16, 64], strides = [1, 1]} : vector<16x128xf32> to vector<16x64xf32>
    %59 = arith.subf %57, %58 : vector<16x64xf32>
    %60 = arith.addf %57, %58 : vector<16x64xf32>
    %cst_26 = arith.constant 0.000000e+00 : f32
    %61 = vector.broadcast %cst_26 : f32 to vector<1x64xf32>
    %62 = vector.extract_strided_slice %59 {offsets = [1, 0], sizes = [15, 64], strides = [1, 1]} : vector<16x64xf32> to vector<15x64xf32>
    %63 = tpu.concatenate %62, %61 in 0 : vector<15x64xf32>, vector<1x64xf32> -> vector<16x64xf32>
    %64 = vector.broadcast %0 : vector<16x1xf32> to vector<16x64xf32>
    %65 = arith.mulf %63, %64 : vector<16x64xf32>
    %66 = vector.extract_strided_slice %60 {offsets = [1, 0], sizes = [15, 64], strides = [1, 1]} : vector<16x64xf32> to vector<15x64xf32>
    %67 = tpu.concatenate %66, %61 in 0 : vector<15x64xf32>, vector<1x64xf32> -> vector<16x64xf32>
    %68 = vector.broadcast %0 : vector<16x1xf32> to vector<16x64xf32>
    %69 = arith.mulf %67, %68 : vector<16x64xf32>
    %70 = tpu.concatenate %59, %65, %60, %69 in 1 : vector<16x64xf32>, vector<16x64xf32>, vector<16x64xf32>, vector<16x64xf32> -> vector<16x256xf32>
    %c0_27 = arith.constant 0 : index
    %c0_28 = arith.constant 0 : index
    %71 = vector.load %arg12[%c0_27, %c0_28] : memref<256x256xf32, #tpu.memory_space<vmem>>, vector<256x256xf32>
    %cst_29 = arith.constant dense<0.000000e+00> : vector<16x256xf32>
    %72 = tpu.matmul %70, %71, %cst_29 {dimension_numbers = #tpu.dot_dimension_numbers<[1], [0], [0], [1], [0, 0, 1, 1], [], []>, precision = #tpu.contract_precision<fp32>} : vector<16x256xf32>, vector<256x256xf32>, vector<16x256xf32> -> vector<16x256xf32>
    %c0_30 = arith.constant 0 : index
    %c0_31 = arith.constant 0 : index
    %73 = vector.load %arg13[%c0_30, %c0_31] : memref<1x256xf32, #tpu.memory_space<vmem>>, vector<1x256xf32>
    %74 = vector.broadcast %73 : vector<1x256xf32> to vector<16x256xf32>
    %75 = arith.mulf %72, %74 : vector<16x256xf32>
    %c0_32 = arith.constant 0 : index
    %c0_33 = arith.constant 0 : index
    %76 = vector.load %arg14[%c0_32, %c0_33] : memref<1x256xf32, #tpu.memory_space<vmem>>, vector<1x256xf32>
    %77 = vector.broadcast %76 : vector<1x256xf32> to vector<16x256xf32>
    %78 = arith.addf %75, %77 : vector<16x256xf32>
    %cst_34 = arith.constant 0.000000e+00 : f32
    %79 = vector.broadcast %cst_34 : f32 to vector<16x256xf32>
    %80 = arith.cmpf oge, %78, %79 : vector<16x256xf32>
    %c0_35 = arith.constant 0 : index
    %c0_36 = arith.constant 0 : index
    %81 = vector.load %arg15[%c0_35, %c0_36] : memref<1x1xf32, #tpu.memory_space<vmem>>, vector<1x1xf32>
    %82 = vector.broadcast %81 : vector<1x1xf32> to vector<16x256xf32>
    %83 = arith.mulf %82, %78 : vector<16x256xf32>
    %84 = arith.select %80, %78, %83 : vector<16x256xi1>, vector<16x256xf32>
    %85 = vector.extract_strided_slice %84 {offsets = [0, 0], sizes = [16, 128], strides = [1, 1]} : vector<16x256xf32> to vector<16x128xf32>
    %86 = vector.extract_strided_slice %84 {offsets = [0, 128], sizes = [16, 128], strides = [1, 1]} : vector<16x256xf32> to vector<16x128xf32>
    %87 = arith.subf %85, %86 : vector<16x128xf32>
    %88 = arith.addf %85, %86 : vector<16x128xf32>
    %cst_37 = arith.constant 0.000000e+00 : f32
    %89 = vector.broadcast %cst_37 : f32 to vector<1x128xf32>
    %90 = vector.extract_strided_slice %87 {offsets = [1, 0], sizes = [15, 128], strides = [1, 1]} : vector<16x128xf32> to vector<15x128xf32>
    %91 = tpu.concatenate %90, %89 in 0 : vector<15x128xf32>, vector<1x128xf32> -> vector<16x128xf32>
    %92 = vector.broadcast %0 : vector<16x1xf32> to vector<16x128xf32>
    %93 = arith.mulf %91, %92 : vector<16x128xf32>
    %94 = vector.extract_strided_slice %88 {offsets = [1, 0], sizes = [15, 128], strides = [1, 1]} : vector<16x128xf32> to vector<15x128xf32>
    %95 = tpu.concatenate %94, %89 in 0 : vector<15x128xf32>, vector<1x128xf32> -> vector<16x128xf32>
    %96 = vector.broadcast %0 : vector<16x1xf32> to vector<16x128xf32>
    %97 = arith.mulf %95, %96 : vector<16x128xf32>
    %98 = tpu.concatenate %87, %93, %88, %97 in 1 : vector<16x128xf32>, vector<16x128xf32>, vector<16x128xf32>, vector<16x128xf32> -> vector<16x512xf32>
    %c0_38 = arith.constant 0 : index
    %c0_39 = arith.constant 0 : index
    %99 = vector.load %arg16[%c0_38, %c0_39] : memref<512x64xf32, #tpu.memory_space<vmem>>, vector<512x64xf32>
    %cst_40 = arith.constant dense<0.000000e+00> : vector<16x64xf32>
    %100 = tpu.matmul %98, %99, %cst_40 {dimension_numbers = #tpu.dot_dimension_numbers<[1], [0], [0], [1], [0, 0, 1, 1], [], []>, precision = #tpu.contract_precision<fp32>} : vector<16x512xf32>, vector<512x64xf32>, vector<16x64xf32> -> vector<16x64xf32>
    %c0_41 = arith.constant 0 : index
    %c0_42 = arith.constant 0 : index
    %101 = vector.load %arg17[%c0_41, %c0_42] : memref<1x64xf32, #tpu.memory_space<vmem>>, vector<1x64xf32>
    %102 = vector.broadcast %101 : vector<1x64xf32> to vector<16x64xf32>
    %103 = arith.mulf %100, %102 : vector<16x64xf32>
    %c0_43 = arith.constant 0 : index
    %c0_44 = arith.constant 0 : index
    %104 = vector.load %arg18[%c0_43, %c0_44] : memref<1x64xf32, #tpu.memory_space<vmem>>, vector<1x64xf32>
    %105 = vector.broadcast %104 : vector<1x64xf32> to vector<16x64xf32>
    %106 = arith.addf %103, %105 : vector<16x64xf32>
    %107 = vector.extract_strided_slice %106 {offsets = [0, 0], sizes = [16, 32], strides = [1, 1]} : vector<16x64xf32> to vector<16x32xf32>
    %108 = vector.extract_strided_slice %106 {offsets = [0, 32], sizes = [16, 32], strides = [1, 1]} : vector<16x64xf32> to vector<16x32xf32>
    %109 = tpu.concatenate %107, %108 in 1 : vector<16x32xf32>, vector<16x32xf32> -> vector<16x64xf32>
    %110 = vector.extract_strided_slice %109 {offsets = [0, 0], sizes = [1, 64], strides = [1, 1]} : vector<16x64xf32> to vector<1x64xf32>
    %111 = vector.extract_strided_slice %109 {offsets = [8, 0], sizes = [1, 64], strides = [1, 1]} : vector<16x64xf32> to vector<1x64xf32>
    %112 = tpu.concatenate %110, %111 in 0 : vector<1x64xf32>, vector<1x64xf32> -> vector<2x64xf32>
    %113 = vector.extract_strided_slice %109 {offsets = [1, 0], sizes = [1, 64], strides = [1, 1]} : vector<16x64xf32> to vector<1x64xf32>
    %114 = vector.extract_strided_slice %109 {offsets = [9, 0], sizes = [1, 64], strides = [1, 1]} : vector<16x64xf32> to vector<1x64xf32>
    %115 = tpu.concatenate %113, %114 in 0 : vector<1x64xf32>, vector<1x64xf32> -> vector<2x64xf32>
    %116 = vector.extract_strided_slice %109 {offsets = [2, 0], sizes = [1, 64], strides = [1, 1]} : vector<16x64xf32> to vector<1x64xf32>
    %117 = vector.extract_strided_slice %109 {offsets = [10, 0], sizes = [1, 64], strides = [1, 1]} : vector<16x64xf32> to vector<1x64xf32>
    %118 = tpu.concatenate %116, %117 in 0 : vector<1x64xf32>, vector<1x64xf32> -> vector<2x64xf32>
    %119 = vector.extract_strided_slice %109 {offsets = [3, 0], sizes = [1, 64], strides = [1, 1]} : vector<16x64xf32> to vector<1x64xf32>
    %120 = vector.extract_strided_slice %109 {offsets = [11, 0], sizes = [1, 64], strides = [1, 1]} : vector<16x64xf32> to vector<1x64xf32>
    %121 = tpu.concatenate %119, %120 in 0 : vector<1x64xf32>, vector<1x64xf32> -> vector<2x64xf32>
    %122 = vector.extract_strided_slice %109 {offsets = [4, 0], sizes = [1, 64], strides = [1, 1]} : vector<16x64xf32> to vector<1x64xf32>
    %123 = vector.extract_strided_slice %109 {offsets = [12, 0], sizes = [1, 64], strides = [1, 1]} : vector<16x64xf32> to vector<1x64xf32>
    %124 = tpu.concatenate %122, %123 in 0 : vector<1x64xf32>, vector<1x64xf32> -> vector<2x64xf32>
    %125 = vector.extract_strided_slice %109 {offsets = [5, 0], sizes = [1, 64], strides = [1, 1]} : vector<16x64xf32> to vector<1x64xf32>
    %126 = vector.extract_strided_slice %109 {offsets = [13, 0], sizes = [1, 64], strides = [1, 1]} : vector<16x64xf32> to vector<1x64xf32>
    %127 = tpu.concatenate %125, %126 in 0 : vector<1x64xf32>, vector<1x64xf32> -> vector<2x64xf32>
    %128 = vector.extract_strided_slice %109 {offsets = [6, 0], sizes = [1, 64], strides = [1, 1]} : vector<16x64xf32> to vector<1x64xf32>
    %129 = vector.extract_strided_slice %109 {offsets = [14, 0], sizes = [1, 64], strides = [1, 1]} : vector<16x64xf32> to vector<1x64xf32>
    %130 = tpu.concatenate %128, %129 in 0 : vector<1x64xf32>, vector<1x64xf32> -> vector<2x64xf32>
    %131 = vector.extract_strided_slice %109 {offsets = [7, 0], sizes = [1, 64], strides = [1, 1]} : vector<16x64xf32> to vector<1x64xf32>
    %132 = vector.extract_strided_slice %109 {offsets = [15, 0], sizes = [1, 64], strides = [1, 1]} : vector<16x64xf32> to vector<1x64xf32>
    %133 = tpu.concatenate %131, %132 in 0 : vector<1x64xf32>, vector<1x64xf32> -> vector<2x64xf32>
    %134 = tpu.concatenate %112, %115, %118, %121, %124, %127, %130, %133 in 1 : vector<2x64xf32>, vector<2x64xf32>, vector<2x64xf32>, vector<2x64xf32>, vector<2x64xf32>, vector<2x64xf32>, vector<2x64xf32>, vector<2x64xf32> -> vector<2x512xf32>
    %c0_45 = arith.constant 0 : index
    %c0_46 = arith.constant 0 : index
    %135 = vector.load %arg3[%c0_45, %c0_46] : memref<512x160xf32, #tpu.memory_space<vmem>>, vector<512x160xf32>
    %cst_47 = arith.constant dense<0.000000e+00> : vector<2x160xf32>
    %136 = tpu.matmul %134, %135, %cst_47 {dimension_numbers = #tpu.dot_dimension_numbers<[1], [0], [0], [1], [0, 0, 1, 1], [], []>, precision = #tpu.contract_precision<fp32>} : vector<2x512xf32>, vector<512x160xf32>, vector<2x160xf32> -> vector<2x160xf32>
    %c0_48 = arith.constant 0 : index
    %c0_49 = arith.constant 0 : index
    %137 = vector.load %arg19[%c0_48, %c0_49] : memref<2x160xf32, #tpu.memory_space<vmem>>, vector<2x160xf32>
    tpu.vector_store %arg19[%c0_48, %c0_49], %136 {strides = array<i32>} : memref<2x160xf32, #tpu.memory_space<vmem>>, vector<2x160xf32>,
    return
  }
}

</mosaic_0001>

<llo_original>
// kernel: dccrn_decoder_forward.1
$region0: #{dccrn_decoder_forward.1}
  #allocation0 [shape = 'u32[]', space=smem, size = 0x4, offset = 0x4, fixed_abs, tag = 'smem constant byte address 0x4 - core index']
  #allocation1 [shape = 'u32[144,128]{1,0:T(1,128)}', space=vmem, size = 0x12000, scoped, tag = 'internal scratch']
  #allocation2 [shape = 'f32[1,1]{1,0:T(1,128)S(1)}', space=vmem, size = 0x200, scoped, tag = 'scoped memory for dccrn_decoder_forward.1']
  #allocation3 [shape = 'f32[1,1]{1,0:T(1,128)S(1)}', space=vmem, size = 0x200, scoped, tag = 'scoped memory for dccrn_decoder_forward.1']
  #allocation4 [shape = 'f32[1,1]{1,0:T(1,128)S(1)}', space=vmem, size = 0x200, scoped, tag = 'scoped memory for dccrn_decoder_forward.1']
  %s0 = inlined_call_operand.vmem [shape: f32[16,32], index: 0, kind: input, shape index: {}]
  %s1 = inlined_call_operand.vmem [shape: f32[16,32], index: 1, kind: input, shape index: {}]
  %s2 = inlined_call_operand.vmem [shape: f32[16,1], index: 2, kind: input, shape index: {}]
  %s3 = inlined_call_operand.hbm [shape: f32[512,160], index: 3, kind: input, shape index: {}]
  %s4 = inlined_call_operand.vmem [shape: f32[128,128], index: 4, kind: input, shape index: {}]
  %s5 = inlined_call_operand.vmem [shape: f32[1,128], index: 5, kind: input, shape index: {}]
  %s6 = inlined_call_operand.vmem [shape: f32[1,128], index: 6, kind: input, shape index: {}]
  %s7 = inlined_call_operand.<no memory space> [shape: f32[1,1], index: 7, kind: input, shape index: {}, may-alias: {7,11,15}]
  %s8 = inlined_call_operand.hbm [shape: f32[256,128], index: 8, kind: input, shape index: {}]
  %s9 = inlined_call_operand.vmem [shape: f32[1,128], index: 9, kind: input, shape index: {}]
  %s10 = inlined_call_operand.vmem [shape: f32[1,128], index: 10, kind: input, shape index: {}]
  %s11 = inlined_call_operand.<no memory space> [shape: f32[1,1], index: 11, kind: input, shape index: {}, may-alias: {7,11,15}]
  %s12 = inlined_call_operand.vmem [shape: f32[256,256], index: 12, kind: input, shape index: {}]
  %s13 = inlined_call_operand.vmem [shape: f32[1,256], index: 13, kind: input, shape index: {}]
  %s14 = inlined_call_operand.vmem [shape: f32[1,256], index: 14, kind: input, shape index: {}]
  %s15 = inlined_call_operand.<no memory space> [shape: f32[1,1], index: 15, kind: input, shape index: {}, may-alias: {7,11,15}]
  %s16 = inlined_call_operand.hbm [shape: f32[512,64], index: 16, kind: input, shape index: {}]
  %s17 = inlined_call_operand.vmem [shape: f32[1,64], index: 17, kind: input, shape index: {}]
  %s18 = inlined_call_operand.vmem [shape: f32[1,64], index: 18, kind: input, shape index: {}]
  %s19 = inlined_call_operand.vmem [shape: f32[2,160], index: 19, kind: output, shape index: {}]
  %s20 = sld [smem:[#allocation0]]
  $region98: #{dccrn_decoder_forward.1} parent=0
    _
  %s22 = ssub.s32 1, %s20
  %s23 = scalar_select 0, %s22, %s20
  %v24 = vstv %s7
  %25 = vst [vmem:[#allocation2] sm:$0x1] %v24
  %v26 = vstv %s11
  %27 = vst [vmem:[#allocation3] sm:$0x1] %v26
  %v28 = vstv %s15
  %29 = vst [vmem:[#allocation4] sm:$0x1] %v28
  $region1: #{dccrn_decoder_forward.1} parent=0
    #allocation5 [shape = 'u8[524288]{0}', space=vmem, size = 0x80000, scoped, tag = 'input window, operand 3, single buffered']
    #allocation6 [shape = 's32[1]{0}', space=sflag, size = 0x4, scoped, tag = 'scoped memory for dccrn_decoder_forward.1']
    #allocation7 [shape = 'u8[131072]{0}', space=vmem, size = 0x20000, scoped, tag = 'input window, operand 8, single buffered']
    #allocation8 [shape = 's32[1]{0}', space=sflag, size = 0x4, scoped, tag = 'scoped memory for dccrn_decoder_forward.1']
    #allocation9 [shape = 'u8[262144]{0}', space=vmem, size = 0x40000, scoped, tag = 'input window, operand 16, single buffered']
    %30 = vsyncpa [#allocation6], 0
    %31 = vsyncpa [#allocation8], 0
    // Predicated region
    $region2: #{dccrn_decoder_forward.1} parent=1 // pred_check
      _
    $region3: #{dccrn_decoder_forward.1} parent=1 // pred_check_branch
      %33 = sbr.rel (0) target = $region5
    $region4: #{dccrn_decoder_forward.1} parent=1 // pred_region
      _
    $region5: #{dccrn_decoder_forward.1} parent=1 // pred_fallthru
      _
    // Predicated region
    $region6: #{dccrn_decoder_forward.1} parent=1 // pred_check
      _
    $region7: #{dccrn_decoder_forward.1} parent=1 // pred_check_branch
      %35 = sbr.rel (0) target = $region9
    $region8: #{dccrn_decoder_forward.1} parent=1 // pred_region
      _
    $region9: #{dccrn_decoder_forward.1} parent=1 // pred_fallthru
      _
    // Predicated region
    $region10: #{dccrn_decoder_forward.1} parent=1 // pred_check
      _
    $region11: #{dccrn_decoder_forward.1} parent=1 // pred_check_branch
      %37 = sbr.rel (0) target = $region13
    $region12: #{dccrn_decoder_forward.1} parent=1 // pred_region
      _
    $region13: #{dccrn_decoder_forward.1} parent=1 // pred_fallthru
      _
    // Predicated region
    $region14: #{dccrn_decoder_forward.1} parent=1 // pred_check
      _
    $region15: #{dccrn_decoder_forward.1} parent=1 // pred_check_branch
      %39 = sbr.rel (0) target = $region17
    $region16: #{dccrn_decoder_forward.1} parent=1 // pred_region
      %s41 = ssub.s32 16384, 16384
      %42 = vsyncadd [#allocation6], %s41
      %s43 = sshll.u32 [#allocation5], 4
      %s44 = int_to_ptr.vmem [resolvable:$true] %s43
      %49 = dma.hbm_to_vmem [thread:$0]  %s3, 16384, %s44, [#allocation6], 256, 256, 16
    $region17: #{dccrn_decoder_forward.1} parent=1 // pred_fallthru
      _
    // Predicated region
    $region18: #{dccrn_decoder_forward.1} parent=1 // pred_check
      _
    $region19: #{dccrn_decoder_forward.1} parent=1 // pred_check_branch
      %51 = sbr.rel (0) target = $region21
    $region20: #{dccrn_decoder_forward.1} parent=1 // pred_region
      _
    $region21: #{dccrn_decoder_forward.1} parent=1 // pred_fallthru
      _
    // Predicated region
    $region22: #{dccrn_decoder_forward.1} parent=1 // pred_check
      _
    $region23: #{dccrn_decoder_forward.1} parent=1 // pred_check_branch
      %53 = sbr.rel (0) target = $region25
    $region24: #{dccrn_decoder_forward.1} parent=1 // pred_region
      _
    $region25: #{dccrn_decoder_forward.1} parent=1 // pred_fallthru
      _
    // Predicated region
    $region26: #{dccrn_decoder_forward.1} parent=1 // pred_check
      _
    $region27: #{dccrn_decoder_forward.1} parent=1 // pred_check_branch
      %55 = sbr.rel (0) target = $region29
    $region28: #{dccrn_decoder_forward.1} parent=1 // pred_region
      _
    $region29: #{dccrn_decoder_forward.1} parent=1 // pred_fallthru
      _
    // Predicated region
    $region30: #{dccrn_decoder_forward.1} parent=1 // pred_check
      _
    $region31: #{dccrn_decoder_forward.1} parent=1 // pred_check_branch
      %57 = sbr.rel (0) target = $region33
    $region32: #{dccrn_decoder_forward.1} parent=1 // pred_region
      _
    $region33: #{dccrn_decoder_forward.1} parent=1 // pred_fallthru
      _
    // Predicated region
    $region34: #{dccrn_decoder_forward.1} parent=1 // pred_check
      _
    $region35: #{dccrn_decoder_forward.1} parent=1 // pred_check_branch
      %59 = sbr.rel (0) target = $region37
    $region36: #{dccrn_decoder_forward.1} parent=1 // pred_region
      %s61 = ssub.s32 4096, 4096
      %62 = vsyncadd [#allocation8], %s61
      %s63 = sshll.u32 [#allocation7], 4
      %s64 = int_to_ptr.vmem [resolvable:$true] %s63
      %69 = dma.hbm_to_vmem [thread:$0]  %s8, 4096, %s64, [#allocation8], 128, 128, 8
    $region37: #{dccrn_decoder_forward.1} parent=1 // pred_fallthru
      _
    // Predicated region
    $region38: #{dccrn_decoder_forward.1} parent=1 // pred_check
      _
    $region39: #{dccrn_decoder_forward.1} parent=1 // pred_check_branch
      %71 = sbr.rel (0) target = $region41
    $region40: #{dccrn_decoder_forward.1} parent=1 // pred_region
      _
    $region41: #{dccrn_decoder_forward.1} parent=1 // pred_fallthru
      _
    // Predicated region
    $region42: #{dccrn_decoder_forward.1} parent=1 // pred_check
      _
    $region43: #{dccrn_decoder_forward.1} parent=1 // pred_check_branch
      %73 = sbr.rel (0) target = $region45
    $region44: #{dccrn_decoder_forward.1} parent=1 // pred_region
      _
    $region45: #{dccrn_decoder_forward.1} parent=1 // pred_fallthru
      _
    // Predicated region
    $region46: #{dccrn_decoder_forward.1} parent=1 // pred_check
      _
    $region47: #{dccrn_decoder_forward.1} parent=1 // pred_check_branch
      %75 = sbr.rel (0) target = $region49
    $region48: #{dccrn_decoder_forward.1} parent=1 // pred_region
      _
    $region49: #{dccrn_decoder_forward.1} parent=1 // pred_fallthru
      _
    // Predicated region
    $region50: #{dccrn_decoder_forward.1} parent=1 // pred_check
      _
    $region51: #{dccrn_decoder_forward.1} parent=1 // pred_check_branch
      %77 = sbr.rel (0) target = $region53
    $region52: #{dccrn_decoder_forward.1} parent=1 // pred_region
      _
    $region53: #{dccrn_decoder_forward.1} parent=1 // pred_fallthru
      _
    // Predicated region
    $region54: #{dccrn_decoder_forward.1} parent=1 // pred_check
      _
    $region55: #{dccrn_decoder_forward.1} parent=1 // pred_check_branch
      %79 = sbr.rel (0) target = $region57
    $region56: #{dccrn_decoder_forward.1} parent=1 // pred_region
      _
    $region57: #{dccrn_decoder_forward.1} parent=1 // pred_fallthru
      _
    // Predicated region
    $region58: #{dccrn_decoder_forward.1} parent=1 // pred_check
      _
    $region59: #{dccrn_decoder_forward.1} parent=1 // pred_check_branch
      %81 = sbr.rel (0) target = $region61
    $region60: #{dccrn_decoder_forward.1} parent=1 // pred_region
      _
    $region61: #{dccrn_decoder_forward.1} parent=1 // pred_fallthru
      _
    // Predicated region
    $region62: #{dccrn_decoder_forward.1} parent=1 // pred_check
      _
    $region63: #{dccrn_decoder_forward.1} parent=1 // pred_check_branch
      %83 = sbr.rel (0) target = $region65
    $region64: #{dccrn_decoder_forward.1} parent=1 // pred_region
      _
    $region65: #{dccrn_decoder_forward.1} parent=1 // pred_fallthru
      _
    // Predicated region
    $region66: #{dccrn_decoder_forward.1} parent=1 // pred_check
      _
    $region67: #{dccrn_decoder_forward.1} parent=1 // pred_check_branch
      %85 = sbr.rel (0) target = $region69
    $region68: #{dccrn_decoder_forward.1} parent=1 // pred_region
      %s87 = ssub.s32 8192, 8192
      %88 = vsyncadd [#allocation8], %s87
      %s89 = sshll.u32 [#allocation9], 4
      %s90 = int_to_ptr.vmem [resolvable:$true] %s89
      %95 = dma.hbm_to_vmem [thread:$0]  %s16, 8192, %s90, [#allocation8], 128, 128, 8
    $region69: #{dccrn_decoder_forward.1} parent=1 // pred_fallthru
      _
    // Predicated region
    $region70: #{dccrn_decoder_forward.1} parent=1 // pred_check
      _
    $region71: #{dccrn_decoder_forward.1} parent=1 // pred_check_branch
      %97 = sbr.rel (0) target = $region73
    $region72: #{dccrn_decoder_forward.1} parent=1 // pred_region
      _
    $region73: #{dccrn_decoder_forward.1} parent=1 // pred_fallthru
      _
    // Predicated region
    $region74: #{dccrn_decoder_forward.1} parent=1 // pred_check
      _
    $region75: #{dccrn_decoder_forward.1} parent=1 // pred_check_branch
      %99 = sbr.rel (0) target = $region77
    $region76: #{dccrn_decoder_forward.1} parent=1 // pred_region
      _
    $region77: #{dccrn_decoder_forward.1} parent=1 // pred_fallthru
      _
    // Predicated region
    $region78: #{dccrn_decoder_forward.1} parent=1 // pred_check
      _
    $region79: #{dccrn_decoder_forward.1} parent=1 // pred_check_branch
      %101 = sbr.rel (0) target = $region81
    $region80: #{dccrn_decoder_forward.1} parent=1 // pred_region
      %102 = dma.done [#allocation6], 16384
    $region81: #{dccrn_decoder_forward.1} parent=1 // pred_fallthru
      _
    // Predicated region
    $region82: #{dccrn_decoder_forward.1} parent=1 // pred_check
      _
    $region83: #{dccrn_decoder_forward.1} parent=1 // pred_check_branch
      %104 = sbr.rel (0) target = $region85
    $region84: #{dccrn_decoder_forward.1} parent=1 // pred_region
      %105 = dma.done [#allocation8], 4096
    $region85: #{dccrn_decoder_forward.1} parent=1 // pred_fallthru
      _
    // Predicated region
    $region86: #{dccrn_decoder_forward.1} parent=1 // pred_check
      _
    $region87: #{dccrn_decoder_forward.1} parent=1 // pred_check_branch
      %107 = sbr.rel (0) target = $region89
    $region88: #{dccrn_decoder_forward.1} parent=1 // pred_region
      %108 = dma.done [#allocation8], 8192
    $region89: #{dccrn_decoder_forward.1} parent=1 // pred_fallthru
      _
    %v109 = vld [vmem:[%s2] sm:$0xff]
    %v110 = vld [vmem:[%s2 + $0x8] sm:$0xff]
    %v111 = vld [vmem:[%s0] sm:$0xff]
    %v112 = vld [vmem:[%s0 + $0x8] sm:$0xff]
    %v113 = vld [vmem:[%s1] sm:$0xff]
    %v114 = vld [vmem:[%s1 + $0x8] sm:$0xff]
    %v115 = vsub.f32 %v111, %v113
    %v116 = vsub.f32 %v112, %v114
    %v117 = vadd.f32 %v111, %v113
    %v118 = vadd.f32 %v112, %v114
    %vm121 = vcmask 1046528
    %v122 = vrot.slane %v115, 1
    %v123 = vrot.slane %v116, 1
    %v124 = vsel %vm121, %v122, %v123
    %v127 = vsel %vm121, %v123, 0.0
    %129 = vset.pattern.permute.xlu0 0
    %130 = vperm.xlu0 %129, %v109
    %v131 = vpop.permute.xlu0 %130
    %134 = vset.pattern.permute.xlu0 0
    %135 = vperm.xlu0 %134, %v110
    %v136 = vpop.permute.xlu0 %135
    %v138 = vmul.f32 %v124, %v131
    %v139 = vmul.f32 %v127, %v136
    %v142 = vrot.slane %v117, 1
    %v143 = vrot.slane %v118, 1
    %v144 = vsel %vm121, %v142, %v143
    %v147 = vsel %vm121, %v143, 0.0
    %v148 = vmul.f32 %v144, %v131
    %v149 = vmul.f32 %v147, %v136
    %152 = vrot.lane.b32.xlu0 %v138, 32
    %v153 = vpop.permute.xlu0 %152
    %154 = vrot.lane.b32.xlu0 %v139, 32
    %v155 = vpop.permute.xlu0 %154
    %158 = vrot.lane.b32.xlu0 %v117, 64
    %v159 = vpop.permute.xlu0 %158
    %160 = vrot.lane.b32.xlu0 %v118, 64
    %v161 = vpop.permute.xlu0 %160
    %166 = vrot.lane.b32.xlu0 %v148, 96
    %v167 = vpop.permute.xlu0 %166
    %168 = vrot.lane.b32.xlu0 %v149, 96
    %v169 = vpop.permute.xlu0 %168
    %vm172 = vcmask 261120
    %v173 = vsel %vm172, %v115, %v153
    %v174 = vsel %vm172, %v116, %v155
    %vm175 = vcmask 523264
    %v176 = vsel %vm175, %v173, %v159
    %v177 = vsel %vm175, %v174, %v161
    %vm178 = vcmask 785408
    %v179 = vsel %vm178, %v176, %v167
    %v180 = vsel %vm178, %v177, %v169
    %v181 = vld [vmem:[%s4] sm:$0xff]
    %v182 = vld [vmem:[%s4 + $0x8] sm:$0xff]
    %v183 = vld [vmem:[%s4 + $0x10] sm:$0xff]
    %v184 = vld [vmem:[%s4 + $0x18] sm:$0xff]
    %v185 = vld [vmem:[%s4 + $0x20] sm:$0xff]
    %v186 = vld [vmem:[%s4 + $0x28] sm:$0xff]
    %v187 = vld [vmem:[%s4 + $0x30] sm:$0xff]
    %v188 = vld [vmem:[%s4 + $0x38] sm:$0xff]
    %v189 = vld [vmem:[%s4 + $0x40] sm:$0xff]
    %v190 = vld [vmem:[%s4 + $0x48] sm:$0xff]
    %v191 = vld [vmem:[%s4 + $0x50] sm:$0xff]
    %v192 = vld [vmem:[%s4 + $0x58] sm:$0xff]
    %v193 = vld [vmem:[%s4 + $0x60] sm:$0xff]
    %v194 = vld [vmem:[%s4 + $0x68] sm:$0xff]
    %v195 = vld [vmem:[%s4 + $0x70] sm:$0xff]
    %v196 = vld [vmem:[%s4 + $0x78] sm:$0xff]
    %197 = vmatprep.subr.mxu0 0.0
    %v198 = vand.u32 %v181, 4294901760
    %199 = vmatpush1.msra.mxu0 %v198
    %200 = vmatprep.subr.mxu0 0.0
    %v201 = vand.u32 %v182, 4294901760
    %202 = vmatpush1.msra.mxu0 %v201
    %203 = vmatprep.subr.mxu0 0.0
    %v204 = vand.u32 %v183, 4294901760
    %205 = vmatpush1.msra.mxu0 %v204
    %206 = vmatprep.subr.mxu0 0.0
    %v207 = vand.u32 %v184, 4294901760
    %208 = vmatpush1.msra.mxu0 %v207
    %209 = vmatprep.subr.mxu0 0.0
    %v210 = vand.u32 %v185, 4294901760
    %211 = vmatpush1.msra.mxu0 %v210
    %212 = vmatprep.subr.mxu0 0.0
    %v213 = vand.u32 %v186, 4294901760
    %214 = vmatpush1.msra.mxu0 %v213
    %215 = vmatprep.subr.mxu0 0.0
    %v216 = vand.u32 %v187, 4294901760
    %217 = vmatpush1.msra.mxu0 %v216
    %218 = vmatprep.subr.mxu0 0.0
    %v219 = vand.u32 %v188, 4294901760
    %220 = vmatpush1.msra.mxu0 %v219
    %221 = vmatprep.subr.mxu0 0.0
    %v222 = vand.u32 %v189, 4294901760
    %223 = vmatpush1.msra.mxu0 %v222
    %224 = vmatprep.subr.mxu0 0.0
    %v225 = vand.u32 %v190, 4294901760
    %226 = vmatpush1.msra.mxu0 %v225
    %227 = vmatprep.subr.mxu0 0.0
    %v228 = vand.u32 %v191, 4294901760
    %229 = vmatpush1.msra.mxu0 %v228
    %230 = vmatprep.subr.mxu0 0.0
    %v231 = vand.u32 %v192, 4294901760
    %232 = vmatpush1.msra.mxu0 %v231
    %233 = vmatprep.subr.mxu0 0.0
    %v234 = vand.u32 %v193, 4294901760
    %235 = vmatpush1.msra.mxu0 %v234
    %236 = vmatprep.subr.mxu0 0.0
    %v237 = vand.u32 %v194, 4294901760
    %238 = vmatpush1.msra.mxu0 %v237
    %239 = vmatprep.subr.mxu0 0.0
    %v240 = vand.u32 %v195, 4294901760
    %241 = vmatpush1.msra.mxu0 %v240
    %242 = vmatprep.subr.mxu0 0.0
    %v243 = vand.u32 %v196, 4294901760
    %244 = vmatpush1.msra.mxu0 %v243
    %245 = vmatprep.subr.mxu0 0.0
    %246 = vmatpush1.msra.mxu0 0.0
    %247 = vmatprep.subr.mxu0 0.0
    %248 = vmatpush1.msra.mxu0 0.0
    %249 = vmatprep.subr.mxu0 0.0
    %250 = vmatpush1.msra.mxu0 0.0
    %251 = vmatprep.subr.mxu0 0.0
    %252 = vmatpush1.msra.mxu0 0.0
    %253 = vmatprep.subr.mxu0 0.0
    %254 = vmatpush1.msra.mxu0 0.0
    %255 = vmatprep.subr.mxu0 0.0
    %256 = vmatpush1.msra.mxu0 0.0
    %257 = vmatprep.subr.mxu0 0.0
    %258 = vmatpush1.msra.mxu0 0.0
    %259 = vmatprep.subr.mxu0 0.0
    %260 = vmatpush1.msra.mxu0 0.0
    %261 = vmatprep.subr.mxu0 0.0
    %262 = vmatpush1.msra.mxu0 0.0
    %263 = vmatprep.subr.mxu0 0.0
    %264 = vmatpush1.msra.mxu0 0.0
    %265 = vmatprep.subr.mxu0 0.0
    %266 = vmatpush1.msra.mxu0 0.0
    %267 = vmatprep.subr.mxu0 0.0
    %268 = vmatpush1.msra.mxu0 0.0
    %269 = vmatprep.subr.mxu0 0.0
    %270 = vmatpush1.msra.mxu0 0.0
    %271 = vmatprep.subr.mxu0 0.0
    %272 = vmatpush1.msra.mxu0 0.0
    %273 = vmatprep.subr.mxu0 0.0
    %274 = vmatpush1.msra.mxu0 0.0
    %275 = vmatprep.subr.mxu0 0.0
    %276 = vmatpush1.msra.mxu0 0.0
    %277 = vmatprep.mubr.f32.mxu0 0.0
    %v278 = vand.u32 %v179, 4294901760
    %v279 = vsub.f32 %v179, %v278
    %v280 = vand.u32 %v279, 4294901760
    %v281 = vsub.f32 %v279, %v280
    %v282 = vand.u32 %v281, 4294901760
    %283 = vmatmul.mubr.f32.gmra.mrb[0].mxu0 %v282
    %v284 = vpop.f32.mrb[0].mxu0
    %v285 = vadd.f32 0.0, %v284
    %v286 = vpop.f32.mrb[0].mxu0
    %287 = vmatprep.mubr.f32.mxu0 0.0
    %v288 = vand.u32 %v180, 4294901760
    %v289 = vsub.f32 %v180, %v288
    %v290 = vand.u32 %v289, 4294901760
    %v291 = vsub.f32 %v289, %v290
    %v292 = vand.u32 %v291, 4294901760
    %293 = vmatmul.mubr.f32.gmra.mrb[0].mxu0 %v292
    %v294 = vpop.f32.mrb[0].mxu0
    %v295 = vadd.f32 0.0, %v294
    %v296 = vpop.f32.mrb[0].mxu0
    %297 = vdwg.mxu0
    %298 = vmatprep.subr.mxu0 0.0
    %v299 = vand.u32 %v181, 4294901760
    %v300 = vsub.f32 %v181, %v299
    %v301 = vand.u32 %v300, 4294901760
    %v302 = vsub.f32 %v300, %v301
    %v303 = vand.u32 %v302, 4294901760
    %304 = vmatpush1.msra.mxu0 %v303
    %305 = vmatprep.subr.mxu0 0.0
    %v306 = vand.u32 %v182, 4294901760
    %v307 = vsub.f32 %v182, %v306
    %v308 = vand.u32 %v307, 4294901760
    %v309 = vsub.f32 %v307, %v308
    %v310 = vand.u32 %v309, 4294901760
    %311 = vmatpush1.msra.mxu0 %v310
    %312 = vmatprep.subr.mxu0 0.0
    %v313 = vand.u32 %v183, 4294901760
    %v314 = vsub.f32 %v183, %v313
    %v315 = vand.u32 %v314, 4294901760
    %v316 = vsub.f32 %v314, %v315
    %v317 = vand.u32 %v316, 4294901760
    %318 = vmatpush1.msra.mxu0 %v317
    %319 = vmatprep.subr.mxu0 0.0
    %v320 = vand.u32 %v184, 4294901760
    %v321 = vsub.f32 %v184, %v320
    %v322 = vand.u32 %v321, 4294901760
    %v323 = vsub.f32 %v321, %v322
    %v324 = vand.u32 %v323, 4294901760
    %325 = vmatpush1.msra.mxu0 %v324
    %326 = vmatprep.subr.mxu0 0.0
    %v327 = vand.u32 %v185, 4294901760
    %v328 = vsub.f32 %v185, %v327
    %v329 = vand.u32 %v328, 4294901760
    %v330 = vsub.f32 %v328, %v329
    %v331 = vand.u32 %v330, 4294901760
    %332 = vmatpush1.msra.mxu0 %v331
    %333 = vmatprep.subr.mxu0 0.0
    %v334 = vand.u32 %v186, 4294901760
    %v335 = vsub.f32 %v186, %v334
    %v336 = vand.u32 %v335, 4294901760
    %v337 = vsub.f32 %v335, %v336
    %v338 = vand.u32 %v337, 4294901760
    %339 = vmatpush1.msra.mxu0 %v338
    %340 = vmatprep.subr.mxu0 0.0
    %v341 = vand.u32 %v187, 4294901760
    %v342 = vsub.f32 %v187, %v341
    %v343 = vand.u32 %v342, 4294901760
    %v344 = vsub.f32 %v342, %v343
    %v345 = vand.u32 %v344, 4294901760
    %346 = vmatpush1.msra.mxu0 %v345
    %347 = vmatprep.subr.mxu0 0.0
    %v348 = vand.u32 %v188, 4294901760
    %v349 = vsub.f32 %v188, %v348
    %v350 = vand.u32 %v349, 4294901760
    %v351 = vsub.f32 %v349, %v350
    %v352 = vand.u32 %v351, 4294901760
    %353 = vmatpush1.msra.mxu0 %v352
    %354 = vmatprep.subr.mxu0 0.0
    %v355 = vand.u32 %v189, 4294901760
    %v356 = vsub.f32 %v189, %v355
    %v357 = vand.u32 %v356, 4294901760
    %v358 = vsub.f32 %v356, %v357
    %v359 = vand.u32 %v358, 4294901760
    %360 = vmatpush1.msra.mxu0 %v359
    %361 = vmatprep.subr.mxu0 0.0
    %v362 = vand.u32 %v190, 4294901760
    %v363 = vsub.f32 %v190, %v362
    %v364 = vand.u32 %v363, 4294901760
    %v365 = vsub.f32 %v363, %v364
    %v366 = vand.u32 %v365, 4294901760
    %367 = vmatpush1.msra.mxu0 %v366
    %368 = vmatprep.subr.mxu0 0.0
    %v369 = vand.u32 %v191, 4294901760
    %v370 = vsub.f32 %v191, %v369
    %v371 = vand.u32 %v370, 4294901760
    %v372 = vsub.f32 %v370, %v371
    %v373 = vand.u32 %v372, 4294901760
    %374 = vmatpush1.msra.mxu0 %v373
    %375 = vmatprep.subr.mxu0 0.0
    %v376 = vand.u32 %v192, 4294901760
    %v377 = vsub.f32 %v192, %v376
    %v378 = vand.u32 %v377, 4294901760
    %v379 = vsub.f32 %v377, %v378
    %v380 = vand.u32 %v379, 4294901760
    %381 = vmatpush1.msra.mxu0 %v380
    %382 = vmatprep.subr.mxu0 0.0
    %v383 = vand.u32 %v193, 4294901760
    %v384 = vsub.f32 %v193, %v383
    %v385 = vand.u32 %v384, 4294901760
    %v386 = vsub.f32 %v384, %v385
    %v387 = vand.u32 %v386, 4294901760
    %388 = vmatpush1.msra.mxu0 %v387
    %389 = vmatprep.subr.mxu0 0.0
    %v390 = vand.u32 %v194, 4294901760
    %v391 = vsub.f32 %v194, %v390
    %v392 = vand.u32 %v391, 4294901760
    %v393 = vsub.f32 %v391, %v392
    %v394 = vand.u32 %v393, 4294901760
    %395 = vmatpush1.msra.mxu0 %v394
    %396 = vmatprep.subr.mxu0 0.0
    %v397 = vand.u32 %v195, 4294901760
    %v398 = vsub.f32 %v195, %v397
    %v399 = vand.u32 %v398, 4294901760
    %v400 = vsub.f32 %v398, %v399
    %v401 = vand.u32 %v400, 4294901760
    %402 = vmatpush1.msra.mxu0 %v401
    %403 = vmatprep.subr.mxu0 0.0
    %v404 = vand.u32 %v196, 4294901760
    %v405 = vsub.f32 %v196, %v404
    %v406 = vand.u32 %v405, 4294901760
    %v407 = vsub.f32 %v405, %v406
    %v408 = vand.u32 %v407, 4294901760
    %409 = vmatpush1.msra.mxu0 %v408
    %410 = vmatprep.subr.mxu0 0.0
    %411 = vmatpush1.msra.mxu0 0.0
    %412 = vmatprep.subr.mxu0 0.0
    %413 = vmatpush1.msra.mxu0 0.0
    %414 = vmatprep.subr.mxu0 0.0
    %415 = vmatpush1.msra.mxu0 0.0
    %416 = vmatprep.subr.mxu0 0.0
    %417 = vmatpush1.msra.mxu0 0.0
    %418 = vmatprep.subr.mxu0 0.0
    %419 = vmatpush1.msra.mxu0 0.0
    %420 = vmatprep.subr.mxu0 0.0
    %421 = vmatpush1.msra.mxu0 0.0
    %422 = vmatprep.subr.mxu0 0.0
    %423 = vmatpush1.msra.mxu0 0.0
    %424 = vmatprep.subr.mxu0 0.0
    %425 = vmatpush1.msra.mxu0 0.0
    %426 = vmatprep.subr.mxu0 0.0
    %427 = vmatpush1.msra.mxu0 0.0
    %428 = vmatprep.subr.mxu0 0.0
    %429 = vmatpush1.msra.mxu0 0.0
    %430 = vmatprep.subr.mxu0 0.0
    %431 = vmatpush1.msra.mxu0 0.0
    %432 = vmatprep.subr.mxu0 0.0
    %433 = vmatpush1.msra.mxu0 0.0
    %434 = vmatprep.subr.mxu0 0.0
    %435 = vmatpush1.msra.mxu0 0.0
    %436 = vmatprep.subr.mxu0 0.0
    %437 = vmatpush1.msra.mxu0 0.0
    %438 = vmatprep.subr.mxu0 0.0
    %439 = vmatpush1.msra.mxu0 0.0
    %440 = vmatprep.subr.mxu0 0.0
    %441 = vmatpush1.msra.mxu0 0.0
    %442 = vmatprep.mubr.f32.mxu0 0.0
    %v443 = vand.u32 %v179, 4294901760
    %444 = vmatmul.mubr.f32.gmra.mrb[0].mxu0 %v443
    %v445 = vpop.f32.mrb[0].mxu0
    %v446 = vadd.f32 %v285, %v445
    %v447 = vpop.f32.mrb[0].mxu0
    %448 = vmatprep.mubr.f32.mxu0 0.0
    %v449 = vand.u32 %v180, 4294901760
    %450 = vmatmul.mubr.f32.gmra.mrb[0].mxu0 %v449
    %v451 = vpop.f32.mrb[0].mxu0
    %v452 = vadd.f32 %v295, %v451
    %v453 = vpop.f32.mrb[0].mxu0
    %454 = vdwg.mxu0
    %455 = vmatprep.subr.mxu0 0.0
    %v456 = vand.u32 %v181, 4294901760
    %v457 = vsub.f32 %v181, %v456
    %458 = vmatpush1.msra.mxu0 %v457
    %459 = vmatprep.subr.mxu0 0.0
    %v460 = vand.u32 %v182, 4294901760
    %v461 = vsub.f32 %v182, %v460
    %462 = vmatpush1.msra.mxu0 %v461
    %463 = vmatprep.subr.mxu0 0.0
    %v464 = vand.u32 %v183, 4294901760
    %v465 = vsub.f32 %v183, %v464
    %466 = vmatpush1.msra.mxu0 %v465
    %467 = vmatprep.subr.mxu0 0.0
    %v468 = vand.u32 %v184, 4294901760
    %v469 = vsub.f32 %v184, %v468
    %470 = vmatpush1.msra.mxu0 %v469
    %471 = vmatprep.subr.mxu0 0.0
    %v472 = vand.u32 %v185, 4294901760
    %v473 = vsub.f32 %v185, %v472
    %474 = vmatpush1.msra.mxu0 %v473
    %475 = vmatprep.subr.mxu0 0.0
    %v476 = vand.u32 %v186, 4294901760
    %v477 = vsub.f32 %v186, %v476
    %478 = vmatpush1.msra.mxu0 %v477
    %479 = vmatprep.subr.mxu0 0.0
    %v480 = vand.u32 %v187, 4294901760
    %v481 = vsub.f32 %v187, %v480
    %482 = vmatpush1.msra.mxu0 %v481
    %483 = vmatprep.subr.mxu0 0.0
    %v484 = vand.u32 %v188, 4294901760
    %v485 = vsub.f32 %v188, %v484
    %486 = vmatpush1.msra.mxu0 %v485
    %487 = vmatprep.subr.mxu0 0.0
    %v488 = vand.u32 %v189, 4294901760
    %v489 = vsub.f32 %v189, %v488
    %490 = vmatpush1.msra.mxu0 %v489
    %491 = vmatprep.subr.mxu0 0.0
    %v492 = vand.u32 %v190, 4294901760
    %v493 = vsub.f32 %v190, %v492
    %494 = vmatpush1.msra.mxu0 %v493
    %495 = vmatprep.subr.mxu0 0.0
    %v496 = vand.u32 %v191, 4294901760
    %v497 = vsub.f32 %v191, %v496
    %498 = vmatpush1.msra.mxu0 %v497
    %499 = vmatprep.subr.mxu0 0.0
    %v500 = vand.u32 %v192, 4294901760
    %v501 = vsub.f32 %v192, %v500
    %502 = vmatpush1.msra.mxu0 %v501
    %503 = vmatprep.subr.mxu0 0.0
    %v504 = vand.u32 %v193, 4294901760
    %v505 = vsub.f32 %v193, %v504
    %506 = vmatpush1.msra.mxu0 %v505
    %507 = vmatprep.subr.mxu0 0.0
    %v508 = vand.u32 %v194, 4294901760
    %v509 = vsub.f32 %v194, %v508
    %510 = vmatpush1.msra.mxu0 %v509
    %511 = vmatprep.subr.mxu0 0.0
    %v512 = vand.u32 %v195, 4294901760
    %v513 = vsub.f32 %v195, %v512
    %514 = vmatpush1.msra.mxu0 %v513
    %515 = vmatprep.subr.mxu0 0.0
    %v516 = vand.u32 %v196, 4294901760
    %v517 = vsub.f32 %v196, %v516
    %518 = vmatpush1.msra.mxu0 %v517
    %519 = vmatprep.subr.mxu0 0.0
    %520 = vmatpush1.msra.mxu0 0.0
    %521 = vmatprep.subr.mxu0 0.0
    %522 = vmatpush1.msra.mxu0 0.0
    %523 = vmatprep.subr.mxu0 0.0
    %524 = vmatpush1.msra.mxu0 0.0
    %525 = vmatprep.subr.mxu0 0.0
    %526 = vmatpush1.msra.mxu0 0.0
    %527 = vmatprep.subr.mxu0 0.0
    %528 = vmatpush1.msra.mxu0 0.0
    %529 = vmatprep.subr.mxu0 0.0
    %530 = vmatpush1.msra.mxu0 0.0
    %531 = vmatprep.subr.mxu0 0.0
    %532 = vmatpush1.msra.mxu0 0.0
    %533 = vmatprep.subr.mxu0 0.0
    %534 = vmatpush1.msra.mxu0 0.0
    %535 = vmatprep.subr.mxu0 0.0
    %536 = vmatpush1.msra.mxu0 0.0
    %537 = vmatprep.subr.mxu0 0.0
    %538 = vmatpush1.msra.mxu0 0.0
    %539 = vmatprep.subr.mxu0 0.0
    %540 = vmatpush1.msra.mxu0 0.0
    %541 = vmatprep.subr.mxu0 0.0
    %542 = vmatpush1.msra.mxu0 0.0
    %543 = vmatprep.subr.mxu0 0.0
    %544 = vmatpush1.msra.mxu0 0.0
    %545 = vmatprep.subr.mxu0 0.0
    %546 = vmatpush1.msra.mxu0 0.0
    %547 = vmatprep.subr.mxu0 0.0
    %548 = vmatpush1.msra.mxu0 0.0
    %549 = vmatprep.subr.mxu0 0.0
    %550 = vmatpush1.msra.mxu0 0.0
    %551 = vmatprep.mubr.f32.mxu0 0.0
    %v552 = vand.u32 %v179, 4294901760
    %v553 = vsub.f32 %v179, %v552
    %554 = vmatmul.mubr.f32.gmra.mrb[0].mxu0 %v553
    %v555 = vpop.f32.mrb[0].mxu0
    %v556 = vadd.f32 %v446, %v555
    %v557 = vpop.f32.mrb[0].mxu0
    %558 = vmatprep.mubr.f32.mxu0 0.0
    %v559 = vand.u32 %v180, 4294901760
    %v560 = vsub.f32 %v180, %v559
    %561 = vmatmul.mubr.f32.gmra.mrb[0].mxu0 %v560
    %v562 = vpop.f32.mrb[0].mxu0
    %v563 = vadd.f32 %v452, %v562
    %v564 = vpop.f32.mrb[0].mxu0
    %565 = vdwg.mxu0
    %566 = vmatprep.subr.mxu0 0.0
    %v567 = vand.u32 %v181, 4294901760
    %568 = vmatpush1.msra.mxu0 %v567
    %569 = vmatprep.subr.mxu0 0.0
    %v570 = vand.u32 %v182, 4294901760
    %571 = vmatpush1.msra.mxu0 %v570
    %572 = vmatprep.subr.mxu0 0.0
    %v573 = vand.u32 %v183, 4294901760
    %574 = vmatpush1.msra.mxu0 %v573
    %575 = vmatprep.subr.mxu0 0.0
    %v576 = vand.u32 %v184, 4294901760
    %577 = vmatpush1.msra.mxu0 %v576
    %578 = vmatprep.subr.mxu0 0.0
    %v579 = vand.u32 %v185, 4294901760
    %580 = vmatpush1.msra.mxu0 %v579
    %581 = vmatprep.subr.mxu0 0.0
    %v582 = vand.u32 %v186, 4294901760
    %583 = vmatpush1.msra.mxu0 %v582
    %584 = vmatprep.subr.mxu0 0.0
    %v585 = vand.u32 %v187, 4294901760
    %586 = vmatpush1.msra.mxu0 %v585
    %587 = vmatprep.subr.mxu0 0.0
    %v588 = vand.u32 %v188, 4294901760
    %589 = vmatpush1.msra.mxu0 %v588
    %590 = vmatprep.subr.mxu0 0.0
    %v591 = vand.u32 %v189, 4294901760
    %592 = vmatpush1.msra.mxu0 %v591
    %593 = vmatprep.subr.mxu0 0.0
    %v594 = vand.u32 %v190, 4294901760
    %595 = vmatpush1.msra.mxu0 %v594
    %596 = vmatprep.subr.mxu0 0.0
    %v597 = vand.u32 %v191, 4294901760
    %598 = vmatpush1.msra.mxu0 %v597
    %599 = vmatprep.subr.mxu0 0.0
    %v600 = vand.u32 %v192, 4294901760
    %601 = vmatpush1.msra.mxu0 %v600
    %602 = vmatprep.subr.mxu0 0.0
    %v603 = vand.u32 %v193, 4294901760
    %604 = vmatpush1.msra.mxu0 %v603
    %605 = vmatprep.subr.mxu0 0.0
    %v606 = vand.u32 %v194, 4294901760
    %607 = vmatpush1.msra.mxu0 %v606
    %608 = vmatprep.subr.mxu0 0.0
    %v609 = vand.u32 %v195, 4294901760
    %610 = vmatpush1.msra.mxu0 %v609
    %611 = vmatprep.subr.mxu0 0.0
    %v612 = vand.u32 %v196, 4294901760
    %613 = vmatpush1.msra.mxu0 %v612
    %614 = vmatprep.subr.mxu0 0.0
    %615 = vmatpush1.msra.mxu0 0.0
    %616 = vmatprep.subr.mxu0 0.0
    %617 = vmatpush1.msra.mxu0 0.0
    %618 = vmatprep.subr.mxu0 0.0
    %619 = vmatpush1.msra.mxu0 0.0
    %620 = vmatprep.subr.mxu0 0.0
    %621 = vmatpush1.msra.mxu0 0.0
    %622 = vmatprep.subr.mxu0 0.0
    %623 = vmatpush1.msra.mxu0 0.0
    %624 = vmatprep.subr.mxu0 0.0
    %625 = vmatpush1.msra.mxu0 0.0
    %626 = vmatprep.subr.mxu0 0.0
    %627 = vmatpush1.msra.mxu0 0.0
    %628 = vmatprep.subr.mxu0 0.0
    %629 = vmatpush1.msra.mxu0 0.0
    %630 = vmatprep.subr.mxu0 0.0
    %631 = vmatpush1.msra.mxu0 0.0
    %632 = vmatprep.subr.mxu0 0.0
    %633 = vmatpush1.msra.mxu0 0.0
    %634 = vmatprep.subr.mxu0 0.0
    %635 = vmatpush1.msra.mxu0 0.0
    %636 = vmatprep.subr.mxu0 0.0
    %637 = vmatpush1.msra.mxu0 0.0
    %638 = vmatprep.subr.mxu0 0.0
    %639 = vmatpush1.msra.mxu0 0.0
    %640 = vmatprep.subr.mxu0 0.0
    %641 = vmatpush1.msra.mxu0 0.0
    %642 = vmatprep.subr.mxu0 0.0
    %643 = vmatpush1.msra.mxu0 0.0
    %644 = vmatprep.subr.mxu0 0.0
    %645 = vmatpush1.msra.mxu0 0.0
    %646 = vmatprep.mubr.f32.mxu0 0.0
    %v647 = vand.u32 %v179, 4294901760
    %v648 = vsub.f32 %v179, %v647
    %v649 = vand.u32 %v648, 4294901760
    %650 = vmatmul.mubr.f32.gmra.mrb[0].mxu0 %v649
    %v651 = vpop.f32.mrb[0].mxu0
    %v652 = vadd.f32 %v556, %v651
    %v653 = vpop.f32.mrb[0].mxu0
    %654 = vmatprep.mubr.f32.mxu0 0.0
    %v655 = vand.u32 %v180, 4294901760
    %v656 = vsub.f32 %v180, %v655
    %v657 = vand.u32 %v656, 4294901760
    %658 = vmatmul.mubr.f32.gmra.mrb[0].mxu0 %v657
    %v659 = vpop.f32.mrb[0].mxu0
    %v660 = vadd.f32 %v563, %v659
    %v661 = vpop.f32.mrb[0].mxu0
    %662 = vdwg.mxu0
    %663 = vmatprep.subr.mxu0 0.0
    %v664 = vand.u32 %v181, 4294901760
    %v665 = vsub.f32 %v181, %v664
    %v666 = vand.u32 %v665, 4294901760
    %667 = vmatpush1.msra.mxu0 %v666
    %668 = vmatprep.subr.mxu0 0.0
    %v669 = vand.u32 %v182, 4294901760
    %v670 = vsub.f32 %v182, %v669
    %v671 = vand.u32 %v670, 4294901760
    %672 = vmatpush1.msra.mxu0 %v671
    %673 = vmatprep.subr.mxu0 0.0
    %v674 = vand.u32 %v183, 4294901760
    %v675 = vsub.f32 %v183, %v674
    %v676 = vand.u32 %v675, 4294901760
    %677 = vmatpush1.msra.mxu0 %v676
    %678 = vmatprep.subr.mxu0 0.0
    %v679 = vand.u32 %v184, 4294901760
    %v680 = vsub.f32 %v184, %v679
    %v681 = vand.u32 %v680, 4294901760
    %682 = vmatpush1.msra.mxu0 %v681
    %683 = vmatprep.subr.mxu0 0.0
    %v684 = vand.u32 %v185, 4294901760
    %v685 = vsub.f32 %v185, %v684
    %v686 = vand.u32 %v685, 4294901760
    %687 = vmatpush1.msra.mxu0 %v686
    %688 = vmatprep.subr.mxu0 0.0
    %v689 = vand.u32 %v186, 4294901760
    %v690 = vsub.f32 %v186, %v689
    %v691 = vand.u32 %v690, 4294901760
    %692 = vmatpush1.msra.mxu0 %v691
    %693 = vmatprep.subr.mxu0 0.0
    %v694 = vand.u32 %v187, 4294901760
    %v695 = vsub.f32 %v187, %v694
    %v696 = vand.u32 %v695, 4294901760
    %697 = vmatpush1.msra.mxu0 %v696
    %698 = vmatprep.subr.mxu0 0.0
    %v699 = vand.u32 %v188, 4294901760
    %v700 = vsub.f32 %v188, %v699
    %v701 = vand.u32 %v700, 4294901760
    %702 = vmatpush1.msra.mxu0 %v701
    %703 = vmatprep.subr.mxu0 0.0
    %v704 = vand.u32 %v189, 4294901760
    %v705 = vsub.f32 %v189, %v704
    %v706 = vand.u32 %v705, 4294901760
    %707 = vmatpush1.msra.mxu0 %v706
    %708 = vmatprep.subr.mxu0 0.0
    %v709 = vand.u32 %v190, 4294901760
    %v710 = vsub.f32 %v190, %v709
    %v711 = vand.u32 %v710, 4294901760
    %712 = vmatpush1.msra.mxu0 %v711
    %713 = vmatprep.subr.mxu0 0.0
    %v714 = vand.u32 %v191, 4294901760
    %v715 = vsub.f32 %v191, %v714
    %v716 = vand.u32 %v715, 4294901760
    %717 = vmatpush1.msra.mxu0 %v716
    %718 = vmatprep.subr.mxu0 0.0
    %v719 = vand.u32 %v192, 4294901760
    %v720 = vsub.f32 %v192, %v719
    %v721 = vand.u32 %v720, 4294901760
    %722 = vmatpush1.msra.mxu0 %v721
    %723 = vmatprep.subr.mxu0 0.0
    %v724 = vand.u32 %v193, 4294901760
    %v725 = vsub.f32 %v193, %v724
    %v726 = vand.u32 %v725, 4294901760
    %727 = vmatpush1.msra.mxu0 %v726
    %728 = vmatprep.subr.mxu0 0.0
    %v729 = vand.u32 %v194, 4294901760
    %v730 = vsub.f32 %v194, %v729
    %v731 = vand.u32 %v730, 4294901760
    %732 = vmatpush1.msra.mxu0 %v731
    %733 = vmatprep.subr.mxu0 0.0
    %v734 = vand.u32 %v195, 4294901760
    %v735 = vsub.f32 %v195, %v734
    %v736 = vand.u32 %v735, 4294901760
    %737 = vmatpush1.msra.mxu0 %v736
    %738 = vmatprep.subr.mxu0 0.0
    %v739 = vand.u32 %v196, 4294901760
    %v740 = vsub.f32 %v196, %v739
    %v741 = vand.u32 %v740, 4294901760
    %742 = vmatpush1.msra.mxu0 %v741
    %743 = vmatprep.subr.mxu0 0.0
    %744 = vmatpush1.msra.mxu0 0.0
    %745 = vmatprep.subr.mxu0 0.0
    %746 = vmatpush1.msra.mxu0 0.0
    %747 = vmatprep.subr.mxu0 0.0
    %748 = vmatpush1.msra.mxu0 0.0
    %749 = vmatprep.subr.mxu0 0.0
    %750 = vmatpush1.msra.mxu0 0.0
    %751 = vmatprep.subr.mxu0 0.0
    %752 = vmatpush1.msra.mxu0 0.0
    %753 = vmatprep.subr.mxu0 0.0
    %754 = vmatpush1.msra.mxu0 0.0
    %755 = vmatprep.subr.mxu0 0.0
    %756 = vmatpush1.msra.mxu0 0.0
    %757 = vmatprep.subr.mxu0 0.0
    %758 = vmatpush1.msra.mxu0 0.0
    %759 = vmatprep.subr.mxu0 0.0
    %760 = vmatpush1.msra.mxu0 0.0
    %761 = vmatprep.subr.mxu0 0.0
    %762 = vmatpush1.msra.mxu0 0.0
    %763 = vmatprep.subr.mxu0 0.0
    %764 = vmatpush1.msra.mxu0 0.0
    %765 = vmatprep.subr.mxu0 0.0
    %766 = vmatpush1.msra.mxu0 0.0
    %767 = vmatprep.subr.mxu0 0.0
    %768 = vmatpush1.msra.mxu0 0.0
    %769 = vmatprep.subr.mxu0 0.0
    %770 = vmatpush1.msra.mxu0 0.0
    %771 = vmatprep.subr.mxu0 0.0
    %772 = vmatpush1.msra.mxu0 0.0
    %773 = vmatprep.subr.mxu0 0.0
    %774 = vmatpush1.msra.mxu0 0.0
    %775 = vmatprep.mubr.f32.mxu0 0.0
    %v776 = vand.u32 %v179, 4294901760
    %777 = vmatmul.mubr.f32.gmra.mrb[0].mxu0 %v776
    %v778 = vpop.f32.mrb[0].mxu0
    %v779 = vadd.f32 %v652, %v778
    %v780 = vpop.f32.mrb[0].mxu0
    %781 = vmatprep.mubr.f32.mxu0 0.0
    %v782 = vand.u32 %v180, 4294901760
    %783 = vmatmul.mubr.f32.gmra.mrb[0].mxu0 %v782
    %v784 = vpop.f32.mrb[0].mxu0
    %v785 = vadd.f32 %v660, %v784
    %v786 = vpop.f32.mrb[0].mxu0
    %787 = vdwg.mxu0
    %788 = vmatprep.subr.mxu0 0.0
    %v789 = vand.u32 %v181, 4294901760
    %790 = vmatpush1.msra.mxu0 %v789
    %791 = vmatprep.subr.mxu0 0.0
    %v792 = vand.u32 %v182, 4294901760
    %793 = vmatpush1.msra.mxu0 %v792
    %794 = vmatprep.subr.mxu0 0.0
    %v795 = vand.u32 %v183, 4294901760
    %796 = vmatpush1.msra.mxu0 %v795
    %797 = vmatprep.subr.mxu0 0.0
    %v798 = vand.u32 %v184, 4294901760
    %799 = vmatpush1.msra.mxu0 %v798
    %800 = vmatprep.subr.mxu0 0.0
    %v801 = vand.u32 %v185, 4294901760
    %802 = vmatpush1.msra.mxu0 %v801
    %803 = vmatprep.subr.mxu0 0.0
    %v804 = vand.u32 %v186, 4294901760
    %805 = vmatpush1.msra.mxu0 %v804
    %806 = vmatprep.subr.mxu0 0.0
    %v807 = vand.u32 %v187, 4294901760
    %808 = vmatpush1.msra.mxu0 %v807
    %809 = vmatprep.subr.mxu0 0.0
    %v810 = vand.u32 %v188, 4294901760
    %811 = vmatpush1.msra.mxu0 %v810
    %812 = vmatprep.subr.mxu0 0.0
    %v813 = vand.u32 %v189, 4294901760
    %814 = vmatpush1.msra.mxu0 %v813
    %815 = vmatprep.subr.mxu0 0.0
    %v816 = vand.u32 %v190, 4294901760
    %817 = vmatpush1.msra.mxu0 %v816
    %818 = vmatprep.subr.mxu0 0.0
    %v819 = vand.u32 %v191, 4294901760
    %820 = vmatpush1.msra.mxu0 %v819
    %821 = vmatprep.subr.mxu0 0.0
    %v822 = vand.u32 %v192, 4294901760
    %823 = vmatpush1.msra.mxu0 %v822
    %824 = vmatprep.subr.mxu0 0.0
    %v825 = vand.u32 %v193, 4294901760
    %826 = vmatpush1.msra.mxu0 %v825
    %827 = vmatprep.subr.mxu0 0.0
    %v828 = vand.u32 %v194, 4294901760
    %829 = vmatpush1.msra.mxu0 %v828
    %830 = vmatprep.subr.mxu0 0.0
    %v831 = vand.u32 %v195, 4294901760
    %832 = vmatpush1.msra.mxu0 %v831
    %833 = vmatprep.subr.mxu0 0.0
    %v834 = vand.u32 %v196, 4294901760
    %835 = vmatpush1.msra.mxu0 %v834
    %836 = vmatprep.subr.mxu0 0.0
    %837 = vmatpush1.msra.mxu0 0.0
    %838 = vmatprep.subr.mxu0 0.0
    %839 = vmatpush1.msra.mxu0 0.0
    %840 = vmatprep.subr.mxu0 0.0
    %841 = vmatpush1.msra.mxu0 0.0
    %842 = vmatprep.subr.mxu0 0.0
    %843 = vmatpush1.msra.mxu0 0.0
    %844 = vmatprep.subr.mxu0 0.0
    %845 = vmatpush1.msra.mxu0 0.0
    %846 = vmatprep.subr.mxu0 0.0
    %847 = vmatpush1.msra.mxu0 0.0
    %848 = vmatprep.subr.mxu0 0.0
    %849 = vmatpush1.msra.mxu0 0.0
    %850 = vmatprep.subr.mxu0 0.0
    %851 = vmatpush1.msra.mxu0 0.0
    %852 = vmatprep.subr.mxu0 0.0
    %853 = vmatpush1.msra.mxu0 0.0
    %854 = vmatprep.subr.mxu0 0.0
    %855 = vmatpush1.msra.mxu0 0.0
    %856 = vmatprep.subr.mxu0 0.0
    %857 = vmatpush1.msra.mxu0 0.0
    %858 = vmatprep.subr.mxu0 0.0
    %859 = vmatpush1.msra.mxu0 0.0
    %860 = vmatprep.subr.mxu0 0.0
    %861 = vmatpush1.msra.mxu0 0.0
    %862 = vmatprep.subr.mxu0 0.0
    %863 = vmatpush1.msra.mxu0 0.0
    %864 = vmatprep.subr.mxu0 0.0
    %865 = vmatpush1.msra.mxu0 0.0
    %866 = vmatprep.subr.mxu0 0.0
    %867 = vmatpush1.msra.mxu0 0.0
    %868 = vmatprep.mubr.f32.mxu0 0.0
    %v869 = vand.u32 %v179, 4294901760
    %870 = vmatmul.mubr.f32.gmra.mrb[0].mxu0 %v869
    %v871 = vpop.f32.mrb[0].mxu0
    %v872 = vadd.f32 %v779, %v871
    %v873 = vpop.f32.mrb[0].mxu0
    %874 = vmatprep.mubr.f32.mxu0 0.0
    %v875 = vand.u32 %v180, 4294901760
    %876 = vmatmul.mubr.f32.gmra.mrb[0].mxu0 %v875
    %v877 = vpop.f32.mrb[0].mxu0
    %v878 = vadd.f32 %v785, %v877
    %v879 = vpop.f32.mrb[0].mxu0
    %880 = vdwg.mxu0
    %v881 = vld [vmem:[%s5] sm:$0x1]
    %v883 = vlaneseq
    %v884 = vshrl.u32 %v883, 7
    %v885 = vsub.s32 0, %v884
    %v886 = vrot.slane %v881, %v885
    %v888 = vmul.f32 %v872, %v886
    %v889 = vmul.f32 %v878, %v886
    %v890 = vld [vmem:[%s6] sm:$0x1]
    %v892 = vlaneseq
    %v893 = vshrl.u32 %v892, 7
    %v894 = vsub.s32 0, %v893
    %v895 = vrot.slane %v890, %v894
    %v897 = vadd.f32 %v888, %v895
    %v898 = vadd.f32 %v889, %v895
    %vm899 = vcmp.ge.f32.partialorder %v897, 0.0
    %vm900 = vcmp.ge.f32.partialorder %v898, 0.0
    %v901 = vld [vmem:[#allocation2] sm:$0x1]
    %v903 = vlaneseq
    %v904 = vshrl.u32 %v903, 7
    %v905 = vsub.s32 0, %v904
    %v906 = vrot.slane %v901, %v905
    %907 = vset.pattern.permute.xlu0 0
    %908 = vperm.xlu0 %907, %v906
    %v909 = vpop.permute.xlu0 %908
    %v911 = vmul.f32 %v909, %v897
    %v912 = vmul.f32 %v909, %v898
    %v913 = vsel %vm899, %v897, %v911
    %v914 = vsel %vm900, %v898, %v912
    %917 = vrot.lane.b32.xlu0 %v913, 64
    %v918 = vpop.permute.xlu0 %917
    %919 = vrot.lane.b32.xlu0 %v914, 64
    %v920 = vpop.permute.xlu0 %919
    %v923 = vsub.f32 %v913, %v918
    %v924 = vsub.f32 %v914, %v920
    %v925 = vadd.f32 %v913, %v918
    %v926 = vadd.f32 %v914, %v920
    %v929 = vrot.slane %v923, 1
    %v930 = vrot.slane %v924, 1
    %v931 = vsel %vm121, %v929, %v930
    %v934 = vsel %vm121, %v930, 0.0
    %v935 = vmul.f32 %v931, %v131
    %v936 = vmul.f32 %v934, %v136
    %v939 = vrot.slane %v925, 1
    %v940 = vrot.slane %v926, 1
    %v941 = vsel %vm121, %v939, %v940
    %v944 = vsel %vm121, %v940, 0.0
    %v945 = vmul.f32 %v941, %v131
    %v946 = vmul.f32 %v944, %v136
    %949 = vrot.lane.b32.xlu0 %v935, 64
    %v950 = vpop.permute.xlu0 %949
    %951 = vrot.lane.b32.xlu0 %v936, 64
    %v952 = vpop.permute.xlu0 %951
    %957 = vrot.lane.b32.xlu0 %v945, 64
    %v958 = vpop.permute.xlu0 %957
    %959 = vrot.lane.b32.xlu0 %v946, 64
    %v960 = vpop.permute.xlu0 %959
    %v963 = vsel %vm175, %v923, %v950
    %v964 = vsel %vm175, %v924, %v952
    %v965 = vsel %vm175, %v925, %v958
    %v966 = vsel %vm175, %v926, %v960
    %v967 = vld [vmem:[#allocation7] sm:$0xff]
    %v968 = vld [vmem:[#allocation7 + $0x8] sm:$0xff]
    %v969 = vld [vmem:[#allocation7 + $0x10] sm:$0xff]
    %v970 = vld [vmem:[#allocation7 + $0x18] sm:$0xff]
    %v971 = vld [vmem:[#allocation7 + $0x20] sm:$0xff]
    %v972 = vld [vmem:[#allocation7 + $0x28] sm:$0xff]
    %v973 = vld [vmem:[#allocation7 + $0x30] sm:$0xff]
    %v974 = vld [vmem:[#allocation7 + $0x38] sm:$0xff]
    %v975 = vld [vmem:[#allocation7 + $0x40] sm:$0xff]
    %v976 = vld [vmem:[#allocation7 + $0x48] sm:$0xff]
    %v977 = vld [vmem:[#allocation7 + $0x50] sm:$0xff]
    %v978 = vld [vmem:[#allocation7 + $0x58] sm:$0xff]
    %v979 = vld [vmem:[#allocation7 + $0x60] sm:$0xff]
    %v980 = vld [vmem:[#allocation7 + $0x68] sm:$0xff]
    %v981 = vld [vmem:[#allocation7 + $0x70] sm:$0xff]
    %v982 = vld [vmem:[#allocation7 + $0x78] sm:$0xff]
    %v983 = vld [vmem:[#allocation7 + $0x80] sm:$0xff]
    %v984 = vld [vmem:[#allocation7 + $0x88] sm:$0xff]
    %v985 = vld [vmem:[#allocation7 + $0x90] sm:$0xff]
    %v986 = vld [vmem:[#allocation7 + $0x98] sm:$0xff]
    %v987 = vld [vmem:[#allocation7 + $0xa0] sm:$0xff]
    %v988 = vld [vmem:[#allocation7 + $0xa8] sm:$0xff]
    %v989 = vld [vmem:[#allocation7 + $0xb0] sm:$0xff]
    %v990 = vld [vmem:[#allocation7 + $0xb8] sm:$0xff]
    %v991 = vld [vmem:[#allocation7 + $0xc0] sm:$0xff]
    %v992 = vld [vmem:[#allocation7 + $0xc8] sm:$0xff]
    %v993 = vld [vmem:[#allocation7 + $0xd0] sm:$0xff]
    %v994 = vld [vmem:[#allocation7 + $0xd8] sm:$0xff]
    %v995 = vld [vmem:[#allocation7 + $0xe0] sm:$0xff]
    %v996 = vld [vmem:[#allocation7 + $0xe8] sm:$0xff]
    %v997 = vld [vmem:[#allocation7 + $0xf0] sm:$0xff]
    %v998 = vld [vmem:[#allocation7 + $0xf8] sm:$0xff]
    %999 = vmatprep.subr.mxu0 0.0
    %v1000 = vand.u32 %v967, 4294901760
    %1001 = vmatpush1.msra.mxu0 %v1000
    %1002 = vmatprep.subr.mxu0 0.0
    %v1003 = vand.u32 %v968, 4294901760
    %1004 = vmatpush1.msra.mxu0 %v1003
    %1005 = vmatprep.subr.mxu0 0.0
    %v1006 = vand.u32 %v969, 4294901760
    %1007 = vmatpush1.msra.mxu0 %v1006
    %1008 = vmatprep.subr.mxu0 0.0
    %v1009 = vand.u32 %v970, 4294901760
    %1010 = vmatpush1.msra.mxu0 %v1009
    %1011 = vmatprep.subr.mxu0 0.0
    %v1012 = vand.u32 %v971, 4294901760
    %1013 = vmatpush1.msra.mxu0 %v1012
    %1014 = vmatprep.subr.mxu0 0.0
    %v1015 = vand.u32 %v972, 4294901760
    %1016 = vmatpush1.msra.mxu0 %v1015
    %1017 = vmatprep.subr.mxu0 0.0
    %v1018 = vand.u32 %v973, 4294901760
    %1019 = vmatpush1.msra.mxu0 %v1018
    %1020 = vmatprep.subr.mxu0 0.0
    %v1021 = vand.u32 %v974, 4294901760
    %1022 = vmatpush1.msra.mxu0 %v1021
    %1023 = vmatprep.subr.mxu0 0.0
    %v1024 = vand.u32 %v975, 4294901760
    %1025 = vmatpush1.msra.mxu0 %v1024
    %1026 = vmatprep.subr.mxu0 0.0
    %v1027 = vand.u32 %v976, 4294901760
    %1028 = vmatpush1.msra.mxu0 %v1027
    %1029 = vmatprep.subr.mxu0 0.0
    %v1030 = vand.u32 %v977, 4294901760
    %1031 = vmatpush1.msra.mxu0 %v1030
    %1032 = vmatprep.subr.mxu0 0.0
    %v1033 = vand.u32 %v978, 4294901760
    %1034 = vmatpush1.msra.mxu0 %v1033
    %1035 = vmatprep.subr.mxu0 0.0
    %v1036 = vand.u32 %v979, 4294901760
    %1037 = vmatpush1.msra.mxu0 %v1036
    %1038 = vmatprep.subr.mxu0 0.0
    %v1039 = vand.u32 %v980, 4294901760
    %1040 = vmatpush1.msra.mxu0 %v1039
    %1041 = vmatprep.subr.mxu0 0.0
    %v1042 = vand.u32 %v981, 4294901760
    %1043 = vmatpush1.msra.mxu0 %v1042
    %1044 = vmatprep.subr.mxu0 0.0
    %v1045 = vand.u32 %v982, 4294901760
    %1046 = vmatpush1.msra.mxu0 %v1045
    %1047 = vmatprep.subr.mxu0 0.0
    %v1048 = vand.u32 %v983, 4294901760
    %1049 = vmatpush1.msra.mxu0 %v1048
    %1050 = vmatprep.subr.mxu0 0.0
    %v1051 = vand.u32 %v984, 4294901760
    %1052 = vmatpush1.msra.mxu0 %v1051
    %1053 = vmatprep.subr.mxu0 0.0
    %v1054 = vand.u32 %v985, 4294901760
    %1055 = vmatpush1.msra.mxu0 %v1054
    %1056 = vmatprep.subr.mxu0 0.0
    %v1057 = vand.u32 %v986, 4294901760
    %1058 = vmatpush1.msra.mxu0 %v1057
    %1059 = vmatprep.subr.mxu0 0.0
    %v1060 = vand.u32 %v987, 4294901760
    %1061 = vmatpush1.msra.mxu0 %v1060
    %1062 = vmatprep.subr.mxu0 0.0
    %v1063 = vand.u32 %v988, 4294901760
    %1064 = vmatpush1.msra.mxu0 %v1063
    %1065 = vmatprep.subr.mxu0 0.0
    %v1066 = vand.u32 %v989, 4294901760
    %1067 = vmatpush1.msra.mxu0 %v1066
    %1068 = vmatprep.subr.mxu0 0.0
    %v1069 = vand.u32 %v990, 4294901760
    %1070 = vmatpush1.msra.mxu0 %v1069
    %1071 = vmatprep.subr.mxu0 0.0
    %v1072 = vand.u32 %v991, 4294901760
    %1073 = vmatpush1.msra.mxu0 %v1072
    %1074 = vmatprep.subr.mxu0 0.0
    %v1075 = vand.u32 %v992, 4294901760
    %1076 = vmatpush1.msra.mxu0 %v1075
    %1077 = vmatprep.subr.mxu0 0.0
    %v1078 = vand.u32 %v993, 4294901760
    %1079 = vmatpush1.msra.mxu0 %v1078
    %1080 = vmatprep.subr.mxu0 0.0
    %v1081 = vand.u32 %v994, 4294901760
    %1082 = vmatpush1.msra.mxu0 %v1081
    %1083 = vmatprep.subr.mxu0 0.0
    %v1084 = vand.u32 %v995, 4294901760
    %1085 = vmatpush1.msra.mxu0 %v1084
    %1086 = vmatprep.subr.mxu0 0.0
    %v1087 = vand.u32 %v996, 4294901760
    %1088 = vmatpush1.msra.mxu0 %v1087
    %1089 = vmatprep.subr.mxu0 0.0
    %v1090 = vand.u32 %v997, 4294901760
    %1091 = vmatpush1.msra.mxu0 %v1090
    %1092 = vmatprep.subr.mxu0 0.0
    %v1093 = vand.u32 %v998, 4294901760
    %1094 = vmatpush1.msra.mxu0 %v1093
    %v1095 = vand.u32 %v965, 4294901760
    %v1096 = vsub.f32 %v965, %v1095
    %v1097 = vand.u32 %v1096, 4294901760
    %v1098 = vsub.f32 %v1096, %v1097
    %v1099 = vand.u32 %v1098, 4294901760
    %1100 = vmatprep.mubr.f32.mxu0 %v1099
    %v1101 = vand.u32 %v963, 4294901760
    %v1102 = vsub.f32 %v963, %v1101
    %v1103 = vand.u32 %v1102, 4294901760
    %v1104 = vsub.f32 %v1102, %v1103
    %v1105 = vand.u32 %v1104, 4294901760
    %1106 = vmatmul.mubr.f32.gmra.mrb[0].mxu0 %v1105
    %v1107 = vpop.f32.mrb[0].mxu0
    %v1108 = vadd.f32 0.0, %v1107
    %v1109 = vpop.f32.mrb[0].mxu0
    %v1110 = vand.u32 %v966, 4294901760
    %v1111 = vsub.f32 %v966, %v1110
    %v1112 = vand.u32 %v1111, 4294901760
    %v1113 = vsub.f32 %v1111, %v1112
    %v1114 = vand.u32 %v1113, 4294901760
    %1115 = vmatprep.mubr.f32.mxu0 %v1114
    %v1116 = vand.u32 %v964, 4294901760
    %v1117 = vsub.f32 %v964, %v1116
    %v1118 = vand.u32 %v1117, 4294901760
    %v1119 = vsub.f32 %v1117, %v1118
    %v1120 = vand.u32 %v1119, 4294901760
    %1121 = vmatmul.mubr.f32.gmra.mrb[0].mxu0 %v1120
    %v1122 = vpop.f32.mrb[0].mxu0
    %v1123 = vadd.f32 0.0, %v1122
    %v1124 = vpop.f32.mrb[0].mxu0
    %1125 = vdwg.mxu0
    %1126 = vmatprep.subr.mxu0 0.0
    %v1127 = vand.u32 %v967, 4294901760
    %v1128 = vsub.f32 %v967, %v1127
    %v1129 = vand.u32 %v1128, 4294901760
    %v1130 = vsub.f32 %v1128, %v1129
    %v1131 = vand.u32 %v1130, 4294901760
    %1132 = vmatpush1.msra.mxu0 %v1131
    %1133 = vmatprep.subr.mxu0 0.0
    %v1134 = vand.u32 %v968, 4294901760
    %v1135 = vsub.f32 %v968, %v1134
    %v1136 = vand.u32 %v1135, 4294901760
    %v1137 = vsub.f32 %v1135, %v1136
    %v1138 = vand.u32 %v1137, 4294901760
    %1139 = vmatpush1.msra.mxu0 %v1138
    %1140 = vmatprep.subr.mxu0 0.0
    %v1141 = vand.u32 %v969, 4294901760
    %v1142 = vsub.f32 %v969, %v1141
    %v1143 = vand.u32 %v1142, 4294901760
    %v1144 = vsub.f32 %v1142, %v1143
    %v1145 = vand.u32 %v1144, 4294901760
    %1146 = vmatpush1.msra.mxu0 %v1145
    %1147 = vmatprep.subr.mxu0 0.0
    %v1148 = vand.u32 %v970, 4294901760
    %v1149 = vsub.f32 %v970, %v1148
    %v1150 = vand.u32 %v1149, 4294901760
    %v1151 = vsub.f32 %v1149, %v1150
    %v1152 = vand.u32 %v1151, 4294901760
    %1153 = vmatpush1.msra.mxu0 %v1152
    %1154 = vmatprep.subr.mxu0 0.0
    %v1155 = vand.u32 %v971, 4294901760
    %v1156 = vsub.f32 %v971, %v1155
    %v1157 = vand.u32 %v1156, 4294901760
    %v1158 = vsub.f32 %v1156, %v1157
    %v1159 = vand.u32 %v1158, 4294901760
    %1160 = vmatpush1.msra.mxu0 %v1159
    %1161 = vmatprep.subr.mxu0 0.0
    %v1162 = vand.u32 %v972, 4294901760
    %v1163 = vsub.f32 %v972, %v1162
    %v1164 = vand.u32 %v1163, 4294901760
    %v1165 = vsub.f32 %v1163, %v1164
    %v1166 = vand.u32 %v1165, 4294901760
    %1167 = vmatpush1.msra.mxu0 %v1166
    %1168 = vmatprep.subr.mxu0 0.0
    %v1169 = vand.u32 %v973, 4294901760
    %v1170 = vsub.f32 %v973, %v1169
    %v1171 = vand.u32 %v1170, 4294901760
    %v1172 = vsub.f32 %v1170, %v1171
    %v1173 = vand.u32 %v1172, 4294901760
    %1174 = vmatpush1.msra.mxu0 %v1173
    %1175 = vmatprep.subr.mxu0 0.0
    %v1176 = vand.u32 %v974, 4294901760
    %v1177 = vsub.f32 %v974, %v1176
    %v1178 = vand.u32 %v1177, 4294901760
    %v1179 = vsub.f32 %v1177, %v1178
    %v1180 = vand.u32 %v1179, 4294901760
    %1181 = vmatpush1.msra.mxu0 %v1180
    %1182 = vmatprep.subr.mxu0 0.0
    %v1183 = vand.u32 %v975, 4294901760
    %v1184 = vsub.f32 %v975, %v1183
    %v1185 = vand.u32 %v1184, 4294901760
    %v1186 = vsub.f32 %v1184, %v1185
    %v1187 = vand.u32 %v1186, 4294901760
    %1188 = vmatpush1.msra.mxu0 %v1187
    %1189 = vmatprep.subr.mxu0 0.0
    %v1190 = vand.u32 %v976, 4294901760
    %v1191 = vsub.f32 %v976, %v1190
    %v1192 = vand.u32 %v1191, 4294901760
    %v1193 = vsub.f32 %v1191, %v1192
    %v1194 = vand.u32 %v1193, 4294901760
    %1195 = vmatpush1.msra.mxu0 %v1194
    %1196 = vmatprep.subr.mxu0 0.0
    %v1197 = vand.u32 %v977, 4294901760
    %v1198 = vsub.f32 %v977, %v1197
    %v1199 = vand.u32 %v1198, 4294901760
    %v1200 = vsub.f32 %v1198, %v1199
    %v1201 = vand.u32 %v1200, 4294901760
    %1202 = vmatpush1.msra.mxu0 %v1201
    %1203 = vmatprep.subr.mxu0 0.0
    %v1204 = vand.u32 %v978, 4294901760
    %v1205 = vsub.f32 %v978, %v1204
    %v1206 = vand.u32 %v1205, 4294901760
    %v1207 = vsub.f32 %v1205, %v1206
    %v1208 = vand.u32 %v1207, 4294901760
    %1209 = vmatpush1.msra.mxu0 %v1208
    %1210 = vmatprep.subr.mxu0 0.0
    %v1211 = vand.u32 %v979, 4294901760
    %v1212 = vsub.f32 %v979, %v1211
    %v1213 = vand.u32 %v1212, 4294901760
    %v1214 = vsub.f32 %v1212, %v1213
    %v1215 = vand.u32 %v1214, 4294901760
    %1216 = vmatpush1.msra.mxu0 %v1215
    %1217 = vmatprep.subr.mxu0 0.0
    %v1218 = vand.u32 %v980, 4294901760
    %v1219 = vsub.f32 %v980, %v1218
    %v1220 = vand.u32 %v1219, 4294901760
    %v1221 = vsub.f32 %v1219, %v1220
    %v1222 = vand.u32 %v1221, 4294901760
    %1223 = vmatpush1.msra.mxu0 %v1222
    %1224 = vmatprep.subr.mxu0 0.0
    %v1225 = vand.u32 %v981, 4294901760
    %v1226 = vsub.f32 %v981, %v1225
    %v1227 = vand.u32 %v1226, 4294901760
    %v1228 = vsub.f32 %v1226, %v1227
    %v1229 = vand.u32 %v1228, 4294901760
    %1230 = vmatpush1.msra.mxu0 %v1229
    %1231 = vmatprep.subr.mxu0 0.0
    %v1232 = vand.u32 %v982, 4294901760
    %v1233 = vsub.f32 %v982, %v1232
    %v1234 = vand.u32 %v1233, 4294901760
    %v1235 = vsub.f32 %v1233, %v1234
    %v1236 = vand.u32 %v1235, 4294901760
    %1237 = vmatpush1.msra.mxu0 %v1236
    %1238 = vmatprep.subr.mxu0 0.0
    %v1239 = vand.u32 %v983, 4294901760
    %v1240 = vsub.f32 %v983, %v1239
    %v1241 = vand.u32 %v1240, 4294901760
    %v1242 = vsub.f32 %v1240, %v1241
    %v1243 = vand.u32 %v1242, 4294901760
    %1244 = vmatpush1.msra.mxu0 %v1243
    %1245 = vmatprep.subr.mxu0 0.0
    %v1246 = vand.u32 %v984, 4294901760
    %v1247 = vsub.f32 %v984, %v1246
    %v1248 = vand.u32 %v1247, 4294901760
    %v1249 = vsub.f32 %v1247, %v1248
    %v1250 = vand.u32 %v1249, 4294901760
    %1251 = vmatpush1.msra.mxu0 %v1250
    %1252 = vmatprep.subr.mxu0 0.0
    %v1253 = vand.u32 %v985, 4294901760
    %v1254 = vsub.f32 %v985, %v1253
    %v1255 = vand.u32 %v1254, 4294901760
    %v1256 = vsub.f32 %v1254, %v1255
    %v1257 = vand.u32 %v1256, 4294901760
    %1258 = vmatpush1.msra.mxu0 %v1257
    %1259 = vmatprep.subr.mxu0 0.0
    %v1260 = vand.u32 %v986, 4294901760
    %v1261 = vsub.f32 %v986, %v1260
    %v1262 = vand.u32 %v1261, 4294901760
    %v1263 = vsub.f32 %v1261, %v1262
    %v1264 = vand.u32 %v1263, 4294901760
    %1265 = vmatpush1.msra.mxu0 %v1264
    %1266 = vmatprep.subr.mxu0 0.0
    %v1267 = vand.u32 %v987, 4294901760
    %v1268 = vsub.f32 %v987, %v1267
    %v1269 = vand.u32 %v1268, 4294901760
    %v1270 = vsub.f32 %v1268, %v1269
    %v1271 = vand.u32 %v1270, 4294901760
    %1272 = vmatpush1.msra.mxu0 %v1271
    %1273 = vmatprep.subr.mxu0 0.0
    %v1274 = vand.u32 %v988, 4294901760
    %v1275 = vsub.f32 %v988, %v1274
    %v1276 = vand.u32 %v1275, 4294901760
    %v1277 = vsub.f32 %v1275, %v1276
    %v1278 = vand.u32 %v1277, 4294901760
    %1279 = vmatpush1.msra.mxu0 %v1278
    %1280 = vmatprep.subr.mxu0 0.0
    %v1281 = vand.u32 %v989, 4294901760
    %v1282 = vsub.f32 %v989, %v1281
    %v1283 = vand.u32 %v1282, 4294901760
    %v1284 = vsub.f32 %v1282, %v1283
    %v1285 = vand.u32 %v1284, 4294901760
    %1286 = vmatpush1.msra.mxu0 %v1285
    %1287 = vmatprep.subr.mxu0 0.0
    %v1288 = vand.u32 %v990, 4294901760
    %v1289 = vsub.f32 %v990, %v1288
    %v1290 = vand.u32 %v1289, 4294901760
    %v1291 = vsub.f32 %v1289, %v1290
    %v1292 = vand.u32 %v1291, 4294901760
    %1293 = vmatpush1.msra.mxu0 %v1292
    %1294 = vmatprep.subr.mxu0 0.0
    %v1295 = vand.u32 %v991, 4294901760
    %v1296 = vsub.f32 %v991, %v1295
    %v1297 = vand.u32 %v1296, 4294901760
    %v1298 = vsub.f32 %v1296, %v1297
    %v1299 = vand.u32 %v1298, 4294901760
    %1300 = vmatpush1.msra.mxu0 %v1299
    %1301 = vmatprep.subr.mxu0 0.0
    %v1302 = vand.u32 %v992, 4294901760
    %v1303 = vsub.f32 %v992, %v1302
    %v1304 = vand.u32 %v1303, 4294901760
    %v1305 = vsub.f32 %v1303, %v1304
    %v1306 = vand.u32 %v1305, 4294901760
    %1307 = vmatpush1.msra.mxu0 %v1306
    %1308 = vmatprep.subr.mxu0 0.0
    %v1309 = vand.u32 %v993, 4294901760
    %v1310 = vsub.f32 %v993, %v1309
    %v1311 = vand.u32 %v1310, 4294901760
    %v1312 = vsub.f32 %v1310, %v1311
    %v1313 = vand.u32 %v1312, 4294901760
    %1314 = vmatpush1.msra.mxu0 %v1313
    %1315 = vmatprep.subr.mxu0 0.0
    %v1316 = vand.u32 %v994, 4294901760
    %v1317 = vsub.f32 %v994, %v1316
    %v1318 = vand.u32 %v1317, 4294901760
    %v1319 = vsub.f32 %v1317, %v1318
    %v1320 = vand.u32 %v1319, 4294901760
    %1321 = vmatpush1.msra.mxu0 %v1320
    %1322 = vmatprep.subr.mxu0 0.0
    %v1323 = vand.u32 %v995, 4294901760
    %v1324 = vsub.f32 %v995, %v1323
    %v1325 = vand.u32 %v1324, 4294901760
    %v1326 = vsub.f32 %v1324, %v1325
    %v1327 = vand.u32 %v1326, 4294901760
    %1328 = vmatpush1.msra.mxu0 %v1327
    %1329 = vmatprep.subr.mxu0 0.0
    %v1330 = vand.u32 %v996, 4294901760
    %v1331 = vsub.f32 %v996, %v1330
    %v1332 = vand.u32 %v1331, 4294901760
    %v1333 = vsub.f32 %v1331, %v1332
    %v1334 = vand.u32 %v1333, 4294901760
    %1335 = vmatpush1.msra.mxu0 %v1334
    %1336 = vmatprep.subr.mxu0 0.0
    %v1337 = vand.u32 %v997, 4294901760
    %v1338 = vsub.f32 %v997, %v1337
    %v1339 = vand.u32 %v1338, 4294901760
    %v1340 = vsub.f32 %v1338, %v1339
    %v1341 = vand.u32 %v1340, 4294901760
    %1342 = vmatpush1.msra.mxu0 %v1341
    %1343 = vmatprep.subr.mxu0 0.0
    %v1344 = vand.u32 %v998, 4294901760
    %v1345 = vsub.f32 %v998, %v1344
    %v1346 = vand.u32 %v1345, 4294901760
    %v1347 = vsub.f32 %v1345, %v1346
    %v1348 = vand.u32 %v1347, 4294901760
    %1349 = vmatpush1.msra.mxu0 %v1348
    %v1350 = vand.u32 %v965, 4294901760
    %1351 = vmatprep.mubr.f32.mxu0 %v1350
    %v1352 = vand.u32 %v963, 4294901760
    %1353 = vmatmul.mubr.f32.gmra.mrb[0].mxu0 %v1352
    %v1354 = vpop.f32.mrb[0].mxu0
    %v1355 = vadd.f32 %v1108, %v1354
    %v1356 = vpop.f32.mrb[0].mxu0
    %v1357 = vand.u32 %v966, 4294901760
    %1358 = vmatprep.mubr.f32.mxu0 %v1357
    %v1359 = vand.u32 %v964, 4294901760
    %1360 = vmatmul.mubr.f32.gmra.mrb[0].mxu0 %v1359
    %v1361 = vpop.f32.mrb[0].mxu0
    %v1362 = vadd.f32 %v1123, %v1361
    %v1363 = vpop.f32.mrb[0].mxu0
    %1364 = vdwg.mxu0
    %1365 = vmatprep.subr.mxu0 0.0
    %v1366 = vand.u32 %v967, 4294901760
    %v1367 = vsub.f32 %v967, %v1366
    %1368 = vmatpush1.msra.mxu0 %v1367
    %1369 = vmatprep.subr.mxu0 0.0
    %v1370 = vand.u32 %v968, 4294901760
    %v1371 = vsub.f32 %v968, %v1370
    %1372 = vmatpush1.msra.mxu0 %v1371
    %1373 = vmatprep.subr.mxu0 0.0
    %v1374 = vand.u32 %v969, 4294901760
    %v1375 = vsub.f32 %v969, %v1374
    %1376 = vmatpush1.msra.mxu0 %v1375
    %1377 = vmatprep.subr.mxu0 0.0
    %v1378 = vand.u32 %v970, 4294901760
    %v1379 = vsub.f32 %v970, %v1378
    %1380 = vmatpush1.msra.mxu0 %v1379
    %1381 = vmatprep.subr.mxu0 0.0
    %v1382 = vand.u32 %v971, 4294901760
    %v1383 = vsub.f32 %v971, %v1382
    %1384 = vmatpush1.msra.mxu0 %v1383
    %1385 = vmatprep.subr.mxu0 0.0
    %v1386 = vand.u32 %v972, 4294901760
    %v1387 = vsub.f32 %v972, %v1386
    %1388 = vmatpush1.msra.mxu0 %v1387
    %1389 = vmatprep.subr.mxu0 0.0
    %v1390 = vand.u32 %v973, 4294901760
    %v1391 = vsub.f32 %v973, %v1390
    %1392 = vmatpush1.msra.mxu0 %v1391
    %1393 = vmatprep.subr.mxu0 0.0
    %v1394 = vand.u32 %v974, 4294901760
    %v1395 = vsub.f32 %v974, %v1394
    %1396 = vmatpush1.msra.mxu0 %v1395
    %1397 = vmatprep.subr.mxu0 0.0
    %v1398 = vand.u32 %v975, 4294901760
    %v1399 = vsub.f32 %v975, %v1398
    %1400 = vmatpush1.msra.mxu0 %v1399
    %1401 = vmatprep.subr.mxu0 0.0
    %v1402 = vand.u32 %v976, 4294901760
    %v1403 = vsub.f32 %v976, %v1402
    %1404 = vmatpush1.msra.mxu0 %v1403
    %1405 = vmatprep.subr.mxu0 0.0
    %v1406 = vand.u32 %v977, 4294901760
    %v1407 = vsub.f32 %v977, %v1406
    %1408 = vmatpush1.msra.mxu0 %v1407
    %1409 = vmatprep.subr.mxu0 0.0
    %v1410 = vand.u32 %v978, 4294901760
    %v1411 = vsub.f32 %v978, %v1410
    %1412 = vmatpush1.msra.mxu0 %v1411
    %1413 = vmatprep.subr.mxu0 0.0
    %v1414 = vand.u32 %v979, 4294901760
    %v1415 = vsub.f32 %v979, %v1414
    %1416 = vmatpush1.msra.mxu0 %v1415
    %1417 = vmatprep.subr.mxu0 0.0
    %v1418 = vand.u32 %v980, 4294901760
    %v1419 = vsub.f32 %v980, %v1418
    %1420 = vmatpush1.msra.mxu0 %v1419
    %1421 = vmatprep.subr.mxu0 0.0
    %v1422 = vand.u32 %v981, 4294901760
    %v1423 = vsub.f32 %v981, %v1422
    %1424 = vmatpush1.msra.mxu0 %v1423
    %1425 = vmatprep.subr.mxu0 0.0
    %v1426 = vand.u32 %v982, 4294901760
    %v1427 = vsub.f32 %v982, %v1426
    %1428 = vmatpush1.msra.mxu0 %v1427
    %1429 = vmatprep.subr.mxu0 0.0
    %v1430 = vand.u32 %v983, 4294901760
    %v1431 = vsub.f32 %v983, %v1430
    %1432 = vmatpush1.msra.mxu0 %v1431
    %1433 = vmatprep.subr.mxu0 0.0
    %v1434 = vand.u32 %v984, 4294901760
    %v1435 = vsub.f32 %v984, %v1434
    %1436 = vmatpush1.msra.mxu0 %v1435
    %1437 = vmatprep.subr.mxu0 0.0
    %v1438 = vand.u32 %v985, 4294901760
    %v1439 = vsub.f32 %v985, %v1438
    %1440 = vmatpush1.msra.mxu0 %v1439
    %1441 = vmatprep.subr.mxu0 0.0
    %v1442 = vand.u32 %v986, 4294901760
    %v1443 = vsub.f32 %v986, %v1442
    %1444 = vmatpush1.msra.mxu0 %v1443
    %1445 = vmatprep.subr.mxu0 0.0
    %v1446 = vand.u32 %v987, 4294901760
    %v1447 = vsub.f32 %v987, %v1446
    %1448 = vmatpush1.msra.mxu0 %v1447
    %1449 = vmatprep.subr.mxu0 0.0
    %v1450 = vand.u32 %v988, 4294901760
    %v1451 = vsub.f32 %v988, %v1450
    %1452 = vmatpush1.msra.mxu0 %v1451
    %1453 = vmatprep.subr.mxu0 0.0
    %v1454 = vand.u32 %v989, 4294901760
    %v1455 = vsub.f32 %v989, %v1454
    %1456 = vmatpush1.msra.mxu0 %v1455
    %1457 = vmatprep.subr.mxu0 0.0
    %v1458 = vand.u32 %v990, 4294901760
    %v1459 = vsub.f32 %v990, %v1458
    %1460 = vmatpush1.msra.mxu0 %v1459
    %1461 = vmatprep.subr.mxu0 0.0
    %v1462 = vand.u32 %v991, 4294901760
    %v1463 = vsub.f32 %v991, %v1462
    %1464 = vmatpush1.msra.mxu0 %v1463
    %1465 = vmatprep.subr.mxu0 0.0
    %v1466 = vand.u32 %v992, 4294901760
    %v1467 = vsub.f32 %v992, %v1466
    %1468 = vmatpush1.msra.mxu0 %v1467
    %1469 = vmatprep.subr.mxu0 0.0
    %v1470 = vand.u32 %v993, 4294901760
    %v1471 = vsub.f32 %v993, %v1470
    %1472 = vmatpush1.msra.mxu0 %v1471
    %1473 = vmatprep.subr.mxu0 0.0
    %v1474 = vand.u32 %v994, 4294901760
    %v1475 = vsub.f32 %v994, %v1474
    %1476 = vmatpush1.msra.mxu0 %v1475
    %1477 = vmatprep.subr.mxu0 0.0
    %v1478 = vand.u32 %v995, 4294901760
    %v1479 = vsub.f32 %v995, %v1478
    %1480 = vmatpush1.msra.mxu0 %v1479
    %1481 = vmatprep.subr.mxu0 0.0
    %v1482 = vand.u32 %v996, 4294901760
    %v1483 = vsub.f32 %v996, %v1482
    %1484 = vmatpush1.msra.mxu0 %v1483
    %1485 = vmatprep.subr.mxu0 0.0
    %v1486 = vand.u32 %v997, 4294901760
    %v1487 = vsub.f32 %v997, %v1486
    %1488 = vmatpush1.msra.mxu0 %v1487
    %1489 = vmatprep.subr.mxu0 0.0
    %v1490 = vand.u32 %v998, 4294901760
    %v1491 = vsub.f32 %v998, %v1490
    %1492 = vmatpush1.msra.mxu0 %v1491
    %v1493 = vand.u32 %v965, 4294901760
    %v1494 = vsub.f32 %v965, %v1493
    %1495 = vmatprep.mubr.f32.mxu0 %v1494
    %v1496 = vand.u32 %v963, 4294901760
    %v1497 = vsub.f32 %v963, %v1496
    %1498 = vmatmul.mubr.f32.gmra.mrb[0].mxu0 %v1497
    %v1499 = vpop.f32.mrb[0].mxu0
    %v1500 = vadd.f32 %v1355, %v1499
    %v1501 = vpop.f32.mrb[0].mxu0
    %v1502 = vand.u32 %v966, 4294901760
    %v1503 = vsub.f32 %v966, %v1502
    %1504 = vmatprep.mubr.f32.mxu0 %v1503
    %v1505 = vand.u32 %v964, 4294901760
    %v1506 = vsub.f32 %v964, %v1505
    %1507 = vmatmul.mubr.f32.gmra.mrb[0].mxu0 %v1506
    %v1508 = vpop.f32.mrb[0].mxu0
    %v1509 = vadd.f32 %v1362, %v1508
    %v1510 = vpop.f32.mrb[0].mxu0
    %1511 = vdwg.mxu0
    %1512 = vmatprep.subr.mxu0 0.0
    %v1513 = vand.u32 %v967, 4294901760
    %1514 = vmatpush1.msra.mxu0 %v1513
    %1515 = vmatprep.subr.mxu0 0.0
    %v1516 = vand.u32 %v968, 4294901760
    %1517 = vmatpush1.msra.mxu0 %v1516
    %1518 = vmatprep.subr.mxu0 0.0
    %v1519 = vand.u32 %v969, 4294901760
    %1520 = vmatpush1.msra.mxu0 %v1519
    %1521 = vmatprep.subr.mxu0 0.0
    %v1522 = vand.u32 %v970, 4294901760
    %1523 = vmatpush1.msra.mxu0 %v1522
    %1524 = vmatprep.subr.mxu0 0.0
    %v1525 = vand.u32 %v971, 4294901760
    %1526 = vmatpush1.msra.mxu0 %v1525
    %1527 = vmatprep.subr.mxu0 0.0
    %v1528 = vand.u32 %v972, 4294901760
    %1529 = vmatpush1.msra.mxu0 %v1528
    %1530 = vmatprep.subr.mxu0 0.0
    %v1531 = vand.u32 %v973, 4294901760
    %1532 = vmatpush1.msra.mxu0 %v1531
    %1533 = vmatprep.subr.mxu0 0.0
    %v1534 = vand.u32 %v974, 4294901760
    %1535 = vmatpush1.msra.mxu0 %v1534
    %1536 = vmatprep.subr.mxu0 0.0
    %v1537 = vand.u32 %v975, 4294901760
    %1538 = vmatpush1.msra.mxu0 %v1537
    %1539 = vmatprep.subr.mxu0 0.0
    %v1540 = vand.u32 %v976, 4294901760
    %1541 = vmatpush1.msra.mxu0 %v1540
    %1542 = vmatprep.subr.mxu0 0.0
    %v1543 = vand.u32 %v977, 4294901760
    %1544 = vmatpush1.msra.mxu0 %v1543
    %1545 = vmatprep.subr.mxu0 0.0
    %v1546 = vand.u32 %v978, 4294901760
    %1547 = vmatpush1.msra.mxu0 %v1546
    %1548 = vmatprep.subr.mxu0 0.0
    %v1549 = vand.u32 %v979, 4294901760
    %1550 = vmatpush1.msra.mxu0 %v1549
    %1551 = vmatprep.subr.mxu0 0.0
    %v1552 = vand.u32 %v980, 4294901760
    %1553 = vmatpush1.msra.mxu0 %v1552
    %1554 = vmatprep.subr.mxu0 0.0
    %v1555 = vand.u32 %v981, 4294901760
    %1556 = vmatpush1.msra.mxu0 %v1555
    %1557 = vmatprep.subr.mxu0 0.0
    %v1558 = vand.u32 %v982, 4294901760
    %1559 = vmatpush1.msra.mxu0 %v1558
    %1560 = vmatprep.subr.mxu0 0.0
    %v1561 = vand.u32 %v983, 4294901760
    %1562 = vmatpush1.msra.mxu0 %v1561
    %1563 = vmatprep.subr.mxu0 0.0
    %v1564 = vand.u32 %v984, 4294901760
    %1565 = vmatpush1.msra.mxu0 %v1564
    %1566 = vmatprep.subr.mxu0 0.0
    %v1567 = vand.u32 %v985, 4294901760
    %1568 = vmatpush1.msra.mxu0 %v1567
    %1569 = vmatprep.subr.mxu0 0.0
    %v1570 = vand.u32 %v986, 4294901760
    %1571 = vmatpush1.msra.mxu0 %v1570
    %1572 = vmatprep.subr.mxu0 0.0
    %v1573 = vand.u32 %v987, 4294901760
    %1574 = vmatpush1.msra.mxu0 %v1573
    %1575 = vmatprep.subr.mxu0 0.0
    %v1576 = vand.u32 %v988, 4294901760
    %1577 = vmatpush1.msra.mxu0 %v1576
    %1578 = vmatprep.subr.mxu0 0.0
    %v1579 = vand.u32 %v989, 4294901760
    %1580 = vmatpush1.msra.mxu0 %v1579
    %1581 = vmatprep.subr.mxu0 0.0
    %v1582 = vand.u32 %v990, 4294901760
    %1583 = vmatpush1.msra.mxu0 %v1582
    %1584 = vmatprep.subr.mxu0 0.0
    %v1585 = vand.u32 %v991, 4294901760
    %1586 = vmatpush1.msra.mxu0 %v1585
    %1587 = vmatprep.subr.mxu0 0.0
    %v1588 = vand.u32 %v992, 4294901760
    %1589 = vmatpush1.msra.mxu0 %v1588
    %1590 = vmatprep.subr.mxu0 0.0
    %v1591 = vand.u32 %v993, 4294901760
    %1592 = vmatpush1.msra.mxu0 %v1591
    %1593 = vmatprep.subr.mxu0 0.0
    %v1594 = vand.u32 %v994, 4294901760
    %1595 = vmatpush1.msra.mxu0 %v1594
    %1596 = vmatprep.subr.mxu0 0.0
    %v1597 = vand.u32 %v995, 4294901760
    %1598 = vmatpush1.msra.mxu0 %v1597
    %1599 = vmatprep.subr.mxu0 0.0
    %v1600 = vand.u32 %v996, 4294901760
    %1601 = vmatpush1.msra.mxu0 %v1600
    %1602 = vmatprep.subr.mxu0 0.0
    %v1603 = vand.u32 %v997, 4294901760
    %1604 = vmatpush1.msra.mxu0 %v1603
    %1605 = vmatprep.subr.mxu0 0.0
    %v1606 = vand.u32 %v998, 4294901760
    %1607 = vmatpush1.msra.mxu0 %v1606
    %v1608 = vand.u32 %v965, 4294901760
    %v1609 = vsub.f32 %v965, %v1608
    %v1610 = vand.u32 %v1609, 4294901760
    %1611 = vmatprep.mubr.f32.mxu0 %v1610
    %v1612 = vand.u32 %v963, 4294901760
    %v1613 = vsub.f32 %v963, %v1612
    %v1614 = vand.u32 %v1613, 4294901760
    %1615 = vmatmul.mubr.f32.gmra.mrb[0].mxu0 %v1614
    %v1616 = vpop.f32.mrb[0].mxu0
    %v1617 = vadd.f32 %v1500, %v1616
    %v1618 = vpop.f32.mrb[0].mxu0
    %v1619 = vand.u32 %v966, 4294901760
    %v1620 = vsub.f32 %v966, %v1619
    %v1621 = vand.u32 %v1620, 4294901760
    %1622 = vmatprep.mubr.f32.mxu0 %v1621
    %v1623 = vand.u32 %v964, 4294901760
    %v1624 = vsub.f32 %v964, %v1623
    %v1625 = vand.u32 %v1624, 4294901760
    %1626 = vmatmul.mubr.f32.gmra.mrb[0].mxu0 %v1625
    %v1627 = vpop.f32.mrb[0].mxu0
    %v1628 = vadd.f32 %v1509, %v1627
    %v1629 = vpop.f32.mrb[0].mxu0
    %1630 = vdwg.mxu0
    %1631 = vmatprep.subr.mxu0 0.0
    %v1632 = vand.u32 %v967, 4294901760
    %v1633 = vsub.f32 %v967, %v1632
    %v1634 = vand.u32 %v1633, 4294901760
    %1635 = vmatpush1.msra.mxu0 %v1634
    %1636 = vmatprep.subr.mxu0 0.0
    %v1637 = vand.u32 %v968, 4294901760
    %v1638 = vsub.f32 %v968, %v1637
    %v1639 = vand.u32 %v1638, 4294901760
    %1640 = vmatpush1.msra.mxu0 %v1639
    %1641 = vmatprep.subr.mxu0 0.0
    %v1642 = vand.u32 %v969, 4294901760
    %v1643 = vsub.f32 %v969, %v1642
    %v1644 = vand.u32 %v1643, 4294901760
    %1645 = vmatpush1.msra.mxu0 %v1644
    %1646 = vmatprep.subr.mxu0 0.0
    %v1647 = vand.u32 %v970, 4294901760
    %v1648 = vsub.f32 %v970, %v1647
    %v1649 = vand.u32 %v1648, 4294901760
    %1650 = vmatpush1.msra.mxu0 %v1649
    %1651 = vmatprep.subr.mxu0 0.0
    %v1652 = vand.u32 %v971, 4294901760
    %v1653 = vsub.f32 %v971, %v1652
    %v1654 = vand.u32 %v1653, 4294901760
    %1655 = vmatpush1.msra.mxu0 %v1654
    %1656 = vmatprep.subr.mxu0 0.0
    %v1657 = vand.u32 %v972, 4294901760
    %v1658 = vsub.f32 %v972, %v1657
    %v1659 = vand.u32 %v1658, 4294901760
    %1660 = vmatpush1.msra.mxu0 %v1659
    %1661 = vmatprep.subr.mxu0 0.0
    %v1662 = vand.u32 %v973, 4294901760
    %v1663 = vsub.f32 %v973, %v1662
    %v1664 = vand.u32 %v1663, 4294901760
    %1665 = vmatpush1.msra.mxu0 %v1664
    %1666 = vmatprep.subr.mxu0 0.0
    %v1667 = vand.u32 %v974, 4294901760
    %v1668 = vsub.f32 %v974, %v1667
    %v1669 = vand.u32 %v1668, 4294901760
    %1670 = vmatpush1.msra.mxu0 %v1669
    %1671 = vmatprep.subr.mxu0 0.0
    %v1672 = vand.u32 %v975, 4294901760
    %v1673 = vsub.f32 %v975, %v1672
    %v1674 = vand.u32 %v1673, 4294901760
    %1675 = vmatpush1.msra.mxu0 %v1674
    %1676 = vmatprep.subr.mxu0 0.0
    %v1677 = vand.u32 %v976, 4294901760
    %v1678 = vsub.f32 %v976, %v1677
    %v1679 = vand.u32 %v1678, 4294901760
    %1680 = vmatpush1.msra.mxu0 %v1679
    %1681 = vmatprep.subr.mxu0 0.0
    %v1682 = vand.u32 %v977, 4294901760
    %v1683 = vsub.f32 %v977, %v1682
    %v1684 = vand.u32 %v1683, 4294901760
    %1685 = vmatpush1.msra.mxu0 %v1684
    %1686 = vmatprep.subr.mxu0 0.0
    %v1687 = vand.u32 %v978, 4294901760
    %v1688 = vsub.f32 %v978, %v1687
    %v1689 = vand.u32 %v1688, 4294901760
    %1690 = vmatpush1.msra.mxu0 %v1689
    %1691 = vmatprep.subr.mxu0 0.0
    %v1692 = vand.u32 %v979, 4294901760
    %v1693 = vsub.f32 %v979, %v1692
    %v1694 = vand.u32 %v1693, 4294901760
    %1695 = vmatpush1.msra.mxu0 %v1694
    %1696 = vmatprep.subr.mxu0 0.0
    %v1697 = vand.u32 %v980, 4294901760
    %v1698 = vsub.f32 %v980, %v1697
    %v1699 = vand.u32 %v1698, 4294901760
    %1700 = vmatpush1.msra.mxu0 %v1699
    %1701 = vmatprep.subr.mxu0 0.0
    %v1702 = vand.u32 %v981, 4294901760
    %v1703 = vsub.f32 %v981, %v1702
    %v1704 = vand.u32 %v1703, 4294901760
    %1705 = vmatpush1.msra.mxu0 %v1704
    %1706 = vmatprep.subr.mxu0 0.0
    %v1707 = vand.u32 %v982, 4294901760
    %v1708 = vsub.f32 %v982, %v1707
    %v1709 = vand.u32 %v1708, 4294901760
    %1710 = vmatpush1.msra.mxu0 %v1709
    %1711 = vmatprep.subr.mxu0 0.0
    %v1712 = vand.u32 %v983, 4294901760
    %v1713 = vsub.f32 %v983, %v1712
    %v1714 = vand.u32 %v1713, 4294901760
    %1715 = vmatpush1.msra.mxu0 %v1714
    %1716 = vmatprep.subr.mxu0 0.0
    %v1717 = vand.u32 %v984, 4294901760
    %v1718 = vsub.f32 %v984, %v1717
    %v1719 = vand.u32 %v1718, 4294901760
    %1720 = vmatpush1.msra.mxu0 %v1719
    %1721 = vmatprep.subr.mxu0 0.0
    %v1722 = vand.u32 %v985, 4294901760
    %v1723 = vsub.f32 %v985, %v1722
    %v1724 = vand.u32 %v1723, 4294901760
    %1725 = vmatpush1.msra.mxu0 %v1724
    %1726 = vmatprep.subr.mxu0 0.0
    %v1727 = vand.u32 %v986, 4294901760
    %v1728 = vsub.f32 %v986, %v1727
    %v1729 = vand.u32 %v1728, 4294901760
    %1730 = vmatpush1.msra.mxu0 %v1729
    %1731 = vmatprep.subr.mxu0 0.0
    %v1732 = vand.u32 %v987, 4294901760
    %v1733 = vsub.f32 %v987, %v1732
    %v1734 = vand.u32 %v1733, 4294901760
    %1735 = vmatpush1.msra.mxu0 %v1734
    %1736 = vmatprep.subr.mxu0 0.0
    %v1737 = vand.u32 %v988, 4294901760
    %v1738 = vsub.f32 %v988, %v1737
    %v1739 = vand.u32 %v1738, 4294901760
    %1740 = vmatpush1.msra.mxu0 %v1739
    %1741 = vmatprep.subr.mxu0 0.0
    %v1742 = vand.u32 %v989, 4294901760
    %v1743 = vsub.f32 %v989, %v1742
    %v1744 = vand.u32 %v1743, 4294901760
    %1745 = vmatpush1.msra.mxu0 %v1744
    %1746 = vmatprep.subr.mxu0 0.0
    %v1747 = vand.u32 %v990, 4294901760
    %v1748 = vsub.f32 %v990, %v1747
    %v1749 = vand.u32 %v1748, 4294901760
    %1750 = vmatpush1.msra.mxu0 %v1749
    %1751 = vmatprep.subr.mxu0 0.0
    %v1752 = vand.u32 %v991, 4294901760
    %v1753 = vsub.f32 %v991, %v1752
    %v1754 = vand.u32 %v1753, 4294901760
    %1755 = vmatpush1.msra.mxu0 %v1754
    %1756 = vmatprep.subr.mxu0 0.0
    %v1757 = vand.u32 %v992, 4294901760
    %v1758 = vsub.f32 %v992, %v1757
    %v1759 = vand.u32 %v1758, 4294901760
    %1760 = vmatpush1.msra.mxu0 %v1759
    %1761 = vmatprep.subr.mxu0 0.0
    %v1762 = vand.u32 %v993, 4294901760
    %v1763 = vsub.f32 %v993, %v1762
    %v1764 = vand.u32 %v1763, 4294901760
    %1765 = vmatpush1.msra.mxu0 %v1764
    %1766 = vmatprep.subr.mxu0 0.0
    %v1767 = vand.u32 %v994, 4294901760
    %v1768 = vsub.f32 %v994, %v1767
    %v1769 = vand.u32 %v1768, 4294901760
    %1770 = vmatpush1.msra.mxu0 %v1769
    %1771 = vmatprep.subr.mxu0 0.0
    %v1772 = vand.u32 %v995, 4294901760
    %v1773 = vsub.f32 %v995, %v1772
    %v1774 = vand.u32 %v1773, 4294901760
    %1775 = vmatpush1.msra.mxu0 %v1774
    %1776 = vmatprep.subr.mxu0 0.0
    %v1777 = vand.u32 %v996, 4294901760
    %v1778 = vsub.f32 %v996, %v1777
    %v1779 = vand.u32 %v1778, 4294901760
    %1780 = vmatpush1.msra.mxu0 %v1779
    %1781 = vmatprep.subr.mxu0 0.0
    %v1782 = vand.u32 %v997, 4294901760
    %v1783 = vsub.f32 %v997, %v1782
    %v1784 = vand.u32 %v1783, 4294901760
    %1785 = vmatpush1.msra.mxu0 %v1784
    %1786 = vmatprep.subr.mxu0 0.0
    %v1787 = vand.u32 %v998, 4294901760
    %v1788 = vsub.f32 %v998, %v1787
    %v1789 = vand.u32 %v1788, 4294901760
    %1790 = vmatpush1.msra.mxu0 %v1789
    %v1791 = vand.u32 %v965, 4294901760
    %1792 = vmatprep.mubr.f32.mxu0 %v1791
    %v1793 = vand.u32 %v963, 4294901760
    %1794 = vmatmul.mubr.f32.gmra.mrb[0].mxu0 %v1793
    %v1795 = vpop.f32.mrb[0].mxu0
    %v1796 = vadd.f32 %v1617, %v1795
    %v1797 = vpop.f32.mrb[0].mxu0
    %v1798 = vand.u32 %v966, 4294901760
    %1799 = vmatprep.mubr.f32.mxu0 %v1798
    %v1800 = vand.u32 %v964, 4294901760
    %1801 = vmatmul.mubr.f32.gmra.mrb[0].mxu0 %v1800
    %v1802 = vpop.f32.mrb[0].mxu0
    %v1803 = vadd.f32 %v1628, %v1802
    %v1804 = vpop.f32.mrb[0].mxu0
    %1805 = vdwg.mxu0
    %1806 = vmatprep.subr.mxu0 0.0
    %v1807 = vand.u32 %v967, 4294901760
    %1808 = vmatpush1.msra.mxu0 %v1807
    %1809 = vmatprep.subr.mxu0 0.0
    %v1810 = vand.u32 %v968, 4294901760
    %1811 = vmatpush1.msra.mxu0 %v1810
    %1812 = vmatprep.subr.mxu0 0.0
    %v1813 = vand.u32 %v969, 4294901760
    %1814 = vmatpush1.msra.mxu0 %v1813
    %1815 = vmatprep.subr.mxu0 0.0
    %v1816 = vand.u32 %v970, 4294901760
    %1817 = vmatpush1.msra.mxu0 %v1816
    %1818 = vmatprep.subr.mxu0 0.0
    %v1819 = vand.u32 %v971, 4294901760
    %1820 = vmatpush1.msra.mxu0 %v1819
    %1821 = vmatprep.subr.mxu0 0.0
    %v1822 = vand.u32 %v972, 4294901760
    %1823 = vmatpush1.msra.mxu0 %v1822
    %1824 = vmatprep.subr.mxu0 0.0
    %v1825 = vand.u32 %v973, 4294901760
    %1826 = vmatpush1.msra.mxu0 %v1825
    %1827 = vmatprep.subr.mxu0 0.0
    %v1828 = vand.u32 %v974, 4294901760
    %1829 = vmatpush1.msra.mxu0 %v1828
    %1830 = vmatprep.subr.mxu0 0.0
    %v1831 = vand.u32 %v975, 4294901760
    %1832 = vmatpush1.msra.mxu0 %v1831
    %1833 = vmatprep.subr.mxu0 0.0
    %v1834 = vand.u32 %v976, 4294901760
    %1835 = vmatpush1.msra.mxu0 %v1834
    %1836 = vmatprep.subr.mxu0 0.0
    %v1837 = vand.u32 %v977, 4294901760
    %1838 = vmatpush1.msra.mxu0 %v1837
    %1839 = vmatprep.subr.mxu0 0.0
    %v1840 = vand.u32 %v978, 4294901760
    %1841 = vmatpush1.msra.mxu0 %v1840
    %1842 = vmatprep.subr.mxu0 0.0
    %v1843 = vand.u32 %v979, 4294901760
    %1844 = vmatpush1.msra.mxu0 %v1843
    %1845 = vmatprep.subr.mxu0 0.0
    %v1846 = vand.u32 %v980, 4294901760
    %1847 = vmatpush1.msra.mxu0 %v1846
    %1848 = vmatprep.subr.mxu0 0.0
    %v1849 = vand.u32 %v981, 4294901760
    %1850 = vmatpush1.msra.mxu0 %v1849
    %1851 = vmatprep.subr.mxu0 0.0
    %v1852 = vand.u32 %v982, 4294901760
    %1853 = vmatpush1.msra.mxu0 %v1852
    %1854 = vmatprep.subr.mxu0 0.0
    %v1855 = vand.u32 %v983, 4294901760
    %1856 = vmatpush1.msra.mxu0 %v1855
    %1857 = vmatprep.subr.mxu0 0.0
    %v1858 = vand.u32 %v984, 4294901760
    %1859 = vmatpush1.msra.mxu0 %v1858
    %1860 = vmatprep.subr.mxu0 0.0
    %v1861 = vand.u32 %v985, 4294901760
    %1862 = vmatpush1.msra.mxu0 %v1861
    %1863 = vmatprep.subr.mxu0 0.0
    %v1864 = vand.u32 %v986, 4294901760
    %1865 = vmatpush1.msra.mxu0 %v1864
    %1866 = vmatprep.subr.mxu0 0.0
    %v1867 = vand.u32 %v987, 4294901760
    %1868 = vmatpush1.msra.mxu0 %v1867
    %1869 = vmatprep.subr.mxu0 0.0
    %v1870 = vand.u32 %v988, 4294901760
    %1871 = vmatpush1.msra.mxu0 %v1870
    %1872 = vmatprep.subr.mxu0 0.0
    %v1873 = vand.u32 %v989, 4294901760
    %1874 = vmatpush1.msra.mxu0 %v1873
    %1875 = vmatprep.subr.mxu0 0.0
    %v1876 = vand.u32 %v990, 4294901760
    %1877 = vmatpush1.msra.mxu0 %v1876
    %1878 = vmatprep.subr.mxu0 0.0
    %v1879 = vand.u32 %v991, 4294901760
    %1880 = vmatpush1.msra.mxu0 %v1879
    %1881 = vmatprep.subr.mxu0 0.0
    %v1882 = vand.u32 %v992, 4294901760
    %1883 = vmatpush1.msra.mxu0 %v1882
    %1884 = vmatprep.subr.mxu0 0.0
    %v1885 = vand.u32 %v993, 4294901760
    %1886 = vmatpush1.msra.mxu0 %v1885
    %1887 = vmatprep.subr.mxu0 0.0
    %v1888 = vand.u32 %v994, 4294901760
    %1889 = vmatpush1.msra.mxu0 %v1888
    %1890 = vmatprep.subr.mxu0 0.0
    %v1891 = vand.u32 %v995, 4294901760
    %1892 = vmatpush1.msra.mxu0 %v1891
    %1893 = vmatprep.subr.mxu0 0.0
    %v1894 = vand.u32 %v996, 4294901760
    %1895 = vmatpush1.msra.mxu0 %v1894
    %1896 = vmatprep.subr.mxu0 0.0
    %v1897 = vand.u32 %v997, 4294901760
    %1898 = vmatpush1.msra.mxu0 %v1897
    %1899 = vmatprep.subr.mxu0 0.0
    %v1900 = vand.u32 %v998, 4294901760
    %1901 = vmatpush1.msra.mxu0 %v1900
    %v1902 = vand.u32 %v965, 4294901760
    %1903 = vmatprep.mubr.f32.mxu0 %v1902
    %v1904 = vand.u32 %v963, 4294901760
    %1905 = vmatmul.mubr.f32.gmra.mrb[0].mxu0 %v1904
    %v1906 = vpop.f32.mrb[0].mxu0
    %v1907 = vadd.f32 %v1796, %v1906
    %v1908 = vpop.f32.mrb[0].mxu0
    %v1909 = vand.u32 %v966, 4294901760
    %1910 = vmatprep.mubr.f32.mxu0 %v1909
    %v1911 = vand.u32 %v964, 4294901760
    %1912 = vmatmul.mubr.f32.gmra.mrb[0].mxu0 %v1911
    %v1913 = vpop.f32.mrb[0].mxu0
    %v1914 = vadd.f32 %v1803, %v1913
    %v1915 = vpop.f32.mrb[0].mxu0
    %1916 = vdwg.mxu0
    %v1917 = vld [vmem:[%s9] sm:$0x1]
    %v1919 = vlaneseq
    %v1920 = vshrl.u32 %v1919, 7
    %v1921 = vsub.s32 0, %v1920
    %v1922 = vrot.slane %v1917, %v1921
    %v1924 = vmul.f32 %v1907, %v1922
    %v1925 = vmul.f32 %v1914, %v1922
    %v1926 = vld [vmem:[%s10] sm:$0x1]
    %v1928 = vlaneseq
    %v1929 = vshrl.u32 %v1928, 7
    %v1930 = vsub.s32 0, %v1929
    %v1931 = vrot.slane %v1926, %v1930
    %v1933 = vadd.f32 %v1924, %v1931
    %v1934 = vadd.f32 %v1925, %v1931
    %vm1935 = vcmp.ge.f32.partialorder %v1933, 0.0
    %vm1936 = vcmp.ge.f32.partialorder %v1934, 0.0
    %v1937 = vld [vmem:[#allocation3] sm:$0x1]
    %v1939 = vlaneseq
    %v1940 = vshrl.u32 %v1939, 7
    %v1941 = vsub.s32 0, %v1940
    %v1942 = vrot.slane %v1937, %v1941
    %1943 = vset.pattern.permute.xlu0 0
    %1944 = vperm.xlu0 %1943, %v1942
    %v1945 = vpop.permute.xlu0 %1944
    %v1947 = vmul.f32 %v1945, %v1933
    %v1948 = vmul.f32 %v1945, %v1934
    %v1949 = vsel %vm1935, %v1933, %v1947
    %v1950 = vsel %vm1936, %v1934, %v1948
    %1953 = vrot.lane.b32.xlu0 %v1949, 64
    %v1954 = vpop.permute.xlu0 %1953
    %1955 = vrot.lane.b32.xlu0 %v1950, 64
    %v1956 = vpop.permute.xlu0 %1955
    %v1959 = vsub.f32 %v1949, %v1954
    %v1960 = vsub.f32 %v1950, %v1956
    %v1961 = vadd.f32 %v1949, %v1954
    %v1962 = vadd.f32 %v1950, %v1956
    %v1965 = vrot.slane %v1959, 1
    %v1966 = vrot.slane %v1960, 1
    %v1967 = vsel %vm121, %v1965, %v1966
    %v1970 = vsel %vm121, %v1966, 0.0
    %v1971 = vmul.f32 %v1967, %v131
    %v1972 = vmul.f32 %v1970, %v136
    %v1975 = vrot.slane %v1961, 1
    %v1976 = vrot.slane %v1962, 1
    %v1977 = vsel %vm121, %v1975, %v1976
    %v1980 = vsel %vm121, %v1976, 0.0
    %v1981 = vmul.f32 %v1977, %v131
    %v1982 = vmul.f32 %v1980, %v136
    %1985 = vrot.lane.b32.xlu0 %v1971, 64
    %v1986 = vpop.permute.xlu0 %1985
    %1987 = vrot.lane.b32.xlu0 %v1972, 64
    %v1988 = vpop.permute.xlu0 %1987
    %1993 = vrot.lane.b32.xlu0 %v1981, 64
    %v1994 = vpop.permute.xlu0 %1993
    %1995 = vrot.lane.b32.xlu0 %v1982, 64
    %v1996 = vpop.permute.xlu0 %1995
    %v1999 = vsel %vm175, %v1959, %v1986
    %v2000 = vsel %vm175, %v1960, %v1988
    %v2001 = vsel %vm175, %v1961, %v1994
    %v2002 = vsel %vm175, %v1962, %v1996
    %v2003 = vld [vmem:[%s12] sm:$0xff]
    %v2004 = vld [vmem:[%s12 + $0x8] sm:$0xff]
    %v2005 = vld [vmem:[%s12 + $0x10] sm:$0xff]
    %v2006 = vld [vmem:[%s12 + $0x18] sm:$0xff]
    %v2007 = vld [vmem:[%s12 + $0x20] sm:$0xff]
    %v2008 = vld [vmem:[%s12 + $0x28] sm:$0xff]
    %v2009 = vld [vmem:[%s12 + $0x30] sm:$0xff]
    %v2010 = vld [vmem:[%s12 + $0x38] sm:$0xff]
    %v2011 = vld [vmem:[%s12 + $0x40] sm:$0xff]
    %v2012 = vld [vmem:[%s12 + $0x48] sm:$0xff]
    %v2013 = vld [vmem:[%s12 + $0x50] sm:$0xff]
    %v2014 = vld [vmem:[%s12 + $0x58] sm:$0xff]
    %v2015 = vld [vmem:[%s12 + $0x60] sm:$0xff]
    %v2016 = vld [vmem:[%s12 + $0x68] sm:$0xff]
    %v2017 = vld [vmem:[%s12 + $0x70] sm:$0xff]
    %v2018 = vld [vmem:[%s12 + $0x78] sm:$0xff]
    %v2019 = vld [vmem:[%s12 + $0x80] sm:$0xff]
    %v2020 = vld [vmem:[%s12 + $0x88] sm:$0xff]
    %v2021 = vld [vmem:[%s12 + $0x90] sm:$0xff]
    %v2022 = vld [vmem:[%s12 + $0x98] sm:$0xff]
    %v2023 = vld [vmem:[%s12 + $0xa0] sm:$0xff]
    %v2024 = vld [vmem:[%s12 + $0xa8] sm:$0xff]
    %v2025 = vld [vmem:[%s12 + $0xb0] sm:$0xff]
    %v2026 = vld [vmem:[%s12 + $0xb8] sm:$0xff]
    %v2027 = vld [vmem:[%s12 + $0xc0] sm:$0xff]
    %v2028 = vld [vmem:[%s12 + $0xc8] sm:$0xff]
    %v2029 = vld [vmem:[%s12 + $0xd0] sm:$0xff]
    %v2030 = vld [vmem:[%s12 + $0xd8] sm:$0xff]
    %v2031 = vld [vmem:[%s12 + $0xe0] sm:$0xff]
    %v2032 = vld [vmem:[%s12 + $0xe8] sm:$0xff]
    %v2033 = vld [vmem:[%s12 + $0xf0] sm:$0xff]
    %v2034 = vld [vmem:[%s12 + $0xf8] sm:$0xff]
    %v2035 = vld [vmem:[%s12 + $0x100] sm:$0xff]
    %v2036 = vld [vmem:[%s12 + $0x108] sm:$0xff]
    %v2037 = vld [vmem:[%s12 + $0x110] sm:$0xff]
    %v2038 = vld [vmem:[%s12 + $0x118] sm:$0xff]
    %v2039 = vld [vmem:[%s12 + $0x120] sm:$0xff]
    %v2040 = vld [vmem:[%s12 + $0x128] sm:$0xff]
    %v2041 = vld [vmem:[%s12 + $0x130] sm:$0xff]
    %v2042 = vld [vmem:[%s12 + $0x138] sm:$0xff]
    %v2043 = vld [vmem:[%s12 + $0x140] sm:$0xff]
    %v2044 = vld [vmem:[%s12 + $0x148] sm:$0xff]
    %v2045 = vld [vmem:[%s12 + $0x150] sm:$0xff]
    %v2046 = vld [vmem:[%s12 + $0x158] sm:$0xff]
    %v2047 = vld [vmem:[%s12 + $0x160] sm:$0xff]
    %v2048 = vld [vmem:[%s12 + $0x168] sm:$0xff]
    %v2049 = vld [vmem:[%s12 + $0x170] sm:$0xff]
    %v2050 = vld [vmem:[%s12 + $0x178] sm:$0xff]
    %v2051 = vld [vmem:[%s12 + $0x180] sm:$0xff]
    %v2052 = vld [vmem:[%s12 + $0x188] sm:$0xff]
    %v2053 = vld [vmem:[%s12 + $0x190] sm:$0xff]
    %v2054 = vld [vmem:[%s12 + $0x198] sm:$0xff]
    %v2055 = vld [vmem:[%s12 + $0x1a0] sm:$0xff]
    %v2056 = vld [vmem:[%s12 + $0x1a8] sm:$0xff]
    %v2057 = vld [vmem:[%s12 + $0x1b0] sm:$0xff]
    %v2058 = vld [vmem:[%s12 + $0x1b8] sm:$0xff]
    %v2059 = vld [vmem:[%s12 + $0x1c0] sm:$0xff]
    %v2060 = vld [vmem:[%s12 + $0x1c8] sm:$0xff]
    %v2061 = vld [vmem:[%s12 + $0x1d0] sm:$0xff]
    %v2062 = vld [vmem:[%s12 + $0x1d8] sm:$0xff]
    %v2063 = vld [vmem:[%s12 + $0x1e0] sm:$0xff]
    %v2064 = vld [vmem:[%s12 + $0x1e8] sm:$0xff]
    %v2065 = vld [vmem:[%s12 + $0x1f0] sm:$0xff]
    %v2066 = vld [vmem:[%s12 + $0x1f8] sm:$0xff]
    %v2067 = vand.u32 %v2004, 4294901760
    %2068 = vmatprep.subr.mxu0 %v2067
    %v2069 = vand.u32 %v2003, 4294901760
    %2070 = vmatpush1.msra.mxu0 %v2069
    %v2071 = vand.u32 %v2006, 4294901760
    %2072 = vmatprep.subr.mxu0 %v2071
    %v2073 = vand.u32 %v2005, 4294901760
    %2074 = vmatpush1.msra.mxu0 %v2073
    %v2075 = vand.u32 %v2008, 4294901760
    %2076 = vmatprep.subr.mxu0 %v2075
    %v2077 = vand.u32 %v2007, 4294901760
    %2078 = vmatpush1.msra.mxu0 %v2077
    %v2079 = vand.u32 %v2010, 4294901760
    %2080 = vmatprep.subr.mxu0 %v2079
    %v2081 = vand.u32 %v2009, 4294901760
    %2082 = vmatpush1.msra.mxu0 %v2081
    %v2083 = vand.u32 %v2012, 4294901760
    %2084 = vmatprep.subr.mxu0 %v2083
    %v2085 = vand.u32 %v2011, 4294901760
    %2086 = vmatpush1.msra.mxu0 %v2085
    %v2087 = vand.u32 %v2014, 4294901760
    %2088 = vmatprep.subr.mxu0 %v2087
    %v2089 = vand.u32 %v2013, 4294901760
    %2090 = vmatpush1.msra.mxu0 %v2089
    %v2091 = vand.u32 %v2016, 4294901760
    %2092 = vmatprep.subr.mxu0 %v2091
    %v2093 = vand.u32 %v2015, 4294901760
    %2094 = vmatpush1.msra.mxu0 %v2093
    %v2095 = vand.u32 %v2018, 4294901760
    %2096 = vmatprep.subr.mxu0 %v2095
    %v2097 = vand.u32 %v2017, 4294901760
    %2098 = vmatpush1.msra.mxu0 %v2097
    %v2099 = vand.u32 %v2020, 4294901760
    %2100 = vmatprep.subr.mxu0 %v2099
    %v2101 = vand.u32 %v2019, 4294901760
    %2102 = vmatpush1.msra.mxu0 %v2101
    %v2103 = vand.u32 %v2022, 4294901760
    %2104 = vmatprep.subr.mxu0 %v2103
    %v2105 = vand.u32 %v2021, 4294901760
    %2106 = vmatpush1.msra.mxu0 %v2105
    %v2107 = vand.u32 %v2024, 4294901760
    %2108 = vmatprep.subr.mxu0 %v2107
    %v2109 = vand.u32 %v2023, 4294901760
    %2110 = vmatpush1.msra.mxu0 %v2109
    %v2111 = vand.u32 %v2026, 4294901760
    %2112 = vmatprep.subr.mxu0 %v2111
    %v2113 = vand.u32 %v2025, 4294901760
    %2114 = vmatpush1.msra.mxu0 %v2113
    %v2115 = vand.u32 %v2028, 4294901760
    %2116 = vmatprep.subr.mxu0 %v2115
    %v2117 = vand.u32 %v2027, 4294901760
    %2118 = vmatpush1.msra.mxu0 %v2117
    %v2119 = vand.u32 %v2030, 4294901760
    %2120 = vmatprep.subr.mxu0 %v2119
    %v2121 = vand.u32 %v2029, 4294901760
    %2122 = vmatpush1.msra.mxu0 %v2121
    %v2123 = vand.u32 %v2032, 4294901760
    %2124 = vmatprep.subr.mxu0 %v2123
    %v2125 = vand.u32 %v2031, 4294901760
    %2126 = vmatpush1.msra.mxu0 %v2125
    %v2127 = vand.u32 %v2034, 4294901760
    %2128 = vmatprep.subr.mxu0 %v2127
    %v2129 = vand.u32 %v2033, 4294901760
    %2130 = vmatpush1.msra.mxu0 %v2129
    %v2131 = vand.u32 %v2036, 4294901760
    %2132 = vmatprep.subr.mxu0 %v2131
    %v2133 = vand.u32 %v2035, 4294901760
    %2134 = vmatpush1.msra.mxu0 %v2133
    %v2135 = vand.u32 %v2038, 4294901760
    %2136 = vmatprep.subr.mxu0 %v2135
    %v2137 = vand.u32 %v2037, 4294901760
    %2138 = vmatpush1.msra.mxu0 %v2137
    %v2139 = vand.u32 %v2040, 4294901760
    %2140 = vmatprep.subr.mxu0 %v2139
    %v2141 = vand.u32 %v2039, 4294901760
    %2142 = vmatpush1.msra.mxu0 %v2141
    %v2143 = vand.u32 %v2042, 4294901760
    %2144 = vmatprep.subr.mxu0 %v2143
    %v2145 = vand.u32 %v2041, 4294901760
    %2146 = vmatpush1.msra.mxu0 %v2145
    %v2147 = vand.u32 %v2044, 4294901760
    %2148 = vmatprep.subr.mxu0 %v2147
    %v2149 = vand.u32 %v2043, 4294901760
    %2150 = vmatpush1.msra.mxu0 %v2149
    %v2151 = vand.u32 %v2046, 4294901760
    %2152 = vmatprep.subr.mxu0 %v2151
    %v2153 = vand.u32 %v2045, 4294901760
    %2154 = vmatpush1.msra.mxu0 %v2153
    %v2155 = vand.u32 %v2048, 4294901760
    %2156 = vmatprep.subr.mxu0 %v2155
    %v2157 = vand.u32 %v2047, 4294901760
    %2158 = vmatpush1.msra.mxu0 %v2157
    %v2159 = vand.u32 %v2050, 4294901760
    %2160 = vmatprep.subr.mxu0 %v2159
    %v2161 = vand.u32 %v2049, 4294901760
    %2162 = vmatpush1.msra.mxu0 %v2161
    %v2163 = vand.u32 %v2052, 4294901760
    %2164 = vmatprep.subr.mxu0 %v2163
    %v2165 = vand.u32 %v2051, 4294901760
    %2166 = vmatpush1.msra.mxu0 %v2165
    %v2167 = vand.u32 %v2054, 4294901760
    %2168 = vmatprep.subr.mxu0 %v2167
    %v2169 = vand.u32 %v2053, 4294901760
    %2170 = vmatpush1.msra.mxu0 %v2169
    %v2171 = vand.u32 %v2056, 4294901760
    %2172 = vmatprep.subr.mxu0 %v2171
    %v2173 = vand.u32 %v2055, 4294901760
    %2174 = vmatpush1.msra.mxu0 %v2173
    %v2175 = vand.u32 %v2058, 4294901760
    %2176 = vmatprep.subr.mxu0 %v2175
    %v2177 = vand.u32 %v2057, 4294901760
    %2178 = vmatpush1.msra.mxu0 %v2177
    %v2179 = vand.u32 %v2060, 4294901760
    %2180 = vmatprep.subr.mxu0 %v2179
    %v2181 = vand.u32 %v2059, 4294901760
    %2182 = vmatpush1.msra.mxu0 %v2181
    %v2183 = vand.u32 %v2062, 4294901760
    %2184 = vmatprep.subr.mxu0 %v2183
    %v2185 = vand.u32 %v2061, 4294901760
    %2186 = vmatpush1.msra.mxu0 %v2185
    %v2187 = vand.u32 %v2064, 4294901760
    %2188 = vmatprep.subr.mxu0 %v2187
    %v2189 = vand.u32 %v2063, 4294901760
    %2190 = vmatpush1.msra.mxu0 %v2189
    %v2191 = vand.u32 %v2066, 4294901760
    %2192 = vmatprep.subr.mxu0 %v2191
    %v2193 = vand.u32 %v2065, 4294901760
    %2194 = vmatpush1.msra.mxu0 %v2193
    %v2195 = vand.u32 %v2001, 4294901760
    %v2196 = vsub.f32 %v2001, %v2195
    %v2197 = vand.u32 %v2196, 4294901760
    %v2198 = vsub.f32 %v2196, %v2197
    %v2199 = vand.u32 %v2198, 4294901760
    %2200 = vmatprep.mubr.f32.mxu0 %v2199
    %v2201 = vand.u32 %v1999, 4294901760
    %v2202 = vsub.f32 %v1999, %v2201
    %v2203 = vand.u32 %v2202, 4294901760
    %v2204 = vsub.f32 %v2202, %v2203
    %v2205 = vand.u32 %v2204, 4294901760
    %2206 = vmatmul.mubr.f32.gmra.mrb[0].mxu0 %v2205
    %v2207 = vpop.f32.mrb[0].mxu0
    %v2208 = vadd.f32 0.0, %v2207
    %v2209 = vpop.f32.mrb[0].mxu0
    %v2210 = vadd.f32 0.0, %v2209
    %v2211 = vand.u32 %v2002, 4294901760
    %v2212 = vsub.f32 %v2002, %v2211
    %v2213 = vand.u32 %v2212, 4294901760
    %v2214 = vsub.f32 %v2212, %v2213
    %v2215 = vand.u32 %v2214, 4294901760
    %2216 = vmatprep.mubr.f32.mxu0 %v2215
    %v2217 = vand.u32 %v2000, 4294901760
    %v2218 = vsub.f32 %v2000, %v2217
    %v2219 = vand.u32 %v2218, 4294901760
    %v2220 = vsub.f32 %v2218, %v2219
    %v2221 = vand.u32 %v2220, 4294901760
    %2222 = vmatmul.mubr.f32.gmra.mrb[0].mxu0 %v2221
    %v2223 = vpop.f32.mrb[0].mxu0
    %v2224 = vadd.f32 0.0, %v2223
    %v2225 = vpop.f32.mrb[0].mxu0
    %v2226 = vadd.f32 0.0, %v2225
    %2227 = vdwg.mxu0
    %v2228 = vand.u32 %v2004, 4294901760
    %v2229 = vsub.f32 %v2004, %v2228
    %v2230 = vand.u32 %v2229, 4294901760
    %v2231 = vsub.f32 %v2229, %v2230
    %v2232 = vand.u32 %v2231, 4294901760
    %2233 = vmatprep.subr.mxu0 %v2232
    %v2234 = vand.u32 %v2003, 4294901760
    %v2235 = vsub.f32 %v2003, %v2234
    %v2236 = vand.u32 %v2235, 4294901760
    %v2237 = vsub.f32 %v2235, %v2236
    %v2238 = vand.u32 %v2237, 4294901760
    %2239 = vmatpush1.msra.mxu0 %v2238
    %v2240 = vand.u32 %v2006, 4294901760
    %v2241 = vsub.f32 %v2006, %v2240
    %v2242 = vand.u32 %v2241, 4294901760
    %v2243 = vsub.f32 %v2241, %v2242
    %v2244 = vand.u32 %v2243, 4294901760
    %2245 = vmatprep.subr.mxu0 %v2244
    %v2246 = vand.u32 %v2005, 4294901760
    %v2247 = vsub.f32 %v2005, %v2246
    %v2248 = vand.u32 %v2247, 4294901760
    %v2249 = vsub.f32 %v2247, %v2248
    %v2250 = vand.u32 %v2249, 4294901760
    %2251 = vmatpush1.msra.mxu0 %v2250
    %v2252 = vand.u32 %v2008, 4294901760
    %v2253 = vsub.f32 %v2008, %v2252
    %v2254 = vand.u32 %v2253, 4294901760
    %v2255 = vsub.f32 %v2253, %v2254
    %v2256 = vand.u32 %v2255, 4294901760
    %2257 = vmatprep.subr.mxu0 %v2256
    %v2258 = vand.u32 %v2007, 4294901760
    %v2259 = vsub.f32 %v2007, %v2258
    %v2260 = vand.u32 %v2259, 4294901760
    %v2261 = vsub.f32 %v2259, %v2260
    %v2262 = vand.u32 %v2261, 4294901760
    %2263 = vmatpush1.msra.mxu0 %v2262
    %v2264 = vand.u32 %v2010, 4294901760
    %v2265 = vsub.f32 %v2010, %v2264
    %v2266 = vand.u32 %v2265, 4294901760
    %v2267 = vsub.f32 %v2265, %v2266
    %v2268 = vand.u32 %v2267, 4294901760
    %2269 = vmatprep.subr.mxu0 %v2268
    %v2270 = vand.u32 %v2009, 4294901760
    %v2271 = vsub.f32 %v2009, %v2270
    %v2272 = vand.u32 %v2271, 4294901760
    %v2273 = vsub.f32 %v2271, %v2272
    %v2274 = vand.u32 %v2273, 4294901760
    %2275 = vmatpush1.msra.mxu0 %v2274
    %v2276 = vand.u32 %v2012, 4294901760
    %v2277 = vsub.f32 %v2012, %v2276
    %v2278 = vand.u32 %v2277, 4294901760
    %v2279 = vsub.f32 %v2277, %v2278
    %v2280 = vand.u32 %v2279, 4294901760
    %2281 = vmatprep.subr.mxu0 %v2280
    %v2282 = vand.u32 %v2011, 4294901760
    %v2283 = vsub.f32 %v2011, %v2282
    %v2284 = vand.u32 %v2283, 4294901760
    %v2285 = vsub.f32 %v2283, %v2284
    %v2286 = vand.u32 %v2285, 4294901760
    %2287 = vmatpush1.msra.mxu0 %v2286
    %v2288 = vand.u32 %v2014, 4294901760
    %v2289 = vsub.f32 %v2014, %v2288
    %v2290 = vand.u32 %v2289, 4294901760
    %v2291 = vsub.f32 %v2289, %v2290
    %v2292 = vand.u32 %v2291, 4294901760
    %2293 = vmatprep.subr.mxu0 %v2292
    %v2294 = vand.u32 %v2013, 4294901760
    %v2295 = vsub.f32 %v2013, %v2294
    %v2296 = vand.u32 %v2295, 4294901760
    %v2297 = vsub.f32 %v2295, %v2296
    %v2298 = vand.u32 %v2297, 4294901760
    %2299 = vmatpush1.msra.mxu0 %v2298
    %v2300 = vand.u32 %v2016, 4294901760
    %v2301 = vsub.f32 %v2016, %v2300
    %v2302 = vand.u32 %v2301, 4294901760
    %v2303 = vsub.f32 %v2301, %v2302
    %v2304 = vand.u32 %v2303, 4294901760
    %2305 = vmatprep.subr.mxu0 %v2304
    %v2306 = vand.u32 %v2015, 4294901760
    %v2307 = vsub.f32 %v2015, %v2306
    %v2308 = vand.u32 %v2307, 4294901760
    %v2309 = vsub.f32 %v2307, %v2308
    %v2310 = vand.u32 %v2309, 4294901760
    %2311 = vmatpush1.msra.mxu0 %v2310
    %v2312 = vand.u32 %v2018, 4294901760
    %v2313 = vsub.f32 %v2018, %v2312
    %v2314 = vand.u32 %v2313, 4294901760
    %v2315 = vsub.f32 %v2313, %v2314
    %v2316 = vand.u32 %v2315, 4294901760
    %2317 = vmatprep.subr.mxu0 %v2316
    %v2318 = vand.u32 %v2017, 4294901760
    %v2319 = vsub.f32 %v2017, %v2318
    %v2320 = vand.u32 %v2319, 4294901760
    %v2321 = vsub.f32 %v2319, %v2320
    %v2322 = vand.u32 %v2321, 4294901760
    %2323 = vmatpush1.msra.mxu0 %v2322
    %v2324 = vand.u32 %v2020, 4294901760
    %v2325 = vsub.f32 %v2020, %v2324
    %v2326 = vand.u32 %v2325, 4294901760
    %v2327 = vsub.f32 %v2325, %v2326
    %v2328 = vand.u32 %v2327, 4294901760
    %2329 = vmatprep.subr.mxu0 %v2328
    %v2330 = vand.u32 %v2019, 4294901760
    %v2331 = vsub.f32 %v2019, %v2330
    %v2332 = vand.u32 %v2331, 4294901760
    %v2333 = vsub.f32 %v2331, %v2332
    %v2334 = vand.u32 %v2333, 4294901760
    %2335 = vmatpush1.msra.mxu0 %v2334
    %v2336 = vand.u32 %v2022, 4294901760
    %v2337 = vsub.f32 %v2022, %v2336
    %v2338 = vand.u32 %v2337, 4294901760
    %v2339 = vsub.f32 %v2337, %v2338
    %v2340 = vand.u32 %v2339, 4294901760
    %2341 = vmatprep.subr.mxu0 %v2340
    %v2342 = vand.u32 %v2021, 4294901760
    %v2343 = vsub.f32 %v2021, %v2342
    %v2344 = vand.u32 %v2343, 4294901760
    %v2345 = vsub.f32 %v2343, %v2344
    %v2346 = vand.u32 %v2345, 4294901760
    %2347 = vmatpush1.msra.mxu0 %v2346
    %v2348 = vand.u32 %v2024, 4294901760
    %v2349 = vsub.f32 %v2024, %v2348
    %v2350 = vand.u32 %v2349, 4294901760
    %v2351 = vsub.f32 %v2349, %v2350
    %v2352 = vand.u32 %v2351, 4294901760
    %2353 = vmatprep.subr.mxu0 %v2352
    %v2354 = vand.u32 %v2023, 4294901760
    %v2355 = vsub.f32 %v2023, %v2354
    %v2356 = vand.u32 %v2355, 4294901760
    %v2357 = vsub.f32 %v2355, %v2356
    %v2358 = vand.u32 %v2357, 4294901760
    %2359 = vmatpush1.msra.mxu0 %v2358
    %v2360 = vand.u32 %v2026, 4294901760
    %v2361 = vsub.f32 %v2026, %v2360
    %v2362 = vand.u32 %v2361, 4294901760
    %v2363 = vsub.f32 %v2361, %v2362
    %v2364 = vand.u32 %v2363, 4294901760
    %2365 = vmatprep.subr.mxu0 %v2364
    %v2366 = vand.u32 %v2025, 4294901760
    %v2367 = vsub.f32 %v2025, %v2366
    %v2368 = vand.u32 %v2367, 4294901760
    %v2369 = vsub.f32 %v2367, %v2368
    %v2370 = vand.u32 %v2369, 4294901760
    %2371 = vmatpush1.msra.mxu0 %v2370
    %v2372 = vand.u32 %v2028, 4294901760
    %v2373 = vsub.f32 %v2028, %v2372
    %v2374 = vand.u32 %v2373, 4294901760
    %v2375 = vsub.f32 %v2373, %v2374
    %v2376 = vand.u32 %v2375, 4294901760
    %2377 = vmatprep.subr.mxu0 %v2376
    %v2378 = vand.u32 %v2027, 4294901760
    %v2379 = vsub.f32 %v2027, %v2378
    %v2380 = vand.u32 %v2379, 4294901760
    %v2381 = vsub.f32 %v2379, %v2380
    %v2382 = vand.u32 %v2381, 4294901760
    %2383 = vmatpush1.msra.mxu0 %v2382
    %v2384 = vand.u32 %v2030, 4294901760
    %v2385 = vsub.f32 %v2030, %v2384
    %v2386 = vand.u32 %v2385, 4294901760
    %v2387 = vsub.f32 %v2385, %v2386
    %v2388 = vand.u32 %v2387, 4294901760
    %2389 = vmatprep.subr.mxu0 %v2388
    %v2390 = vand.u32 %v2029, 4294901760
    %v2391 = vsub.f32 %v2029, %v2390
    %v2392 = vand.u32 %v2391, 4294901760
    %v2393 = vsub.f32 %v2391, %v2392
    %v2394 = vand.u32 %v2393, 4294901760
    %2395 = vmatpush1.msra.mxu0 %v2394
    %v2396 = vand.u32 %v2032, 4294901760
    %v2397 = vsub.f32 %v2032, %v2396
    %v2398 = vand.u32 %v2397, 4294901760
    %v2399 = vsub.f32 %v2397, %v2398
    %v2400 = vand.u32 %v2399, 4294901760
    %2401 = vmatprep.subr.mxu0 %v2400
    %v2402 = vand.u32 %v2031, 4294901760
    %v2403 = vsub.f32 %v2031, %v2402
    %v2404 = vand.u32 %v2403, 4294901760
    %v2405 = vsub.f32 %v2403, %v2404
    %v2406 = vand.u32 %v2405, 4294901760
    %2407 = vmatpush1.msra.mxu0 %v2406
    %v2408 = vand.u32 %v2034, 4294901760
    %v2409 = vsub.f32 %v2034, %v2408
    %v2410 = vand.u32 %v2409, 4294901760
    %v2411 = vsub.f32 %v2409, %v2410
    %v2412 = vand.u32 %v2411, 4294901760
    %2413 = vmatprep.subr.mxu0 %v2412
    %v2414 = vand.u32 %v2033, 4294901760
    %v2415 = vsub.f32 %v2033, %v2414
    %v2416 = vand.u32 %v2415, 4294901760
    %v2417 = vsub.f32 %v2415, %v2416
    %v2418 = vand.u32 %v2417, 4294901760
    %2419 = vmatpush1.msra.mxu0 %v2418
    %v2420 = vand.u32 %v2036, 4294901760
    %v2421 = vsub.f32 %v2036, %v2420
    %v2422 = vand.u32 %v2421, 4294901760
    %v2423 = vsub.f32 %v2421, %v2422
    %v2424 = vand.u32 %v2423, 4294901760
    %2425 = vmatprep.subr.mxu0 %v2424
    %v2426 = vand.u32 %v2035, 4294901760
    %v2427 = vsub.f32 %v2035, %v2426
    %v2428 = vand.u32 %v2427, 4294901760
    %v2429 = vsub.f32 %v2427, %v2428
    %v2430 = vand.u32 %v2429, 4294901760
    %2431 = vmatpush1.msra.mxu0 %v2430
    %v2432 = vand.u32 %v2038, 4294901760
    %v2433 = vsub.f32 %v2038, %v2432
    %v2434 = vand.u32 %v2433, 4294901760
    %v2435 = vsub.f32 %v2433, %v2434
    %v2436 = vand.u32 %v2435, 4294901760
    %2437 = vmatprep.subr.mxu0 %v2436
    %v2438 = vand.u32 %v2037, 4294901760
    %v2439 = vsub.f32 %v2037, %v2438
    %v2440 = vand.u32 %v2439, 4294901760
    %v2441 = vsub.f32 %v2439, %v2440
    %v2442 = vand.u32 %v2441, 4294901760
    %2443 = vmatpush1.msra.mxu0 %v2442
    %v2444 = vand.u32 %v2040, 4294901760
    %v2445 = vsub.f32 %v2040, %v2444
    %v2446 = vand.u32 %v2445, 4294901760
    %v2447 = vsub.f32 %v2445, %v2446
    %v2448 = vand.u32 %v2447, 4294901760
    %2449 = vmatprep.subr.mxu0 %v2448
    %v2450 = vand.u32 %v2039, 4294901760
    %v2451 = vsub.f32 %v2039, %v2450
    %v2452 = vand.u32 %v2451, 4294901760
    %v2453 = vsub.f32 %v2451, %v2452
    %v2454 = vand.u32 %v2453, 4294901760
    %2455 = vmatpush1.msra.mxu0 %v2454
    %v2456 = vand.u32 %v2042, 4294901760
    %v2457 = vsub.f32 %v2042, %v2456
    %v2458 = vand.u32 %v2457, 4294901760
    %v2459 = vsub.f32 %v2457, %v2458
    %v2460 = vand.u32 %v2459, 4294901760
    %2461 = vmatprep.subr.mxu0 %v2460
    %v2462 = vand.u32 %v2041, 4294901760
    %v2463 = vsub.f32 %v2041, %v2462
    %v2464 = vand.u32 %v2463, 4294901760
    %v2465 = vsub.f32 %v2463, %v2464
    %v2466 = vand.u32 %v2465, 4294901760
    %2467 = vmatpush1.msra.mxu0 %v2466
    %v2468 = vand.u32 %v2044, 4294901760
    %v2469 = vsub.f32 %v2044, %v2468
    %v2470 = vand.u32 %v2469, 4294901760
    %v2471 = vsub.f32 %v2469, %v2470
    %v2472 = vand.u32 %v2471, 4294901760
    %2473 = vmatprep.subr.mxu0 %v2472
    %v2474 = vand.u32 %v2043, 4294901760
    %v2475 = vsub.f32 %v2043, %v2474
    %v2476 = vand.u32 %v2475, 4294901760
    %v2477 = vsub.f32 %v2475, %v2476
    %v2478 = vand.u32 %v2477, 4294901760
    %2479 = vmatpush1.msra.mxu0 %v2478
    %v2480 = vand.u32 %v2046, 4294901760
    %v2481 = vsub.f32 %v2046, %v2480
    %v2482 = vand.u32 %v2481, 4294901760
    %v2483 = vsub.f32 %v2481, %v2482
    %v2484 = vand.u32 %v2483, 4294901760
    %2485 = vmatprep.subr.mxu0 %v2484
    %v2486 = vand.u32 %v2045, 4294901760
    %v2487 = vsub.f32 %v2045, %v2486
    %v2488 = vand.u32 %v2487, 4294901760
    %v2489 = vsub.f32 %v2487, %v2488
    %v2490 = vand.u32 %v2489, 4294901760
    %2491 = vmatpush1.msra.mxu0 %v2490
    %v2492 = vand.u32 %v2048, 4294901760
    %v2493 = vsub.f32 %v2048, %v2492
    %v2494 = vand.u32 %v2493, 4294901760
    %v2495 = vsub.f32 %v2493, %v2494
    %v2496 = vand.u32 %v2495, 4294901760
    %2497 = vmatprep.subr.mxu0 %v2496
    %v2498 = vand.u32 %v2047, 4294901760
    %v2499 = vsub.f32 %v2047, %v2498
    %v2500 = vand.u32 %v2499, 4294901760
    %v2501 = vsub.f32 %v2499, %v2500
    %v2502 = vand.u32 %v2501, 4294901760
    %2503 = vmatpush1.msra.mxu0 %v2502
    %v2504 = vand.u32 %v2050, 4294901760
    %v2505 = vsub.f32 %v2050, %v2504
    %v2506 = vand.u32 %v2505, 4294901760
    %v2507 = vsub.f32 %v2505, %v2506
    %v2508 = vand.u32 %v2507, 4294901760
    %2509 = vmatprep.subr.mxu0 %v2508
    %v2510 = vand.u32 %v2049, 4294901760
    %v2511 = vsub.f32 %v2049, %v2510
    %v2512 = vand.u32 %v2511, 4294901760
    %v2513 = vsub.f32 %v2511, %v2512
    %v2514 = vand.u32 %v2513, 4294901760
    %2515 = vmatpush1.msra.mxu0 %v2514
    %v2516 = vand.u32 %v2052, 4294901760
    %v2517 = vsub.f32 %v2052, %v2516
    %v2518 = vand.u32 %v2517, 4294901760
    %v2519 = vsub.f32 %v2517, %v2518
    %v2520 = vand.u32 %v2519, 4294901760
    %2521 = vmatprep.subr.mxu0 %v2520
    %v2522 = vand.u32 %v2051, 4294901760
    %v2523 = vsub.f32 %v2051, %v2522
    %v2524 = vand.u32 %v2523, 4294901760
    %v2525 = vsub.f32 %v2523, %v2524
    %v2526 = vand.u32 %v2525, 4294901760
    %2527 = vmatpush1.msra.mxu0 %v2526
    %v2528 = vand.u32 %v2054, 4294901760
    %v2529 = vsub.f32 %v2054, %v2528
    %v2530 = vand.u32 %v2529, 4294901760
    %v2531 = vsub.f32 %v2529, %v2530
    %v2532 = vand.u32 %v2531, 4294901760
    %2533 = vmatprep.subr.mxu0 %v2532
    %v2534 = vand.u32 %v2053, 4294901760
    %v2535 = vsub.f32 %v2053, %v2534
    %v2536 = vand.u32 %v2535, 4294901760
    %v2537 = vsub.f32 %v2535, %v2536
    %v2538 = vand.u32 %v2537, 4294901760
    %2539 = vmatpush1.msra.mxu0 %v2538
    %v2540 = vand.u32 %v2056, 4294901760
    %v2541 = vsub.f32 %v2056, %v2540
    %v2542 = vand.u32 %v2541, 4294901760
    %v2543 = vsub.f32 %v2541, %v2542
    %v2544 = vand.u32 %v2543, 4294901760
    %2545 = vmatprep.subr.mxu0 %v2544
    %v2546 = vand.u32 %v2055, 4294901760
    %v2547 = vsub.f32 %v2055, %v2546
    %v2548 = vand.u32 %v2547, 4294901760
    %v2549 = vsub.f32 %v2547, %v2548
    %v2550 = vand.u32 %v2549, 4294901760
    %2551 = vmatpush1.msra.mxu0 %v2550
    %v2552 = vand.u32 %v2058, 4294901760
    %v2553 = vsub.f32 %v2058, %v2552
    %v2554 = vand.u32 %v2553, 4294901760
    %v2555 = vsub.f32 %v2553, %v2554
    %v2556 = vand.u32 %v2555, 4294901760
    %2557 = vmatprep.subr.mxu0 %v2556
    %v2558 = vand.u32 %v2057, 4294901760
    %v2559 = vsub.f32 %v2057, %v2558
    %v2560 = vand.u32 %v2559, 4294901760
    %v2561 = vsub.f32 %v2559, %v2560
    %v2562 = vand.u32 %v2561, 4294901760
    %2563 = vmatpush1.msra.mxu0 %v2562
    %v2564 = vand.u32 %v2060, 4294901760
    %v2565 = vsub.f32 %v2060, %v2564
    %v2566 = vand.u32 %v2565, 4294901760
    %v2567 = vsub.f32 %v2565, %v2566
    %v2568 = vand.u32 %v2567, 4294901760
    %2569 = vmatprep.subr.mxu0 %v2568
    %v2570 = vand.u32 %v2059, 4294901760
    %v2571 = vsub.f32 %v2059, %v2570
    %v2572 = vand.u32 %v2571, 4294901760
    %v2573 = vsub.f32 %v2571, %v2572
    %v2574 = vand.u32 %v2573, 4294901760
    %2575 = vmatpush1.msra.mxu0 %v2574
    %v2576 = vand.u32 %v2062, 4294901760
    %v2577 = vsub.f32 %v2062, %v2576
    %v2578 = vand.u32 %v2577, 4294901760
    %v2579 = vsub.f32 %v2577, %v2578
    %v2580 = vand.u32 %v2579, 4294901760
    %2581 = vmatprep.subr.mxu0 %v2580
    %v2582 = vand.u32 %v2061, 4294901760
    %v2583 = vsub.f32 %v2061, %v2582
    %v2584 = vand.u32 %v2583, 4294901760
    %v2585 = vsub.f32 %v2583, %v2584
    %v2586 = vand.u32 %v2585, 4294901760
    %2587 = vmatpush1.msra.mxu0 %v2586
    %v2588 = vand.u32 %v2064, 4294901760
    %v2589 = vsub.f32 %v2064, %v2588
    %v2590 = vand.u32 %v2589, 4294901760
    %v2591 = vsub.f32 %v2589, %v2590
    %v2592 = vand.u32 %v2591, 4294901760
    %2593 = vmatprep.subr.mxu0 %v2592
    %v2594 = vand.u32 %v2063, 4294901760
    %v2595 = vsub.f32 %v2063, %v2594
    %v2596 = vand.u32 %v2595, 4294901760
    %v2597 = vsub.f32 %v2595, %v2596
    %v2598 = vand.u32 %v2597, 4294901760
    %2599 = vmatpush1.msra.mxu0 %v2598
    %v2600 = vand.u32 %v2066, 4294901760
    %v2601 = vsub.f32 %v2066, %v2600
    %v2602 = vand.u32 %v2601, 4294901760
    %v2603 = vsub.f32 %v2601, %v2602
    %v2604 = vand.u32 %v2603, 4294901760
    %2605 = vmatprep.subr.mxu0 %v2604
    %v2606 = vand.u32 %v2065, 4294901760
    %v2607 = vsub.f32 %v2065, %v2606
    %v2608 = vand.u32 %v2607, 4294901760
    %v2609 = vsub.f32 %v2607, %v2608
    %v2610 = vand.u32 %v2609, 4294901760
    %2611 = vmatpush1.msra.mxu0 %v2610
    %v2612 = vand.u32 %v2001, 4294901760
    %2613 = vmatprep.mubr.f32.mxu0 %v2612
    %v2614 = vand.u32 %v1999, 4294901760
    %2615 = vmatmul.mubr.f32.gmra.mrb[0].mxu0 %v2614
    %v2616 = vpop.f32.mrb[0].mxu0
    %v2617 = vadd.f32 %v2208, %v2616
    %v2618 = vpop.f32.mrb[0].mxu0
    %v2619 = vadd.f32 %v2210, %v2618
    %v2620 = vand.u32 %v2002, 4294901760
    %2621 = vmatprep.mubr.f32.mxu0 %v2620
    %v2622 = vand.u32 %v2000, 4294901760
    %2623 = vmatmul.mubr.f32.gmra.mrb[0].mxu0 %v2622
    %v2624 = vpop.f32.mrb[0].mxu0
    %v2625 = vadd.f32 %v2224, %v2624
    %v2626 = vpop.f32.mrb[0].mxu0
    %v2627 = vadd.f32 %v2226, %v2626
    %2628 = vdwg.mxu0
    %v2629 = vand.u32 %v2004, 4294901760
    %v2630 = vsub.f32 %v2004, %v2629
    %2631 = vmatprep.subr.mxu0 %v2630
    %v2632 = vand.u32 %v2003, 4294901760
    %v2633 = vsub.f32 %v2003, %v2632
    %2634 = vmatpush1.msra.mxu0 %v2633
    %v2635 = vand.u32 %v2006, 4294901760
    %v2636 = vsub.f32 %v2006, %v2635
    %2637 = vmatprep.subr.mxu0 %v2636
    %v2638 = vand.u32 %v2005, 4294901760
    %v2639 = vsub.f32 %v2005, %v2638
    %2640 = vmatpush1.msra.mxu0 %v2639
    %v2641 = vand.u32 %v2008, 4294901760
    %v2642 = vsub.f32 %v2008, %v2641
    %2643 = vmatprep.subr.mxu0 %v2642
    %v2644 = vand.u32 %v2007, 4294901760
    %v2645 = vsub.f32 %v2007, %v2644
    %2646 = vmatpush1.msra.mxu0 %v2645
    %v2647 = vand.u32 %v2010, 4294901760
    %v2648 = vsub.f32 %v2010, %v2647
    %2649 = vmatprep.subr.mxu0 %v2648
    %v2650 = vand.u32 %v2009, 4294901760
    %v2651 = vsub.f32 %v2009, %v2650
    %2652 = vmatpush1.msra.mxu0 %v2651
    %v2653 = vand.u32 %v2012, 4294901760
    %v2654 = vsub.f32 %v2012, %v2653
    %2655 = vmatprep.subr.mxu0 %v2654
    %v2656 = vand.u32 %v2011, 4294901760
    %v2657 = vsub.f32 %v2011, %v2656
    %2658 = vmatpush1.msra.mxu0 %v2657
    %v2659 = vand.u32 %v2014, 4294901760
    %v2660 = vsub.f32 %v2014, %v2659
    %2661 = vmatprep.subr.mxu0 %v2660
    %v2662 = vand.u32 %v2013, 4294901760
    %v2663 = vsub.f32 %v2013, %v2662
    %2664 = vmatpush1.msra.mxu0 %v2663
    %v2665 = vand.u32 %v2016, 4294901760
    %v2666 = vsub.f32 %v2016, %v2665
    %2667 = vmatprep.subr.mxu0 %v2666
    %v2668 = vand.u32 %v2015, 4294901760
    %v2669 = vsub.f32 %v2015, %v2668
    %2670 = vmatpush1.msra.mxu0 %v2669
    %v2671 = vand.u32 %v2018, 4294901760
    %v2672 = vsub.f32 %v2018, %v2671
    %2673 = vmatprep.subr.mxu0 %v2672
    %v2674 = vand.u32 %v2017, 4294901760
    %v2675 = vsub.f32 %v2017, %v2674
    %2676 = vmatpush1.msra.mxu0 %v2675
    %v2677 = vand.u32 %v2020, 4294901760
    %v2678 = vsub.f32 %v2020, %v2677
    %2679 = vmatprep.subr.mxu0 %v2678
    %v2680 = vand.u32 %v2019, 4294901760
    %v2681 = vsub.f32 %v2019, %v2680
    %2682 = vmatpush1.msra.mxu0 %v2681
    %v2683 = vand.u32 %v2022, 4294901760
    %v2684 = vsub.f32 %v2022, %v2683
    %2685 = vmatprep.subr.mxu0 %v2684
    %v2686 = vand.u32 %v2021, 4294901760
    %v2687 = vsub.f32 %v2021, %v2686
    %2688 = vmatpush1.msra.mxu0 %v2687
    %v2689 = vand.u32 %v2024, 4294901760
    %v2690 = vsub.f32 %v2024, %v2689
    %2691 = vmatprep.subr.mxu0 %v2690
    %v2692 = vand.u32 %v2023, 4294901760
    %v2693 = vsub.f32 %v2023, %v2692
    %2694 = vmatpush1.msra.mxu0 %v2693
    %v2695 = vand.u32 %v2026, 4294901760
    %v2696 = vsub.f32 %v2026, %v2695
    %2697 = vmatprep.subr.mxu0 %v2696
    %v2698 = vand.u32 %v2025, 4294901760
    %v2699 = vsub.f32 %v2025, %v2698
    %2700 = vmatpush1.msra.mxu0 %v2699
    %v2701 = vand.u32 %v2028, 4294901760
    %v2702 = vsub.f32 %v2028, %v2701
    %2703 = vmatprep.subr.mxu0 %v2702
    %v2704 = vand.u32 %v2027, 4294901760
    %v2705 = vsub.f32 %v2027, %v2704
    %2706 = vmatpush1.msra.mxu0 %v2705
    %v2707 = vand.u32 %v2030, 4294901760
    %v2708 = vsub.f32 %v2030, %v2707
    %2709 = vmatprep.subr.mxu0 %v2708
    %v2710 = vand.u32 %v2029, 4294901760
    %v2711 = vsub.f32 %v2029, %v2710
    %2712 = vmatpush1.msra.mxu0 %v2711
    %v2713 = vand.u32 %v2032, 4294901760
    %v2714 = vsub.f32 %v2032, %v2713
    %2715 = vmatprep.subr.mxu0 %v2714
    %v2716 = vand.u32 %v2031, 4294901760
    %v2717 = vsub.f32 %v2031, %v2716
    %2718 = vmatpush1.msra.mxu0 %v2717
    %v2719 = vand.u32 %v2034, 4294901760
    %v2720 = vsub.f32 %v2034, %v2719
    %2721 = vmatprep.subr.mxu0 %v2720
    %v2722 = vand.u32 %v2033, 4294901760
    %v2723 = vsub.f32 %v2033, %v2722
    %2724 = vmatpush1.msra.mxu0 %v2723
    %v2725 = vand.u32 %v2036, 4294901760
    %v2726 = vsub.f32 %v2036, %v2725
    %2727 = vmatprep.subr.mxu0 %v2726
    %v2728 = vand.u32 %v2035, 4294901760
    %v2729 = vsub.f32 %v2035, %v2728
    %2730 = vmatpush1.msra.mxu0 %v2729
    %v2731 = vand.u32 %v2038, 4294901760
    %v2732 = vsub.f32 %v2038, %v2731
    %2733 = vmatprep.subr.mxu0 %v2732
    %v2734 = vand.u32 %v2037, 4294901760
    %v2735 = vsub.f32 %v2037, %v2734
    %2736 = vmatpush1.msra.mxu0 %v2735
    %v2737 = vand.u32 %v2040, 4294901760
    %v2738 = vsub.f32 %v2040, %v2737
    %2739 = vmatprep.subr.mxu0 %v2738
    %v2740 = vand.u32 %v2039, 4294901760
    %v2741 = vsub.f32 %v2039, %v2740
    %2742 = vmatpush1.msra.mxu0 %v2741
    %v2743 = vand.u32 %v2042, 4294901760
    %v2744 = vsub.f32 %v2042, %v2743
    %2745 = vmatprep.subr.mxu0 %v2744
    %v2746 = vand.u32 %v2041, 4294901760
    %v2747 = vsub.f32 %v2041, %v2746
    %2748 = vmatpush1.msra.mxu0 %v2747
    %v2749 = vand.u32 %v2044, 4294901760
    %v2750 = vsub.f32 %v2044, %v2749
    %2751 = vmatprep.subr.mxu0 %v2750
    %v2752 = vand.u32 %v2043, 4294901760
    %v2753 = vsub.f32 %v2043, %v2752
    %2754 = vmatpush1.msra.mxu0 %v2753
    %v2755 = vand.u32 %v2046, 4294901760
    %v2756 = vsub.f32 %v2046, %v2755
    %2757 = vmatprep.subr.mxu0 %v2756
    %v2758 = vand.u32 %v2045, 4294901760
    %v2759 = vsub.f32 %v2045, %v2758
    %2760 = vmatpush1.msra.mxu0 %v2759
    %v2761 = vand.u32 %v2048, 4294901760
    %v2762 = vsub.f32 %v2048, %v2761
    %2763 = vmatprep.subr.mxu0 %v2762
    %v2764 = vand.u32 %v2047, 4294901760
    %v2765 = vsub.f32 %v2047, %v2764
    %2766 = vmatpush1.msra.mxu0 %v2765
    %v2767 = vand.u32 %v2050, 4294901760
    %v2768 = vsub.f32 %v2050, %v2767
    %2769 = vmatprep.subr.mxu0 %v2768
    %v2770 = vand.u32 %v2049, 4294901760
    %v2771 = vsub.f32 %v2049, %v2770
    %2772 = vmatpush1.msra.mxu0 %v2771
    %v2773 = vand.u32 %v2052, 4294901760
    %v2774 = vsub.f32 %v2052, %v2773
    %2775 = vmatprep.subr.mxu0 %v2774
    %v2776 = vand.u32 %v2051, 4294901760
    %v2777 = vsub.f32 %v2051, %v2776
    %2778 = vmatpush1.msra.mxu0 %v2777
    %v2779 = vand.u32 %v2054, 4294901760
    %v2780 = vsub.f32 %v2054, %v2779
    %2781 = vmatprep.subr.mxu0 %v2780
    %v2782 = vand.u32 %v2053, 4294901760
    %v2783 = vsub.f32 %v2053, %v2782
    %2784 = vmatpush1.msra.mxu0 %v2783
    %v2785 = vand.u32 %v2056, 4294901760
    %v2786 = vsub.f32 %v2056, %v2785
    %2787 = vmatprep.subr.mxu0 %v2786
    %v2788 = vand.u32 %v2055, 4294901760
    %v2789 = vsub.f32 %v2055, %v2788
    %2790 = vmatpush1.msra.mxu0 %v2789
    %v2791 = vand.u32 %v2058, 4294901760
    %v2792 = vsub.f32 %v2058, %v2791
    %2793 = vmatprep.subr.mxu0 %v2792
    %v2794 = vand.u32 %v2057, 4294901760
    %v2795 = vsub.f32 %v2057, %v2794
    %2796 = vmatpush1.msra.mxu0 %v2795
    %v2797 = vand.u32 %v2060, 4294901760
    %v2798 = vsub.f32 %v2060, %v2797
    %2799 = vmatprep.subr.mxu0 %v2798
    %v2800 = vand.u32 %v2059, 4294901760
    %v2801 = vsub.f32 %v2059, %v2800
    %2802 = vmatpush1.msra.mxu0 %v2801
    %v2803 = vand.u32 %v2062, 4294901760
    %v2804 = vsub.f32 %v2062, %v2803
    %2805 = vmatprep.subr.mxu0 %v2804
    %v2806 = vand.u32 %v2061, 4294901760
    %v2807 = vsub.f32 %v2061, %v2806
    %2808 = vmatpush1.msra.mxu0 %v2807
    %v2809 = vand.u32 %v2064, 4294901760
    %v2810 = vsub.f32 %v2064, %v2809
    %2811 = vmatprep.subr.mxu0 %v2810
    %v2812 = vand.u32 %v2063, 4294901760
    %v2813 = vsub.f32 %v2063, %v2812
    %2814 = vmatpush1.msra.mxu0 %v2813
    %v2815 = vand.u32 %v2066, 4294901760
    %v2816 = vsub.f32 %v2066, %v2815
    %2817 = vmatprep.subr.mxu0 %v2816
    %v2818 = vand.u32 %v2065, 4294901760
    %v2819 = vsub.f32 %v2065, %v2818
    %2820 = vmatpush1.msra.mxu0 %v2819
    %v2821 = vand.u32 %v2001, 4294901760
    %v2822 = vsub.f32 %v2001, %v2821
    %2823 = vmatprep.mubr.f32.mxu0 %v2822
    %v2824 = vand.u32 %v1999, 4294901760
    %v2825 = vsub.f32 %v1999, %v2824
    %2826 = vmatmul.mubr.f32.gmra.mrb[0].mxu0 %v2825
    %v2827 = vpop.f32.mrb[0].mxu0
    %v2828 = vadd.f32 %v2617, %v2827
    %v2829 = vpop.f32.mrb[0].mxu0
    %v2830 = vadd.f32 %v2619, %v2829
    %v2831 = vand.u32 %v2002, 4294901760
    %v2832 = vsub.f32 %v2002, %v2831
    %2833 = vmatprep.mubr.f32.mxu0 %v2832
    %v2834 = vand.u32 %v2000, 4294901760
    %v2835 = vsub.f32 %v2000, %v2834
    %2836 = vmatmul.mubr.f32.gmra.mrb[0].mxu0 %v2835
    %v2837 = vpop.f32.mrb[0].mxu0
    %v2838 = vadd.f32 %v2625, %v2837
    %v2839 = vpop.f32.mrb[0].mxu0
    %v2840 = vadd.f32 %v2627, %v2839
    %2841 = vdwg.mxu0
    %v2842 = vand.u32 %v2004, 4294901760
    %2843 = vmatprep.subr.mxu0 %v2842
    %v2844 = vand.u32 %v2003, 4294901760
    %2845 = vmatpush1.msra.mxu0 %v2844
    %v2846 = vand.u32 %v2006, 4294901760
    %2847 = vmatprep.subr.mxu0 %v2846
    %v2848 = vand.u32 %v2005, 4294901760
    %2849 = vmatpush1.msra.mxu0 %v2848
    %v2850 = vand.u32 %v2008, 4294901760
    %2851 = vmatprep.subr.mxu0 %v2850
    %v2852 = vand.u32 %v2007, 4294901760
    %2853 = vmatpush1.msra.mxu0 %v2852
    %v2854 = vand.u32 %v2010, 4294901760
    %2855 = vmatprep.subr.mxu0 %v2854
    %v2856 = vand.u32 %v2009, 4294901760
    %2857 = vmatpush1.msra.mxu0 %v2856
    %v2858 = vand.u32 %v2012, 4294901760
    %2859 = vmatprep.subr.mxu0 %v2858
    %v2860 = vand.u32 %v2011, 4294901760
    %2861 = vmatpush1.msra.mxu0 %v2860
    %v2862 = vand.u32 %v2014, 4294901760
    %2863 = vmatprep.subr.mxu0 %v2862
    %v2864 = vand.u32 %v2013, 4294901760
    %2865 = vmatpush1.msra.mxu0 %v2864
    %v2866 = vand.u32 %v2016, 4294901760
    %2867 = vmatprep.subr.mxu0 %v2866
    %v2868 = vand.u32 %v2015, 4294901760
    %2869 = vmatpush1.msra.mxu0 %v2868
    %v2870 = vand.u32 %v2018, 4294901760
    %2871 = vmatprep.subr.mxu0 %v2870
    %v2872 = vand.u32 %v2017, 4294901760
    %2873 = vmatpush1.msra.mxu0 %v2872
    %v2874 = vand.u32 %v2020, 4294901760
    %2875 = vmatprep.subr.mxu0 %v2874
    %v2876 = vand.u32 %v2019, 4294901760
    %2877 = vmatpush1.msra.mxu0 %v2876
    %v2878 = vand.u32 %v2022, 4294901760
    %2879 = vmatprep.subr.mxu0 %v2878
    %v2880 = vand.u32 %v2021, 4294901760
    %2881 = vmatpush1.msra.mxu0 %v2880
    %v2882 = vand.u32 %v2024, 4294901760
    %2883 = vmatprep.subr.mxu0 %v2882
    %v2884 = vand.u32 %v2023, 4294901760
    %2885 = vmatpush1.msra.mxu0 %v2884
    %v2886 = vand.u32 %v2026, 4294901760
    %2887 = vmatprep.subr.mxu0 %v2886
    %v2888 = vand.u32 %v2025, 4294901760
    %2889 = vmatpush1.msra.mxu0 %v2888
    %v2890 = vand.u32 %v2028, 4294901760
    %2891 = vmatprep.subr.mxu0 %v2890
    %v2892 = vand.u32 %v2027, 4294901760
    %2893 = vmatpush1.msra.mxu0 %v2892
    %v2894 = vand.u32 %v2030, 4294901760
    %2895 = vmatprep.subr.mxu0 %v2894
    %v2896 = vand.u32 %v2029, 4294901760
    %2897 = vmatpush1.msra.mxu0 %v2896
    %v2898 = vand.u32 %v2032, 4294901760
    %2899 = vmatprep.subr.mxu0 %v2898
    %v2900 = vand.u32 %v2031, 4294901760
    %2901 = vmatpush1.msra.mxu0 %v2900
    %v2902 = vand.u32 %v2034, 4294901760
    %2903 = vmatprep.subr.mxu0 %v2902
    %v2904 = vand.u32 %v2033, 4294901760
    %2905 = vmatpush1.msra.mxu0 %v2904
    %v2906 = vand.u32 %v2036, 4294901760
    %2907 = vmatprep.subr.mxu0 %v2906
    %v2908 = vand.u32 %v2035, 4294901760
    %2909 = vmatpush1.msra.mxu0 %v2908
    %v2910 = vand.u32 %v2038, 4294901760
    %2911 = vmatprep.subr.mxu0 %v2910
    %v2912 = vand.u32 %v2037, 4294901760
    %2913 = vmatpush1.msra.mxu0 %v2912
    %v2914 = vand.u32 %v2040, 4294901760
    %2915 = vmatprep.subr.mxu0 %v2914
    %v2916 = vand.u32 %v2039, 4294901760
    %2917 = vmatpush1.msra.mxu0 %v2916
    %v2918 = vand.u32 %v2042, 4294901760
    %2919 = vmatprep.subr.mxu0 %v2918
    %v2920 = vand.u32 %v2041, 4294901760
    %2921 = vmatpush1.msra.mxu0 %v2920
    %v2922 = vand.u32 %v2044, 4294901760
    %2923 = vmatprep.subr.mxu0 %v2922
    %v2924 = vand.u32 %v2043, 4294901760
    %2925 = vmatpush1.msra.mxu0 %v2924
    %v2926 = vand.u32 %v2046, 4294901760
    %2927 = vmatprep.subr.mxu0 %v2926
    %v2928 = vand.u32 %v2045, 4294901760
    %2929 = vmatpush1.msra.mxu0 %v2928
    %v2930 = vand.u32 %v2048, 4294901760
    %2931 = vmatprep.subr.mxu0 %v2930
    %v2932 = vand.u32 %v2047, 4294901760
    %2933 = vmatpush1.msra.mxu0 %v2932
    %v2934 = vand.u32 %v2050, 4294901760
    %2935 = vmatprep.subr.mxu0 %v2934
    %v2936 = vand.u32 %v2049, 4294901760
    %2937 = vmatpush1.msra.mxu0 %v2936
    %v2938 = vand.u32 %v2052, 4294901760
    %2939 = vmatprep.subr.mxu0 %v2938
    %v2940 = vand.u32 %v2051, 4294901760
    %2941 = vmatpush1.msra.mxu0 %v2940
    %v2942 = vand.u32 %v2054, 4294901760
    %2943 = vmatprep.subr.mxu0 %v2942
    %v2944 = vand.u32 %v2053, 4294901760
    %2945 = vmatpush1.msra.mxu0 %v2944
    %v2946 = vand.u32 %v2056, 4294901760
    %2947 = vmatprep.subr.mxu0 %v2946
    %v2948 = vand.u32 %v2055, 4294901760
    %2949 = vmatpush1.msra.mxu0 %v2948
    %v2950 = vand.u32 %v2058, 4294901760
    %2951 = vmatprep.subr.mxu0 %v2950
    %v2952 = vand.u32 %v2057, 4294901760
    %2953 = vmatpush1.msra.mxu0 %v2952
    %v2954 = vand.u32 %v2060, 4294901760
    %2955 = vmatprep.subr.mxu0 %v2954
    %v2956 = vand.u32 %v2059, 4294901760
    %2957 = vmatpush1.msra.mxu0 %v2956
    %v2958 = vand.u32 %v2062, 4294901760
    %2959 = vmatprep.subr.mxu0 %v2958
    %v2960 = vand.u32 %v2061, 4294901760
    %2961 = vmatpush1.msra.mxu0 %v2960
    %v2962 = vand.u32 %v2064, 4294901760
    %2963 = vmatprep.subr.mxu0 %v2962
    %v2964 = vand.u32 %v2063, 4294901760
    %2965 = vmatpush1.msra.mxu0 %v2964
    %v2966 = vand.u32 %v2066, 4294901760
    %2967 = vmatprep.subr.mxu0 %v2966
    %v2968 = vand.u32 %v2065, 4294901760
    %2969 = vmatpush1.msra.mxu0 %v2968
    %v2970 = vand.u32 %v2001, 4294901760
    %v2971 = vsub.f32 %v2001, %v2970
    %v2972 = vand.u32 %v2971, 4294901760
    %2973 = vmatprep.mubr.f32.mxu0 %v2972
    %v2974 = vand.u32 %v1999, 4294901760
    %v2975 = vsub.f32 %v1999, %v2974
    %v2976 = vand.u32 %v2975, 4294901760
    %2977 = vmatmul.mubr.f32.gmra.mrb[0].mxu0 %v2976
    %v2978 = vpop.f32.mrb[0].mxu0
    %v2979 = vadd.f32 %v2828, %v2978
    %v2980 = vpop.f32.mrb[0].mxu0
    %v2981 = vadd.f32 %v2830, %v2980
    %v2982 = vand.u32 %v2002, 4294901760
    %v2983 = vsub.f32 %v2002, %v2982
    %v2984 = vand.u32 %v2983, 4294901760
    %2985 = vmatprep.mubr.f32.mxu0 %v2984
    %v2986 = vand.u32 %v2000, 4294901760
    %v2987 = vsub.f32 %v2000, %v2986
    %v2988 = vand.u32 %v2987, 4294901760
    %2989 = vmatmul.mubr.f32.gmra.mrb[0].mxu0 %v2988
    %v2990 = vpop.f32.mrb[0].mxu0
    %v2991 = vadd.f32 %v2838, %v2990
    %v2992 = vpop.f32.mrb[0].mxu0
    %v2993 = vadd.f32 %v2840, %v2992
    %2994 = vdwg.mxu0
    %v2995 = vand.u32 %v2004, 4294901760
    %v2996 = vsub.f32 %v2004, %v2995
    %v2997 = vand.u32 %v2996, 4294901760
    %2998 = vmatprep.subr.mxu0 %v2997
    %v2999 = vand.u32 %v2003, 4294901760
    %v3000 = vsub.f32 %v2003, %v2999
    %v3001 = vand.u32 %v3000, 4294901760
    %3002 = vmatpush1.msra.mxu0 %v3001
    %v3003 = vand.u32 %v2006, 4294901760
    %v3004 = vsub.f32 %v2006, %v3003
    %v3005 = vand.u32 %v3004, 4294901760
    %3006 = vmatprep.subr.mxu0 %v3005
    %v3007 = vand.u32 %v2005, 4294901760
    %v3008 = vsub.f32 %v2005, %v3007
    %v3009 = vand.u32 %v3008, 4294901760
    %3010 = vmatpush1.msra.mxu0 %v3009
    %v3011 = vand.u32 %v2008, 4294901760
    %v3012 = vsub.f32 %v2008, %v3011
    %v3013 = vand.u32 %v3012, 4294901760
    %3014 = vmatprep.subr.mxu0 %v3013
    %v3015 = vand.u32 %v2007, 4294901760
    %v3016 = vsub.f32 %v2007, %v3015
    %v3017 = vand.u32 %v3016, 4294901760
    %3018 = vmatpush1.msra.mxu0 %v3017
    %v3019 = vand.u32 %v2010, 4294901760
    %v3020 = vsub.f32 %v2010, %v3019
    %v3021 = vand.u32 %v3020, 4294901760
    %3022 = vmatprep.subr.mxu0 %v3021
    %v3023 = vand.u32 %v2009, 4294901760
    %v3024 = vsub.f32 %v2009, %v3023
    %v3025 = vand.u32 %v3024, 4294901760
    %3026 = vmatpush1.msra.mxu0 %v3025
    %v3027 = vand.u32 %v2012, 4294901760
    %v3028 = vsub.f32 %v2012, %v3027
    %v3029 = vand.u32 %v3028, 4294901760
    %3030 = vmatprep.subr.mxu0 %v3029
    %v3031 = vand.u32 %v2011, 4294901760
    %v3032 = vsub.f32 %v2011, %v3031
    %v3033 = vand.u32 %v3032, 4294901760
    %3034 = vmatpush1.msra.mxu0 %v3033
    %v3035 = vand.u32 %v2014, 4294901760
    %v3036 = vsub.f32 %v2014, %v3035
    %v3037 = vand.u32 %v3036, 4294901760
    %3038 = vmatprep.subr.mxu0 %v3037
    %v3039 = vand.u32 %v2013, 4294901760
    %v3040 = vsub.f32 %v2013, %v3039
    %v3041 = vand.u32 %v3040, 4294901760
    %3042 = vmatpush1.msra.mxu0 %v3041
    %v3043 = vand.u32 %v2016, 4294901760
    %v3044 = vsub.f32 %v2016, %v3043
    %v3045 = vand.u32 %v3044, 4294901760
    %3046 = vmatprep.subr.mxu0 %v3045
    %v3047 = vand.u32 %v2015, 4294901760
    %v3048 = vsub.f32 %v2015, %v3047
    %v3049 = vand.u32 %v3048, 4294901760
    %3050 = vmatpush1.msra.mxu0 %v3049
    %v3051 = vand.u32 %v2018, 4294901760
    %v3052 = vsub.f32 %v2018, %v3051
    %v3053 = vand.u32 %v3052, 4294901760
    %3054 = vmatprep.subr.mxu0 %v3053
    %v3055 = vand.u32 %v2017, 4294901760
    %v3056 = vsub.f32 %v2017, %v3055
    %v3057 = vand.u32 %v3056, 4294901760
    %3058 = vmatpush1.msra.mxu0 %v3057
    %v3059 = vand.u32 %v2020, 4294901760
    %v3060 = vsub.f32 %v2020, %v3059
    %v3061 = vand.u32 %v3060, 4294901760
    %3062 = vmatprep.subr.mxu0 %v3061
    %v3063 = vand.u32 %v2019, 4294901760
    %v3064 = vsub.f32 %v2019, %v3063
    %v3065 = vand.u32 %v3064, 4294901760
    %3066 = vmatpush1.msra.mxu0 %v3065
    %v3067 = vand.u32 %v2022, 4294901760
    %v3068 = vsub.f32 %v2022, %v3067
    %v3069 = vand.u32 %v3068, 4294901760
    %3070 = vmatprep.subr.mxu0 %v3069
    %v3071 = vand.u32 %v2021, 4294901760
    %v3072 = vsub.f32 %v2021, %v3071
    %v3073 = vand.u32 %v3072, 4294901760
    %3074 = vmatpush1.msra.mxu0 %v3073
    %v3075 = vand.u32 %v2024, 4294901760
    %v3076 = vsub.f32 %v2024, %v3075
    %v3077 = vand.u32 %v3076, 4294901760
    %3078 = vmatprep.subr.mxu0 %v3077
    %v3079 = vand.u32 %v2023, 4294901760
    %v3080 = vsub.f32 %v2023, %v3079
    %v3081 = vand.u32 %v3080, 4294901760
    %3082 = vmatpush1.msra.mxu0 %v3081
    %v3083 = vand.u32 %v2026, 4294901760
    %v3084 = vsub.f32 %v2026, %v3083
    %v3085 = vand.u32 %v3084, 4294901760
    %3086 = vmatprep.subr.mxu0 %v3085
    %v3087 = vand.u32 %v2025, 4294901760
    %v3088 = vsub.f32 %v2025, %v3087
    %v3089 = vand.u32 %v3088, 4294901760
    %3090 = vmatpush1.msra.mxu0 %v3089
    %v3091 = vand.u32 %v2028, 4294901760
    %v3092 = vsub.f32 %v2028, %v3091
    %v3093 = vand.u32 %v3092, 4294901760
    %3094 = vmatprep.subr.mxu0 %v3093
    %v3095 = vand.u32 %v2027, 4294901760
    %v3096 = vsub.f32 %v2027, %v3095
    %v3097 = vand.u32 %v3096, 4294901760
    %3098 = vmatpush1.msra.mxu0 %v3097
    %v3099 = vand.u32 %v2030, 4294901760
    %v3100 = vsub.f32 %v2030, %v3099
    %v3101 = vand.u32 %v3100, 4294901760
    %3102 = vmatprep.subr.mxu0 %v3101
    %v3103 = vand.u32 %v2029, 4294901760
    %v3104 = vsub.f32 %v2029, %v3103
    %v3105 = vand.u32 %v3104, 4294901760
    %3106 = vmatpush1.msra.mxu0 %v3105
    %v3107 = vand.u32 %v2032, 4294901760
    %v3108 = vsub.f32 %v2032, %v3107
    %v3109 = vand.u32 %v3108, 4294901760
    %3110 = vmatprep.subr.mxu0 %v3109
    %v3111 = vand.u32 %v2031, 4294901760
    %v3112 = vsub.f32 %v2031, %v3111
    %v3113 = vand.u32 %v3112, 4294901760
    %3114 = vmatpush1.msra.mxu0 %v3113
    %v3115 = vand.u32 %v2034, 4294901760
    %v3116 = vsub.f32 %v2034, %v3115
    %v3117 = vand.u32 %v3116, 4294901760
    %3118 = vmatprep.subr.mxu0 %v3117
    %v3119 = vand.u32 %v2033, 4294901760
    %v3120 = vsub.f32 %v2033, %v3119
    %v3121 = vand.u32 %v3120, 4294901760
    %3122 = vmatpush1.msra.mxu0 %v3121
    %v3123 = vand.u32 %v2036, 4294901760
    %v3124 = vsub.f32 %v2036, %v3123
    %v3125 = vand.u32 %v3124, 4294901760
    %3126 = vmatprep.subr.mxu0 %v3125
    %v3127 = vand.u32 %v2035, 4294901760
    %v3128 = vsub.f32 %v2035, %v3127
    %v3129 = vand.u32 %v3128, 4294901760
    %3130 = vmatpush1.msra.mxu0 %v3129
    %v3131 = vand.u32 %v2038, 4294901760
    %v3132 = vsub.f32 %v2038, %v3131
    %v3133 = vand.u32 %v3132, 4294901760
    %3134 = vmatprep.subr.mxu0 %v3133
    %v3135 = vand.u32 %v2037, 4294901760
    %v3136 = vsub.f32 %v2037, %v3135
    %v3137 = vand.u32 %v3136, 4294901760
    %3138 = vmatpush1.msra.mxu0 %v3137
    %v3139 = vand.u32 %v2040, 4294901760
    %v3140 = vsub.f32 %v2040, %v3139
    %v3141 = vand.u32 %v3140, 4294901760
    %3142 = vmatprep.subr.mxu0 %v3141
    %v3143 = vand.u32 %v2039, 4294901760
    %v3144 = vsub.f32 %v2039, %v3143
    %v3145 = vand.u32 %v3144, 4294901760
    %3146 = vmatpush1.msra.mxu0 %v3145
    %v3147 = vand.u32 %v2042, 4294901760
    %v3148 = vsub.f32 %v2042, %v3147
    %v3149 = vand.u32 %v3148, 4294901760
    %3150 = vmatprep.subr.mxu0 %v3149
    %v3151 = vand.u32 %v2041, 4294901760
    %v3152 = vsub.f32 %v2041, %v3151
    %v3153 = vand.u32 %v3152, 4294901760
    %3154 = vmatpush1.msra.mxu0 %v3153
    %v3155 = vand.u32 %v2044, 4294901760
    %v3156 = vsub.f32 %v2044, %v3155
    %v3157 = vand.u32 %v3156, 4294901760
    %3158 = vmatprep.subr.mxu0 %v3157
    %v3159 = vand.u32 %v2043, 4294901760
    %v3160 = vsub.f32 %v2043, %v3159
    %v3161 = vand.u32 %v3160, 4294901760
    %3162 = vmatpush1.msra.mxu0 %v3161
    %v3163 = vand.u32 %v2046, 4294901760
    %v3164 = vsub.f32 %v2046, %v3163
    %v3165 = vand.u32 %v3164, 4294901760
    %3166 = vmatprep.subr.mxu0 %v3165
    %v3167 = vand.u32 %v2045, 4294901760
    %v3168 = vsub.f32 %v2045, %v3167
    %v3169 = vand.u32 %v3168, 4294901760
    %3170 = vmatpush1.msra.mxu0 %v3169
    %v3171 = vand.u32 %v2048, 4294901760
    %v3172 = vsub.f32 %v2048, %v3171
    %v3173 = vand.u32 %v3172, 4294901760
    %3174 = vmatprep.subr.mxu0 %v3173
    %v3175 = vand.u32 %v2047, 4294901760
    %v3176 = vsub.f32 %v2047, %v3175
    %v3177 = vand.u32 %v3176, 4294901760
    %3178 = vmatpush1.msra.mxu0 %v3177
    %v3179 = vand.u32 %v2050, 4294901760
    %v3180 = vsub.f32 %v2050, %v3179
    %v3181 = vand.u32 %v3180, 4294901760
    %3182 = vmatprep.subr.mxu0 %v3181
    %v3183 = vand.u32 %v2049, 4294901760
    %v3184 = vsub.f32 %v2049, %v3183
    %v3185 = vand.u32 %v3184, 4294901760
    %3186 = vmatpush1.msra.mxu0 %v3185
    %v3187 = vand.u32 %v2052, 4294901760
    %v3188 = vsub.f32 %v2052, %v3187
    %v3189 = vand.u32 %v3188, 4294901760
    %3190 = vmatprep.subr.mxu0 %v3189
    %v3191 = vand.u32 %v2051, 4294901760
    %v3192 = vsub.f32 %v2051, %v3191
    %v3193 = vand.u32 %v3192, 4294901760
    %3194 = vmatpush1.msra.mxu0 %v3193
    %v3195 = vand.u32 %v2054, 4294901760
    %v3196 = vsub.f32 %v2054, %v3195
    %v3197 = vand.u32 %v3196, 4294901760
    %3198 = vmatprep.subr.mxu0 %v3197
    %v3199 = vand.u32 %v2053, 4294901760
    %v3200 = vsub.f32 %v2053, %v3199
    %v3201 = vand.u32 %v3200, 4294901760
    %3202 = vmatpush1.msra.mxu0 %v3201
    %v3203 = vand.u32 %v2056, 4294901760
    %v3204 = vsub.f32 %v2056, %v3203
    %v3205 = vand.u32 %v3204, 4294901760
    %3206 = vmatprep.subr.mxu0 %v3205
    %v3207 = vand.u32 %v2055, 4294901760
    %v3208 = vsub.f32 %v2055, %v3207
    %v3209 = vand.u32 %v3208, 4294901760
    %3210 = vmatpush1.msra.mxu0 %v3209
    %v3211 = vand.u32 %v2058, 4294901760
    %v3212 = vsub.f32 %v2058, %v3211
    %v3213 = vand.u32 %v3212, 4294901760
    %3214 = vmatprep.subr.mxu0 %v3213
    %v3215 = vand.u32 %v2057, 4294901760
    %v3216 = vsub.f32 %v2057, %v3215
    %v3217 = vand.u32 %v3216, 4294901760
    %3218 = vmatpush1.msra.mxu0 %v3217
    %v3219 = vand.u32 %v2060, 4294901760
    %v3220 = vsub.f32 %v2060, %v3219
    %v3221 = vand.u32 %v3220, 4294901760
    %3222 = vmatprep.subr.mxu0 %v3221
    %v3223 = vand.u32 %v2059, 4294901760
    %v3224 = vsub.f32 %v2059, %v3223
    %v3225 = vand.u32 %v3224, 4294901760
    %3226 = vmatpush1.msra.mxu0 %v3225
    %v3227 = vand.u32 %v2062, 4294901760
    %v3228 = vsub.f32 %v2062, %v3227
    %v3229 = vand.u32 %v3228, 4294901760
    %3230 = vmatprep.subr.mxu0 %v3229
    %v3231 = vand.u32 %v2061, 4294901760
    %v3232 = vsub.f32 %v2061, %v3231
    %v3233 = vand.u32 %v3232, 4294901760
    %3234 = vmatpush1.msra.mxu0 %v3233
    %v3235 = vand.u32 %v2064, 4294901760
    %v3236 = vsub.f32 %v2064, %v3235
    %v3237 = vand.u32 %v3236, 4294901760
    %3238 = vmatprep.subr.mxu0 %v3237
    %v3239 = vand.u32 %v2063, 4294901760
    %v3240 = vsub.f32 %v2063, %v3239
    %v3241 = vand.u32 %v3240, 4294901760
    %3242 = vmatpush1.msra.mxu0 %v3241
    %v3243 = vand.u32 %v2066, 4294901760
    %v3244 = vsub.f32 %v2066, %v3243
    %v3245 = vand.u32 %v3244, 4294901760
    %3246 = vmatprep.subr.mxu0 %v3245
    %v3247 = vand.u32 %v2065, 4294901760
    %v3248 = vsub.f32 %v2065, %v3247
    %v3249 = vand.u32 %v3248, 4294901760
    %3250 = vmatpush1.msra.mxu0 %v3249
    %v3251 = vand.u32 %v2001, 4294901760
    %3252 = vmatprep.mubr.f32.mxu0 %v3251
    %v3253 = vand.u32 %v1999, 4294901760
    %3254 = vmatmul.mubr.f32.gmra.mrb[0].mxu0 %v3253
    %v3255 = vpop.f32.mrb[0].mxu0
    %v3256 = vadd.f32 %v2979, %v3255
    %v3257 = vpop.f32.mrb[0].mxu0
    %v3258 = vadd.f32 %v2981, %v3257
    %v3259 = vand.u32 %v2002, 4294901760
    %3260 = vmatprep.mubr.f32.mxu0 %v3259
    %v3261 = vand.u32 %v2000, 4294901760
    %3262 = vmatmul.mubr.f32.gmra.mrb[0].mxu0 %v3261
    %v3263 = vpop.f32.mrb[0].mxu0
    %v3264 = vadd.f32 %v2991, %v3263
    %v3265 = vpop.f32.mrb[0].mxu0
    %v3266 = vadd.f32 %v2993, %v3265
    %3267 = vdwg.mxu0
    %v3268 = vand.u32 %v2004, 4294901760
    %3269 = vmatprep.subr.mxu0 %v3268
    %v3270 = vand.u32 %v2003, 4294901760
    %3271 = vmatpush1.msra.mxu0 %v3270
    %v3272 = vand.u32 %v2006, 4294901760
    %3273 = vmatprep.subr.mxu0 %v3272
    %v3274 = vand.u32 %v2005, 4294901760
    %3275 = vmatpush1.msra.mxu0 %v3274
    %v3276 = vand.u32 %v2008, 4294901760
    %3277 = vmatprep.subr.mxu0 %v3276
    %v3278 = vand.u32 %v2007, 4294901760
    %3279 = vmatpush1.msra.mxu0 %v3278
    %v3280 = vand.u32 %v2010, 4294901760
    %3281 = vmatprep.subr.mxu0 %v3280
    %v3282 = vand.u32 %v2009, 4294901760
    %3283 = vmatpush1.msra.mxu0 %v3282
    %v3284 = vand.u32 %v2012, 4294901760
    %3285 = vmatprep.subr.mxu0 %v3284
    %v3286 = vand.u32 %v2011, 4294901760
    %3287 = vmatpush1.msra.mxu0 %v3286
    %v3288 = vand.u32 %v2014, 4294901760
    %3289 = vmatprep.subr.mxu0 %v3288
    %v3290 = vand.u32 %v2013, 4294901760
    %3291 = vmatpush1.msra.mxu0 %v3290
    %v3292 = vand.u32 %v2016, 4294901760
    %3293 = vmatprep.subr.mxu0 %v3292
    %v3294 = vand.u32 %v2015, 4294901760
    %3295 = vmatpush1.msra.mxu0 %v3294
    %v3296 = vand.u32 %v2018, 4294901760
    %3297 = vmatprep.subr.mxu0 %v3296
    %v3298 = vand.u32 %v2017, 4294901760
    %3299 = vmatpush1.msra.mxu0 %v3298
    %v3300 = vand.u32 %v2020, 4294901760
    %3301 = vmatprep.subr.mxu0 %v3300
    %v3302 = vand.u32 %v2019, 4294901760
    %3303 = vmatpush1.msra.mxu0 %v3302
    %v3304 = vand.u32 %v2022, 4294901760
    %3305 = vmatprep.subr.mxu0 %v3304
    %v3306 = vand.u32 %v2021, 4294901760
    %3307 = vmatpush1.msra.mxu0 %v3306
    %v3308 = vand.u32 %v2024, 4294901760
    %3309 = vmatprep.subr.mxu0 %v3308
    %v3310 = vand.u32 %v2023, 4294901760
    %3311 = vmatpush1.msra.mxu0 %v3310
    %v3312 = vand.u32 %v2026, 4294901760
    %3313 = vmatprep.subr.mxu0 %v3312
    %v3314 = vand.u32 %v2025, 4294901760
    %3315 = vmatpush1.msra.mxu0 %v3314
    %v3316 = vand.u32 %v2028, 4294901760
    %3317 = vmatprep.subr.mxu0 %v3316
    %v3318 = vand.u32 %v2027, 4294901760
    %3319 = vmatpush1.msra.mxu0 %v3318
    %v3320 = vand.u32 %v2030, 4294901760
    %3321 = vmatprep.subr.mxu0 %v3320
    %v3322 = vand.u32 %v2029, 4294901760
    %3323 = vmatpush1.msra.mxu0 %v3322
    %v3324 = vand.u32 %v2032, 4294901760
    %3325 = vmatprep.subr.mxu0 %v3324
    %v3326 = vand.u32 %v2031, 4294901760
    %3327 = vmatpush1.msra.mxu0 %v3326
    %v3328 = vand.u32 %v2034, 4294901760
    %3329 = vmatprep.subr.mxu0 %v3328
    %v3330 = vand.u32 %v2033, 4294901760
    %3331 = vmatpush1.msra.mxu0 %v3330
    %v3332 = vand.u32 %v2036, 4294901760
    %3333 = vmatprep.subr.mxu0 %v3332
    %v3334 = vand.u32 %v2035, 4294901760
    %3335 = vmatpush1.msra.mxu0 %v3334
    %v3336 = vand.u32 %v2038, 4294901760
    %3337 = vmatprep.subr.mxu0 %v3336
    %v3338 = vand.u32 %v2037, 4294901760
    %3339 = vmatpush1.msra.mxu0 %v3338
    %v3340 = vand.u32 %v2040, 4294901760
    %3341 = vmatprep.subr.mxu0 %v3340
    %v3342 = vand.u32 %v2039, 4294901760
    %3343 = vmatpush1.msra.mxu0 %v3342
    %v3344 = vand.u32 %v2042, 4294901760
    %3345 = vmatprep.subr.mxu0 %v3344
    %v3346 = vand.u32 %v2041, 4294901760
    %3347 = vmatpush1.msra.mxu0 %v3346
    %v3348 = vand.u32 %v2044, 4294901760
    %3349 = vmatprep.subr.mxu0 %v3348
    %v3350 = vand.u32 %v2043, 4294901760
    %3351 = vmatpush1.msra.mxu0 %v3350
    %v3352 = vand.u32 %v2046, 4294901760
    %3353 = vmatprep.subr.mxu0 %v3352
    %v3354 = vand.u32 %v2045, 4294901760
    %3355 = vmatpush1.msra.mxu0 %v3354
    %v3356 = vand.u32 %v2048, 4294901760
    %3357 = vmatprep.subr.mxu0 %v3356
    %v3358 = vand.u32 %v2047, 4294901760
    %3359 = vmatpush1.msra.mxu0 %v3358
    %v3360 = vand.u32 %v2050, 4294901760
    %3361 = vmatprep.subr.mxu0 %v3360
    %v3362 = vand.u32 %v2049, 4294901760
    %3363 = vmatpush1.msra.mxu0 %v3362
    %v3364 = vand.u32 %v2052, 4294901760
    %3365 = vmatprep.subr.mxu0 %v3364
    %v3366 = vand.u32 %v2051, 4294901760
    %3367 = vmatpush1.msra.mxu0 %v3366
    %v3368 = vand.u32 %v2054, 4294901760
    %3369 = vmatprep.subr.mxu0 %v3368
    %v3370 = vand.u32 %v2053, 4294901760
    %3371 = vmatpush1.msra.mxu0 %v3370
    %v3372 = vand.u32 %v2056, 4294901760
    %3373 = vmatprep.subr.mxu0 %v3372
    %v3374 = vand.u32 %v2055, 4294901760
    %3375 = vmatpush1.msra.mxu0 %v3374
    %v3376 = vand.u32 %v2058, 4294901760
    %3377 = vmatprep.subr.mxu0 %v3376
    %v3378 = vand.u32 %v2057, 4294901760
    %3379 = vmatpush1.msra.mxu0 %v3378
    %v3380 = vand.u32 %v2060, 4294901760
    %3381 = vmatprep.subr.mxu0 %v3380
    %v3382 = vand.u32 %v2059, 4294901760
    %3383 = vmatpush1.msra.mxu0 %v3382
    %v3384 = vand.u32 %v2062, 4294901760
    %3385 = vmatprep.subr.mxu0 %v3384
    %v3386 = vand.u32 %v2061, 4294901760
    %3387 = vmatpush1.msra.mxu0 %v3386
    %v3388 = vand.u32 %v2064, 4294901760
    %3389 = vmatprep.subr.mxu0 %v3388
    %v3390 = vand.u32 %v2063, 4294901760
    %3391 = vmatpush1.msra.mxu0 %v3390
    %v3392 = vand.u32 %v2066, 4294901760
    %3393 = vmatprep.subr.mxu0 %v3392
    %v3394 = vand.u32 %v2065, 4294901760
    %3395 = vmatpush1.msra.mxu0 %v3394
    %v3396 = vand.u32 %v2001, 4294901760
    %3397 = vmatprep.mubr.f32.mxu0 %v3396
    %v3398 = vand.u32 %v1999, 4294901760
    %3399 = vmatmul.mubr.f32.gmra.mrb[0].mxu0 %v3398
    %v3400 = vpop.f32.mrb[0].mxu0
    %v3401 = vadd.f32 %v3256, %v3400
    %v3402 = vpop.f32.mrb[0].mxu0
    %v3403 = vadd.f32 %v3258, %v3402
    %v3404 = vand.u32 %v2002, 4294901760
    %3405 = vmatprep.mubr.f32.mxu0 %v3404
    %v3406 = vand.u32 %v2000, 4294901760
    %3407 = vmatmul.mubr.f32.gmra.mrb[0].mxu0 %v3406
    %v3408 = vpop.f32.mrb[0].mxu0
    %v3409 = vadd.f32 %v3264, %v3408
    %v3410 = vpop.f32.mrb[0].mxu0
    %v3411 = vadd.f32 %v3266, %v3410
    %3412 = vdwg.mxu0
    %v3413 = vld [vmem:[%s13] sm:$0x3]
    %v3415 = vlaneseq
    %v3416 = vshrl.u32 %v3415, 7
    %v3417 = vsub.s32 0, %v3416
    %v3418 = vrot.slane %v3413, %v3417
    %v3419 = vlaneseq
    %v3420 = vshrl.u32 %v3419, 7
    %v3421 = vsub.s32 1, %v3420
    %v3422 = vrot.slane %v3413, %v3421
    %v3425 = vmul.f32 %v3401, %v3418
    %v3426 = vmul.f32 %v3403, %v3422
    %v3427 = vmul.f32 %v3409, %v3418
    %v3428 = vmul.f32 %v3411, %v3422
    %v3429 = vld [vmem:[%s14] sm:$0x3]
    %v3431 = vlaneseq
    %v3432 = vshrl.u32 %v3431, 7
    %v3433 = vsub.s32 0, %v3432
    %v3434 = vrot.slane %v3429, %v3433
    %v3435 = vlaneseq
    %v3436 = vshrl.u32 %v3435, 7
    %v3437 = vsub.s32 1, %v3436
    %v3438 = vrot.slane %v3429, %v3437
    %v3441 = vadd.f32 %v3425, %v3434
    %v3442 = vadd.f32 %v3426, %v3438
    %v3443 = vadd.f32 %v3427, %v3434
    %v3444 = vadd.f32 %v3428, %v3438
    %vm3445 = vcmp.ge.f32.partialorder %v3441, 0.0
    %vm3446 = vcmp.ge.f32.partialorder %v3442, 0.0
    %vm3447 = vcmp.ge.f32.partialorder %v3443, 0.0
    %vm3448 = vcmp.ge.f32.partialorder %v3444, 0.0
    %v3449 = vld [vmem:[#allocation4] sm:$0x1]
    %v3451 = vlaneseq
    %v3452 = vshrl.u32 %v3451, 7
    %v3453 = vsub.s32 0, %v3452
    %v3454 = vrot.slane %v3449, %v3453
    %3455 = vset.pattern.permute.xlu0 0
    %3456 = vperm.xlu0 %3455, %v3454
    %v3457 = vpop.permute.xlu0 %3456
    %v3459 = vmul.f32 %v3457, %v3441
    %v3460 = vmul.f32 %v3457, %v3442
    %v3461 = vmul.f32 %v3457, %v3443
    %v3462 = vmul.f32 %v3457, %v3444
    %v3463 = vsel %vm3445, %v3441, %v3459
    %v3464 = vsel %vm3446, %v3442, %v3460
    %v3465 = vsel %vm3447, %v3443, %v3461
    %v3466 = vsel %vm3448, %v3444, %v3462
    %v3467 = vsub.f32 %v3463, %v3464
    %v3468 = vsub.f32 %v3465, %v3466
    %v3469 = vadd.f32 %v3463, %v3464
    %v3470 = vadd.f32 %v3465, %v3466
    %v3473 = vrot.slane %v3467, 1
    %v3474 = vrot.slane %v3468, 1
    %v3475 = vsel %vm121, %v3473, %v3474
    %v3478 = vsel %vm121, %v3474, 0.0
    %v3479 = vmul.f32 %v3475, %v131
    %v3480 = vmul.f32 %v3478, %v136
    %v3483 = vrot.slane %v3469, 1
    %v3484 = vrot.slane %v3470, 1
    %v3485 = vsel %vm121, %v3483, %v3484
    %v3488 = vsel %vm121, %v3484, 0.0
    %v3489 = vmul.f32 %v3485, %v131
    %v3490 = vmul.f32 %v3488, %v136
    %v3491 = vld [vmem:[#allocation9] sm:$0xff]
    %v3492 = vld [vmem:[#allocation9 + $0x8] sm:$0xff]
    %v3493 = vld [vmem:[#allocation9 + $0x10] sm:$0xff]
    %v3494 = vld [vmem:[#allocation9 + $0x18] sm:$0xff]
    %v3495 = vld [vmem:[#allocation9 + $0x20] sm:$0xff]
    %v3496 = vld [vmem:[#allocation9 + $0x28] sm:$0xff]
    %v3497 = vld [vmem:[#allocation9 + $0x30] sm:$0xff]
    %v3498 = vld [vmem:[#allocation9 + $0x38] sm:$0xff]
    %v3499 = vld [vmem:[#allocation9 + $0x40] sm:$0xff]
    %v3500 = vld [vmem:[#allocation9 + $0x48] sm:$0xff]
    %v3501 = vld [vmem:[#allocation9 + $0x50] sm:$0xff]
    %v3502 = vld [vmem:[#allocation9 + $0x58] sm:$0xff]
    %v3503 = vld [vmem:[#allocation9 + $0x60] sm:$0xff]
    %v3504 = vld [vmem:[#allocation9 + $0x68] sm:$0xff]
    %v3505 = vld [vmem:[#allocation9 + $0x70] sm:$0xff]
    %v3506 = vld [vmem:[#allocation9 + $0x78] sm:$0xff]
    %v3507 = vld [vmem:[#allocation9 + $0x80] sm:$0xff]
    %v3508 = vld [vmem:[#allocation9 + $0x88] sm:$0xff]
    %v3509 = vld [vmem:[#allocation9 + $0x90] sm:$0xff]
    %v3510 = vld [vmem:[#allocation9 + $0x98] sm:$0xff]
    %v3511 = vld [vmem:[#allocation9 + $0xa0] sm:$0xff]
    %v3512 = vld [vmem:[#allocation9 + $0xa8] sm:$0xff]
    %v3513 = vld [vmem:[#allocation9 + $0xb0] sm:$0xff]
    %v3514 = vld [vmem:[#allocation9 + $0xb8] sm:$0xff]
    %v3515 = vld [vmem:[#allocation9 + $0xc0] sm:$0xff]
    %v3516 = vld [vmem:[#allocation9 + $0xc8] sm:$0xff]
    %v3517 = vld [vmem:[#allocation9 + $0xd0] sm:$0xff]
    %v3518 = vld [vmem:[#allocation9 + $0xd8] sm:$0xff]
    %v3519 = vld [vmem:[#allocation9 + $0xe0] sm:$0xff]
    %v3520 = vld [vmem:[#allocation9 + $0xe8] sm:$0xff]
    %v3521 = vld [vmem:[#allocation9 + $0xf0] sm:$0xff]
    %v3522 = vld [vmem:[#allocation9 + $0xf8] sm:$0xff]
    %v3523 = vld [vmem:[#allocation9 + $0x100] sm:$0xff]
    %v3524 = vld [vmem:[#allocation9 + $0x108] sm:$0xff]
    %v3525 = vld [vmem:[#allocation9 + $0x110] sm:$0xff]
    %v3526 = vld [vmem:[#allocation9 + $0x118] sm:$0xff]
    %v3527 = vld [vmem:[#allocation9 + $0x120] sm:$0xff]
    %v3528 = vld [vmem:[#allocation9 + $0x128] sm:$0xff]
    %v3529 = vld [vmem:[#allocation9 + $0x130] sm:$0xff]
    %v3530 = vld [vmem:[#allocation9 + $0x138] sm:$0xff]
    %v3531 = vld [vmem:[#allocation9 + $0x140] sm:$0xff]
    %v3532 = vld [vmem:[#allocation9 + $0x148] sm:$0xff]
    %v3533 = vld [vmem:[#allocation9 + $0x150] sm:$0xff]
    %v3534 = vld [vmem:[#allocation9 + $0x158] sm:$0xff]
    %v3535 = vld [vmem:[#allocation9 + $0x160] sm:$0xff]
    %v3536 = vld [vmem:[#allocation9 + $0x168] sm:$0xff]
    %v3537 = vld [vmem:[#allocation9 + $0x170] sm:$0xff]
    %v3538 = vld [vmem:[#allocation9 + $0x178] sm:$0xff]
    %v3539 = vld [vmem:[#allocation9 + $0x180] sm:$0xff]
    %v3540 = vld [vmem:[#allocation9 + $0x188] sm:$0xff]
    %v3541 = vld [vmem:[#allocation9 + $0x190] sm:$0xff]
    %v3542 = vld [vmem:[#allocation9 + $0x198] sm:$0xff]
    %v3543 = vld [vmem:[#allocation9 + $0x1a0] sm:$0xff]
    %v3544 = vld [vmem:[#allocation9 + $0x1a8] sm:$0xff]
    %v3545 = vld [vmem:[#allocation9 + $0x1b0] sm:$0xff]
    %v3546 = vld [vmem:[#allocation9 + $0x1b8] sm:$0xff]
    %v3547 = vld [vmem:[#allocation9 + $0x1c0] sm:$0xff]
    %v3548 = vld [vmem:[#allocation9 + $0x1c8] sm:$0xff]
    %v3549 = vld [vmem:[#allocation9 + $0x1d0] sm:$0xff]
    %v3550 = vld [vmem:[#allocation9 + $0x1d8] sm:$0xff]
    %v3551 = vld [vmem:[#allocation9 + $0x1e0] sm:$0xff]
    %v3552 = vld [vmem:[#allocation9 + $0x1e8] sm:$0xff]
    %v3553 = vld [vmem:[#allocation9 + $0x1f0] sm:$0xff]
    %v3554 = vld [vmem:[#allocation9 + $0x1f8] sm:$0xff]
    %3555 = vmatprep.subr.mxu0 0.0
    %v3556 = vand.u32 %v3491, 4294901760
    %3557 = vmatpush1.msra.mxu0 %v3556
    %3558 = vmatprep.subr.mxu0 0.0
    %v3559 = vand.u32 %v3492, 4294901760
    %3560 = vmatpush1.msra.mxu0 %v3559
    %3561 = vmatprep.subr.mxu0 0.0
    %v3562 = vand.u32 %v3493, 4294901760
    %3563 = vmatpush1.msra.mxu0 %v3562
    %3564 = vmatprep.subr.mxu0 0.0
    %v3565 = vand.u32 %v3494, 4294901760
    %3566 = vmatpush1.msra.mxu0 %v3565
    %3567 = vmatprep.subr.mxu0 0.0
    %v3568 = vand.u32 %v3495, 4294901760
    %3569 = vmatpush1.msra.mxu0 %v3568
    %3570 = vmatprep.subr.mxu0 0.0
    %v3571 = vand.u32 %v3496, 4294901760
    %3572 = vmatpush1.msra.mxu0 %v3571
    %3573 = vmatprep.subr.mxu0 0.0
    %v3574 = vand.u32 %v3497, 4294901760
    %3575 = vmatpush1.msra.mxu0 %v3574
    %3576 = vmatprep.subr.mxu0 0.0
    %v3577 = vand.u32 %v3498, 4294901760
    %3578 = vmatpush1.msra.mxu0 %v3577
    %3579 = vmatprep.subr.mxu0 0.0
    %v3580 = vand.u32 %v3499, 4294901760
    %3581 = vmatpush1.msra.mxu0 %v3580
    %3582 = vmatprep.subr.mxu0 0.0
    %v3583 = vand.u32 %v3500, 4294901760
    %3584 = vmatpush1.msra.mxu0 %v3583
    %3585 = vmatprep.subr.mxu0 0.0
    %v3586 = vand.u32 %v3501, 4294901760
    %3587 = vmatpush1.msra.mxu0 %v3586
    %3588 = vmatprep.subr.mxu0 0.0
    %v3589 = vand.u32 %v3502, 4294901760
    %3590 = vmatpush1.msra.mxu0 %v3589
    %3591 = vmatprep.subr.mxu0 0.0
    %v3592 = vand.u32 %v3503, 4294901760
    %3593 = vmatpush1.msra.mxu0 %v3592
    %3594 = vmatprep.subr.mxu0 0.0
    %v3595 = vand.u32 %v3504, 4294901760
    %3596 = vmatpush1.msra.mxu0 %v3595
    %3597 = vmatprep.subr.mxu0 0.0
    %v3598 = vand.u32 %v3505, 4294901760
    %3599 = vmatpush1.msra.mxu0 %v3598
    %3600 = vmatprep.subr.mxu0 0.0
    %v3601 = vand.u32 %v3506, 4294901760
    %3602 = vmatpush1.msra.mxu0 %v3601
    %3603 = vmatprep.subr.mxu0 0.0
    %v3604 = vand.u32 %v3507, 4294901760
    %3605 = vmatpush1.msra.mxu0 %v3604
    %3606 = vmatprep.subr.mxu0 0.0
    %v3607 = vand.u32 %v3508, 4294901760
    %3608 = vmatpush1.msra.mxu0 %v3607
    %3609 = vmatprep.subr.mxu0 0.0
    %v3610 = vand.u32 %v3509, 4294901760
    %3611 = vmatpush1.msra.mxu0 %v3610
    %3612 = vmatprep.subr.mxu0 0.0
    %v3613 = vand.u32 %v3510, 4294901760
    %3614 = vmatpush1.msra.mxu0 %v3613
    %3615 = vmatprep.subr.mxu0 0.0
    %v3616 = vand.u32 %v3511, 4294901760
    %3617 = vmatpush1.msra.mxu0 %v3616
    %3618 = vmatprep.subr.mxu0 0.0
    %v3619 = vand.u32 %v3512, 4294901760
    %3620 = vmatpush1.msra.mxu0 %v3619
    %3621 = vmatprep.subr.mxu0 0.0
    %v3622 = vand.u32 %v3513, 4294901760
    %3623 = vmatpush1.msra.mxu0 %v3622
    %3624 = vmatprep.subr.mxu0 0.0
    %v3625 = vand.u32 %v3514, 4294901760
    %3626 = vmatpush1.msra.mxu0 %v3625
    %3627 = vmatprep.subr.mxu0 0.0
    %v3628 = vand.u32 %v3515, 4294901760
    %3629 = vmatpush1.msra.mxu0 %v3628
    %3630 = vmatprep.subr.mxu0 0.0
    %v3631 = vand.u32 %v3516, 4294901760
    %3632 = vmatpush1.msra.mxu0 %v3631
    %3633 = vmatprep.subr.mxu0 0.0
    %v3634 = vand.u32 %v3517, 4294901760
    %3635 = vmatpush1.msra.mxu0 %v3634
    %3636 = vmatprep.subr.mxu0 0.0
    %v3637 = vand.u32 %v3518, 4294901760
    %3638 = vmatpush1.msra.mxu0 %v3637
    %3639 = vmatprep.subr.mxu0 0.0
    %v3640 = vand.u32 %v3519, 4294901760
    %3641 = vmatpush1.msra.mxu0 %v3640
    %3642 = vmatprep.subr.mxu0 0.0
    %v3643 = vand.u32 %v3520, 4294901760
    %3644 = vmatpush1.msra.mxu0 %v3643
    %3645 = vmatprep.subr.mxu0 0.0
    %v3646 = vand.u32 %v3521, 4294901760
    %3647 = vmatpush1.msra.mxu0 %v3646
    %3648 = vmatprep.subr.mxu0 0.0
    %v3649 = vand.u32 %v3522, 4294901760
    %3650 = vmatpush1.msra.mxu0 %v3649
    %v3651 = vand.u32 %v3479, 4294901760
    %v3652 = vsub.f32 %v3479, %v3651
    %v3653 = vand.u32 %v3652, 4294901760
    %v3654 = vsub.f32 %v3652, %v3653
    %v3655 = vand.u32 %v3654, 4294901760
    %3656 = vmatprep.mubr.f32.mxu0 %v3655
    %v3657 = vand.u32 %v3467, 4294901760
    %v3658 = vsub.f32 %v3467, %v3657
    %v3659 = vand.u32 %v3658, 4294901760
    %v3660 = vsub.f32 %v3658, %v3659
    %v3661 = vand.u32 %v3660, 4294901760
    %3662 = vmatmul.mubr.f32.gmra.mrb[0].mxu0 %v3661
    %v3663 = vpop.f32.mrb[0].mxu0
    %v3664 = vadd.f32 0.0, %v3663
    %v3665 = vpop.f32.mrb[0].mxu0
    %v3666 = vand.u32 %v3480, 4294901760
    %v3667 = vsub.f32 %v3480, %v3666
    %v3668 = vand.u32 %v3667, 4294901760
    %v3669 = vsub.f32 %v3667, %v3668
    %v3670 = vand.u32 %v3669, 4294901760
    %3671 = vmatprep.mubr.f32.mxu0 %v3670
    %v3672 = vand.u32 %v3468, 4294901760
    %v3673 = vsub.f32 %v3468, %v3672
    %v3674 = vand.u32 %v3673, 4294901760
    %v3675 = vsub.f32 %v3673, %v3674
    %v3676 = vand.u32 %v3675, 4294901760
    %3677 = vmatmul.mubr.f32.gmra.mrb[0].mxu0 %v3676
    %v3678 = vpop.f32.mrb[0].mxu0
    %v3679 = vadd.f32 0.0, %v3678
    %v3680 = vpop.f32.mrb[0].mxu0
    %3681 = vdwg.mxu0
    %3682 = vmatprep.subr.mxu0 0.0
    %v3683 = vand.u32 %v3491, 4294901760
    %v3684 = vsub.f32 %v3491, %v3683
    %v3685 = vand.u32 %v3684, 4294901760
    %v3686 = vsub.f32 %v3684, %v3685
    %v3687 = vand.u32 %v3686, 4294901760
    %3688 = vmatpush1.msra.mxu0 %v3687
    %3689 = vmatprep.subr.mxu0 0.0
    %v3690 = vand.u32 %v3492, 4294901760
    %v3691 = vsub.f32 %v3492, %v3690
    %v3692 = vand.u32 %v3691, 4294901760
    %v3693 = vsub.f32 %v3691, %v3692
    %v3694 = vand.u32 %v3693, 4294901760
    %3695 = vmatpush1.msra.mxu0 %v3694
    %3696 = vmatprep.subr.mxu0 0.0
    %v3697 = vand.u32 %v3493, 4294901760
    %v3698 = vsub.f32 %v3493, %v3697
    %v3699 = vand.u32 %v3698, 4294901760
    %v3700 = vsub.f32 %v3698, %v3699
    %v3701 = vand.u32 %v3700, 4294901760
    %3702 = vmatpush1.msra.mxu0 %v3701
    %3703 = vmatprep.subr.mxu0 0.0
    %v3704 = vand.u32 %v3494, 4294901760
    %v3705 = vsub.f32 %v3494, %v3704
    %v3706 = vand.u32 %v3705, 4294901760
    %v3707 = vsub.f32 %v3705, %v3706
    %v3708 = vand.u32 %v3707, 4294901760
    %3709 = vmatpush1.msra.mxu0 %v3708
    %3710 = vmatprep.subr.mxu0 0.0
    %v3711 = vand.u32 %v3495, 4294901760
    %v3712 = vsub.f32 %v3495, %v3711
    %v3713 = vand.u32 %v3712, 4294901760
    %v3714 = vsub.f32 %v3712, %v3713
    %v3715 = vand.u32 %v3714, 4294901760
    %3716 = vmatpush1.msra.mxu0 %v3715
    %3717 = vmatprep.subr.mxu0 0.0
    %v3718 = vand.u32 %v3496, 4294901760
    %v3719 = vsub.f32 %v3496, %v3718
    %v3720 = vand.u32 %v3719, 4294901760
    %v3721 = vsub.f32 %v3719, %v3720
    %v3722 = vand.u32 %v3721, 4294901760
    %3723 = vmatpush1.msra.mxu0 %v3722
    %3724 = vmatprep.subr.mxu0 0.0
    %v3725 = vand.u32 %v3497, 4294901760
    %v3726 = vsub.f32 %v3497, %v3725
    %v3727 = vand.u32 %v3726, 4294901760
    %v3728 = vsub.f32 %v3726, %v3727
    %v3729 = vand.u32 %v3728, 4294901760
    %3730 = vmatpush1.msra.mxu0 %v3729
    %3731 = vmatprep.subr.mxu0 0.0
    %v3732 = vand.u32 %v3498, 4294901760
    %v3733 = vsub.f32 %v3498, %v3732
    %v3734 = vand.u32 %v3733, 4294901760
    %v3735 = vsub.f32 %v3733, %v3734
    %v3736 = vand.u32 %v3735, 4294901760
    %3737 = vmatpush1.msra.mxu0 %v3736
    %3738 = vmatprep.subr.mxu0 0.0
    %v3739 = vand.u32 %v3499, 4294901760
    %v3740 = vsub.f32 %v3499, %v3739
    %v3741 = vand.u32 %v3740, 4294901760
    %v3742 = vsub.f32 %v3740, %v3741
    %v3743 = vand.u32 %v3742, 4294901760
    %3744 = vmatpush1.msra.mxu0 %v3743
    %3745 = vmatprep.subr.mxu0 0.0
    %v3746 = vand.u32 %v3500, 4294901760
    %v3747 = vsub.f32 %v3500, %v3746
    %v3748 = vand.u32 %v3747, 4294901760
    %v3749 = vsub.f32 %v3747, %v3748
    %v3750 = vand.u32 %v3749, 4294901760
    %3751 = vmatpush1.msra.mxu0 %v3750
    %3752 = vmatprep.subr.mxu0 0.0
    %v3753 = vand.u32 %v3501, 4294901760
    %v3754 = vsub.f32 %v3501, %v3753
    %v3755 = vand.u32 %v3754, 4294901760
    %v3756 = vsub.f32 %v3754, %v3755
    %v3757 = vand.u32 %v3756, 4294901760
    %3758 = vmatpush1.msra.mxu0 %v3757
    %3759 = vmatprep.subr.mxu0 0.0
    %v3760 = vand.u32 %v3502, 4294901760
    %v3761 = vsub.f32 %v3502, %v3760
    %v3762 = vand.u32 %v3761, 4294901760
    %v3763 = vsub.f32 %v3761, %v3762
    %v3764 = vand.u32 %v3763, 4294901760
    %3765 = vmatpush1.msra.mxu0 %v3764
    %3766 = vmatprep.subr.mxu0 0.0
    %v3767 = vand.u32 %v3503, 4294901760
    %v3768 = vsub.f32 %v3503, %v3767
    %v3769 = vand.u32 %v3768, 4294901760
    %v3770 = vsub.f32 %v3768, %v3769
    %v3771 = vand.u32 %v3770, 4294901760
    %3772 = vmatpush1.msra.mxu0 %v3771
    %3773 = vmatprep.subr.mxu0 0.0
    %v3774 = vand.u32 %v3504, 4294901760
    %v3775 = vsub.f32 %v3504, %v3774
    %v3776 = vand.u32 %v3775, 4294901760
    %v3777 = vsub.f32 %v3775, %v3776
    %v3778 = vand.u32 %v3777, 4294901760
    %3779 = vmatpush1.msra.mxu0 %v3778
    %3780 = vmatprep.subr.mxu0 0.0
    %v3781 = vand.u32 %v3505, 4294901760
    %v3782 = vsub.f32 %v3505, %v3781
    %v3783 = vand.u32 %v3782, 4294901760
    %v3784 = vsub.f32 %v3782, %v3783
    %v3785 = vand.u32 %v3784, 4294901760
    %3786 = vmatpush1.msra.mxu0 %v3785
    %3787 = vmatprep.subr.mxu0 0.0
    %v3788 = vand.u32 %v3506, 4294901760
    %v3789 = vsub.f32 %v3506, %v3788
    %v3790 = vand.u32 %v3789, 4294901760
    %v3791 = vsub.f32 %v3789, %v3790
    %v3792 = vand.u32 %v3791, 4294901760
    %3793 = vmatpush1.msra.mxu0 %v3792
    %3794 = vmatprep.subr.mxu0 0.0
    %v3795 = vand.u32 %v3507, 4294901760
    %v3796 = vsub.f32 %v3507, %v3795
    %v3797 = vand.u32 %v3796, 4294901760
    %v3798 = vsub.f32 %v3796, %v3797
    %v3799 = vand.u32 %v3798, 4294901760
    %3800 = vmatpush1.msra.mxu0 %v3799
    %3801 = vmatprep.subr.mxu0 0.0
    %v3802 = vand.u32 %v3508, 4294901760
    %v3803 = vsub.f32 %v3508, %v3802
    %v3804 = vand.u32 %v3803, 4294901760
    %v3805 = vsub.f32 %v3803, %v3804
    %v3806 = vand.u32 %v3805, 4294901760
    %3807 = vmatpush1.msra.mxu0 %v3806
    %3808 = vmatprep.subr.mxu0 0.0
    %v3809 = vand.u32 %v3509, 4294901760
    %v3810 = vsub.f32 %v3509, %v3809
    %v3811 = vand.u32 %v3810, 4294901760
    %v3812 = vsub.f32 %v3810, %v3811
    %v3813 = vand.u32 %v3812, 4294901760
    %3814 = vmatpush1.msra.mxu0 %v3813
    %3815 = vmatprep.subr.mxu0 0.0
    %v3816 = vand.u32 %v3510, 4294901760
    %v3817 = vsub.f32 %v3510, %v3816
    %v3818 = vand.u32 %v3817, 4294901760
    %v3819 = vsub.f32 %v3817, %v3818
    %v3820 = vand.u32 %v3819, 4294901760
    %3821 = vmatpush1.msra.mxu0 %v3820
    %3822 = vmatprep.subr.mxu0 0.0
    %v3823 = vand.u32 %v3511, 4294901760
    %v3824 = vsub.f32 %v3511, %v3823
    %v3825 = vand.u32 %v3824, 4294901760
    %v3826 = vsub.f32 %v3824, %v3825
    %v3827 = vand.u32 %v3826, 4294901760
    %3828 = vmatpush1.msra.mxu0 %v3827
    %3829 = vmatprep.subr.mxu0 0.0
    %v3830 = vand.u32 %v3512, 4294901760
    %v3831 = vsub.f32 %v3512, %v3830
    %v3832 = vand.u32 %v3831, 4294901760
    %v3833 = vsub.f32 %v3831, %v3832
    %v3834 = vand.u32 %v3833, 4294901760
    %3835 = vmatpush1.msra.mxu0 %v3834
    %3836 = vmatprep.subr.mxu0 0.0
    %v3837 = vand.u32 %v3513, 4294901760
    %v3838 = vsub.f32 %v3513, %v3837
    %v3839 = vand.u32 %v3838, 4294901760
    %v3840 = vsub.f32 %v3838, %v3839
    %v3841 = vand.u32 %v3840, 4294901760
    %3842 = vmatpush1.msra.mxu0 %v3841
    %3843 = vmatprep.subr.mxu0 0.0
    %v3844 = vand.u32 %v3514, 4294901760
    %v3845 = vsub.f32 %v3514, %v3844
    %v3846 = vand.u32 %v3845, 4294901760
    %v3847 = vsub.f32 %v3845, %v3846
    %v3848 = vand.u32 %v3847, 4294901760
    %3849 = vmatpush1.msra.mxu0 %v3848
    %3850 = vmatprep.subr.mxu0 0.0
    %v3851 = vand.u32 %v3515, 4294901760
    %v3852 = vsub.f32 %v3515, %v3851
    %v3853 = vand.u32 %v3852, 4294901760
    %v3854 = vsub.f32 %v3852, %v3853
    %v3855 = vand.u32 %v3854, 4294901760
    %3856 = vmatpush1.msra.mxu0 %v3855
    %3857 = vmatprep.subr.mxu0 0.0
    %v3858 = vand.u32 %v3516, 4294901760
    %v3859 = vsub.f32 %v3516, %v3858
    %v3860 = vand.u32 %v3859, 4294901760
    %v3861 = vsub.f32 %v3859, %v3860
    %v3862 = vand.u32 %v3861, 4294901760
    %3863 = vmatpush1.msra.mxu0 %v3862
    %3864 = vmatprep.subr.mxu0 0.0
    %v3865 = vand.u32 %v3517, 4294901760
    %v3866 = vsub.f32 %v3517, %v3865
    %v3867 = vand.u32 %v3866, 4294901760
    %v3868 = vsub.f32 %v3866, %v3867
    %v3869 = vand.u32 %v3868, 4294901760
    %3870 = vmatpush1.msra.mxu0 %v3869
    %3871 = vmatprep.subr.mxu0 0.0
    %v3872 = vand.u32 %v3518, 4294901760
    %v3873 = vsub.f32 %v3518, %v3872
    %v3874 = vand.u32 %v3873, 4294901760
    %v3875 = vsub.f32 %v3873, %v3874
    %v3876 = vand.u32 %v3875, 4294901760
    %3877 = vmatpush1.msra.mxu0 %v3876
    %3878 = vmatprep.subr.mxu0 0.0
    %v3879 = vand.u32 %v3519, 4294901760
    %v3880 = vsub.f32 %v3519, %v3879
    %v3881 = vand.u32 %v3880, 4294901760
    %v3882 = vsub.f32 %v3880, %v3881
    %v3883 = vand.u32 %v3882, 4294901760
    %3884 = vmatpush1.msra.mxu0 %v3883
    %3885 = vmatprep.subr.mxu0 0.0
    %v3886 = vand.u32 %v3520, 4294901760
    %v3887 = vsub.f32 %v3520, %v3886
    %v3888 = vand.u32 %v3887, 4294901760
    %v3889 = vsub.f32 %v3887, %v3888
    %v3890 = vand.u32 %v3889, 4294901760
    %3891 = vmatpush1.msra.mxu0 %v3890
    %3892 = vmatprep.subr.mxu0 0.0
    %v3893 = vand.u32 %v3521, 4294901760
    %v3894 = vsub.f32 %v3521, %v3893
    %v3895 = vand.u32 %v3894, 4294901760
    %v3896 = vsub.f32 %v3894, %v3895
    %v3897 = vand.u32 %v3896, 4294901760
    %3898 = vmatpush1.msra.mxu0 %v3897
    %3899 = vmatprep.subr.mxu0 0.0
    %v3900 = vand.u32 %v3522, 4294901760
    %v3901 = vsub.f32 %v3522, %v3900
    %v3902 = vand.u32 %v3901, 4294901760
    %v3903 = vsub.f32 %v3901, %v3902
    %v3904 = vand.u32 %v3903, 4294901760
    %3905 = vmatpush1.msra.mxu0 %v3904
    %v3906 = vand.u32 %v3479, 4294901760
    %3907 = vmatprep.mubr.f32.mxu0 %v3906
    %v3908 = vand.u32 %v3467, 4294901760
    %3909 = vmatmul.mubr.f32.gmra.mrb[0].mxu0 %v3908
    %v3910 = vpop.f32.mrb[0].mxu0
    %v3911 = vadd.f32 %v3664, %v3910
    %v3912 = vpop.f32.mrb[0].mxu0
    %v3913 = vand.u32 %v3480, 4294901760
    %3914 = vmatprep.mubr.f32.mxu0 %v3913
    %v3915 = vand.u32 %v3468, 4294901760
    %3916 = vmatmul.mubr.f32.gmra.mrb[0].mxu0 %v3915
    %v3917 = vpop.f32.mrb[0].mxu0
    %v3918 = vadd.f32 %v3679, %v3917
    %v3919 = vpop.f32.mrb[0].mxu0
    %3920 = vdwg.mxu0
    %3921 = vmatprep.subr.mxu0 0.0
    %v3922 = vand.u32 %v3491, 4294901760
    %v3923 = vsub.f32 %v3491, %v3922
    %3924 = vmatpush1.msra.mxu0 %v3923
    %3925 = vmatprep.subr.mxu0 0.0
    %v3926 = vand.u32 %v3492, 4294901760
    %v3927 = vsub.f32 %v3492, %v3926
    %3928 = vmatpush1.msra.mxu0 %v3927
    %3929 = vmatprep.subr.mxu0 0.0
    %v3930 = vand.u32 %v3493, 4294901760
    %v3931 = vsub.f32 %v3493, %v3930
    %3932 = vmatpush1.msra.mxu0 %v3931
    %3933 = vmatprep.subr.mxu0 0.0
    %v3934 = vand.u32 %v3494, 4294901760
    %v3935 = vsub.f32 %v3494, %v3934
    %3936 = vmatpush1.msra.mxu0 %v3935
    %3937 = vmatprep.subr.mxu0 0.0
    %v3938 = vand.u32 %v3495, 4294901760
    %v3939 = vsub.f32 %v3495, %v3938
    %3940 = vmatpush1.msra.mxu0 %v3939
    %3941 = vmatprep.subr.mxu0 0.0
    %v3942 = vand.u32 %v3496, 4294901760
    %v3943 = vsub.f32 %v3496, %v3942
    %3944 = vmatpush1.msra.mxu0 %v3943
    %3945 = vmatprep.subr.mxu0 0.0
    %v3946 = vand.u32 %v3497, 4294901760
    %v3947 = vsub.f32 %v3497, %v3946
    %3948 = vmatpush1.msra.mxu0 %v3947
    %3949 = vmatprep.subr.mxu0 0.0
    %v3950 = vand.u32 %v3498, 4294901760
    %v3951 = vsub.f32 %v3498, %v3950
    %3952 = vmatpush1.msra.mxu0 %v3951
    %3953 = vmatprep.subr.mxu0 0.0
    %v3954 = vand.u32 %v3499, 4294901760
    %v3955 = vsub.f32 %v3499, %v3954
    %3956 = vmatpush1.msra.mxu0 %v3955
    %3957 = vmatprep.subr.mxu0 0.0
    %v3958 = vand.u32 %v3500, 4294901760
    %v3959 = vsub.f32 %v3500, %v3958
    %3960 = vmatpush1.msra.mxu0 %v3959
    %3961 = vmatprep.subr.mxu0 0.0
    %v3962 = vand.u32 %v3501, 4294901760
    %v3963 = vsub.f32 %v3501, %v3962
    %3964 = vmatpush1.msra.mxu0 %v3963
    %3965 = vmatprep.subr.mxu0 0.0
    %v3966 = vand.u32 %v3502, 4294901760
    %v3967 = vsub.f32 %v3502, %v3966
    %3968 = vmatpush1.msra.mxu0 %v3967
    %3969 = vmatprep.subr.mxu0 0.0
    %v3970 = vand.u32 %v3503, 4294901760
    %v3971 = vsub.f32 %v3503, %v3970
    %3972 = vmatpush1.msra.mxu0 %v3971
    %3973 = vmatprep.subr.mxu0 0.0
    %v3974 = vand.u32 %v3504, 4294901760
    %v3975 = vsub.f32 %v3504, %v3974
    %3976 = vmatpush1.msra.mxu0 %v3975
    %3977 = vmatprep.subr.mxu0 0.0
    %v3978 = vand.u32 %v3505, 4294901760
    %v3979 = vsub.f32 %v3505, %v3978
    %3980 = vmatpush1.msra.mxu0 %v3979
    %3981 = vmatprep.subr.mxu0 0.0
    %v3982 = vand.u32 %v3506, 4294901760
    %v3983 = vsub.f32 %v3506, %v3982
    %3984 = vmatpush1.msra.mxu0 %v3983
    %3985 = vmatprep.subr.mxu0 0.0
    %v3986 = vand.u32 %v3507, 4294901760
    %v3987 = vsub.f32 %v3507, %v3986
    %3988 = vmatpush1.msra.mxu0 %v3987
    %3989 = vmatprep.subr.mxu0 0.0
    %v3990 = vand.u32 %v3508, 4294901760
    %v3991 = vsub.f32 %v3508, %v3990
    %3992 = vmatpush1.msra.mxu0 %v3991
    %3993 = vmatprep.subr.mxu0 0.0
    %v3994 = vand.u32 %v3509, 4294901760
    %v3995 = vsub.f32 %v3509, %v3994
    %3996 = vmatpush1.msra.mxu0 %v3995
    %3997 = vmatprep.subr.mxu0 0.0
    %v3998 = vand.u32 %v3510, 4294901760
    %v3999 = vsub.f32 %v3510, %v3998
    %4000 = vmatpush1.msra.mxu0 %v3999
    %4001 = vmatprep.subr.mxu0 0.0
    %v4002 = vand.u32 %v3511, 4294901760
    %v4003 = vsub.f32 %v3511, %v4002
    %4004 = vmatpush1.msra.mxu0 %v4003
    %4005 = vmatprep.subr.mxu0 0.0
    %v4006 = vand.u32 %v3512, 4294901760
    %v4007 = vsub.f32 %v3512, %v4006
    %4008 = vmatpush1.msra.mxu0 %v4007
    %4009 = vmatprep.subr.mxu0 0.0
    %v4010 = vand.u32 %v3513, 4294901760
    %v4011 = vsub.f32 %v3513, %v4010
    %4012 = vmatpush1.msra.mxu0 %v4011
    %4013 = vmatprep.subr.mxu0 0.0
    %v4014 = vand.u32 %v3514, 4294901760
    %v4015 = vsub.f32 %v3514, %v4014
    %4016 = vmatpush1.msra.mxu0 %v4015
    %4017 = vmatprep.subr.mxu0 0.0
    %v4018 = vand.u32 %v3515, 4294901760
    %v4019 = vsub.f32 %v3515, %v4018
    %4020 = vmatpush1.msra.mxu0 %v4019
    %4021 = vmatprep.subr.mxu0 0.0
    %v4022 = vand.u32 %v3516, 4294901760
    %v4023 = vsub.f32 %v3516, %v4022
    %4024 = vmatpush1.msra.mxu0 %v4023
    %4025 = vmatprep.subr.mxu0 0.0
    %v4026 = vand.u32 %v3517, 4294901760
    %v4027 = vsub.f32 %v3517, %v4026
    %4028 = vmatpush1.msra.mxu0 %v4027
    %4029 = vmatprep.subr.mxu0 0.0
    %v4030 = vand.u32 %v3518, 4294901760
    %v4031 = vsub.f32 %v3518, %v4030
    %4032 = vmatpush1.msra.mxu0 %v4031
    %4033 = vmatprep.subr.mxu0 0.0
    %v4034 = vand.u32 %v3519, 4294901760
    %v4035 = vsub.f32 %v3519, %v4034
    %4036 = vmatpush1.msra.mxu0 %v4035
    %4037 = vmatprep.subr.mxu0 0.0
    %v4038 = vand.u32 %v3520, 4294901760
    %v4039 = vsub.f32 %v3520, %v4038
    %4040 = vmatpush1.msra.mxu0 %v4039
    %4041 = vmatprep.subr.mxu0 0.0
    %v4042 = vand.u32 %v3521, 4294901760
    %v4043 = vsub.f32 %v3521, %v4042
    %4044 = vmatpush1.msra.mxu0 %v4043
    %4045 = vmatprep.subr.mxu0 0.0
    %v4046 = vand.u32 %v3522, 4294901760
    %v4047 = vsub.f32 %v3522, %v4046
    %4048 = vmatpush1.msra.mxu0 %v4047
    %v4049 = vand.u32 %v3479, 4294901760
    %v4050 = vsub.f32 %v3479, %v4049
    %4051 = vmatprep.mubr.f32.mxu0 %v4050
    %v4052 = vand.u32 %v3467, 4294901760
    %v4053 = vsub.f32 %v3467, %v4052
    %4054 = vmatmul.mubr.f32.gmra.mrb[0].mxu0 %v4053
    %v4055 = vpop.f32.mrb[0].mxu0
    %v4056 = vadd.f32 %v3911, %v4055
    %v4057 = vpop.f32.mrb[0].mxu0
    %v4058 = vand.u32 %v3480, 4294901760
    %v4059 = vsub.f32 %v3480, %v4058
    %4060 = vmatprep.mubr.f32.mxu0 %v4059
    %v4061 = vand.u32 %v3468, 4294901760
    %v4062 = vsub.f32 %v3468, %v4061
    %4063 = vmatmul.mubr.f32.gmra.mrb[0].mxu0 %v4062
    %v4064 = vpop.f32.mrb[0].mxu0
    %v4065 = vadd.f32 %v3918, %v4064
    %v4066 = vpop.f32.mrb[0].mxu0
    %4067 = vdwg.mxu0
    %4068 = vmatprep.subr.mxu0 0.0
    %v4069 = vand.u32 %v3491, 4294901760
    %4070 = vmatpush1.msra.mxu0 %v4069
    %4071 = vmatprep.subr.mxu0 0.0
    %v4072 = vand.u32 %v3492, 4294901760
    %4073 = vmatpush1.msra.mxu0 %v4072
    %4074 = vmatprep.subr.mxu0 0.0
    %v4075 = vand.u32 %v3493, 4294901760
    %4076 = vmatpush1.msra.mxu0 %v4075
    %4077 = vmatprep.subr.mxu0 0.0
    %v4078 = vand.u32 %v3494, 4294901760
    %4079 = vmatpush1.msra.mxu0 %v4078
    %4080 = vmatprep.subr.mxu0 0.0
    %v4081 = vand.u32 %v3495, 4294901760
    %4082 = vmatpush1.msra.mxu0 %v4081
    %4083 = vmatprep.subr.mxu0 0.0
    %v4084 = vand.u32 %v3496, 4294901760
    %4085 = vmatpush1.msra.mxu0 %v4084
    %4086 = vmatprep.subr.mxu0 0.0
    %v4087 = vand.u32 %v3497, 4294901760
    %4088 = vmatpush1.msra.mxu0 %v4087
    %4089 = vmatprep.subr.mxu0 0.0
    %v4090 = vand.u32 %v3498, 4294901760
    %4091 = vmatpush1.msra.mxu0 %v4090
    %4092 = vmatprep.subr.mxu0 0.0
    %v4093 = vand.u32 %v3499, 4294901760
    %4094 = vmatpush1.msra.mxu0 %v4093
    %4095 = vmatprep.subr.mxu0 0.0
    %v4096 = vand.u32 %v3500, 4294901760
    %4097 = vmatpush1.msra.mxu0 %v4096
    %4098 = vmatprep.subr.mxu0 0.0
    %v4099 = vand.u32 %v3501, 4294901760
    %4100 = vmatpush1.msra.mxu0 %v4099
    %4101 = vmatprep.subr.mxu0 0.0
    %v4102 = vand.u32 %v3502, 4294901760
    %4103 = vmatpush1.msra.mxu0 %v4102
    %4104 = vmatprep.subr.mxu0 0.0
    %v4105 = vand.u32 %v3503, 4294901760
    %4106 = vmatpush1.msra.mxu0 %v4105
    %4107 = vmatprep.subr.mxu0 0.0
    %v4108 = vand.u32 %v3504, 4294901760
    %4109 = vmatpush1.msra.mxu0 %v4108
    %4110 = vmatprep.subr.mxu0 0.0
    %v4111 = vand.u32 %v3505, 4294901760
    %4112 = vmatpush1.msra.mxu0 %v4111
    %4113 = vmatprep.subr.mxu0 0.0
    %v4114 = vand.u32 %v3506, 4294901760
    %4115 = vmatpush1.msra.mxu0 %v4114
    %4116 = vmatprep.subr.mxu0 0.0
    %v4117 = vand.u32 %v3507, 4294901760
    %4118 = vmatpush1.msra.mxu0 %v4117
    %4119 = vmatprep.subr.mxu0 0.0
    %v4120 = vand.u32 %v3508, 4294901760
    %4121 = vmatpush1.msra.mxu0 %v4120
    %4122 = vmatprep.subr.mxu0 0.0
    %v4123 = vand.u32 %v3509, 4294901760
    %4124 = vmatpush1.msra.mxu0 %v4123
    %4125 = vmatprep.subr.mxu0 0.0
    %v4126 = vand.u32 %v3510, 4294901760
    %4127 = vmatpush1.msra.mxu0 %v4126
    %4128 = vmatprep.subr.mxu0 0.0
    %v4129 = vand.u32 %v3511, 4294901760
    %4130 = vmatpush1.msra.mxu0 %v4129
    %4131 = vmatprep.subr.mxu0 0.0
    %v4132 = vand.u32 %v3512, 4294901760
    %4133 = vmatpush1.msra.mxu0 %v4132
    %4134 = vmatprep.subr.mxu0 0.0
    %v4135 = vand.u32 %v3513, 4294901760
    %4136 = vmatpush1.msra.mxu0 %v4135
    %4137 = vmatprep.subr.mxu0 0.0
    %v4138 = vand.u32 %v3514, 4294901760
    %4139 = vmatpush1.msra.mxu0 %v4138
    %4140 = vmatprep.subr.mxu0 0.0
    %v4141 = vand.u32 %v3515, 4294901760
    %4142 = vmatpush1.msra.mxu0 %v4141
    %4143 = vmatprep.subr.mxu0 0.0
    %v4144 = vand.u32 %v3516, 4294901760
    %4145 = vmatpush1.msra.mxu0 %v4144
    %4146 = vmatprep.subr.mxu0 0.0
    %v4147 = vand.u32 %v3517, 4294901760
    %4148 = vmatpush1.msra.mxu0 %v4147
    %4149 = vmatprep.subr.mxu0 0.0
    %v4150 = vand.u32 %v3518, 4294901760
    %4151 = vmatpush1.msra.mxu0 %v4150
    %4152 = vmatprep.subr.mxu0 0.0
    %v4153 = vand.u32 %v3519, 4294901760
    %4154 = vmatpush1.msra.mxu0 %v4153
    %4155 = vmatprep.subr.mxu0 0.0
    %v4156 = vand.u32 %v3520, 4294901760
    %4157 = vmatpush1.msra.mxu0 %v4156
    %4158 = vmatprep.subr.mxu0 0.0
    %v4159 = vand.u32 %v3521, 4294901760
    %4160 = vmatpush1.msra.mxu0 %v4159
    %4161 = vmatprep.subr.mxu0 0.0
    %v4162 = vand.u32 %v3522, 4294901760
    %4163 = vmatpush1.msra.mxu0 %v4162
    %v4164 = vand.u32 %v3479, 4294901760
    %v4165 = vsub.f32 %v3479, %v4164
    %v4166 = vand.u32 %v4165, 4294901760
    %4167 = vmatprep.mubr.f32.mxu0 %v4166
    %v4168 = vand.u32 %v3467, 4294901760
    %v4169 = vsub.f32 %v3467, %v4168
    %v4170 = vand.u32 %v4169, 4294901760
    %4171 = vmatmul.mubr.f32.gmra.mrb[0].mxu0 %v4170
    %v4172 = vpop.f32.mrb[0].mxu0
    %v4173 = vadd.f32 %v4056, %v4172
    %v4174 = vpop.f32.mrb[0].mxu0
    %v4175 = vand.u32 %v3480, 4294901760
    %v4176 = vsub.f32 %v3480, %v4175
    %v4177 = vand.u32 %v4176, 4294901760
    %4178 = vmatprep.mubr.f32.mxu0 %v4177
    %v4179 = vand.u32 %v3468, 4294901760
    %v4180 = vsub.f32 %v3468, %v4179
    %v4181 = vand.u32 %v4180, 4294901760
    %4182 = vmatmul.mubr.f32.gmra.mrb[0].mxu0 %v4181
    %v4183 = vpop.f32.mrb[0].mxu0
    %v4184 = vadd.f32 %v4065, %v4183
    %v4185 = vpop.f32.mrb[0].mxu0
    %4186 = vdwg.mxu0
    %4187 = vmatprep.subr.mxu0 0.0
    %v4188 = vand.u32 %v3491, 4294901760
    %v4189 = vsub.f32 %v3491, %v4188
    %v4190 = vand.u32 %v4189, 4294901760
    %4191 = vmatpush1.msra.mxu0 %v4190
    %4192 = vmatprep.subr.mxu0 0.0
    %v4193 = vand.u32 %v3492, 4294901760
    %v4194 = vsub.f32 %v3492, %v4193
    %v4195 = vand.u32 %v4194, 4294901760
    %4196 = vmatpush1.msra.mxu0 %v4195
    %4197 = vmatprep.subr.mxu0 0.0
    %v4198 = vand.u32 %v3493, 4294901760
    %v4199 = vsub.f32 %v3493, %v4198
    %v4200 = vand.u32 %v4199, 4294901760
    %4201 = vmatpush1.msra.mxu0 %v4200
    %4202 = vmatprep.subr.mxu0 0.0
    %v4203 = vand.u32 %v3494, 4294901760
    %v4204 = vsub.f32 %v3494, %v4203
    %v4205 = vand.u32 %v4204, 4294901760
    %4206 = vmatpush1.msra.mxu0 %v4205
    %4207 = vmatprep.subr.mxu0 0.0
    %v4208 = vand.u32 %v3495, 4294901760
    %v4209 = vsub.f32 %v3495, %v4208
    %v4210 = vand.u32 %v4209, 4294901760
    %4211 = vmatpush1.msra.mxu0 %v4210
    %4212 = vmatprep.subr.mxu0 0.0
    %v4213 = vand.u32 %v3496, 4294901760
    %v4214 = vsub.f32 %v3496, %v4213
    %v4215 = vand.u32 %v4214, 4294901760
    %4216 = vmatpush1.msra.mxu0 %v4215
    %4217 = vmatprep.subr.mxu0 0.0
    %v4218 = vand.u32 %v3497, 4294901760
    %v4219 = vsub.f32 %v3497, %v4218
    %v4220 = vand.u32 %v4219, 4294901760
    %4221 = vmatpush1.msra.mxu0 %v4220
    %4222 = vmatprep.subr.mxu0 0.0
    %v4223 = vand.u32 %v3498, 4294901760
    %v4224 = vsub.f32 %v3498, %v4223
    %v4225 = vand.u32 %v4224, 4294901760
    %4226 = vmatpush1.msra.mxu0 %v4225
    %4227 = vmatprep.subr.mxu0 0.0
    %v4228 = vand.u32 %v3499, 4294901760
    %v4229 = vsub.f32 %v3499, %v4228
    %v4230 = vand.u32 %v4229, 4294901760
    %4231 = vmatpush1.msra.mxu0 %v4230
    %4232 = vmatprep.subr.mxu0 0.0
    %v4233 = vand.u32 %v3500, 4294901760
    %v4234 = vsub.f32 %v3500, %v4233
    %v4235 = vand.u32 %v4234, 4294901760
    %4236 = vmatpush1.msra.mxu0 %v4235
    %4237 = vmatprep.subr.mxu0 0.0
    %v4238 = vand.u32 %v3501, 4294901760
    %v4239 = vsub.f32 %v3501, %v4238
    %v4240 = vand.u32 %v4239, 4294901760
    %4241 = vmatpush1.msra.mxu0 %v4240
    %4242 = vmatprep.subr.mxu0 0.0
    %v4243 = vand.u32 %v3502, 4294901760
    %v4244 = vsub.f32 %v3502, %v4243
    %v4245 = vand.u32 %v4244, 4294901760
    %4246 = vmatpush1.msra.mxu0 %v4245
    %4247 = vmatprep.subr.mxu0 0.0
    %v4248 = vand.u32 %v3503, 4294901760
    %v4249 = vsub.f32 %v3503, %v4248
    %v4250 = vand.u32 %v4249, 4294901760
    %4251 = vmatpush1.msra.mxu0 %v4250
    %4252 = vmatprep.subr.mxu0 0.0
    %v4253 = vand.u32 %v3504, 4294901760
    %v4254 = vsub.f32 %v3504, %v4253
    %v4255 = vand.u32 %v4254, 4294901760
    %4256 = vmatpush1.msra.mxu0 %v4255
    %4257 = vmatprep.subr.mxu0 0.0
    %v4258 = vand.u32 %v3505, 4294901760
    %v4259 = vsub.f32 %v3505, %v4258
    %v4260 = vand.u32 %v4259, 4294901760
    %4261 = vmatpush1.msra.mxu0 %v4260
    %4262 = vmatprep.subr.mxu0 0.0
    %v4263 = vand.u32 %v3506, 4294901760
    %v4264 = vsub.f32 %v3506, %v4263
    %v4265 = vand.u32 %v4264, 4294901760
    %4266 = vmatpush1.msra.mxu0 %v4265
    %4267 = vmatprep.subr.mxu0 0.0
    %v4268 = vand.u32 %v3507, 4294901760
    %v4269 = vsub.f32 %v3507, %v4268
    %v4270 = vand.u32 %v4269, 4294901760
    %4271 = vmatpush1.msra.mxu0 %v4270
    %4272 = vmatprep.subr.mxu0 0.0
    %v4273 = vand.u32 %v3508, 4294901760
    %v4274 = vsub.f32 %v3508, %v4273
    %v4275 = vand.u32 %v4274, 4294901760
    %4276 = vmatpush1.msra.mxu0 %v4275
    %4277 = vmatprep.subr.mxu0 0.0
    %v4278 = vand.u32 %v3509, 4294901760
    %v4279 = vsub.f32 %v3509, %v4278
    %v4280 = vand.u32 %v4279, 4294901760
    %4281 = vmatpush1.msra.mxu0 %v4280
    %4282 = vmatprep.subr.mxu0 0.0
    %v4283 = vand.u32 %v3510, 4294901760
    %v4284 = vsub.f32 %v3510, %v4283
    %v4285 = vand.u32 %v4284, 4294901760
    %4286 = vmatpush1.msra.mxu0 %v4285
    %4287 = vmatprep.subr.mxu0 0.0
    %v4288 = vand.u32 %v3511, 4294901760
    %v4289 = vsub.f32 %v3511, %v4288
    %v4290 = vand.u32 %v4289, 4294901760
    %4291 = vmatpush1.msra.mxu0 %v4290
    %4292 = vmatprep.subr.mxu0 0.0
    %v4293 = vand.u32 %v3512, 4294901760
    %v4294 = vsub.f32 %v3512, %v4293
    %v4295 = vand.u32 %v4294, 4294901760
    %4296 = vmatpush1.msra.mxu0 %v4295
    %4297 = vmatprep.subr.mxu0 0.0
    %v4298 = vand.u32 %v3513, 4294901760
    %v4299 = vsub.f32 %v3513, %v4298
    %v4300 = vand.u32 %v4299, 4294901760
    %4301 = vmatpush1.msra.mxu0 %v4300
    %4302 = vmatprep.subr.mxu0 0.0
    %v4303 = vand.u32 %v3514, 4294901760
    %v4304 = vsub.f32 %v3514, %v4303
    %v4305 = vand.u32 %v4304, 4294901760
    %4306 = vmatpush1.msra.mxu0 %v4305
    %4307 = vmatprep.subr.mxu0 0.0
    %v4308 = vand.u32 %v3515, 4294901760
    %v4309 = vsub.f32 %v3515, %v4308
    %v4310 = vand.u32 %v4309, 4294901760
    %4311 = vmatpush1.msra.mxu0 %v4310
    %4312 = vmatprep.subr.mxu0 0.0
    %v4313 = vand.u32 %v3516, 4294901760
    %v4314 = vsub.f32 %v3516, %v4313
    %v4315 = vand.u32 %v4314, 4294901760
    %4316 = vmatpush1.msra.mxu0 %v4315
    %4317 = vmatprep.subr.mxu0 0.0
    %v4318 = vand.u32 %v3517, 4294901760
    %v4319 = vsub.f32 %v3517, %v4318
    %v4320 = vand.u32 %v4319, 4294901760
    %4321 = vmatpush1.msra.mxu0 %v4320
    %4322 = vmatprep.subr.mxu0 0.0
    %v4323 = vand.u32 %v3518, 4294901760
    %v4324 = vsub.f32 %v3518, %v4323
    %v4325 = vand.u32 %v4324, 4294901760
    %4326 = vmatpush1.msra.mxu0 %v4325
    %4327 = vmatprep.subr.mxu0 0.0
    %v4328 = vand.u32 %v3519, 4294901760
    %v4329 = vsub.f32 %v3519, %v4328
    %v4330 = vand.u32 %v4329, 4294901760
    %4331 = vmatpush1.msra.mxu0 %v4330
    %4332 = vmatprep.subr.mxu0 0.0
    %v4333 = vand.u32 %v3520, 4294901760
    %v4334 = vsub.f32 %v3520, %v4333
    %v4335 = vand.u32 %v4334, 4294901760
    %4336 = vmatpush1.msra.mxu0 %v4335
    %4337 = vmatprep.subr.mxu0 0.0
    %v4338 = vand.u32 %v3521, 4294901760
    %v4339 = vsub.f32 %v3521, %v4338
    %v4340 = vand.u32 %v4339, 4294901760
    %4341 = vmatpush1.msra.mxu0 %v4340
    %4342 = vmatprep.subr.mxu0 0.0
    %v4343 = vand.u32 %v3522, 4294901760
    %v4344 = vsub.f32 %v3522, %v4343
    %v4345 = vand.u32 %v4344, 4294901760
    %4346 = vmatpush1.msra.mxu0 %v4345
    %v4347 = vand.u32 %v3479, 4294901760
    %4348 = vmatprep.mubr.f32.mxu0 %v4347
    %v4349 = vand.u32 %v3467, 4294901760
    %4350 = vmatmul.mubr.f32.gmra.mrb[0].mxu0 %v4349
    %v4351 = vpop.f32.mrb[0].mxu0
    %v4352 = vadd.f32 %v4173, %v4351
    %v4353 = vpop.f32.mrb[0].mxu0
    %v4354 = vand.u32 %v3480, 4294901760
    %4355 = vmatprep.mubr.f32.mxu0 %v4354
    %v4356 = vand.u32 %v3468, 4294901760
    %4357 = vmatmul.mubr.f32.gmra.mrb[0].mxu0 %v4356
    %v4358 = vpop.f32.mrb[0].mxu0
    %v4359 = vadd.f32 %v4184, %v4358
    %v4360 = vpop.f32.mrb[0].mxu0
    %4361 = vdwg.mxu0
    %4362 = vmatprep.subr.mxu0 0.0
    %v4363 = vand.u32 %v3491, 4294901760
    %4364 = vmatpush1.msra.mxu0 %v4363
    %4365 = vmatprep.subr.mxu0 0.0
    %v4366 = vand.u32 %v3492, 4294901760
    %4367 = vmatpush1.msra.mxu0 %v4366
    %4368 = vmatprep.subr.mxu0 0.0
    %v4369 = vand.u32 %v3493, 4294901760
    %4370 = vmatpush1.msra.mxu0 %v4369
    %4371 = vmatprep.subr.mxu0 0.0
    %v4372 = vand.u32 %v3494, 4294901760
    %4373 = vmatpush1.msra.mxu0 %v4372
    %4374 = vmatprep.subr.mxu0 0.0
    %v4375 = vand.u32 %v3495, 4294901760
    %4376 = vmatpush1.msra.mxu0 %v4375
    %4377 = vmatprep.subr.mxu0 0.0
    %v4378 = vand.u32 %v3496, 4294901760
    %4379 = vmatpush1.msra.mxu0 %v4378
    %4380 = vmatprep.subr.mxu0 0.0
    %v4381 = vand.u32 %v3497, 4294901760
    %4382 = vmatpush1.msra.mxu0 %v4381
    %4383 = vmatprep.subr.mxu0 0.0
    %v4384 = vand.u32 %v3498, 4294901760
    %4385 = vmatpush1.msra.mxu0 %v4384
    %4386 = vmatprep.subr.mxu0 0.0
    %v4387 = vand.u32 %v3499, 4294901760
    %4388 = vmatpush1.msra.mxu0 %v4387
    %4389 = vmatprep.subr.mxu0 0.0
    %v4390 = vand.u32 %v3500, 4294901760
    %4391 = vmatpush1.msra.mxu0 %v4390
    %4392 = vmatprep.subr.mxu0 0.0
    %v4393 = vand.u32 %v3501, 4294901760
    %4394 = vmatpush1.msra.mxu0 %v4393
    %4395 = vmatprep.subr.mxu0 0.0
    %v4396 = vand.u32 %v3502, 4294901760
    %4397 = vmatpush1.msra.mxu0 %v4396
    %4398 = vmatprep.subr.mxu0 0.0
    %v4399 = vand.u32 %v3503, 4294901760
    %4400 = vmatpush1.msra.mxu0 %v4399
    %4401 = vmatprep.subr.mxu0 0.0
    %v4402 = vand.u32 %v3504, 4294901760
    %4403 = vmatpush1.msra.mxu0 %v4402
    %4404 = vmatprep.subr.mxu0 0.0
    %v4405 = vand.u32 %v3505, 4294901760
    %4406 = vmatpush1.msra.mxu0 %v4405
    %4407 = vmatprep.subr.mxu0 0.0
    %v4408 = vand.u32 %v3506, 4294901760
    %4409 = vmatpush1.msra.mxu0 %v4408
    %4410 = vmatprep.subr.mxu0 0.0
    %v4411 = vand.u32 %v3507, 4294901760
    %4412 = vmatpush1.msra.mxu0 %v4411
    %4413 = vmatprep.subr.mxu0 0.0
    %v4414 = vand.u32 %v3508, 4294901760
    %4415 = vmatpush1.msra.mxu0 %v4414
    %4416 = vmatprep.subr.mxu0 0.0
    %v4417 = vand.u32 %v3509, 4294901760
    %4418 = vmatpush1.msra.mxu0 %v4417
    %4419 = vmatprep.subr.mxu0 0.0
    %v4420 = vand.u32 %v3510, 4294901760
    %4421 = vmatpush1.msra.mxu0 %v4420
    %4422 = vmatprep.subr.mxu0 0.0
    %v4423 = vand.u32 %v3511, 4294901760
    %4424 = vmatpush1.msra.mxu0 %v4423
    %4425 = vmatprep.subr.mxu0 0.0
    %v4426 = vand.u32 %v3512, 4294901760
    %4427 = vmatpush1.msra.mxu0 %v4426
    %4428 = vmatprep.subr.mxu0 0.0
    %v4429 = vand.u32 %v3513, 4294901760
    %4430 = vmatpush1.msra.mxu0 %v4429
    %4431 = vmatprep.subr.mxu0 0.0
    %v4432 = vand.u32 %v3514, 4294901760
    %4433 = vmatpush1.msra.mxu0 %v4432
    %4434 = vmatprep.subr.mxu0 0.0
    %v4435 = vand.u32 %v3515, 4294901760
    %4436 = vmatpush1.msra.mxu0 %v4435
    %4437 = vmatprep.subr.mxu0 0.0
    %v4438 = vand.u32 %v3516, 4294901760
    %4439 = vmatpush1.msra.mxu0 %v4438
    %4440 = vmatprep.subr.mxu0 0.0
    %v4441 = vand.u32 %v3517, 4294901760
    %4442 = vmatpush1.msra.mxu0 %v4441
    %4443 = vmatprep.subr.mxu0 0.0
    %v4444 = vand.u32 %v3518, 4294901760
    %4445 = vmatpush1.msra.mxu0 %v4444
    %4446 = vmatprep.subr.mxu0 0.0
    %v4447 = vand.u32 %v3519, 4294901760
    %4448 = vmatpush1.msra.mxu0 %v4447
    %4449 = vmatprep.subr.mxu0 0.0
    %v4450 = vand.u32 %v3520, 4294901760
    %4451 = vmatpush1.msra.mxu0 %v4450
    %4452 = vmatprep.subr.mxu0 0.0
    %v4453 = vand.u32 %v3521, 4294901760
    %4454 = vmatpush1.msra.mxu0 %v4453
    %4455 = vmatprep.subr.mxu0 0.0
    %v4456 = vand.u32 %v3522, 4294901760
    %4457 = vmatpush1.msra.mxu0 %v4456
    %v4458 = vand.u32 %v3479, 4294901760
    %4459 = vmatprep.mubr.f32.mxu0 %v4458
    %v4460 = vand.u32 %v3467, 4294901760
    %4461 = vmatmul.mubr.f32.gmra.mrb[0].mxu0 %v4460
    %v4462 = vpop.f32.mrb[0].mxu0
    %v4463 = vadd.f32 %v4352, %v4462
    %v4464 = vpop.f32.mrb[0].mxu0
    %v4465 = vand.u32 %v3480, 4294901760
    %4466 = vmatprep.mubr.f32.mxu0 %v4465
    %v4467 = vand.u32 %v3468, 4294901760
    %4468 = vmatmul.mubr.f32.gmra.mrb[0].mxu0 %v4467
    %v4469 = vpop.f32.mrb[0].mxu0
    %v4470 = vadd.f32 %v4359, %v4469
    %v4471 = vpop.f32.mrb[0].mxu0
    %4472 = vdwg.mxu0
    %4473 = vmatprep.subr.mxu0 0.0
    %v4474 = vand.u32 %v3523, 4294901760
    %4475 = vmatpush1.msra.mxu0 %v4474
    %4476 = vmatprep.subr.mxu0 0.0
    %v4477 = vand.u32 %v3524, 4294901760
    %4478 = vmatpush1.msra.mxu0 %v4477
    %4479 = vmatprep.subr.mxu0 0.0
    %v4480 = vand.u32 %v3525, 4294901760
    %4481 = vmatpush1.msra.mxu0 %v4480
    %4482 = vmatprep.subr.mxu0 0.0
    %v4483 = vand.u32 %v3526, 4294901760
    %4484 = vmatpush1.msra.mxu0 %v4483
    %4485 = vmatprep.subr.mxu0 0.0
    %v4486 = vand.u32 %v3527, 4294901760
    %4487 = vmatpush1.msra.mxu0 %v4486
    %4488 = vmatprep.subr.mxu0 0.0
    %v4489 = vand.u32 %v3528, 4294901760
    %4490 = vmatpush1.msra.mxu0 %v4489
    %4491 = vmatprep.subr.mxu0 0.0
    %v4492 = vand.u32 %v3529, 4294901760
    %4493 = vmatpush1.msra.mxu0 %v4492
    %4494 = vmatprep.subr.mxu0 0.0
    %v4495 = vand.u32 %v3530, 4294901760
    %4496 = vmatpush1.msra.mxu0 %v4495
    %4497 = vmatprep.subr.mxu0 0.0
    %v4498 = vand.u32 %v3531, 4294901760
    %4499 = vmatpush1.msra.mxu0 %v4498
    %4500 = vmatprep.subr.mxu0 0.0
    %v4501 = vand.u32 %v3532, 4294901760
    %4502 = vmatpush1.msra.mxu0 %v4501
    %4503 = vmatprep.subr.mxu0 0.0
    %v4504 = vand.u32 %v3533, 4294901760
    %4505 = vmatpush1.msra.mxu0 %v4504
    %4506 = vmatprep.subr.mxu0 0.0
    %v4507 = vand.u32 %v3534, 4294901760
    %4508 = vmatpush1.msra.mxu0 %v4507
    %4509 = vmatprep.subr.mxu0 0.0
    %v4510 = vand.u32 %v3535, 4294901760
    %4511 = vmatpush1.msra.mxu0 %v4510
    %4512 = vmatprep.subr.mxu0 0.0
    %v4513 = vand.u32 %v3536, 4294901760
    %4514 = vmatpush1.msra.mxu0 %v4513
    %4515 = vmatprep.subr.mxu0 0.0
    %v4516 = vand.u32 %v3537, 4294901760
    %4517 = vmatpush1.msra.mxu0 %v4516
    %4518 = vmatprep.subr.mxu0 0.0
    %v4519 = vand.u32 %v3538, 4294901760
    %4520 = vmatpush1.msra.mxu0 %v4519
    %4521 = vmatprep.subr.mxu0 0.0
    %v4522 = vand.u32 %v3539, 4294901760
    %4523 = vmatpush1.msra.mxu0 %v4522
    %4524 = vmatprep.subr.mxu0 0.0
    %v4525 = vand.u32 %v3540, 4294901760
    %4526 = vmatpush1.msra.mxu0 %v4525
    %4527 = vmatprep.subr.mxu0 0.0
    %v4528 = vand.u32 %v3541, 4294901760
    %4529 = vmatpush1.msra.mxu0 %v4528
    %4530 = vmatprep.subr.mxu0 0.0
    %v4531 = vand.u32 %v3542, 4294901760
    %4532 = vmatpush1.msra.mxu0 %v4531
    %4533 = vmatprep.subr.mxu0 0.0
    %v4534 = vand.u32 %v3543, 4294901760
    %4535 = vmatpush1.msra.mxu0 %v4534
    %4536 = vmatprep.subr.mxu0 0.0
    %v4537 = vand.u32 %v3544, 4294901760
    %4538 = vmatpush1.msra.mxu0 %v4537
    %4539 = vmatprep.subr.mxu0 0.0
    %v4540 = vand.u32 %v3545, 4294901760
    %4541 = vmatpush1.msra.mxu0 %v4540
    %4542 = vmatprep.subr.mxu0 0.0
    %v4543 = vand.u32 %v3546, 4294901760
    %4544 = vmatpush1.msra.mxu0 %v4543
    %4545 = vmatprep.subr.mxu0 0.0
    %v4546 = vand.u32 %v3547, 4294901760
    %4547 = vmatpush1.msra.mxu0 %v4546
    %4548 = vmatprep.subr.mxu0 0.0
    %v4549 = vand.u32 %v3548, 4294901760
    %4550 = vmatpush1.msra.mxu0 %v4549
    %4551 = vmatprep.subr.mxu0 0.0
    %v4552 = vand.u32 %v3549, 4294901760
    %4553 = vmatpush1.msra.mxu0 %v4552
    %4554 = vmatprep.subr.mxu0 0.0
    %v4555 = vand.u32 %v3550, 4294901760
    %4556 = vmatpush1.msra.mxu0 %v4555
    %4557 = vmatprep.subr.mxu0 0.0
    %v4558 = vand.u32 %v3551, 4294901760
    %4559 = vmatpush1.msra.mxu0 %v4558
    %4560 = vmatprep.subr.mxu0 0.0
    %v4561 = vand.u32 %v3552, 4294901760
    %4562 = vmatpush1.msra.mxu0 %v4561
    %4563 = vmatprep.subr.mxu0 0.0
    %v4564 = vand.u32 %v3553, 4294901760
    %4565 = vmatpush1.msra.mxu0 %v4564
    %4566 = vmatprep.subr.mxu0 0.0
    %v4567 = vand.u32 %v3554, 4294901760
    %4568 = vmatpush1.msra.mxu0 %v4567
    %v4569 = vand.u32 %v3489, 4294901760
    %v4570 = vsub.f32 %v3489, %v4569
    %v4571 = vand.u32 %v4570, 4294901760
    %v4572 = vsub.f32 %v4570, %v4571
    %v4573 = vand.u32 %v4572, 4294901760
    %4574 = vmatprep.mubr.f32.mxu0 %v4573
    %v4575 = vand.u32 %v3469, 4294901760
    %v4576 = vsub.f32 %v3469, %v4575
    %v4577 = vand.u32 %v4576, 4294901760
    %v4578 = vsub.f32 %v4576, %v4577
    %v4579 = vand.u32 %v4578, 4294901760
    %4580 = vmatmul.mubr.f32.gmra.mrb[0].mxu0 %v4579
    %v4581 = vpop.f32.mrb[0].mxu0
    %v4582 = vadd.f32 %v4463, %v4581
    %v4583 = vpop.f32.mrb[0].mxu0
    %v4584 = vand.u32 %v3490, 4294901760
    %v4585 = vsub.f32 %v3490, %v4584
    %v4586 = vand.u32 %v4585, 4294901760
    %v4587 = vsub.f32 %v4585, %v4586
    %v4588 = vand.u32 %v4587, 4294901760
    %4589 = vmatprep.mubr.f32.mxu0 %v4588
    %v4590 = vand.u32 %v3470, 4294901760
    %v4591 = vsub.f32 %v3470, %v4590
    %v4592 = vand.u32 %v4591, 4294901760
    %v4593 = vsub.f32 %v4591, %v4592
    %v4594 = vand.u32 %v4593, 4294901760
    %4595 = vmatmul.mubr.f32.gmra.mrb[0].mxu0 %v4594
    %v4596 = vpop.f32.mrb[0].mxu0
    %v4597 = vadd.f32 %v4470, %v4596
    %v4598 = vpop.f32.mrb[0].mxu0
    %4599 = vdwg.mxu0
    %4600 = vmatprep.subr.mxu0 0.0
    %v4601 = vand.u32 %v3523, 4294901760
    %v4602 = vsub.f32 %v3523, %v4601
    %v4603 = vand.u32 %v4602, 4294901760
    %v4604 = vsub.f32 %v4602, %v4603
    %v4605 = vand.u32 %v4604, 4294901760
    %4606 = vmatpush1.msra.mxu0 %v4605
    %4607 = vmatprep.subr.mxu0 0.0
    %v4608 = vand.u32 %v3524, 4294901760
    %v4609 = vsub.f32 %v3524, %v4608
    %v4610 = vand.u32 %v4609, 4294901760
    %v4611 = vsub.f32 %v4609, %v4610
    %v4612 = vand.u32 %v4611, 4294901760
    %4613 = vmatpush1.msra.mxu0 %v4612
    %4614 = vmatprep.subr.mxu0 0.0
    %v4615 = vand.u32 %v3525, 4294901760
    %v4616 = vsub.f32 %v3525, %v4615
    %v4617 = vand.u32 %v4616, 4294901760
    %v4618 = vsub.f32 %v4616, %v4617
    %v4619 = vand.u32 %v4618, 4294901760
    %4620 = vmatpush1.msra.mxu0 %v4619
    %4621 = vmatprep.subr.mxu0 0.0
    %v4622 = vand.u32 %v3526, 4294901760
    %v4623 = vsub.f32 %v3526, %v4622
    %v4624 = vand.u32 %v4623, 4294901760
    %v4625 = vsub.f32 %v4623, %v4624
    %v4626 = vand.u32 %v4625, 4294901760
    %4627 = vmatpush1.msra.mxu0 %v4626
    %4628 = vmatprep.subr.mxu0 0.0
    %v4629 = vand.u32 %v3527, 4294901760
    %v4630 = vsub.f32 %v3527, %v4629
    %v4631 = vand.u32 %v4630, 4294901760
    %v4632 = vsub.f32 %v4630, %v4631
    %v4633 = vand.u32 %v4632, 4294901760
    %4634 = vmatpush1.msra.mxu0 %v4633
    %4635 = vmatprep.subr.mxu0 0.0
    %v4636 = vand.u32 %v3528, 4294901760
    %v4637 = vsub.f32 %v3528, %v4636
    %v4638 = vand.u32 %v4637, 4294901760
    %v4639 = vsub.f32 %v4637, %v4638
    %v4640 = vand.u32 %v4639, 4294901760
    %4641 = vmatpush1.msra.mxu0 %v4640
    %4642 = vmatprep.subr.mxu0 0.0
    %v4643 = vand.u32 %v3529, 4294901760
    %v4644 = vsub.f32 %v3529, %v4643
    %v4645 = vand.u32 %v4644, 4294901760
    %v4646 = vsub.f32 %v4644, %v4645
    %v4647 = vand.u32 %v4646, 4294901760
    %4648 = vmatpush1.msra.mxu0 %v4647
    %4649 = vmatprep.subr.mxu0 0.0
    %v4650 = vand.u32 %v3530, 4294901760
    %v4651 = vsub.f32 %v3530, %v4650
    %v4652 = vand.u32 %v4651, 4294901760
    %v4653 = vsub.f32 %v4651, %v4652
    %v4654 = vand.u32 %v4653, 4294901760
    %4655 = vmatpush1.msra.mxu0 %v4654
    %4656 = vmatprep.subr.mxu0 0.0
    %v4657 = vand.u32 %v3531, 4294901760
    %v4658 = vsub.f32 %v3531, %v4657
    %v4659 = vand.u32 %v4658, 4294901760
    %v4660 = vsub.f32 %v4658, %v4659
    %v4661 = vand.u32 %v4660, 4294901760
    %4662 = vmatpush1.msra.mxu0 %v4661
    %4663 = vmatprep.subr.mxu0 0.0
    %v4664 = vand.u32 %v3532, 4294901760
    %v4665 = vsub.f32 %v3532, %v4664
    %v4666 = vand.u32 %v4665, 4294901760
    %v4667 = vsub.f32 %v4665, %v4666
    %v4668 = vand.u32 %v4667, 4294901760
    %4669 = vmatpush1.msra.mxu0 %v4668
    %4670 = vmatprep.subr.mxu0 0.0
    %v4671 = vand.u32 %v3533, 4294901760
    %v4672 = vsub.f32 %v3533, %v4671
    %v4673 = vand.u32 %v4672, 4294901760
    %v4674 = vsub.f32 %v4672, %v4673
    %v4675 = vand.u32 %v4674, 4294901760
    %4676 = vmatpush1.msra.mxu0 %v4675
    %4677 = vmatprep.subr.mxu0 0.0
    %v4678 = vand.u32 %v3534, 4294901760
    %v4679 = vsub.f32 %v3534, %v4678
    %v4680 = vand.u32 %v4679, 4294901760
    %v4681 = vsub.f32 %v4679, %v4680
    %v4682 = vand.u32 %v4681, 4294901760
    %4683 = vmatpush1.msra.mxu0 %v4682
    %4684 = vmatprep.subr.mxu0 0.0
    %v4685 = vand.u32 %v3535, 4294901760
    %v4686 = vsub.f32 %v3535, %v4685
    %v4687 = vand.u32 %v4686, 4294901760
    %v4688 = vsub.f32 %v4686, %v4687
    %v4689 = vand.u32 %v4688, 4294901760
    %4690 = vmatpush1.msra.mxu0 %v4689
    %4691 = vmatprep.subr.mxu0 0.0
    %v4692 = vand.u32 %v3536, 4294901760
    %v4693 = vsub.f32 %v3536, %v4692
    %v4694 = vand.u32 %v4693, 4294901760
    %v4695 = vsub.f32 %v4693, %v4694
    %v4696 = vand.u32 %v4695, 4294901760
    %4697 = vmatpush1.msra.mxu0 %v4696
    %4698 = vmatprep.subr.mxu0 0.0
    %v4699 = vand.u32 %v3537, 4294901760
    %v4700 = vsub.f32 %v3537, %v4699
    %v4701 = vand.u32 %v4700, 4294901760
    %v4702 = vsub.f32 %v4700, %v4701
    %v4703 = vand.u32 %v4702, 4294901760
    %4704 = vmatpush1.msra.mxu0 %v4703
    %4705 = vmatprep.subr.mxu0 0.0
    %v4706 = vand.u32 %v3538, 4294901760
    %v4707 = vsub.f32 %v3538, %v4706
    %v4708 = vand.u32 %v4707, 4294901760
    %v4709 = vsub.f32 %v4707, %v4708
    %v4710 = vand.u32 %v4709, 4294901760
    %4711 = vmatpush1.msra.mxu0 %v4710
    %4712 = vmatprep.subr.mxu0 0.0
    %v4713 = vand.u32 %v3539, 4294901760
    %v4714 = vsub.f32 %v3539, %v4713
    %v4715 = vand.u32 %v4714, 4294901760
    %v4716 = vsub.f32 %v4714, %v4715
    %v4717 = vand.u32 %v4716, 4294901760
    %4718 = vmatpush1.msra.mxu0 %v4717
    %4719 = vmatprep.subr.mxu0 0.0
    %v4720 = vand.u32 %v3540, 4294901760
    %v4721 = vsub.f32 %v3540, %v4720
    %v4722 = vand.u32 %v4721, 4294901760
    %v4723 = vsub.f32 %v4721, %v4722
    %v4724 = vand.u32 %v4723, 4294901760
    %4725 = vmatpush1.msra.mxu0 %v4724
    %4726 = vmatprep.subr.mxu0 0.0
    %v4727 = vand.u32 %v3541, 4294901760
    %v4728 = vsub.f32 %v3541, %v4727
    %v4729 = vand.u32 %v4728, 4294901760
    %v4730 = vsub.f32 %v4728, %v4729
    %v4731 = vand.u32 %v4730, 4294901760
    %4732 = vmatpush1.msra.mxu0 %v4731
    %4733 = vmatprep.subr.mxu0 0.0
    %v4734 = vand.u32 %v3542, 4294901760
    %v4735 = vsub.f32 %v3542, %v4734
    %v4736 = vand.u32 %v4735, 4294901760
    %v4737 = vsub.f32 %v4735, %v4736
    %v4738 = vand.u32 %v4737, 4294901760
    %4739 = vmatpush1.msra.mxu0 %v4738
    %4740 = vmatprep.subr.mxu0 0.0
    %v4741 = vand.u32 %v3543, 4294901760
    %v4742 = vsub.f32 %v3543, %v4741
    %v4743 = vand.u32 %v4742, 4294901760
    %v4744 = vsub.f32 %v4742, %v4743
    %v4745 = vand.u32 %v4744, 4294901760
    %4746 = vmatpush1.msra.mxu0 %v4745
    %4747 = vmatprep.subr.mxu0 0.0
    %v4748 = vand.u32 %v3544, 4294901760
    %v4749 = vsub.f32 %v3544, %v4748
    %v4750 = vand.u32 %v4749, 4294901760
    %v4751 = vsub.f32 %v4749, %v4750
    %v4752 = vand.u32 %v4751, 4294901760
    %4753 = vmatpush1.msra.mxu0 %v4752
    %4754 = vmatprep.subr.mxu0 0.0
    %v4755 = vand.u32 %v3545, 4294901760
    %v4756 = vsub.f32 %v3545, %v4755
    %v4757 = vand.u32 %v4756, 4294901760
    %v4758 = vsub.f32 %v4756, %v4757
    %v4759 = vand.u32 %v4758, 4294901760
    %4760 = vmatpush1.msra.mxu0 %v4759
    %4761 = vmatprep.subr.mxu0 0.0
    %v4762 = vand.u32 %v3546, 4294901760
    %v4763 = vsub.f32 %v3546, %v4762
    %v4764 = vand.u32 %v4763, 4294901760
    %v4765 = vsub.f32 %v4763, %v4764
    %v4766 = vand.u32 %v4765, 4294901760
    %4767 = vmatpush1.msra.mxu0 %v4766
    %4768 = vmatprep.subr.mxu0 0.0
    %v4769 = vand.u32 %v3547, 4294901760
    %v4770 = vsub.f32 %v3547, %v4769
    %v4771 = vand.u32 %v4770, 4294901760
    %v4772 = vsub.f32 %v4770, %v4771
    %v4773 = vand.u32 %v4772, 4294901760
    %4774 = vmatpush1.msra.mxu0 %v4773
    %4775 = vmatprep.subr.mxu0 0.0
    %v4776 = vand.u32 %v3548, 4294901760
    %v4777 = vsub.f32 %v3548, %v4776
    %v4778 = vand.u32 %v4777, 4294901760
    %v4779 = vsub.f32 %v4777, %v4778
    %v4780 = vand.u32 %v4779, 4294901760
    %4781 = vmatpush1.msra.mxu0 %v4780
    %4782 = vmatprep.subr.mxu0 0.0
    %v4783 = vand.u32 %v3549, 4294901760
    %v4784 = vsub.f32 %v3549, %v4783
    %v4785 = vand.u32 %v4784, 4294901760
    %v4786 = vsub.f32 %v4784, %v4785
    %v4787 = vand.u32 %v4786, 4294901760
    %4788 = vmatpush1.msra.mxu0 %v4787
    %4789 = vmatprep.subr.mxu0 0.0
    %v4790 = vand.u32 %v3550, 4294901760
    %v4791 = vsub.f32 %v3550, %v4790
    %v4792 = vand.u32 %v4791, 4294901760
    %v4793 = vsub.f32 %v4791, %v4792
    %v4794 = vand.u32 %v4793, 4294901760
    %4795 = vmatpush1.msra.mxu0 %v4794
    %4796 = vmatprep.subr.mxu0 0.0
    %v4797 = vand.u32 %v3551, 4294901760
    %v4798 = vsub.f32 %v3551, %v4797
    %v4799 = vand.u32 %v4798, 4294901760
    %v4800 = vsub.f32 %v4798, %v4799
    %v4801 = vand.u32 %v4800, 4294901760
    %4802 = vmatpush1.msra.mxu0 %v4801
    %4803 = vmatprep.subr.mxu0 0.0
    %v4804 = vand.u32 %v3552, 4294901760
    %v4805 = vsub.f32 %v3552, %v4804
    %v4806 = vand.u32 %v4805, 4294901760
    %v4807 = vsub.f32 %v4805, %v4806
    %v4808 = vand.u32 %v4807, 4294901760
    %4809 = vmatpush1.msra.mxu0 %v4808
    %4810 = vmatprep.subr.mxu0 0.0
    %v4811 = vand.u32 %v3553, 4294901760
    %v4812 = vsub.f32 %v3553, %v4811
    %v4813 = vand.u32 %v4812, 4294901760
    %v4814 = vsub.f32 %v4812, %v4813
    %v4815 = vand.u32 %v4814, 4294901760
    %4816 = vmatpush1.msra.mxu0 %v4815
    %4817 = vmatprep.subr.mxu0 0.0
    %v4818 = vand.u32 %v3554, 4294901760
    %v4819 = vsub.f32 %v3554, %v4818
    %v4820 = vand.u32 %v4819, 4294901760
    %v4821 = vsub.f32 %v4819, %v4820
    %v4822 = vand.u32 %v4821, 4294901760
    %4823 = vmatpush1.msra.mxu0 %v4822
    %v4824 = vand.u32 %v3489, 4294901760
    %4825 = vmatprep.mubr.f32.mxu0 %v4824
    %v4826 = vand.u32 %v3469, 4294901760
    %4827 = vmatmul.mubr.f32.gmra.mrb[0].mxu0 %v4826
    %v4828 = vpop.f32.mrb[0].mxu0
    %v4829 = vadd.f32 %v4582, %v4828
    %v4830 = vpop.f32.mrb[0].mxu0
    %v4831 = vand.u32 %v3490, 4294901760
    %4832 = vmatprep.mubr.f32.mxu0 %v4831
    %v4833 = vand.u32 %v3470, 4294901760
    %4834 = vmatmul.mubr.f32.gmra.mrb[0].mxu0 %v4833
    %v4835 = vpop.f32.mrb[0].mxu0
    %v4836 = vadd.f32 %v4597, %v4835
    %v4837 = vpop.f32.mrb[0].mxu0
    %4838 = vdwg.mxu0
    %4839 = vmatprep.subr.mxu0 0.0
    %v4840 = vand.u32 %v3523, 4294901760
    %v4841 = vsub.f32 %v3523, %v4840
    %4842 = vmatpush1.msra.mxu0 %v4841
    %4843 = vmatprep.subr.mxu0 0.0
    %v4844 = vand.u32 %v3524, 4294901760
    %v4845 = vsub.f32 %v3524, %v4844
    %4846 = vmatpush1.msra.mxu0 %v4845
    %4847 = vmatprep.subr.mxu0 0.0
    %v4848 = vand.u32 %v3525, 4294901760
    %v4849 = vsub.f32 %v3525, %v4848
    %4850 = vmatpush1.msra.mxu0 %v4849
    %4851 = vmatprep.subr.mxu0 0.0
    %v4852 = vand.u32 %v3526, 4294901760
    %v4853 = vsub.f32 %v3526, %v4852
    %4854 = vmatpush1.msra.mxu0 %v4853
    %4855 = vmatprep.subr.mxu0 0.0
    %v4856 = vand.u32 %v3527, 4294901760
    %v4857 = vsub.f32 %v3527, %v4856
    %4858 = vmatpush1.msra.mxu0 %v4857
    %4859 = vmatprep.subr.mxu0 0.0
    %v4860 = vand.u32 %v3528, 4294901760
    %v4861 = vsub.f32 %v3528, %v4860
    %4862 = vmatpush1.msra.mxu0 %v4861
    %4863 = vmatprep.subr.mxu0 0.0
    %v4864 = vand.u32 %v3529, 4294901760
    %v4865 = vsub.f32 %v3529, %v4864
    %4866 = vmatpush1.msra.mxu0 %v4865
    %4867 = vmatprep.subr.mxu0 0.0
    %v4868 = vand.u32 %v3530, 4294901760
    %v4869 = vsub.f32 %v3530, %v4868
    %4870 = vmatpush1.msra.mxu0 %v4869
    %4871 = vmatprep.subr.mxu0 0.0
    %v4872 = vand.u32 %v3531, 4294901760
    %v4873 = vsub.f32 %v3531, %v4872
    %4874 = vmatpush1.msra.mxu0 %v4873
    %4875 = vmatprep.subr.mxu0 0.0
    %v4876 = vand.u32 %v3532, 4294901760
    %v4877 = vsub.f32 %v3532, %v4876
    %4878 = vmatpush1.msra.mxu0 %v4877
    %4879 = vmatprep.subr.mxu0 0.0
    %v4880 = vand.u32 %v3533, 4294901760
    %v4881 = vsub.f32 %v3533, %v4880
    %4882 = vmatpush1.msra.mxu0 %v4881
    %4883 = vmatprep.subr.mxu0 0.0
    %v4884 = vand.u32 %v3534, 4294901760
    %v4885 = vsub.f32 %v3534, %v4884
    %4886 = vmatpush1.msra.mxu0 %v4885
    %4887 = vmatprep.subr.mxu0 0.0
    %v4888 = vand.u32 %v3535, 4294901760
    %v4889 = vsub.f32 %v3535, %v4888
    %4890 = vmatpush1.msra.mxu0 %v4889
    %4891 = vmatprep.subr.mxu0 0.0
    %v4892 = vand.u32 %v3536, 4294901760
    %v4893 = vsub.f32 %v3536, %v4892
    %4894 = vmatpush1.msra.mxu0 %v4893
    %4895 = vmatprep.subr.mxu0 0.0
    %v4896 = vand.u32 %v3537, 4294901760
    %v4897 = vsub.f32 %v3537, %v4896
    %4898 = vmatpush1.msra.mxu0 %v4897
    %4899 = vmatprep.subr.mxu0 0.0
    %v4900 = vand.u32 %v3538, 4294901760
    %v4901 = vsub.f32 %v3538, %v4900
    %4902 = vmatpush1.msra.mxu0 %v4901
    %4903 = vmatprep.subr.mxu0 0.0
    %v4904 = vand.u32 %v3539, 4294901760
    %v4905 = vsub.f32 %v3539, %v4904
    %4906 = vmatpush1.msra.mxu0 %v4905
    %4907 = vmatprep.subr.mxu0 0.0
    %v4908 = vand.u32 %v3540, 4294901760
    %v4909 = vsub.f32 %v3540, %v4908
    %4910 = vmatpush1.msra.mxu0 %v4909
    %4911 = vmatprep.subr.mxu0 0.0
    %v4912 = vand.u32 %v3541, 4294901760
    %v4913 = vsub.f32 %v3541, %v4912
    %4914 = vmatpush1.msra.mxu0 %v4913
    %4915 = vmatprep.subr.mxu0 0.0
    %v4916 = vand.u32 %v3542, 4294901760
    %v4917 = vsub.f32 %v3542, %v4916
    %4918 = vmatpush1.msra.mxu0 %v4917
    %4919 = vmatprep.subr.mxu0 0.0
    %v4920 = vand.u32 %v3543, 4294901760
    %v4921 = vsub.f32 %v3543, %v4920
    %4922 = vmatpush1.msra.mxu0 %v4921
    %4923 = vmatprep.subr.mxu0 0.0
    %v4924 = vand.u32 %v3544, 4294901760
    %v4925 = vsub.f32 %v3544, %v4924
    %4926 = vmatpush1.msra.mxu0 %v4925
    %4927 = vmatprep.subr.mxu0 0.0
    %v4928 = vand.u32 %v3545, 4294901760
    %v4929 = vsub.f32 %v3545, %v4928
    %4930 = vmatpush1.msra.mxu0 %v4929
    %4931 = vmatprep.subr.mxu0 0.0
    %v4932 = vand.u32 %v3546, 4294901760
    %v4933 = vsub.f32 %v3546, %v4932
    %4934 = vmatpush1.msra.mxu0 %v4933
    %4935 = vmatprep.subr.mxu0 0.0
    %v4936 = vand.u32 %v3547, 4294901760
    %v4937 = vsub.f32 %v3547, %v4936
    %4938 = vmatpush1.msra.mxu0 %v4937
    %4939 = vmatprep.subr.mxu0 0.0
    %v4940 = vand.u32 %v3548, 4294901760
    %v4941 = vsub.f32 %v3548, %v4940
    %4942 = vmatpush1.msra.mxu0 %v4941
    %4943 = vmatprep.subr.mxu0 0.0
    %v4944 = vand.u32 %v3549, 4294901760
    %v4945 = vsub.f32 %v3549, %v4944
    %4946 = vmatpush1.msra.mxu0 %v4945
    %4947 = vmatprep.subr.mxu0 0.0
    %v4948 = vand.u32 %v3550, 4294901760
    %v4949 = vsub.f32 %v3550, %v4948
    %4950 = vmatpush1.msra.mxu0 %v4949
    %4951 = vmatprep.subr.mxu0 0.0
    %v4952 = vand.u32 %v3551, 4294901760
    %v4953 = vsub.f32 %v3551, %v4952
    %4954 = vmatpush1.msra.mxu0 %v4953
    %4955 = vmatprep.subr.mxu0 0.0
    %v4956 = vand.u32 %v3552, 4294901760
    %v4957 = vsub.f32 %v3552, %v4956
    %4958 = vmatpush1.msra.mxu0 %v4957
    %4959 = vmatprep.subr.mxu0 0.0
    %v4960 = vand.u32 %v3553, 4294901760
    %v4961 = vsub.f32 %v3553, %v4960
    %4962 = vmatpush1.msra.mxu0 %v4961
    %4963 = vmatprep.subr.mxu0 0.0
    %v4964 = vand.u32 %v3554, 4294901760
    %v4965 = vsub.f32 %v3554, %v4964
    %4966 = vmatpush1.msra.mxu0 %v4965
    %v4967 = vand.u32 %v3489, 4294901760
    %v4968 = vsub.f32 %v3489, %v4967
    %4969 = vmatprep.mubr.f32.mxu0 %v4968
    %v4970 = vand.u32 %v3469, 4294901760
    %v4971 = vsub.f32 %v3469, %v4970
    %4972 = vmatmul.mubr.f32.gmra.mrb[0].mxu0 %v4971
    %v4973 = vpop.f32.mrb[0].mxu0
    %v4974 = vadd.f32 %v4829, %v4973
    %v4975 = vpop.f32.mrb[0].mxu0
    %v4976 = vand.u32 %v3490, 4294901760
    %v4977 = vsub.f32 %v3490, %v4976
    %4978 = vmatprep.mubr.f32.mxu0 %v4977
    %v4979 = vand.u32 %v3470, 4294901760
    %v4980 = vsub.f32 %v3470, %v4979
    %4981 = vmatmul.mubr.f32.gmra.mrb[0].mxu0 %v4980
    %v4982 = vpop.f32.mrb[0].mxu0
    %v4983 = vadd.f32 %v4836, %v4982
    %v4984 = vpop.f32.mrb[0].mxu0
    %4985 = vdwg.mxu0
    %4986 = vmatprep.subr.mxu0 0.0
    %v4987 = vand.u32 %v3523, 4294901760
    %4988 = vmatpush1.msra.mxu0 %v4987
    %4989 = vmatprep.subr.mxu0 0.0
    %v4990 = vand.u32 %v3524, 4294901760
    %4991 = vmatpush1.msra.mxu0 %v4990
    %4992 = vmatprep.subr.mxu0 0.0
    %v4993 = vand.u32 %v3525, 4294901760
    %4994 = vmatpush1.msra.mxu0 %v4993
    %4995 = vmatprep.subr.mxu0 0.0
    %v4996 = vand.u32 %v3526, 4294901760
    %4997 = vmatpush1.msra.mxu0 %v4996
    %4998 = vmatprep.subr.mxu0 0.0
    %v4999 = vand.u32 %v3527, 4294901760
    %5000 = vmatpush1.msra.mxu0 %v4999
    %5001 = vmatprep.subr.mxu0 0.0
    %v5002 = vand.u32 %v3528, 4294901760
    %5003 = vmatpush1.msra.mxu0 %v5002
    %5004 = vmatprep.subr.mxu0 0.0
    %v5005 = vand.u32 %v3529, 4294901760
    %5006 = vmatpush1.msra.mxu0 %v5005
    %5007 = vmatprep.subr.mxu0 0.0
    %v5008 = vand.u32 %v3530, 4294901760
    %5009 = vmatpush1.msra.mxu0 %v5008
    %5010 = vmatprep.subr.mxu0 0.0
    %v5011 = vand.u32 %v3531, 4294901760
    %5012 = vmatpush1.msra.mxu0 %v5011
    %5013 = vmatprep.subr.mxu0 0.0
    %v5014 = vand.u32 %v3532, 4294901760
    %5015 = vmatpush1.msra.mxu0 %v5014
    %5016 = vmatprep.subr.mxu0 0.0
    %v5017 = vand.u32 %v3533, 4294901760
    %5018 = vmatpush1.msra.mxu0 %v5017
    %5019 = vmatprep.subr.mxu0 0.0
    %v5020 = vand.u32 %v3534, 4294901760
    %5021 = vmatpush1.msra.mxu0 %v5020
    %5022 = vmatprep.subr.mxu0 0.0
    %v5023 = vand.u32 %v3535, 4294901760
    %5024 = vmatpush1.msra.mxu0 %v5023
    %5025 = vmatprep.subr.mxu0 0.0
    %v5026 = vand.u32 %v3536, 4294901760
    %5027 = vmatpush1.msra.mxu0 %v5026
    %5028 = vmatprep.subr.mxu0 0.0
    %v5029 = vand.u32 %v3537, 4294901760
    %5030 = vmatpush1.msra.mxu0 %v5029
    %5031 = vmatprep.subr.mxu0 0.0
    %v5032 = vand.u32 %v3538, 4294901760
    %5033 = vmatpush1.msra.mxu0 %v5032
    %5034 = vmatprep.subr.mxu0 0.0
    %v5035 = vand.u32 %v3539, 4294901760
    %5036 = vmatpush1.msra.mxu0 %v5035
    %5037 = vmatprep.subr.mxu0 0.0
    %v5038 = vand.u32 %v3540, 4294901760
    %5039 = vmatpush1.msra.mxu0 %v5038
    %5040 = vmatprep.subr.mxu0 0.0
    %v5041 = vand.u32 %v3541, 4294901760
    %5042 = vmatpush1.msra.mxu0 %v5041
    %5043 = vmatprep.subr.mxu0 0.0
    %v5044 = vand.u32 %v3542, 4294901760
    %5045 = vmatpush1.msra.mxu0 %v5044
    %5046 = vmatprep.subr.mxu0 0.0
    %v5047 = vand.u32 %v3543, 4294901760
    %5048 = vmatpush1.msra.mxu0 %v5047
    %5049 = vmatprep.subr.mxu0 0.0
    %v5050 = vand.u32 %v3544, 4294901760
    %5051 = vmatpush1.msra.mxu0 %v5050
    %5052 = vmatprep.subr.mxu0 0.0
    %v5053 = vand.u32 %v3545, 4294901760
    %5054 = vmatpush1.msra.mxu0 %v5053
    %5055 = vmatprep.subr.mxu0 0.0
    %v5056 = vand.u32 %v3546, 4294901760
    %5057 = vmatpush1.msra.mxu0 %v5056
    %5058 = vmatprep.subr.mxu0 0.0
    %v5059 = vand.u32 %v3547, 4294901760
    %5060 = vmatpush1.msra.mxu0 %v5059
    %5061 = vmatprep.subr.mxu0 0.0
    %v5062 = vand.u32 %v3548, 4294901760
    %5063 = vmatpush1.msra.mxu0 %v5062
    %5064 = vmatprep.subr.mxu0 0.0
    %v5065 = vand.u32 %v3549, 4294901760
    %5066 = vmatpush1.msra.mxu0 %v5065
    %5067 = vmatprep.subr.mxu0 0.0
    %v5068 = vand.u32 %v3550, 4294901760
    %5069 = vmatpush1.msra.mxu0 %v5068
    %5070 = vmatprep.subr.mxu0 0.0
    %v5071 = vand.u32 %v3551, 4294901760
    %5072 = vmatpush1.msra.mxu0 %v5071
    %5073 = vmatprep.subr.mxu0 0.0
    %v5074 = vand.u32 %v3552, 4294901760
    %5075 = vmatpush1.msra.mxu0 %v5074
    %5076 = vmatprep.subr.mxu0 0.0
    %v5077 = vand.u32 %v3553, 4294901760
    %5078 = vmatpush1.msra.mxu0 %v5077
    %5079 = vmatprep.subr.mxu0 0.0
    %v5080 = vand.u32 %v3554, 4294901760
    %5081 = vmatpush1.msra.mxu0 %v5080
    %v5082 = vand.u32 %v3489, 4294901760
    %v5083 = vsub.f32 %v3489, %v5082
    %v5084 = vand.u32 %v5083, 4294901760
    %5085 = vmatprep.mubr.f32.mxu0 %v5084
    %v5086 = vand.u32 %v3469, 4294901760
    %v5087 = vsub.f32 %v3469, %v5086
    %v5088 = vand.u32 %v5087, 4294901760
    %5089 = vmatmul.mubr.f32.gmra.mrb[0].mxu0 %v5088
    %v5090 = vpop.f32.mrb[0].mxu0
    %v5091 = vadd.f32 %v4974, %v5090
    %v5092 = vpop.f32.mrb[0].mxu0
    %v5093 = vand.u32 %v3490, 4294901760
    %v5094 = vsub.f32 %v3490, %v5093
    %v5095 = vand.u32 %v5094, 4294901760
    %5096 = vmatprep.mubr.f32.mxu0 %v5095
    %v5097 = vand.u32 %v3470, 4294901760
    %v5098 = vsub.f32 %v3470, %v5097
    %v5099 = vand.u32 %v5098, 4294901760
    %5100 = vmatmul.mubr.f32.gmra.mrb[0].mxu0 %v5099
    %v5101 = vpop.f32.mrb[0].mxu0
    %v5102 = vadd.f32 %v4983, %v5101
    %v5103 = vpop.f32.mrb[0].mxu0
    %5104 = vdwg.mxu0
    %5105 = vmatprep.subr.mxu0 0.0
    %v5106 = vand.u32 %v3523, 4294901760
    %v5107 = vsub.f32 %v3523, %v5106
    %v5108 = vand.u32 %v5107, 4294901760
    %5109 = vmatpush1.msra.mxu0 %v5108
    %5110 = vmatprep.subr.mxu0 0.0
    %v5111 = vand.u32 %v3524, 4294901760
    %v5112 = vsub.f32 %v3524, %v5111
    %v5113 = vand.u32 %v5112, 4294901760
    %5114 = vmatpush1.msra.mxu0 %v5113
    %5115 = vmatprep.subr.mxu0 0.0
    %v5116 = vand.u32 %v3525, 4294901760
    %v5117 = vsub.f32 %v3525, %v5116
    %v5118 = vand.u32 %v5117, 4294901760
    %5119 = vmatpush1.msra.mxu0 %v5118
    %5120 = vmatprep.subr.mxu0 0.0
    %v5121 = vand.u32 %v3526, 4294901760
    %v5122 = vsub.f32 %v3526, %v5121
    %v5123 = vand.u32 %v5122, 4294901760
    %5124 = vmatpush1.msra.mxu0 %v5123
    %5125 = vmatprep.subr.mxu0 0.0
    %v5126 = vand.u32 %v3527, 4294901760
    %v5127 = vsub.f32 %v3527, %v5126
    %v5128 = vand.u32 %v5127, 4294901760
    %5129 = vmatpush1.msra.mxu0 %v5128
    %5130 = vmatprep.subr.mxu0 0.0
    %v5131 = vand.u32 %v3528, 4294901760
    %v5132 = vsub.f32 %v3528, %v5131
    %v5133 = vand.u32 %v5132, 4294901760
    %5134 = vmatpush1.msra.mxu0 %v5133
    %5135 = vmatprep.subr.mxu0 0.0
    %v5136 = vand.u32 %v3529, 4294901760
    %v5137 = vsub.f32 %v3529, %v5136
    %v5138 = vand.u32 %v5137, 4294901760
    %5139 = vmatpush1.msra.mxu0 %v5138
    %5140 = vmatprep.subr.mxu0 0.0
    %v5141 = vand.u32 %v3530, 4294901760
    %v5142 = vsub.f32 %v3530, %v5141
    %v5143 = vand.u32 %v5142, 4294901760
    %5144 = vmatpush1.msra.mxu0 %v5143
    %5145 = vmatprep.subr.mxu0 0.0
    %v5146 = vand.u32 %v3531, 4294901760
    %v5147 = vsub.f32 %v3531, %v5146
    %v5148 = vand.u32 %v5147, 4294901760
    %5149 = vmatpush1.msra.mxu0 %v5148
    %5150 = vmatprep.subr.mxu0 0.0
    %v5151 = vand.u32 %v3532, 4294901760
    %v5152 = vsub.f32 %v3532, %v5151
    %v5153 = vand.u32 %v5152, 4294901760
    %5154 = vmatpush1.msra.mxu0 %v5153
    %5155 = vmatprep.subr.mxu0 0.0
    %v5156 = vand.u32 %v3533, 4294901760
    %v5157 = vsub.f32 %v3533, %v5156
    %v5158 = vand.u32 %v5157, 4294901760
    %5159 = vmatpush1.msra.mxu0 %v5158
    %5160 = vmatprep.subr.mxu0 0.0
    %v5161 = vand.u32 %v3534, 4294901760
    %v5162 = vsub.f32 %v3534, %v5161
    %v5163 = vand.u32 %v5162, 4294901760
    %5164 = vmatpush1.msra.mxu0 %v5163
    %5165 = vmatprep.subr.mxu0 0.0
    %v5166 = vand.u32 %v3535, 4294901760
    %v5167 = vsub.f32 %v3535, %v5166
    %v5168 = vand.u32 %v5167, 4294901760
    %5169 = vmatpush1.msra.mxu0 %v5168
    %5170 = vmatprep.subr.mxu0 0.0
    %v5171 = vand.u32 %v3536, 4294901760
    %v5172 = vsub.f32 %v3536, %v5171
    %v5173 = vand.u32 %v5172, 4294901760
    %5174 = vmatpush1.msra.mxu0 %v5173
    %5175 = vmatprep.subr.mxu0 0.0
    %v5176 = vand.u32 %v3537, 4294901760
    %v5177 = vsub.f32 %v3537, %v5176
    %v5178 = vand.u32 %v5177, 4294901760
    %5179 = vmatpush1.msra.mxu0 %v5178
    %5180 = vmatprep.subr.mxu0 0.0
    %v5181 = vand.u32 %v3538, 4294901760
    %v5182 = vsub.f32 %v3538, %v5181
    %v5183 = vand.u32 %v5182, 4294901760
    %5184 = vmatpush1.msra.mxu0 %v5183
    %5185 = vmatprep.subr.mxu0 0.0
    %v5186 = vand.u32 %v3539, 4294901760
    %v5187 = vsub.f32 %v3539, %v5186
    %v5188 = vand.u32 %v5187, 4294901760
    %5189 = vmatpush1.msra.mxu0 %v5188
    %5190 = vmatprep.subr.mxu0 0.0
    %v5191 = vand.u32 %v3540, 4294901760
    %v5192 = vsub.f32 %v3540, %v5191
    %v5193 = vand.u32 %v5192, 4294901760
    %5194 = vmatpush1.msra.mxu0 %v5193
    %5195 = vmatprep.subr.mxu0 0.0
    %v5196 = vand.u32 %v3541, 4294901760
    %v5197 = vsub.f32 %v3541, %v5196
    %v5198 = vand.u32 %v5197, 4294901760
    %5199 = vmatpush1.msra.mxu0 %v5198
    %5200 = vmatprep.subr.mxu0 0.0
    %v5201 = vand.u32 %v3542, 4294901760
    %v5202 = vsub.f32 %v3542, %v5201
    %v5203 = vand.u32 %v5202, 4294901760
    %5204 = vmatpush1.msra.mxu0 %v5203
    %5205 = vmatprep.subr.mxu0 0.0
    %v5206 = vand.u32 %v3543, 4294901760
    %v5207 = vsub.f32 %v3543, %v5206
    %v5208 = vand.u32 %v5207, 4294901760
    %5209 = vmatpush1.msra.mxu0 %v5208
    %5210 = vmatprep.subr.mxu0 0.0
    %v5211 = vand.u32 %v3544, 4294901760
    %v5212 = vsub.f32 %v3544, %v5211
    %v5213 = vand.u32 %v5212, 4294901760
    %5214 = vmatpush1.msra.mxu0 %v5213
    %5215 = vmatprep.subr.mxu0 0.0
    %v5216 = vand.u32 %v3545, 4294901760
    %v5217 = vsub.f32 %v3545, %v5216
    %v5218 = vand.u32 %v5217, 4294901760
    %5219 = vmatpush1.msra.mxu0 %v5218
    %5220 = vmatprep.subr.mxu0 0.0
    %v5221 = vand.u32 %v3546, 4294901760
    %v5222 = vsub.f32 %v3546, %v5221
    %v5223 = vand.u32 %v5222, 4294901760
    %5224 = vmatpush1.msra.mxu0 %v5223
    %5225 = vmatprep.subr.mxu0 0.0
    %v5226 = vand.u32 %v3547, 4294901760
    %v5227 = vsub.f32 %v3547, %v5226
    %v5228 = vand.u32 %v5227, 4294901760
    %5229 = vmatpush1.msra.mxu0 %v5228
    %5230 = vmatprep.subr.mxu0 0.0
    %v5231 = vand.u32 %v3548, 4294901760
    %v5232 = vsub.f32 %v3548, %v5231
    %v5233 = vand.u32 %v5232, 4294901760
    %5234 = vmatpush1.msra.mxu0 %v5233
    %5235 = vmatprep.subr.mxu0 0.0
    %v5236 = vand.u32 %v3549, 4294901760
    %v5237 = vsub.f32 %v3549, %v5236
    %v5238 = vand.u32 %v5237, 4294901760
    %5239 = vmatpush1.msra.mxu0 %v5238
    %5240 = vmatprep.subr.mxu0 0.0
    %v5241 = vand.u32 %v3550, 4294901760
    %v5242 = vsub.f32 %v3550, %v5241
    %v5243 = vand.u32 %v5242, 4294901760
    %5244 = vmatpush1.msra.mxu0 %v5243
    %5245 = vmatprep.subr.mxu0 0.0
    %v5246 = vand.u32 %v3551, 4294901760
    %v5247 = vsub.f32 %v3551, %v5246
    %v5248 = vand.u32 %v5247, 4294901760
    %5249 = vmatpush1.msra.mxu0 %v5248
    %5250 = vmatprep.subr.mxu0 0.0
    %v5251 = vand.u32 %v3552, 4294901760
    %v5252 = vsub.f32 %v3552, %v5251
    %v5253 = vand.u32 %v5252, 4294901760
    %5254 = vmatpush1.msra.mxu0 %v5253
    %5255 = vmatprep.subr.mxu0 0.0
    %v5256 = vand.u32 %v3553, 4294901760
    %v5257 = vsub.f32 %v3553, %v5256
    %v5258 = vand.u32 %v5257, 4294901760
    %5259 = vmatpush1.msra.mxu0 %v5258
    %5260 = vmatprep.subr.mxu0 0.0
    %v5261 = vand.u32 %v3554, 4294901760
    %v5262 = vsub.f32 %v3554, %v5261
    %v5263 = vand.u32 %v5262, 4294901760
    %5264 = vmatpush1.msra.mxu0 %v5263
    %v5265 = vand.u32 %v3489, 4294901760
    %5266 = vmatprep.mubr.f32.mxu0 %v5265
    %v5267 = vand.u32 %v3469, 4294901760
    %5268 = vmatmul.mubr.f32.gmra.mrb[0].mxu0 %v5267
    %v5269 = vpop.f32.mrb[0].mxu0
    %v5270 = vadd.f32 %v5091, %v5269
    %v5271 = vpop.f32.mrb[0].mxu0
    %v5272 = vand.u32 %v3490, 4294901760
    %5273 = vmatprep.mubr.f32.mxu0 %v5272
    %v5274 = vand.u32 %v3470, 4294901760
    %5275 = vmatmul.mubr.f32.gmra.mrb[0].mxu0 %v5274
    %v5276 = vpop.f32.mrb[0].mxu0
    %v5277 = vadd.f32 %v5102, %v5276
    %v5278 = vpop.f32.mrb[0].mxu0
    %5279 = vdwg.mxu0
    %5280 = vmatprep.subr.mxu0 0.0
    %v5281 = vand.u32 %v3523, 4294901760
    %5282 = vmatpush1.msra.mxu0 %v5281
    %5283 = vmatprep.subr.mxu0 0.0
    %v5284 = vand.u32 %v3524, 4294901760
    %5285 = vmatpush1.msra.mxu0 %v5284
    %5286 = vmatprep.subr.mxu0 0.0
    %v5287 = vand.u32 %v3525, 4294901760
    %5288 = vmatpush1.msra.mxu0 %v5287
    %5289 = vmatprep.subr.mxu0 0.0
    %v5290 = vand.u32 %v3526, 4294901760
    %5291 = vmatpush1.msra.mxu0 %v5290
    %5292 = vmatprep.subr.mxu0 0.0
    %v5293 = vand.u32 %v3527, 4294901760
    %5294 = vmatpush1.msra.mxu0 %v5293
    %5295 = vmatprep.subr.mxu0 0.0
    %v5296 = vand.u32 %v3528, 4294901760
    %5297 = vmatpush1.msra.mxu0 %v5296
    %5298 = vmatprep.subr.mxu0 0.0
    %v5299 = vand.u32 %v3529, 4294901760
    %5300 = vmatpush1.msra.mxu0 %v5299
    %5301 = vmatprep.subr.mxu0 0.0
    %v5302 = vand.u32 %v3530, 4294901760
    %5303 = vmatpush1.msra.mxu0 %v5302
    %5304 = vmatprep.subr.mxu0 0.0
    %v5305 = vand.u32 %v3531, 4294901760
    %5306 = vmatpush1.msra.mxu0 %v5305
    %5307 = vmatprep.subr.mxu0 0.0
    %v5308 = vand.u32 %v3532, 4294901760
    %5309 = vmatpush1.msra.mxu0 %v5308
    %5310 = vmatprep.subr.mxu0 0.0
    %v5311 = vand.u32 %v3533, 4294901760
    %5312 = vmatpush1.msra.mxu0 %v5311
    %5313 = vmatprep.subr.mxu0 0.0
    %v5314 = vand.u32 %v3534, 4294901760
    %5315 = vmatpush1.msra.mxu0 %v5314
    %5316 = vmatprep.subr.mxu0 0.0
    %v5317 = vand.u32 %v3535, 4294901760
    %5318 = vmatpush1.msra.mxu0 %v5317
    %5319 = vmatprep.subr.mxu0 0.0
    %v5320 = vand.u32 %v3536, 4294901760
    %5321 = vmatpush1.msra.mxu0 %v5320
    %5322 = vmatprep.subr.mxu0 0.0
    %v5323 = vand.u32 %v3537, 4294901760
    %5324 = vmatpush1.msra.mxu0 %v5323
    %5325 = vmatprep.subr.mxu0 0.0
    %v5326 = vand.u32 %v3538, 4294901760
    %5327 = vmatpush1.msra.mxu0 %v5326
    %5328 = vmatprep.subr.mxu0 0.0
    %v5329 = vand.u32 %v3539, 4294901760
    %5330 = vmatpush1.msra.mxu0 %v5329
    %5331 = vmatprep.subr.mxu0 0.0
    %v5332 = vand.u32 %v3540, 4294901760
    %5333 = vmatpush1.msra.mxu0 %v5332
    %5334 = vmatprep.subr.mxu0 0.0
    %v5335 = vand.u32 %v3541, 4294901760
    %5336 = vmatpush1.msra.mxu0 %v5335
    %5337 = vmatprep.subr.mxu0 0.0
    %v5338 = vand.u32 %v3542, 4294901760
    %5339 = vmatpush1.msra.mxu0 %v5338
    %5340 = vmatprep.subr.mxu0 0.0
    %v5341 = vand.u32 %v3543, 4294901760
    %5342 = vmatpush1.msra.mxu0 %v5341
    %5343 = vmatprep.subr.mxu0 0.0
    %v5344 = vand.u32 %v3544, 4294901760
    %5345 = vmatpush1.msra.mxu0 %v5344
    %5346 = vmatprep.subr.mxu0 0.0
    %v5347 = vand.u32 %v3545, 4294901760
    %5348 = vmatpush1.msra.mxu0 %v5347
    %5349 = vmatprep.subr.mxu0 0.0
    %v5350 = vand.u32 %v3546, 4294901760
    %5351 = vmatpush1.msra.mxu0 %v5350
    %5352 = vmatprep.subr.mxu0 0.0
    %v5353 = vand.u32 %v3547, 4294901760
    %5354 = vmatpush1.msra.mxu0 %v5353
    %5355 = vmatprep.subr.mxu0 0.0
    %v5356 = vand.u32 %v3548, 4294901760
    %5357 = vmatpush1.msra.mxu0 %v5356
    %5358 = vmatprep.subr.mxu0 0.0
    %v5359 = vand.u32 %v3549, 4294901760
    %5360 = vmatpush1.msra.mxu0 %v5359
    %5361 = vmatprep.subr.mxu0 0.0
    %v5362 = vand.u32 %v3550, 4294901760
    %5363 = vmatpush1.msra.mxu0 %v5362
    %5364 = vmatprep.subr.mxu0 0.0
    %v5365 = vand.u32 %v3551, 4294901760
    %5366 = vmatpush1.msra.mxu0 %v5365
    %5367 = vmatprep.subr.mxu0 0.0
    %v5368 = vand.u32 %v3552, 4294901760
    %5369 = vmatpush1.msra.mxu0 %v5368
    %5370 = vmatprep.subr.mxu0 0.0
    %v5371 = vand.u32 %v3553, 4294901760
    %5372 = vmatpush1.msra.mxu0 %v5371
    %5373 = vmatprep.subr.mxu0 0.0
    %v5374 = vand.u32 %v3554, 4294901760
    %5375 = vmatpush1.msra.mxu0 %v5374
    %v5376 = vand.u32 %v3489, 4294901760
    %5377 = vmatprep.mubr.f32.mxu0 %v5376
    %v5378 = vand.u32 %v3469, 4294901760
    %5379 = vmatmul.mubr.f32.gmra.mrb[0].mxu0 %v5378
    %v5380 = vpop.f32.mrb[0].mxu0
    %v5381 = vadd.f32 %v5270, %v5380
    %v5382 = vpop.f32.mrb[0].mxu0
    %v5383 = vand.u32 %v3490, 4294901760
    %5384 = vmatprep.mubr.f32.mxu0 %v5383
    %v5385 = vand.u32 %v3470, 4294901760
    %5386 = vmatmul.mubr.f32.gmra.mrb[0].mxu0 %v5385
    %v5387 = vpop.f32.mrb[0].mxu0
    %v5388 = vadd.f32 %v5277, %v5387
    %v5389 = vpop.f32.mrb[0].mxu0
    %5390 = vdwg.mxu0
    %v5391 = vld [vmem:[%s17] sm:$0x1]
    %v5393 = vlaneseq
    %v5394 = vshrl.u32 %v5393, 7
    %v5395 = vsub.s32 0, %v5394
    %v5396 = vrot.slane %v5391, %v5395
    %v5398 = vmul.f32 %v5381, %v5396
    %v5399 = vmul.f32 %v5388, %v5396
    %v5400 = vld [vmem:[%s18] sm:$0x1]
    %v5402 = vlaneseq
    %v5403 = vshrl.u32 %v5402, 7
    %v5404 = vsub.s32 0, %v5403
    %v5405 = vrot.slane %v5400, %v5404
    %v5407 = vadd.f32 %v5398, %v5405
    %v5408 = vadd.f32 %v5399, %v5405
    %v5410 = vrot.slane %v5408, 7
    %vm5412 = vcmask 1040384
    %v5413 = vsel %vm5412, %v5407, %v5410
    %v5415 = vrot.slane %v5407, 1
    %v5417 = vsel %vm5412, %v5415, %v5408
    %v5418 = vrot.slane %v5407, 2
    %v5420 = vrot.slane %v5408, 1
    %v5422 = vsel %vm5412, %v5418, %v5420
    %v5423 = vrot.slane %v5407, 3
    %v5425 = vrot.slane %v5408, 2
    %v5427 = vsel %vm5412, %v5423, %v5425
    %v5428 = vrot.slane %v5407, 4
    %v5430 = vrot.slane %v5408, 3
    %v5432 = vsel %vm5412, %v5428, %v5430
    %v5433 = vrot.slane %v5407, 5
    %v5435 = vrot.slane %v5408, 4
    %v5437 = vsel %vm5412, %v5433, %v5435
    %v5438 = vrot.slane %v5407, 6
    %v5440 = vrot.slane %v5408, 5
    %v5442 = vsel %vm5412, %v5438, %v5440
    %v5443 = vrot.slane %v5407, 7
    %v5445 = vrot.slane %v5408, 6
    %v5447 = vsel %vm5412, %v5443, %v5445
    %5449 = vrot.lane.b32.xlu0 %v5417, 64
    %v5450 = vpop.permute.xlu0 %5449
    %5453 = vrot.lane.b32.xlu0 %v5427, 64
    %v5454 = vpop.permute.xlu0 %5453
    %5457 = vrot.lane.b32.xlu0 %v5437, 64
    %v5458 = vpop.permute.xlu0 %5457
    %5461 = vrot.lane.b32.xlu0 %v5447, 64
    %v5462 = vpop.permute.xlu0 %5461
    %v5464 = vsel %vm175, %v5413, %v5450
    %v5465 = vsel %vm175, %v5422, %v5454
    %v5466 = vsel %vm175, %v5432, %v5458
    %v5467 = vsel %vm175, %v5442, %v5462
    %v5468 = vld [vmem:[#allocation5] sm:$0xff]
    %v5469 = vld [vmem:[#allocation5 + $0x8] sm:$0xff]
    %v5470 = vld [vmem:[#allocation5 + $0x10] sm:$0xff]
    %v5471 = vld [vmem:[#allocation5 + $0x18] sm:$0xff]
    %v5472 = vld [vmem:[#allocation5 + $0x20] sm:$0xff]
    %v5473 = vld [vmem:[#allocation5 + $0x28] sm:$0xff]
    %v5474 = vld [vmem:[#allocation5 + $0x30] sm:$0xff]
    %v5475 = vld [vmem:[#allocation5 + $0x38] sm:$0xff]
    %v5476 = vld [vmem:[#allocation5 + $0x40] sm:$0xff]
    %v5477 = vld [vmem:[#allocation5 + $0x48] sm:$0xff]
    %v5478 = vld [vmem:[#allocation5 + $0x50] sm:$0xff]
    %v5479 = vld [vmem:[#allocation5 + $0x58] sm:$0xff]
    %v5480 = vld [vmem:[#allocation5 + $0x60] sm:$0xff]
    %v5481 = vld [vmem:[#allocation5 + $0x68] sm:$0xff]
    %v5482 = vld [vmem:[#allocation5 + $0x70] sm:$0xff]
    %v5483 = vld [vmem:[#allocation5 + $0x78] sm:$0xff]
    %v5484 = vld [vmem:[#allocation5 + $0x80] sm:$0xff]
    %v5485 = vld [vmem:[#allocation5 + $0x88] sm:$0xff]
    %v5486 = vld [vmem:[#allocation5 + $0x90] sm:$0xff]
    %v5487 = vld [vmem:[#allocation5 + $0x98] sm:$0xff]
    %v5488 = vld [vmem:[#allocation5 + $0xa0] sm:$0xff]
    %v5489 = vld [vmem:[#allocation5 + $0xa8] sm:$0xff]
    %v5490 = vld [vmem:[#allocation5 + $0xb0] sm:$0xff]
    %v5491 = vld [vmem:[#allocation5 + $0xb8] sm:$0xff]
    %v5492 = vld [vmem:[#allocation5 + $0xc0] sm:$0xff]
    %v5493 = vld [vmem:[#allocation5 + $0xc8] sm:$0xff]
    %v5494 = vld [vmem:[#allocation5 + $0xd0] sm:$0xff]
    %v5495 = vld [vmem:[#allocation5 + $0xd8] sm:$0xff]
    %v5496 = vld [vmem:[#allocation5 + $0xe0] sm:$0xff]
    %v5497 = vld [vmem:[#allocation5 + $0xe8] sm:$0xff]
    %v5498 = vld [vmem:[#allocation5 + $0xf0] sm:$0xff]
    %v5499 = vld [vmem:[#allocation5 + $0xf8] sm:$0xff]
    %v5500 = vld [vmem:[#allocation5 + $0x100] sm:$0xff]
    %v5501 = vld [vmem:[#allocation5 + $0x108] sm:$0xff]
    %v5502 = vld [vmem:[#allocation5 + $0x110] sm:$0xff]
    %v5503 = vld [vmem:[#allocation5 + $0x118] sm:$0xff]
    %v5504 = vld [vmem:[#allocation5 + $0x120] sm:$0xff]
    %v5505 = vld [vmem:[#allocation5 + $0x128] sm:$0xff]
    %v5506 = vld [vmem:[#allocation5 + $0x130] sm:$0xff]
    %v5507 = vld [vmem:[#allocation5 + $0x138] sm:$0xff]
    %v5508 = vld [vmem:[#allocation5 + $0x140] sm:$0xff]
    %v5509 = vld [vmem:[#allocation5 + $0x148] sm:$0xff]
    %v5510 = vld [vmem:[#allocation5 + $0x150] sm:$0xff]
    %v5511 = vld [vmem:[#allocation5 + $0x158] sm:$0xff]
    %v5512 = vld [vmem:[#allocation5 + $0x160] sm:$0xff]
    %v5513 = vld [vmem:[#allocation5 + $0x168] sm:$0xff]
    %v5514 = vld [vmem:[#allocation5 + $0x170] sm:$0xff]
    %v5515 = vld [vmem:[#allocation5 + $0x178] sm:$0xff]
    %v5516 = vld [vmem:[#allocation5 + $0x180] sm:$0xff]
    %v5517 = vld [vmem:[#allocation5 + $0x188] sm:$0xff]
    %v5518 = vld [vmem:[#allocation5 + $0x190] sm:$0xff]
    %v5519 = vld [vmem:[#allocation5 + $0x198] sm:$0xff]
    %v5520 = vld [vmem:[#allocation5 + $0x1a0] sm:$0xff]
    %v5521 = vld [vmem:[#allocation5 + $0x1a8] sm:$0xff]
    %v5522 = vld [vmem:[#allocation5 + $0x1b0] sm:$0xff]
    %v5523 = vld [vmem:[#allocation5 + $0x1b8] sm:$0xff]
    %v5524 = vld [vmem:[#allocation5 + $0x1c0] sm:$0xff]
    %v5525 = vld [vmem:[#allocation5 + $0x1c8] sm:$0xff]
    %v5526 = vld [vmem:[#allocation5 + $0x1d0] sm:$0xff]
    %v5527 = vld [vmem:[#allocation5 + $0x1d8] sm:$0xff]
    %v5528 = vld [vmem:[#allocation5 + $0x1e0] sm:$0xff]
    %v5529 = vld [vmem:[#allocation5 + $0x1e8] sm:$0xff]
    %v5530 = vld [vmem:[#allocation5 + $0x1f0] sm:$0xff]
    %v5531 = vld [vmem:[#allocation5 + $0x1f8] sm:$0xff]
    %v5532 = vld [vmem:[#allocation5 + $0x200] sm:$0xff]
    %v5533 = vld [vmem:[#allocation5 + $0x208] sm:$0xff]
    %v5534 = vld [vmem:[#allocation5 + $0x210] sm:$0xff]
    %v5535 = vld [vmem:[#allocation5 + $0x218] sm:$0xff]
    %v5536 = vld [vmem:[#allocation5 + $0x220] sm:$0xff]
    %v5537 = vld [vmem:[#allocation5 + $0x228] sm:$0xff]
    %v5538 = vld [vmem:[#allocation5 + $0x230] sm:$0xff]
    %v5539 = vld [vmem:[#allocation5 + $0x238] sm:$0xff]
    %v5540 = vld [vmem:[#allocation5 + $0x240] sm:$0xff]
    %v5541 = vld [vmem:[#allocation5 + $0x248] sm:$0xff]
    %v5542 = vld [vmem:[#allocation5 + $0x250] sm:$0xff]
    %v5543 = vld [vmem:[#allocation5 + $0x258] sm:$0xff]
    %v5544 = vld [vmem:[#allocation5 + $0x260] sm:$0xff]
    %v5545 = vld [vmem:[#allocation5 + $0x268] sm:$0xff]
    %v5546 = vld [vmem:[#allocation5 + $0x270] sm:$0xff]
    %v5547 = vld [vmem:[#allocation5 + $0x278] sm:$0xff]
    %v5548 = vld [vmem:[#allocation5 + $0x280] sm:$0xff]
    %v5549 = vld [vmem:[#allocation5 + $0x288] sm:$0xff]
    %v5550 = vld [vmem:[#allocation5 + $0x290] sm:$0xff]
    %v5551 = vld [vmem:[#allocation5 + $0x298] sm:$0xff]
    %v5552 = vld [vmem:[#allocation5 + $0x2a0] sm:$0xff]
    %v5553 = vld [vmem:[#allocation5 + $0x2a8] sm:$0xff]
    %v5554 = vld [vmem:[#allocation5 + $0x2b0] sm:$0xff]
    %v5555 = vld [vmem:[#allocation5 + $0x2b8] sm:$0xff]
    %v5556 = vld [vmem:[#allocation5 + $0x2c0] sm:$0xff]
    %v5557 = vld [vmem:[#allocation5 + $0x2c8] sm:$0xff]
    %v5558 = vld [vmem:[#allocation5 + $0x2d0] sm:$0xff]
    %v5559 = vld [vmem:[#allocation5 + $0x2d8] sm:$0xff]
    %v5560 = vld [vmem:[#allocation5 + $0x2e0] sm:$0xff]
    %v5561 = vld [vmem:[#allocation5 + $0x2e8] sm:$0xff]
    %v5562 = vld [vmem:[#allocation5 + $0x2f0] sm:$0xff]
    %v5563 = vld [vmem:[#allocation5 + $0x2f8] sm:$0xff]
    %v5564 = vld [vmem:[#allocation5 + $0x300] sm:$0xff]
    %v5565 = vld [vmem:[#allocation5 + $0x308] sm:$0xff]
    %v5566 = vld [vmem:[#allocation5 + $0x310] sm:$0xff]
    %v5567 = vld [vmem:[#allocation5 + $0x318] sm:$0xff]
    %v5568 = vld [vmem:[#allocation5 + $0x320] sm:$0xff]
    %v5569 = vld [vmem:[#allocation5 + $0x328] sm:$0xff]
    %v5570 = vld [vmem:[#allocation5 + $0x330] sm:$0xff]
    %v5571 = vld [vmem:[#allocation5 + $0x338] sm:$0xff]
    %v5572 = vld [vmem:[#allocation5 + $0x340] sm:$0xff]
    %v5573 = vld [vmem:[#allocation5 + $0x348] sm:$0xff]
    %v5574 = vld [vmem:[#allocation5 + $0x350] sm:$0xff]
    %v5575 = vld [vmem:[#allocation5 + $0x358] sm:$0xff]
    %v5576 = vld [vmem:[#allocation5 + $0x360] sm:$0xff]
    %v5577 = vld [vmem:[#allocation5 + $0x368] sm:$0xff]
    %v5578 = vld [vmem:[#allocation5 + $0x370] sm:$0xff]
    %v5579 = vld [vmem:[#allocation5 + $0x378] sm:$0xff]
    %v5580 = vld [vmem:[#allocation5 + $0x380] sm:$0xff]
    %v5581 = vld [vmem:[#allocation5 + $0x388] sm:$0xff]
    %v5582 = vld [vmem:[#allocation5 + $0x390] sm:$0xff]
    %v5583 = vld [vmem:[#allocation5 + $0x398] sm:$0xff]
    %v5584 = vld [vmem:[#allocation5 + $0x3a0] sm:$0xff]
    %v5585 = vld [vmem:[#allocation5 + $0x3a8] sm:$0xff]
    %v5586 = vld [vmem:[#allocation5 + $0x3b0] sm:$0xff]
    %v5587 = vld [vmem:[#allocation5 + $0x3b8] sm:$0xff]
    %v5588 = vld [vmem:[#allocation5 + $0x3c0] sm:$0xff]
    %v5589 = vld [vmem:[#allocation5 + $0x3c8] sm:$0xff]
    %v5590 = vld [vmem:[#allocation5 + $0x3d0] sm:$0xff]
    %v5591 = vld [vmem:[#allocation5 + $0x3d8] sm:$0xff]
    %v5592 = vld [vmem:[#allocation5 + $0x3e0] sm:$0xff]
    %v5593 = vld [vmem:[#allocation5 + $0x3e8] sm:$0xff]
    %v5594 = vld [vmem:[#allocation5 + $0x3f0] sm:$0xff]
    %v5595 = vld [vmem:[#allocation5 + $0x3f8] sm:$0xff]
    %v5596 = vand.u32 %v5469, 4294901760
    %5597 = vmatprep.subr.mxu0 %v5596
    %v5598 = vand.u32 %v5468, 4294901760
    %5599 = vmatpush1.msra.mxu0 %v5598
    %v5600 = vand.u32 %v5471, 4294901760
    %5601 = vmatprep.subr.mxu0 %v5600
    %v5602 = vand.u32 %v5470, 4294901760
    %5603 = vmatpush1.msra.mxu0 %v5602
    %v5604 = vand.u32 %v5473, 4294901760
    %5605 = vmatprep.subr.mxu0 %v5604
    %v5606 = vand.u32 %v5472, 4294901760
    %5607 = vmatpush1.msra.mxu0 %v5606
    %v5608 = vand.u32 %v5475, 4294901760
    %5609 = vmatprep.subr.mxu0 %v5608
    %v5610 = vand.u32 %v5474, 4294901760
    %5611 = vmatpush1.msra.mxu0 %v5610
    %v5612 = vand.u32 %v5477, 4294901760
    %5613 = vmatprep.subr.mxu0 %v5612
    %v5614 = vand.u32 %v5476, 4294901760
    %5615 = vmatpush1.msra.mxu0 %v5614
    %v5616 = vand.u32 %v5479, 4294901760
    %5617 = vmatprep.subr.mxu0 %v5616
    %v5618 = vand.u32 %v5478, 4294901760
    %5619 = vmatpush1.msra.mxu0 %v5618
    %v5620 = vand.u32 %v5481, 4294901760
    %5621 = vmatprep.subr.mxu0 %v5620
    %v5622 = vand.u32 %v5480, 4294901760
    %5623 = vmatpush1.msra.mxu0 %v5622
    %v5624 = vand.u32 %v5483, 4294901760
    %5625 = vmatprep.subr.mxu0 %v5624
    %v5626 = vand.u32 %v5482, 4294901760
    %5627 = vmatpush1.msra.mxu0 %v5626
    %v5628 = vand.u32 %v5485, 4294901760
    %5629 = vmatprep.subr.mxu0 %v5628
    %v5630 = vand.u32 %v5484, 4294901760
    %5631 = vmatpush1.msra.mxu0 %v5630
    %v5632 = vand.u32 %v5487, 4294901760
    %5633 = vmatprep.subr.mxu0 %v5632
    %v5634 = vand.u32 %v5486, 4294901760
    %5635 = vmatpush1.msra.mxu0 %v5634
    %v5636 = vand.u32 %v5489, 4294901760
    %5637 = vmatprep.subr.mxu0 %v5636
    %v5638 = vand.u32 %v5488, 4294901760
    %5639 = vmatpush1.msra.mxu0 %v5638
    %v5640 = vand.u32 %v5491, 4294901760
    %5641 = vmatprep.subr.mxu0 %v5640
    %v5642 = vand.u32 %v5490, 4294901760
    %5643 = vmatpush1.msra.mxu0 %v5642
    %v5644 = vand.u32 %v5493, 4294901760
    %5645 = vmatprep.subr.mxu0 %v5644
    %v5646 = vand.u32 %v5492, 4294901760
    %5647 = vmatpush1.msra.mxu0 %v5646
    %v5648 = vand.u32 %v5495, 4294901760
    %5649 = vmatprep.subr.mxu0 %v5648
    %v5650 = vand.u32 %v5494, 4294901760
    %5651 = vmatpush1.msra.mxu0 %v5650
    %v5652 = vand.u32 %v5497, 4294901760
    %5653 = vmatprep.subr.mxu0 %v5652
    %v5654 = vand.u32 %v5496, 4294901760
    %5655 = vmatpush1.msra.mxu0 %v5654
    %v5656 = vand.u32 %v5499, 4294901760
    %5657 = vmatprep.subr.mxu0 %v5656
    %v5658 = vand.u32 %v5498, 4294901760
    %5659 = vmatpush1.msra.mxu0 %v5658
    %v5660 = vand.u32 %v5501, 4294901760
    %5661 = vmatprep.subr.mxu0 %v5660
    %v5662 = vand.u32 %v5500, 4294901760
    %5663 = vmatpush1.msra.mxu0 %v5662
    %v5664 = vand.u32 %v5503, 4294901760
    %5665 = vmatprep.subr.mxu0 %v5664
    %v5666 = vand.u32 %v5502, 4294901760
    %5667 = vmatpush1.msra.mxu0 %v5666
    %v5668 = vand.u32 %v5505, 4294901760
    %5669 = vmatprep.subr.mxu0 %v5668
    %v5670 = vand.u32 %v5504, 4294901760
    %5671 = vmatpush1.msra.mxu0 %v5670
    %v5672 = vand.u32 %v5507, 4294901760
    %5673 = vmatprep.subr.mxu0 %v5672
    %v5674 = vand.u32 %v5506, 4294901760
    %5675 = vmatpush1.msra.mxu0 %v5674
    %v5676 = vand.u32 %v5509, 4294901760
    %5677 = vmatprep.subr.mxu0 %v5676
    %v5678 = vand.u32 %v5508, 4294901760
    %5679 = vmatpush1.msra.mxu0 %v5678
    %v5680 = vand.u32 %v5511, 4294901760
    %5681 = vmatprep.subr.mxu0 %v5680
    %v5682 = vand.u32 %v5510, 4294901760
    %5683 = vmatpush1.msra.mxu0 %v5682
    %v5684 = vand.u32 %v5513, 4294901760
    %5685 = vmatprep.subr.mxu0 %v5684
    %v5686 = vand.u32 %v5512, 4294901760
    %5687 = vmatpush1.msra.mxu0 %v5686
    %v5688 = vand.u32 %v5515, 4294901760
    %5689 = vmatprep.subr.mxu0 %v5688
    %v5690 = vand.u32 %v5514, 4294901760
    %5691 = vmatpush1.msra.mxu0 %v5690
    %v5692 = vand.u32 %v5517, 4294901760
    %5693 = vmatprep.subr.mxu0 %v5692
    %v5694 = vand.u32 %v5516, 4294901760
    %5695 = vmatpush1.msra.mxu0 %v5694
    %v5696 = vand.u32 %v5519, 4294901760
    %5697 = vmatprep.subr.mxu0 %v5696
    %v5698 = vand.u32 %v5518, 4294901760
    %5699 = vmatpush1.msra.mxu0 %v5698
    %v5700 = vand.u32 %v5521, 4294901760
    %5701 = vmatprep.subr.mxu0 %v5700
    %v5702 = vand.u32 %v5520, 4294901760
    %5703 = vmatpush1.msra.mxu0 %v5702
    %v5704 = vand.u32 %v5523, 4294901760
    %5705 = vmatprep.subr.mxu0 %v5704
    %v5706 = vand.u32 %v5522, 4294901760
    %5707 = vmatpush1.msra.mxu0 %v5706
    %v5708 = vand.u32 %v5525, 4294901760
    %5709 = vmatprep.subr.mxu0 %v5708
    %v5710 = vand.u32 %v5524, 4294901760
    %5711 = vmatpush1.msra.mxu0 %v5710
    %v5712 = vand.u32 %v5527, 4294901760
    %5713 = vmatprep.subr.mxu0 %v5712
    %v5714 = vand.u32 %v5526, 4294901760
    %5715 = vmatpush1.msra.mxu0 %v5714
    %v5716 = vand.u32 %v5529, 4294901760
    %5717 = vmatprep.subr.mxu0 %v5716
    %v5718 = vand.u32 %v5528, 4294901760
    %5719 = vmatpush1.msra.mxu0 %v5718
    %v5720 = vand.u32 %v5531, 4294901760
    %5721 = vmatprep.subr.mxu0 %v5720
    %v5722 = vand.u32 %v5530, 4294901760
    %5723 = vmatpush1.msra.mxu0 %v5722
    %v5724 = vand.u32 %v5465, 4294901760
    %v5725 = vsub.f32 %v5465, %v5724
    %v5726 = vand.u32 %v5725, 4294901760
    %v5727 = vsub.f32 %v5725, %v5726
    %v5728 = vand.u32 %v5727, 4294901760
    %5729 = vmatprep.mubr.f32.mxu0 %v5728
    %v5730 = vand.u32 %v5464, 4294901760
    %v5731 = vsub.f32 %v5464, %v5730
    %v5732 = vand.u32 %v5731, 4294901760
    %v5733 = vsub.f32 %v5731, %v5732
    %v5734 = vand.u32 %v5733, 4294901760
    %5735 = vmatmul.mubr.f32.gmra.mrb[0].mxu0 %v5734
    %v5736 = vpop.f32.mrb[0].mxu0
    %v5737 = vadd.f32 0.0, %v5736
    %v5738 = vpop.f32.mrb[0].mxu0
    %v5739 = vadd.f32 0.0, %v5738
    %5740 = vdwg.mxu0
    %v5741 = vand.u32 %v5469, 4294901760
    %v5742 = vsub.f32 %v5469, %v5741
    %v5743 = vand.u32 %v5742, 4294901760
    %v5744 = vsub.f32 %v5742, %v5743
    %v5745 = vand.u32 %v5744, 4294901760
    %5746 = vmatprep.subr.mxu0 %v5745
    %v5747 = vand.u32 %v5468, 4294901760
    %v5748 = vsub.f32 %v5468, %v5747
    %v5749 = vand.u32 %v5748, 4294901760
    %v5750 = vsub.f32 %v5748, %v5749
    %v5751 = vand.u32 %v5750, 4294901760
    %5752 = vmatpush1.msra.mxu0 %v5751
    %v5753 = vand.u32 %v5471, 4294901760
    %v5754 = vsub.f32 %v5471, %v5753
    %v5755 = vand.u32 %v5754, 4294901760
    %v5756 = vsub.f32 %v5754, %v5755
    %v5757 = vand.u32 %v5756, 4294901760
    %5758 = vmatprep.subr.mxu0 %v5757
    %v5759 = vand.u32 %v5470, 4294901760
    %v5760 = vsub.f32 %v5470, %v5759
    %v5761 = vand.u32 %v5760, 4294901760
    %v5762 = vsub.f32 %v5760, %v5761
    %v5763 = vand.u32 %v5762, 4294901760
    %5764 = vmatpush1.msra.mxu0 %v5763
    %v5765 = vand.u32 %v5473, 4294901760
    %v5766 = vsub.f32 %v5473, %v5765
    %v5767 = vand.u32 %v5766, 4294901760
    %v5768 = vsub.f32 %v5766, %v5767
    %v5769 = vand.u32 %v5768, 4294901760
    %5770 = vmatprep.subr.mxu0 %v5769
    %v5771 = vand.u32 %v5472, 4294901760
    %v5772 = vsub.f32 %v5472, %v5771
    %v5773 = vand.u32 %v5772, 4294901760
    %v5774 = vsub.f32 %v5772, %v5773
    %v5775 = vand.u32 %v5774, 4294901760
    %5776 = vmatpush1.msra.mxu0 %v5775
    %v5777 = vand.u32 %v5475, 4294901760
    %v5778 = vsub.f32 %v5475, %v5777
    %v5779 = vand.u32 %v5778, 4294901760
    %v5780 = vsub.f32 %v5778, %v5779
    %v5781 = vand.u32 %v5780, 4294901760
    %5782 = vmatprep.subr.mxu0 %v5781
    %v5783 = vand.u32 %v5474, 4294901760
    %v5784 = vsub.f32 %v5474, %v5783
    %v5785 = vand.u32 %v5784, 4294901760
    %v5786 = vsub.f32 %v5784, %v5785
    %v5787 = vand.u32 %v5786, 4294901760
    %5788 = vmatpush1.msra.mxu0 %v5787
    %v5789 = vand.u32 %v5477, 4294901760
    %v5790 = vsub.f32 %v5477, %v5789
    %v5791 = vand.u32 %v5790, 4294901760
    %v5792 = vsub.f32 %v5790, %v5791
    %v5793 = vand.u32 %v5792, 4294901760
    %5794 = vmatprep.subr.mxu0 %v5793
    %v5795 = vand.u32 %v5476, 4294901760
    %v5796 = vsub.f32 %v5476, %v5795
    %v5797 = vand.u32 %v5796, 4294901760
    %v5798 = vsub.f32 %v5796, %v5797
    %v5799 = vand.u32 %v5798, 4294901760
    %5800 = vmatpush1.msra.mxu0 %v5799
    %v5801 = vand.u32 %v5479, 4294901760
    %v5802 = vsub.f32 %v5479, %v5801
    %v5803 = vand.u32 %v5802, 4294901760
    %v5804 = vsub.f32 %v5802, %v5803
    %v5805 = vand.u32 %v5804, 4294901760
    %5806 = vmatprep.subr.mxu0 %v5805
    %v5807 = vand.u32 %v5478, 4294901760
    %v5808 = vsub.f32 %v5478, %v5807
    %v5809 = vand.u32 %v5808, 4294901760
    %v5810 = vsub.f32 %v5808, %v5809
    %v5811 = vand.u32 %v5810, 4294901760
    %5812 = vmatpush1.msra.mxu0 %v5811
    %v5813 = vand.u32 %v5481, 4294901760
    %v5814 = vsub.f32 %v5481, %v5813
    %v5815 = vand.u32 %v5814, 4294901760
    %v5816 = vsub.f32 %v5814, %v5815
    %v5817 = vand.u32 %v5816, 4294901760
    %5818 = vmatprep.subr.mxu0 %v5817
    %v5819 = vand.u32 %v5480, 4294901760
    %v5820 = vsub.f32 %v5480, %v5819
    %v5821 = vand.u32 %v5820, 4294901760
    %v5822 = vsub.f32 %v5820, %v5821
    %v5823 = vand.u32 %v5822, 4294901760
    %5824 = vmatpush1.msra.mxu0 %v5823
    %v5825 = vand.u32 %v5483, 4294901760
    %v5826 = vsub.f32 %v5483, %v5825
    %v5827 = vand.u32 %v5826, 4294901760
    %v5828 = vsub.f32 %v5826, %v5827
    %v5829 = vand.u32 %v5828, 4294901760
    %5830 = vmatprep.subr.mxu0 %v5829
    %v5831 = vand.u32 %v5482, 4294901760
    %v5832 = vsub.f32 %v5482, %v5831
    %v5833 = vand.u32 %v5832, 4294901760
    %v5834 = vsub.f32 %v5832, %v5833
    %v5835 = vand.u32 %v5834, 4294901760
    %5836 = vmatpush1.msra.mxu0 %v5835
    %v5837 = vand.u32 %v5485, 4294901760
    %v5838 = vsub.f32 %v5485, %v5837
    %v5839 = vand.u32 %v5838, 4294901760
    %v5840 = vsub.f32 %v5838, %v5839
    %v5841 = vand.u32 %v5840, 4294901760
    %5842 = vmatprep.subr.mxu0 %v5841
    %v5843 = vand.u32 %v5484, 4294901760
    %v5844 = vsub.f32 %v5484, %v5843
    %v5845 = vand.u32 %v5844, 4294901760
    %v5846 = vsub.f32 %v5844, %v5845
    %v5847 = vand.u32 %v5846, 4294901760
    %5848 = vmatpush1.msra.mxu0 %v5847
    %v5849 = vand.u32 %v5487, 4294901760
    %v5850 = vsub.f32 %v5487, %v5849
    %v5851 = vand.u32 %v5850, 4294901760
    %v5852 = vsub.f32 %v5850, %v5851
    %v5853 = vand.u32 %v5852, 4294901760
    %5854 = vmatprep.subr.mxu0 %v5853
    %v5855 = vand.u32 %v5486, 4294901760
    %v5856 = vsub.f32 %v5486, %v5855
    %v5857 = vand.u32 %v5856, 4294901760
    %v5858 = vsub.f32 %v5856, %v5857
    %v5859 = vand.u32 %v5858, 4294901760
    %5860 = vmatpush1.msra.mxu0 %v5859
    %v5861 = vand.u32 %v5489, 4294901760
    %v5862 = vsub.f32 %v5489, %v5861
    %v5863 = vand.u32 %v5862, 4294901760
    %v5864 = vsub.f32 %v5862, %v5863
    %v5865 = vand.u32 %v5864, 4294901760
    %5866 = vmatprep.subr.mxu0 %v5865
    %v5867 = vand.u32 %v5488, 4294901760
    %v5868 = vsub.f32 %v5488, %v5867
    %v5869 = vand.u32 %v5868, 4294901760
    %v5870 = vsub.f32 %v5868, %v5869
    %v5871 = vand.u32 %v5870, 4294901760
    %5872 = vmatpush1.msra.mxu0 %v5871
    %v5873 = vand.u32 %v5491, 4294901760
    %v5874 = vsub.f32 %v5491, %v5873
    %v5875 = vand.u32 %v5874, 4294901760
    %v5876 = vsub.f32 %v5874, %v5875
    %v5877 = vand.u32 %v5876, 4294901760
    %5878 = vmatprep.subr.mxu0 %v5877
    %v5879 = vand.u32 %v5490, 4294901760
    %v5880 = vsub.f32 %v5490, %v5879
    %v5881 = vand.u32 %v5880, 4294901760
    %v5882 = vsub.f32 %v5880, %v5881
    %v5883 = vand.u32 %v5882, 4294901760
    %5884 = vmatpush1.msra.mxu0 %v5883
    %v5885 = vand.u32 %v5493, 4294901760
    %v5886 = vsub.f32 %v5493, %v5885
    %v5887 = vand.u32 %v5886, 4294901760
    %v5888 = vsub.f32 %v5886, %v5887
    %v5889 = vand.u32 %v5888, 4294901760
    %5890 = vmatprep.subr.mxu0 %v5889
    %v5891 = vand.u32 %v5492, 4294901760
    %v5892 = vsub.f32 %v5492, %v5891
    %v5893 = vand.u32 %v5892, 4294901760
    %v5894 = vsub.f32 %v5892, %v5893
    %v5895 = vand.u32 %v5894, 4294901760
    %5896 = vmatpush1.msra.mxu0 %v5895
    %v5897 = vand.u32 %v5495, 4294901760
    %v5898 = vsub.f32 %v5495, %v5897
    %v5899 = vand.u32 %v5898, 4294901760
    %v5900 = vsub.f32 %v5898, %v5899
    %v5901 = vand.u32 %v5900, 4294901760
    %5902 = vmatprep.subr.mxu0 %v5901
    %v5903 = vand.u32 %v5494, 4294901760
    %v5904 = vsub.f32 %v5494, %v5903
    %v5905 = vand.u32 %v5904, 4294901760
    %v5906 = vsub.f32 %v5904, %v5905
    %v5907 = vand.u32 %v5906, 4294901760
    %5908 = vmatpush1.msra.mxu0 %v5907
    %v5909 = vand.u32 %v5497, 4294901760
    %v5910 = vsub.f32 %v5497, %v5909
    %v5911 = vand.u32 %v5910, 4294901760
    %v5912 = vsub.f32 %v5910, %v5911
    %v5913 = vand.u32 %v5912, 4294901760
    %5914 = vmatprep.subr.mxu0 %v5913
    %v5915 = vand.u32 %v5496, 4294901760
    %v5916 = vsub.f32 %v5496, %v5915
    %v5917 = vand.u32 %v5916, 4294901760
    %v5918 = vsub.f32 %v5916, %v5917
    %v5919 = vand.u32 %v5918, 4294901760
    %5920 = vmatpush1.msra.mxu0 %v5919
    %v5921 = vand.u32 %v5499, 4294901760
    %v5922 = vsub.f32 %v5499, %v5921
    %v5923 = vand.u32 %v5922, 4294901760
    %v5924 = vsub.f32 %v5922, %v5923
    %v5925 = vand.u32 %v5924, 4294901760
    %5926 = vmatprep.subr.mxu0 %v5925
    %v5927 = vand.u32 %v5498, 4294901760
    %v5928 = vsub.f32 %v5498, %v5927
    %v5929 = vand.u32 %v5928, 4294901760
    %v5930 = vsub.f32 %v5928, %v5929
    %v5931 = vand.u32 %v5930, 4294901760
    %5932 = vmatpush1.msra.mxu0 %v5931
    %v5933 = vand.u32 %v5501, 4294901760
    %v5934 = vsub.f32 %v5501, %v5933
    %v5935 = vand.u32 %v5934, 4294901760
    %v5936 = vsub.f32 %v5934, %v5935
    %v5937 = vand.u32 %v5936, 4294901760
    %5938 = vmatprep.subr.mxu0 %v5937
    %v5939 = vand.u32 %v5500, 4294901760
    %v5940 = vsub.f32 %v5500, %v5939
    %v5941 = vand.u32 %v5940, 4294901760
    %v5942 = vsub.f32 %v5940, %v5941
    %v5943 = vand.u32 %v5942, 4294901760
    %5944 = vmatpush1.msra.mxu0 %v5943
    %v5945 = vand.u32 %v5503, 4294901760
    %v5946 = vsub.f32 %v5503, %v5945
    %v5947 = vand.u32 %v5946, 4294901760
    %v5948 = vsub.f32 %v5946, %v5947
    %v5949 = vand.u32 %v5948, 4294901760
    %5950 = vmatprep.subr.mxu0 %v5949
    %v5951 = vand.u32 %v5502, 4294901760
    %v5952 = vsub.f32 %v5502, %v5951
    %v5953 = vand.u32 %v5952, 4294901760
    %v5954 = vsub.f32 %v5952, %v5953
    %v5955 = vand.u32 %v5954, 4294901760
    %5956 = vmatpush1.msra.mxu0 %v5955
    %v5957 = vand.u32 %v5505, 4294901760
    %v5958 = vsub.f32 %v5505, %v5957
    %v5959 = vand.u32 %v5958, 4294901760
    %v5960 = vsub.f32 %v5958, %v5959
    %v5961 = vand.u32 %v5960, 4294901760
    %5962 = vmatprep.subr.mxu0 %v5961
    %v5963 = vand.u32 %v5504, 4294901760
    %v5964 = vsub.f32 %v5504, %v5963
    %v5965 = vand.u32 %v5964, 4294901760
    %v5966 = vsub.f32 %v5964, %v5965
    %v5967 = vand.u32 %v5966, 4294901760
    %5968 = vmatpush1.msra.mxu0 %v5967
    %v5969 = vand.u32 %v5507, 4294901760
    %v5970 = vsub.f32 %v5507, %v5969
    %v5971 = vand.u32 %v5970, 4294901760
    %v5972 = vsub.f32 %v5970, %v5971
    %v5973 = vand.u32 %v5972, 4294901760
    %5974 = vmatprep.subr.mxu0 %v5973
    %v5975 = vand.u32 %v5506, 4294901760
    %v5976 = vsub.f32 %v5506, %v5975
    %v5977 = vand.u32 %v5976, 4294901760
    %v5978 = vsub.f32 %v5976, %v5977
    %v5979 = vand.u32 %v5978, 4294901760
    %5980 = vmatpush1.msra.mxu0 %v5979
    %v5981 = vand.u32 %v5509, 4294901760
    %v5982 = vsub.f32 %v5509, %v5981
    %v5983 = vand.u32 %v5982, 4294901760
    %v5984 = vsub.f32 %v5982, %v5983
    %v5985 = vand.u32 %v5984, 4294901760
    %5986 = vmatprep.subr.mxu0 %v5985
    %v5987 = vand.u32 %v5508, 4294901760
    %v5988 = vsub.f32 %v5508, %v5987
    %v5989 = vand.u32 %v5988, 4294901760
    %v5990 = vsub.f32 %v5988, %v5989
    %v5991 = vand.u32 %v5990, 4294901760
    %5992 = vmatpush1.msra.mxu0 %v5991
    %v5993 = vand.u32 %v5511, 4294901760
    %v5994 = vsub.f32 %v5511, %v5993
    %v5995 = vand.u32 %v5994, 4294901760
    %v5996 = vsub.f32 %v5994, %v5995
    %v5997 = vand.u32 %v5996, 4294901760
    %5998 = vmatprep.subr.mxu0 %v5997
    %v5999 = vand.u32 %v5510, 4294901760
    %v6000 = vsub.f32 %v5510, %v5999
    %v6001 = vand.u32 %v6000, 4294901760
    %v6002 = vsub.f32 %v6000, %v6001
    %v6003 = vand.u32 %v6002, 4294901760
    %6004 = vmatpush1.msra.mxu0 %v6003
    %v6005 = vand.u32 %v5513, 4294901760
    %v6006 = vsub.f32 %v5513, %v6005
    %v6007 = vand.u32 %v6006, 4294901760
    %v6008 = vsub.f32 %v6006, %v6007
    %v6009 = vand.u32 %v6008, 4294901760
    %6010 = vmatprep.subr.mxu0 %v6009
    %v6011 = vand.u32 %v5512, 4294901760
    %v6012 = vsub.f32 %v5512, %v6011
    %v6013 = vand.u32 %v6012, 4294901760
    %v6014 = vsub.f32 %v6012, %v6013
    %v6015 = vand.u32 %v6014, 4294901760
    %6016 = vmatpush1.msra.mxu0 %v6015
    %v6017 = vand.u32 %v5515, 4294901760
    %v6018 = vsub.f32 %v5515, %v6017
    %v6019 = vand.u32 %v6018, 4294901760
    %v6020 = vsub.f32 %v6018, %v6019
    %v6021 = vand.u32 %v6020, 4294901760
    %6022 = vmatprep.subr.mxu0 %v6021
    %v6023 = vand.u32 %v5514, 4294901760
    %v6024 = vsub.f32 %v5514, %v6023
    %v6025 = vand.u32 %v6024, 4294901760
    %v6026 = vsub.f32 %v6024, %v6025
    %v6027 = vand.u32 %v6026, 4294901760
    %6028 = vmatpush1.msra.mxu0 %v6027
    %v6029 = vand.u32 %v5517, 4294901760
    %v6030 = vsub.f32 %v5517, %v6029
    %v6031 = vand.u32 %v6030, 4294901760
    %v6032 = vsub.f32 %v6030, %v6031
    %v6033 = vand.u32 %v6032, 4294901760
    %6034 = vmatprep.subr.mxu0 %v6033
    %v6035 = vand.u32 %v5516, 4294901760
    %v6036 = vsub.f32 %v5516, %v6035
    %v6037 = vand.u32 %v6036, 4294901760
    %v6038 = vsub.f32 %v6036, %v6037
    %v6039 = vand.u32 %v6038, 4294901760
    %6040 = vmatpush1.msra.mxu0 %v6039
    %v6041 = vand.u32 %v5519, 4294901760
    %v6042 = vsub.f32 %v5519, %v6041
    %v6043 = vand.u32 %v6042, 4294901760
    %v6044 = vsub.f32 %v6042, %v6043
    %v6045 = vand.u32 %v6044, 4294901760
    %6046 = vmatprep.subr.mxu0 %v6045
    %v6047 = vand.u32 %v5518, 4294901760
    %v6048 = vsub.f32 %v5518, %v6047
    %v6049 = vand.u32 %v6048, 4294901760
    %v6050 = vsub.f32 %v6048, %v6049
    %v6051 = vand.u32 %v6050, 4294901760
    %6052 = vmatpush1.msra.mxu0 %v6051
    %v6053 = vand.u32 %v5521, 4294901760
    %v6054 = vsub.f32 %v5521, %v6053
    %v6055 = vand.u32 %v6054, 4294901760
    %v6056 = vsub.f32 %v6054, %v6055
    %v6057 = vand.u32 %v6056, 4294901760
    %6058 = vmatprep.subr.mxu0 %v6057
    %v6059 = vand.u32 %v5520, 4294901760
    %v6060 = vsub.f32 %v5520, %v6059
    %v6061 = vand.u32 %v6060, 4294901760
    %v6062 = vsub.f32 %v6060, %v6061
    %v6063 = vand.u32 %v6062, 4294901760
    %6064 = vmatpush1.msra.mxu0 %v6063
    %v6065 = vand.u32 %v5523, 4294901760
    %v6066 = vsub.f32 %v5523, %v6065
    %v6067 = vand.u32 %v6066, 4294901760
    %v6068 = vsub.f32 %v6066, %v6067
    %v6069 = vand.u32 %v6068, 4294901760
    %6070 = vmatprep.subr.mxu0 %v6069
    %v6071 = vand.u32 %v5522, 4294901760
    %v6072 = vsub.f32 %v5522, %v6071
    %v6073 = vand.u32 %v6072, 4294901760
    %v6074 = vsub.f32 %v6072, %v6073
    %v6075 = vand.u32 %v6074, 4294901760
    %6076 = vmatpush1.msra.mxu0 %v6075
    %v6077 = vand.u32 %v5525, 4294901760
    %v6078 = vsub.f32 %v5525, %v6077
    %v6079 = vand.u32 %v6078, 4294901760
    %v6080 = vsub.f32 %v6078, %v6079
    %v6081 = vand.u32 %v6080, 4294901760
    %6082 = vmatprep.subr.mxu0 %v6081
    %v6083 = vand.u32 %v5524, 4294901760
    %v6084 = vsub.f32 %v5524, %v6083
    %v6085 = vand.u32 %v6084, 4294901760
    %v6086 = vsub.f32 %v6084, %v6085
    %v6087 = vand.u32 %v6086, 4294901760
    %6088 = vmatpush1.msra.mxu0 %v6087
    %v6089 = vand.u32 %v5527, 4294901760
    %v6090 = vsub.f32 %v5527, %v6089
    %v6091 = vand.u32 %v6090, 4294901760
    %v6092 = vsub.f32 %v6090, %v6091
    %v6093 = vand.u32 %v6092, 4294901760
    %6094 = vmatprep.subr.mxu0 %v6093
    %v6095 = vand.u32 %v5526, 4294901760
    %v6096 = vsub.f32 %v5526, %v6095
    %v6097 = vand.u32 %v6096, 4294901760
    %v6098 = vsub.f32 %v6096, %v6097
    %v6099 = vand.u32 %v6098, 4294901760
    %6100 = vmatpush1.msra.mxu0 %v6099
    %v6101 = vand.u32 %v5529, 4294901760
    %v6102 = vsub.f32 %v5529, %v6101
    %v6103 = vand.u32 %v6102, 4294901760
    %v6104 = vsub.f32 %v6102, %v6103
    %v6105 = vand.u32 %v6104, 4294901760
    %6106 = vmatprep.subr.mxu0 %v6105
    %v6107 = vand.u32 %v5528, 4294901760
    %v6108 = vsub.f32 %v5528, %v6107
    %v6109 = vand.u32 %v6108, 4294901760
    %v6110 = vsub.f32 %v6108, %v6109
    %v6111 = vand.u32 %v6110, 4294901760
    %6112 = vmatpush1.msra.mxu0 %v6111
    %v6113 = vand.u32 %v5531, 4294901760
    %v6114 = vsub.f32 %v5531, %v6113
    %v6115 = vand.u32 %v6114, 4294901760
    %v6116 = vsub.f32 %v6114, %v6115
    %v6117 = vand.u32 %v6116, 4294901760
    %6118 = vmatprep.subr.mxu0 %v6117
    %v6119 = vand.u32 %v5530, 4294901760
    %v6120 = vsub.f32 %v5530, %v6119
    %v6121 = vand.u32 %v6120, 4294901760
    %v6122 = vsub.f32 %v6120, %v6121
    %v6123 = vand.u32 %v6122, 4294901760
    %6124 = vmatpush1.msra.mxu0 %v6123
    %v6125 = vand.u32 %v5465, 4294901760
    %6126 = vmatprep.mubr.f32.mxu0 %v6125
    %v6127 = vand.u32 %v5464, 4294901760
    %6128 = vmatmul.mubr.f32.gmra.mrb[0].mxu0 %v6127
    %v6129 = vpop.f32.mrb[0].mxu0
    %v6130 = vadd.f32 %v5737, %v6129
    %v6131 = vpop.f32.mrb[0].mxu0
    %v6132 = vadd.f32 %v5739, %v6131
    %6133 = vdwg.mxu0
    %v6134 = vand.u32 %v5469, 4294901760
    %v6135 = vsub.f32 %v5469, %v6134
    %6136 = vmatprep.subr.mxu0 %v6135
    %v6137 = vand.u32 %v5468, 4294901760
    %v6138 = vsub.f32 %v5468, %v6137
    %6139 = vmatpush1.msra.mxu0 %v6138
    %v6140 = vand.u32 %v5471, 4294901760
    %v6141 = vsub.f32 %v5471, %v6140
    %6142 = vmatprep.subr.mxu0 %v6141
    %v6143 = vand.u32 %v5470, 4294901760
    %v6144 = vsub.f32 %v5470, %v6143
    %6145 = vmatpush1.msra.mxu0 %v6144
    %v6146 = vand.u32 %v5473, 4294901760
    %v6147 = vsub.f32 %v5473, %v6146
    %6148 = vmatprep.subr.mxu0 %v6147
    %v6149 = vand.u32 %v5472, 4294901760
    %v6150 = vsub.f32 %v5472, %v6149
    %6151 = vmatpush1.msra.mxu0 %v6150
    %v6152 = vand.u32 %v5475, 4294901760
    %v6153 = vsub.f32 %v5475, %v6152
    %6154 = vmatprep.subr.mxu0 %v6153
    %v6155 = vand.u32 %v5474, 4294901760
    %v6156 = vsub.f32 %v5474, %v6155
    %6157 = vmatpush1.msra.mxu0 %v6156
    %v6158 = vand.u32 %v5477, 4294901760
    %v6159 = vsub.f32 %v5477, %v6158
    %6160 = vmatprep.subr.mxu0 %v6159
    %v6161 = vand.u32 %v5476, 4294901760
    %v6162 = vsub.f32 %v5476, %v6161
    %6163 = vmatpush1.msra.mxu0 %v6162
    %v6164 = vand.u32 %v5479, 4294901760
    %v6165 = vsub.f32 %v5479, %v6164
    %6166 = vmatprep.subr.mxu0 %v6165
    %v6167 = vand.u32 %v5478, 4294901760
    %v6168 = vsub.f32 %v5478, %v6167
    %6169 = vmatpush1.msra.mxu0 %v6168
    %v6170 = vand.u32 %v5481, 4294901760
    %v6171 = vsub.f32 %v5481, %v6170
    %6172 = vmatprep.subr.mxu0 %v6171
    %v6173 = vand.u32 %v5480, 4294901760
    %v6174 = vsub.f32 %v5480, %v6173
    %6175 = vmatpush1.msra.mxu0 %v6174
    %v6176 = vand.u32 %v5483, 4294901760
    %v6177 = vsub.f32 %v5483, %v6176
    %6178 = vmatprep.subr.mxu0 %v6177
    %v6179 = vand.u32 %v5482, 4294901760
    %v6180 = vsub.f32 %v5482, %v6179
    %6181 = vmatpush1.msra.mxu0 %v6180
    %v6182 = vand.u32 %v5485, 4294901760
    %v6183 = vsub.f32 %v5485, %v6182
    %6184 = vmatprep.subr.mxu0 %v6183
    %v6185 = vand.u32 %v5484, 4294901760
    %v6186 = vsub.f32 %v5484, %v6185
    %6187 = vmatpush1.msra.mxu0 %v6186
    %v6188 = vand.u32 %v5487, 4294901760
    %v6189 = vsub.f32 %v5487, %v6188
    %6190 = vmatprep.subr.mxu0 %v6189
    %v6191 = vand.u32 %v5486, 4294901760
    %v6192 = vsub.f32 %v5486, %v6191
    %6193 = vmatpush1.msra.mxu0 %v6192
    %v6194 = vand.u32 %v5489, 4294901760
    %v6195 = vsub.f32 %v5489, %v6194
    %6196 = vmatprep.subr.mxu0 %v6195
    %v6197 = vand.u32 %v5488, 4294901760
    %v6198 = vsub.f32 %v5488, %v6197
    %6199 = vmatpush1.msra.mxu0 %v6198
    %v6200 = vand.u32 %v5491, 4294901760
    %v6201 = vsub.f32 %v5491, %v6200
    %6202 = vmatprep.subr.mxu0 %v6201
    %v6203 = vand.u32 %v5490, 4294901760
    %v6204 = vsub.f32 %v5490, %v6203
    %6205 = vmatpush1.msra.mxu0 %v6204
    %v6206 = vand.u32 %v5493, 4294901760
    %v6207 = vsub.f32 %v5493, %v6206
    %6208 = vmatprep.subr.mxu0 %v6207
    %v6209 = vand.u32 %v5492, 4294901760
    %v6210 = vsub.f32 %v5492, %v6209
    %6211 = vmatpush1.msra.mxu0 %v6210
    %v6212 = vand.u32 %v5495, 4294901760
    %v6213 = vsub.f32 %v5495, %v6212
    %6214 = vmatprep.subr.mxu0 %v6213
    %v6215 = vand.u32 %v5494, 4294901760
    %v6216 = vsub.f32 %v5494, %v6215
    %6217 = vmatpush1.msra.mxu0 %v6216
    %v6218 = vand.u32 %v5497, 4294901760
    %v6219 = vsub.f32 %v5497, %v6218
    %6220 = vmatprep.subr.mxu0 %v6219
    %v6221 = vand.u32 %v5496, 4294901760
    %v6222 = vsub.f32 %v5496, %v6221
    %6223 = vmatpush1.msra.mxu0 %v6222
    %v6224 = vand.u32 %v5499, 4294901760
    %v6225 = vsub.f32 %v5499, %v6224
    %6226 = vmatprep.subr.mxu0 %v6225
    %v6227 = vand.u32 %v5498, 4294901760
    %v6228 = vsub.f32 %v5498, %v6227
    %6229 = vmatpush1.msra.mxu0 %v6228
    %v6230 = vand.u32 %v5501, 4294901760
    %v6231 = vsub.f32 %v5501, %v6230
    %6232 = vmatprep.subr.mxu0 %v6231
    %v6233 = vand.u32 %v5500, 4294901760
    %v6234 = vsub.f32 %v5500, %v6233
    %6235 = vmatpush1.msra.mxu0 %v6234
    %v6236 = vand.u32 %v5503, 4294901760
    %v6237 = vsub.f32 %v5503, %v6236
    %6238 = vmatprep.subr.mxu0 %v6237
    %v6239 = vand.u32 %v5502, 4294901760
    %v6240 = vsub.f32 %v5502, %v6239
    %6241 = vmatpush1.msra.mxu0 %v6240
    %v6242 = vand.u32 %v5505, 4294901760
    %v6243 = vsub.f32 %v5505, %v6242
    %6244 = vmatprep.subr.mxu0 %v6243
    %v6245 = vand.u32 %v5504, 4294901760
    %v6246 = vsub.f32 %v5504, %v6245
    %6247 = vmatpush1.msra.mxu0 %v6246
    %v6248 = vand.u32 %v5507, 4294901760
    %v6249 = vsub.f32 %v5507, %v6248
    %6250 = vmatprep.subr.mxu0 %v6249
    %v6251 = vand.u32 %v5506, 4294901760
    %v6252 = vsub.f32 %v5506, %v6251
    %6253 = vmatpush1.msra.mxu0 %v6252
    %v6254 = vand.u32 %v5509, 4294901760
    %v6255 = vsub.f32 %v5509, %v6254
    %6256 = vmatprep.subr.mxu0 %v6255
    %v6257 = vand.u32 %v5508, 4294901760
    %v6258 = vsub.f32 %v5508, %v6257
    %6259 = vmatpush1.msra.mxu0 %v6258
    %v6260 = vand.u32 %v5511, 4294901760
    %v6261 = vsub.f32 %v5511, %v6260
    %6262 = vmatprep.subr.mxu0 %v6261
    %v6263 = vand.u32 %v5510, 4294901760
    %v6264 = vsub.f32 %v5510, %v6263
    %6265 = vmatpush1.msra.mxu0 %v6264
    %v6266 = vand.u32 %v5513, 4294901760
    %v6267 = vsub.f32 %v5513, %v6266
    %6268 = vmatprep.subr.mxu0 %v6267
    %v6269 = vand.u32 %v5512, 4294901760
    %v6270 = vsub.f32 %v5512, %v6269
    %6271 = vmatpush1.msra.mxu0 %v6270
    %v6272 = vand.u32 %v5515, 4294901760
    %v6273 = vsub.f32 %v5515, %v6272
    %6274 = vmatprep.subr.mxu0 %v6273
    %v6275 = vand.u32 %v5514, 4294901760
    %v6276 = vsub.f32 %v5514, %v6275
    %6277 = vmatpush1.msra.mxu0 %v6276
    %v6278 = vand.u32 %v5517, 4294901760
    %v6279 = vsub.f32 %v5517, %v6278
    %6280 = vmatprep.subr.mxu0 %v6279
    %v6281 = vand.u32 %v5516, 4294901760
    %v6282 = vsub.f32 %v5516, %v6281
    %6283 = vmatpush1.msra.mxu0 %v6282
    %v6284 = vand.u32 %v5519, 4294901760
    %v6285 = vsub.f32 %v5519, %v6284
    %6286 = vmatprep.subr.mxu0 %v6285
    %v6287 = vand.u32 %v5518, 4294901760
    %v6288 = vsub.f32 %v5518, %v6287
    %6289 = vmatpush1.msra.mxu0 %v6288
    %v6290 = vand.u32 %v5521, 4294901760
    %v6291 = vsub.f32 %v5521, %v6290
    %6292 = vmatprep.subr.mxu0 %v6291
    %v6293 = vand.u32 %v5520, 4294901760
    %v6294 = vsub.f32 %v5520, %v6293
    %6295 = vmatpush1.msra.mxu0 %v6294
    %v6296 = vand.u32 %v5523, 4294901760
    %v6297 = vsub.f32 %v5523, %v6296
    %6298 = vmatprep.subr.mxu0 %v6297
    %v6299 = vand.u32 %v5522, 4294901760
    %v6300 = vsub.f32 %v5522, %v6299
    %6301 = vmatpush1.msra.mxu0 %v6300
    %v6302 = vand.u32 %v5525, 4294901760
    %v6303 = vsub.f32 %v5525, %v6302
    %6304 = vmatprep.subr.mxu0 %v6303
    %v6305 = vand.u32 %v5524, 4294901760
    %v6306 = vsub.f32 %v5524, %v6305
    %6307 = vmatpush1.msra.mxu0 %v6306
    %v6308 = vand.u32 %v5527, 4294901760
    %v6309 = vsub.f32 %v5527, %v6308
    %6310 = vmatprep.subr.mxu0 %v6309
    %v6311 = vand.u32 %v5526, 4294901760
    %v6312 = vsub.f32 %v5526, %v6311
    %6313 = vmatpush1.msra.mxu0 %v6312
    %v6314 = vand.u32 %v5529, 4294901760
    %v6315 = vsub.f32 %v5529, %v6314
    %6316 = vmatprep.subr.mxu0 %v6315
    %v6317 = vand.u32 %v5528, 4294901760
    %v6318 = vsub.f32 %v5528, %v6317
    %6319 = vmatpush1.msra.mxu0 %v6318
    %v6320 = vand.u32 %v5531, 4294901760
    %v6321 = vsub.f32 %v5531, %v6320
    %6322 = vmatprep.subr.mxu0 %v6321
    %v6323 = vand.u32 %v5530, 4294901760
    %v6324 = vsub.f32 %v5530, %v6323
    %6325 = vmatpush1.msra.mxu0 %v6324
    %v6326 = vand.u32 %v5465, 4294901760
    %v6327 = vsub.f32 %v5465, %v6326
    %6328 = vmatprep.mubr.f32.mxu0 %v6327
    %v6329 = vand.u32 %v5464, 4294901760
    %v6330 = vsub.f32 %v5464, %v6329
    %6331 = vmatmul.mubr.f32.gmra.mrb[0].mxu0 %v6330
    %v6332 = vpop.f32.mrb[0].mxu0
    %v6333 = vadd.f32 %v6130, %v6332
    %v6334 = vpop.f32.mrb[0].mxu0
    %v6335 = vadd.f32 %v6132, %v6334
    %6336 = vdwg.mxu0
    %v6337 = vand.u32 %v5469, 4294901760
    %6338 = vmatprep.subr.mxu0 %v6337
    %v6339 = vand.u32 %v5468, 4294901760
    %6340 = vmatpush1.msra.mxu0 %v6339
    %v6341 = vand.u32 %v5471, 4294901760
    %6342 = vmatprep.subr.mxu0 %v6341
    %v6343 = vand.u32 %v5470, 4294901760
    %6344 = vmatpush1.msra.mxu0 %v6343
    %v6345 = vand.u32 %v5473, 4294901760
    %6346 = vmatprep.subr.mxu0 %v6345
    %v6347 = vand.u32 %v5472, 4294901760
    %6348 = vmatpush1.msra.mxu0 %v6347
    %v6349 = vand.u32 %v5475, 4294901760
    %6350 = vmatprep.subr.mxu0 %v6349
    %v6351 = vand.u32 %v5474, 4294901760
    %6352 = vmatpush1.msra.mxu0 %v6351
    %v6353 = vand.u32 %v5477, 4294901760
    %6354 = vmatprep.subr.mxu0 %v6353
    %v6355 = vand.u32 %v5476, 4294901760
    %6356 = vmatpush1.msra.mxu0 %v6355
    %v6357 = vand.u32 %v5479, 4294901760
    %6358 = vmatprep.subr.mxu0 %v6357
    %v6359 = vand.u32 %v5478, 4294901760
    %6360 = vmatpush1.msra.mxu0 %v6359
    %v6361 = vand.u32 %v5481, 4294901760
    %6362 = vmatprep.subr.mxu0 %v6361
    %v6363 = vand.u32 %v5480, 4294901760
    %6364 = vmatpush1.msra.mxu0 %v6363
    %v6365 = vand.u32 %v5483, 4294901760
    %6366 = vmatprep.subr.mxu0 %v6365
    %v6367 = vand.u32 %v5482, 4294901760
    %6368 = vmatpush1.msra.mxu0 %v6367
    %v6369 = vand.u32 %v5485, 4294901760
    %6370 = vmatprep.subr.mxu0 %v6369
    %v6371 = vand.u32 %v5484, 4294901760
    %6372 = vmatpush1.msra.mxu0 %v6371
    %v6373 = vand.u32 %v5487, 4294901760
    %6374 = vmatprep.subr.mxu0 %v6373
    %v6375 = vand.u32 %v5486, 4294901760
    %6376 = vmatpush1.msra.mxu0 %v6375
    %v6377 = vand.u32 %v5489, 4294901760
    %6378 = vmatprep.subr.mxu0 %v6377
    %v6379 = vand.u32 %v5488, 4294901760
    %6380 = vmatpush1.msra.mxu0 %v6379
    %v6381 = vand.u32 %v5491, 4294901760
    %6382 = vmatprep.subr.mxu0 %v6381
    %v6383 = vand.u32 %v5490, 4294901760
    %6384 = vmatpush1.msra.mxu0 %v6383
    %v6385 = vand.u32 %v5493, 4294901760
    %6386 = vmatprep.subr.mxu0 %v6385
    %v6387 = vand.u32 %v5492, 4294901760
    %6388 = vmatpush1.msra.mxu0 %v6387
    %v6389 = vand.u32 %v5495, 4294901760
    %6390 = vmatprep.subr.mxu0 %v6389
    %v6391 = vand.u32 %v5494, 4294901760
    %6392 = vmatpush1.msra.mxu0 %v6391
    %v6393 = vand.u32 %v5497, 4294901760
    %6394 = vmatprep.subr.mxu0 %v6393
    %v6395 = vand.u32 %v5496, 4294901760
    %6396 = vmatpush1.msra.mxu0 %v6395
    %v6397 = vand.u32 %v5499, 4294901760
    %6398 = vmatprep.subr.mxu0 %v6397
    %v6399 = vand.u32 %v5498, 4294901760
    %6400 = vmatpush1.msra.mxu0 %v6399
    %v6401 = vand.u32 %v5501, 4294901760
    %6402 = vmatprep.subr.mxu0 %v6401
    %v6403 = vand.u32 %v5500, 4294901760
    %6404 = vmatpush1.msra.mxu0 %v6403
    %v6405 = vand.u32 %v5503, 4294901760
    %6406 = vmatprep.subr.mxu0 %v6405
    %v6407 = vand.u32 %v5502, 4294901760
    %6408 = vmatpush1.msra.mxu0 %v6407
    %v6409 = vand.u32 %v5505, 4294901760
    %6410 = vmatprep.subr.mxu0 %v6409
    %v6411 = vand.u32 %v5504, 4294901760
    %6412 = vmatpush1.msra.mxu0 %v6411
    %v6413 = vand.u32 %v5507, 4294901760
    %6414 = vmatprep.subr.mxu0 %v6413
    %v6415 = vand.u32 %v5506, 4294901760
    %6416 = vmatpush1.msra.mxu0 %v6415
    %v6417 = vand.u32 %v5509, 4294901760
    %6418 = vmatprep.subr.mxu0 %v6417
    %v6419 = vand.u32 %v5508, 4294901760
    %6420 = vmatpush1.msra.mxu0 %v6419
    %v6421 = vand.u32 %v5511, 4294901760
    %6422 = vmatprep.subr.mxu0 %v6421
    %v6423 = vand.u32 %v5510, 4294901760
    %6424 = vmatpush1.msra.mxu0 %v6423
    %v6425 = vand.u32 %v5513, 4294901760
    %6426 = vmatprep.subr.mxu0 %v6425
    %v6427 = vand.u32 %v5512, 4294901760
    %6428 = vmatpush1.msra.mxu0 %v6427
    %v6429 = vand.u32 %v5515, 4294901760
    %6430 = vmatprep.subr.mxu0 %v6429
    %v6431 = vand.u32 %v5514, 4294901760
    %6432 = vmatpush1.msra.mxu0 %v6431
    %v6433 = vand.u32 %v5517, 4294901760
    %6434 = vmatprep.subr.mxu0 %v6433
    %v6435 = vand.u32 %v5516, 4294901760
    %6436 = vmatpush1.msra.mxu0 %v6435
    %v6437 = vand.u32 %v5519, 4294901760
    %6438 = vmatprep.subr.mxu0 %v6437
    %v6439 = vand.u32 %v5518, 4294901760
    %6440 = vmatpush1.msra.mxu0 %v6439
    %v6441 = vand.u32 %v5521, 4294901760
    %6442 = vmatprep.subr.mxu0 %v6441
    %v6443 = vand.u32 %v5520, 4294901760
    %6444 = vmatpush1.msra.mxu0 %v6443
    %v6445 = vand.u32 %v5523, 4294901760
    %6446 = vmatprep.subr.mxu0 %v6445
    %v6447 = vand.u32 %v5522, 4294901760
    %6448 = vmatpush1.msra.mxu0 %v6447
    %v6449 = vand.u32 %v5525, 4294901760
    %6450 = vmatprep.subr.mxu0 %v6449
    %v6451 = vand.u32 %v5524, 4294901760
    %6452 = vmatpush1.msra.mxu0 %v6451
    %v6453 = vand.u32 %v5527, 4294901760
    %6454 = vmatprep.subr.mxu0 %v6453
    %v6455 = vand.u32 %v5526, 4294901760
    %6456 = vmatpush1.msra.mxu0 %v6455
    %v6457 = vand.u32 %v5529, 4294901760
    %6458 = vmatprep.subr.mxu0 %v6457
    %v6459 = vand.u32 %v5528, 4294901760
    %6460 = vmatpush1.msra.mxu0 %v6459
    %v6461 = vand.u32 %v5531, 4294901760
    %6462 = vmatprep.subr.mxu0 %v6461
    %v6463 = vand.u32 %v5530, 4294901760
    %6464 = vmatpush1.msra.mxu0 %v6463
    %v6465 = vand.u32 %v5465, 4294901760
    %v6466 = vsub.f32 %v5465, %v6465
    %v6467 = vand.u32 %v6466, 4294901760
    %6468 = vmatprep.mubr.f32.mxu0 %v6467
    %v6469 = vand.u32 %v5464, 4294901760
    %v6470 = vsub.f32 %v5464, %v6469
    %v6471 = vand.u32 %v6470, 4294901760
    %6472 = vmatmul.mubr.f32.gmra.mrb[0].mxu0 %v6471
    %v6473 = vpop.f32.mrb[0].mxu0
    %v6474 = vadd.f32 %v6333, %v6473
    %v6475 = vpop.f32.mrb[0].mxu0
    %v6476 = vadd.f32 %v6335, %v6475
    %6477 = vdwg.mxu0
    %v6478 = vand.u32 %v5469, 4294901760
    %v6479 = vsub.f32 %v5469, %v6478
    %v6480 = vand.u32 %v6479, 4294901760
    %6481 = vmatprep.subr.mxu0 %v6480
    %v6482 = vand.u32 %v5468, 4294901760
    %v6483 = vsub.f32 %v5468, %v6482
    %v6484 = vand.u32 %v6483, 4294901760
    %6485 = vmatpush1.msra.mxu0 %v6484
    %v6486 = vand.u32 %v5471, 4294901760
    %v6487 = vsub.f32 %v5471, %v6486
    %v6488 = vand.u32 %v6487, 4294901760
    %6489 = vmatprep.subr.mxu0 %v6488
    %v6490 = vand.u32 %v5470, 4294901760
    %v6491 = vsub.f32 %v5470, %v6490
    %v6492 = vand.u32 %v6491, 4294901760
    %6493 = vmatpush1.msra.mxu0 %v6492
    %v6494 = vand.u32 %v5473, 4294901760
    %v6495 = vsub.f32 %v5473, %v6494
    %v6496 = vand.u32 %v6495, 4294901760
    %6497 = vmatprep.subr.mxu0 %v6496
    %v6498 = vand.u32 %v5472, 4294901760
    %v6499 = vsub.f32 %v5472, %v6498
    %v6500 = vand.u32 %v6499, 4294901760
    %6501 = vmatpush1.msra.mxu0 %v6500
    %v6502 = vand.u32 %v5475, 4294901760
    %v6503 = vsub.f32 %v5475, %v6502
    %v6504 = vand.u32 %v6503, 4294901760
    %6505 = vmatprep.subr.mxu0 %v6504
    %v6506 = vand.u32 %v5474, 4294901760
    %v6507 = vsub.f32 %v5474, %v6506
    %v6508 = vand.u32 %v6507, 4294901760
    %6509 = vmatpush1.msra.mxu0 %v6508
    %v6510 = vand.u32 %v5477, 4294901760
    %v6511 = vsub.f32 %v5477, %v6510
    %v6512 = vand.u32 %v6511, 4294901760
    %6513 = vmatprep.subr.mxu0 %v6512
    %v6514 = vand.u32 %v5476, 4294901760
    %v6515 = vsub.f32 %v5476, %v6514
    %v6516 = vand.u32 %v6515, 4294901760
    %6517 = vmatpush1.msra.mxu0 %v6516
    %v6518 = vand.u32 %v5479, 4294901760
    %v6519 = vsub.f32 %v5479, %v6518
    %v6520 = vand.u32 %v6519, 4294901760
    %6521 = vmatprep.subr.mxu0 %v6520
    %v6522 = vand.u32 %v5478, 4294901760
    %v6523 = vsub.f32 %v5478, %v6522
    %v6524 = vand.u32 %v6523, 4294901760
    %6525 = vmatpush1.msra.mxu0 %v6524
    %v6526 = vand.u32 %v5481, 4294901760
    %v6527 = vsub.f32 %v5481, %v6526
    %v6528 = vand.u32 %v6527, 4294901760
    %6529 = vmatprep.subr.mxu0 %v6528
    %v6530 = vand.u32 %v5480, 4294901760
    %v6531 = vsub.f32 %v5480, %v6530
    %v6532 = vand.u32 %v6531, 4294901760
    %6533 = vmatpush1.msra.mxu0 %v6532
    %v6534 = vand.u32 %v5483, 4294901760
    %v6535 = vsub.f32 %v5483, %v6534
    %v6536 = vand.u32 %v6535, 4294901760
    %6537 = vmatprep.subr.mxu0 %v6536
    %v6538 = vand.u32 %v5482, 4294901760
    %v6539 = vsub.f32 %v5482, %v6538
    %v6540 = vand.u32 %v6539, 4294901760
    %6541 = vmatpush1.msra.mxu0 %v6540
    %v6542 = vand.u32 %v5485, 4294901760
    %v6543 = vsub.f32 %v5485, %v6542
    %v6544 = vand.u32 %v6543, 4294901760
    %6545 = vmatprep.subr.mxu0 %v6544
    %v6546 = vand.u32 %v5484, 4294901760
    %v6547 = vsub.f32 %v5484, %v6546
    %v6548 = vand.u32 %v6547, 4294901760
    %6549 = vmatpush1.msra.mxu0 %v6548
    %v6550 = vand.u32 %v5487, 4294901760
    %v6551 = vsub.f32 %v5487, %v6550
    %v6552 = vand.u32 %v6551, 4294901760
    %6553 = vmatprep.subr.mxu0 %v6552
    %v6554 = vand.u32 %v5486, 4294901760
    %v6555 = vsub.f32 %v5486, %v6554
    %v6556 = vand.u32 %v6555, 4294901760
    %6557 = vmatpush1.msra.mxu0 %v6556
    %v6558 = vand.u32 %v5489, 4294901760
    %v6559 = vsub.f32 %v5489, %v6558
    %v6560 = vand.u32 %v6559, 4294901760
    %6561 = vmatprep.subr.mxu0 %v6560
    %v6562 = vand.u32 %v5488, 4294901760
    %v6563 = vsub.f32 %v5488, %v6562
    %v6564 = vand.u32 %v6563, 4294901760
    %6565 = vmatpush1.msra.mxu0 %v6564
    %v6566 = vand.u32 %v5491, 4294901760
    %v6567 = vsub.f32 %v5491, %v6566
    %v6568 = vand.u32 %v6567, 4294901760
    %6569 = vmatprep.subr.mxu0 %v6568
    %v6570 = vand.u32 %v5490, 4294901760
    %v6571 = vsub.f32 %v5490, %v6570
    %v6572 = vand.u32 %v6571, 4294901760
    %6573 = vmatpush1.msra.mxu0 %v6572
    %v6574 = vand.u32 %v5493, 4294901760
    %v6575 = vsub.f32 %v5493, %v6574
    %v6576 = vand.u32 %v6575, 4294901760
    %6577 = vmatprep.subr.mxu0 %v6576
    %v6578 = vand.u32 %v5492, 4294901760
    %v6579 = vsub.f32 %v5492, %v6578
    %v6580 = vand.u32 %v6579, 4294901760
    %6581 = vmatpush1.msra.mxu0 %v6580
    %v6582 = vand.u32 %v5495, 4294901760
    %v6583 = vsub.f32 %v5495, %v6582
    %v6584 = vand.u32 %v6583, 4294901760
    %6585 = vmatprep.subr.mxu0 %v6584
    %v6586 = vand.u32 %v5494, 4294901760
    %v6587 = vsub.f32 %v5494, %v6586
    %v6588 = vand.u32 %v6587, 4294901760
    %6589 = vmatpush1.msra.mxu0 %v6588
    %v6590 = vand.u32 %v5497, 4294901760
    %v6591 = vsub.f32 %v5497, %v6590
    %v6592 = vand.u32 %v6591, 4294901760
    %6593 = vmatprep.subr.mxu0 %v6592
    %v6594 = vand.u32 %v5496, 4294901760
    %v6595 = vsub.f32 %v5496, %v6594
    %v6596 = vand.u32 %v6595, 4294901760
    %6597 = vmatpush1.msra.mxu0 %v6596
    %v6598 = vand.u32 %v5499, 4294901760
    %v6599 = vsub.f32 %v5499, %v6598
    %v6600 = vand.u32 %v6599, 4294901760
    %6601 = vmatprep.subr.mxu0 %v6600
    %v6602 = vand.u32 %v5498, 4294901760
    %v6603 = vsub.f32 %v5498, %v6602
    %v6604 = vand.u32 %v6603, 4294901760
    %6605 = vmatpush1.msra.mxu0 %v6604
    %v6606 = vand.u32 %v5501, 4294901760
    %v6607 = vsub.f32 %v5501, %v6606
    %v6608 = vand.u32 %v6607, 4294901760
    %6609 = vmatprep.subr.mxu0 %v6608
    %v6610 = vand.u32 %v5500, 4294901760
    %v6611 = vsub.f32 %v5500, %v6610
    %v6612 = vand.u32 %v6611, 4294901760
    %6613 = vmatpush1.msra.mxu0 %v6612
    %v6614 = vand.u32 %v5503, 4294901760
    %v6615 = vsub.f32 %v5503, %v6614
    %v6616 = vand.u32 %v6615, 4294901760
    %6617 = vmatprep.subr.mxu0 %v6616
    %v6618 = vand.u32 %v5502, 4294901760
    %v6619 = vsub.f32 %v5502, %v6618
    %v6620 = vand.u32 %v6619, 4294901760
    %6621 = vmatpush1.msra.mxu0 %v6620
    %v6622 = vand.u32 %v5505, 4294901760
    %v6623 = vsub.f32 %v5505, %v6622
    %v6624 = vand.u32 %v6623, 4294901760
    %6625 = vmatprep.subr.mxu0 %v6624
    %v6626 = vand.u32 %v5504, 4294901760
    %v6627 = vsub.f32 %v5504, %v6626
    %v6628 = vand.u32 %v6627, 4294901760
    %6629 = vmatpush1.msra.mxu0 %v6628
    %v6630 = vand.u32 %v5507, 4294901760
    %v6631 = vsub.f32 %v5507, %v6630
    %v6632 = vand.u32 %v6631, 4294901760
    %6633 = vmatprep.subr.mxu0 %v6632
    %v6634 = vand.u32 %v5506, 4294901760
    %v6635 = vsub.f32 %v5506, %v6634
    %v6636 = vand.u32 %v6635, 4294901760
    %6637 = vmatpush1.msra.mxu0 %v6636
    %v6638 = vand.u32 %v5509, 4294901760
    %v6639 = vsub.f32 %v5509, %v6638
    %v6640 = vand.u32 %v6639, 4294901760
    %6641 = vmatprep.subr.mxu0 %v6640
    %v6642 = vand.u32 %v5508, 4294901760
    %v6643 = vsub.f32 %v5508, %v6642
    %v6644 = vand.u32 %v6643, 4294901760
    %6645 = vmatpush1.msra.mxu0 %v6644
    %v6646 = vand.u32 %v5511, 4294901760
    %v6647 = vsub.f32 %v5511, %v6646
    %v6648 = vand.u32 %v6647, 4294901760
    %6649 = vmatprep.subr.mxu0 %v6648
    %v6650 = vand.u32 %v5510, 4294901760
    %v6651 = vsub.f32 %v5510, %v6650
    %v6652 = vand.u32 %v6651, 4294901760
    %6653 = vmatpush1.msra.mxu0 %v6652
    %v6654 = vand.u32 %v5513, 4294901760
    %v6655 = vsub.f32 %v5513, %v6654
    %v6656 = vand.u32 %v6655, 4294901760
    %6657 = vmatprep.subr.mxu0 %v6656
    %v6658 = vand.u32 %v5512, 4294901760
    %v6659 = vsub.f32 %v5512, %v6658
    %v6660 = vand.u32 %v6659, 4294901760
    %6661 = vmatpush1.msra.mxu0 %v6660
    %v6662 = vand.u32 %v5515, 4294901760
    %v6663 = vsub.f32 %v5515, %v6662
    %v6664 = vand.u32 %v6663, 4294901760
    %6665 = vmatprep.subr.mxu0 %v6664
    %v6666 = vand.u32 %v5514, 4294901760
    %v6667 = vsub.f32 %v5514, %v6666
    %v6668 = vand.u32 %v6667, 4294901760
    %6669 = vmatpush1.msra.mxu0 %v6668
    %v6670 = vand.u32 %v5517, 4294901760
    %v6671 = vsub.f32 %v5517, %v6670
    %v6672 = vand.u32 %v6671, 4294901760
    %6673 = vmatprep.subr.mxu0 %v6672
    %v6674 = vand.u32 %v5516, 4294901760
    %v6675 = vsub.f32 %v5516, %v6674
    %v6676 = vand.u32 %v6675, 4294901760
    %6677 = vmatpush1.msra.mxu0 %v6676
    %v6678 = vand.u32 %v5519, 4294901760
    %v6679 = vsub.f32 %v5519, %v6678
    %v6680 = vand.u32 %v6679, 4294901760
    %6681 = vmatprep.subr.mxu0 %v6680
    %v6682 = vand.u32 %v5518, 4294901760
    %v6683 = vsub.f32 %v5518, %v6682
    %v6684 = vand.u32 %v6683, 4294901760
    %6685 = vmatpush1.msra.mxu0 %v6684
    %v6686 = vand.u32 %v5521, 4294901760
    %v6687 = vsub.f32 %v5521, %v6686
    %v6688 = vand.u32 %v6687, 4294901760
    %6689 = vmatprep.subr.mxu0 %v6688
    %v6690 = vand.u32 %v5520, 4294901760
    %v6691 = vsub.f32 %v5520, %v6690
    %v6692 = vand.u32 %v6691, 4294901760
    %6693 = vmatpush1.msra.mxu0 %v6692
    %v6694 = vand.u32 %v5523, 4294901760
    %v6695 = vsub.f32 %v5523, %v6694
    %v6696 = vand.u32 %v6695, 4294901760
    %6697 = vmatprep.subr.mxu0 %v6696
    %v6698 = vand.u32 %v5522, 4294901760
    %v6699 = vsub.f32 %v5522, %v6698
    %v6700 = vand.u32 %v6699, 4294901760
    %6701 = vmatpush1.msra.mxu0 %v6700
    %v6702 = vand.u32 %v5525, 4294901760
    %v6703 = vsub.f32 %v5525, %v6702
    %v6704 = vand.u32 %v6703, 4294901760
    %6705 = vmatprep.subr.mxu0 %v6704
    %v6706 = vand.u32 %v5524, 4294901760
    %v6707 = vsub.f32 %v5524, %v6706
    %v6708 = vand.u32 %v6707, 4294901760
    %6709 = vmatpush1.msra.mxu0 %v6708
    %v6710 = vand.u32 %v5527, 4294901760
    %v6711 = vsub.f32 %v5527, %v6710
    %v6712 = vand.u32 %v6711, 4294901760
    %6713 = vmatprep.subr.mxu0 %v6712
    %v6714 = vand.u32 %v5526, 4294901760
    %v6715 = vsub.f32 %v5526, %v6714
    %v6716 = vand.u32 %v6715, 4294901760
    %6717 = vmatpush1.msra.mxu0 %v6716
    %v6718 = vand.u32 %v5529, 4294901760
    %v6719 = vsub.f32 %v5529, %v6718
    %v6720 = vand.u32 %v6719, 4294901760
    %6721 = vmatprep.subr.mxu0 %v6720
    %v6722 = vand.u32 %v5528, 4294901760
    %v6723 = vsub.f32 %v5528, %v6722
    %v6724 = vand.u32 %v6723, 4294901760
    %6725 = vmatpush1.msra.mxu0 %v6724
    %v6726 = vand.u32 %v5531, 4294901760
    %v6727 = vsub.f32 %v5531, %v6726
    %v6728 = vand.u32 %v6727, 4294901760
    %6729 = vmatprep.subr.mxu0 %v6728
    %v6730 = vand.u32 %v5530, 4294901760
    %v6731 = vsub.f32 %v5530, %v6730
    %v6732 = vand.u32 %v6731, 4294901760
    %6733 = vmatpush1.msra.mxu0 %v6732
    %v6734 = vand.u32 %v5465, 4294901760
    %6735 = vmatprep.mubr.f32.mxu0 %v6734
    %v6736 = vand.u32 %v5464, 4294901760
    %6737 = vmatmul.mubr.f32.gmra.mrb[0].mxu0 %v6736
    %v6738 = vpop.f32.mrb[0].mxu0
    %v6739 = vadd.f32 %v6474, %v6738
    %v6740 = vpop.f32.mrb[0].mxu0
    %v6741 = vadd.f32 %v6476, %v6740
    %6742 = vdwg.mxu0
    %v6743 = vand.u32 %v5469, 4294901760
    %6744 = vmatprep.subr.mxu0 %v6743
    %v6745 = vand.u32 %v5468, 4294901760
    %6746 = vmatpush1.msra.mxu0 %v6745
    %v6747 = vand.u32 %v5471, 4294901760
    %6748 = vmatprep.subr.mxu0 %v6747
    %v6749 = vand.u32 %v5470, 4294901760
    %6750 = vmatpush1.msra.mxu0 %v6749
    %v6751 = vand.u32 %v5473, 4294901760
    %6752 = vmatprep.subr.mxu0 %v6751
    %v6753 = vand.u32 %v5472, 4294901760
    %6754 = vmatpush1.msra.mxu0 %v6753
    %v6755 = vand.u32 %v5475, 4294901760
    %6756 = vmatprep.subr.mxu0 %v6755
    %v6757 = vand.u32 %v5474, 4294901760
    %6758 = vmatpush1.msra.mxu0 %v6757
    %v6759 = vand.u32 %v5477, 4294901760
    %6760 = vmatprep.subr.mxu0 %v6759
    %v6761 = vand.u32 %v5476, 4294901760
    %6762 = vmatpush1.msra.mxu0 %v6761
    %v6763 = vand.u32 %v5479, 4294901760
    %6764 = vmatprep.subr.mxu0 %v6763
    %v6765 = vand.u32 %v5478, 4294901760
    %6766 = vmatpush1.msra.mxu0 %v6765
    %v6767 = vand.u32 %v5481, 4294901760
    %6768 = vmatprep.subr.mxu0 %v6767
    %v6769 = vand.u32 %v5480, 4294901760
    %6770 = vmatpush1.msra.mxu0 %v6769
    %v6771 = vand.u32 %v5483, 4294901760
    %6772 = vmatprep.subr.mxu0 %v6771
    %v6773 = vand.u32 %v5482, 4294901760
    %6774 = vmatpush1.msra.mxu0 %v6773
    %v6775 = vand.u32 %v5485, 4294901760
    %6776 = vmatprep.subr.mxu0 %v6775
    %v6777 = vand.u32 %v5484, 4294901760
    %6778 = vmatpush1.msra.mxu0 %v6777
    %v6779 = vand.u32 %v5487, 4294901760
    %6780 = vmatprep.subr.mxu0 %v6779
    %v6781 = vand.u32 %v5486, 4294901760
    %6782 = vmatpush1.msra.mxu0 %v6781
    %v6783 = vand.u32 %v5489, 4294901760
    %6784 = vmatprep.subr.mxu0 %v6783
    %v6785 = vand.u32 %v5488, 4294901760
    %6786 = vmatpush1.msra.mxu0 %v6785
    %v6787 = vand.u32 %v5491, 4294901760
    %6788 = vmatprep.subr.mxu0 %v6787
    %v6789 = vand.u32 %v5490, 4294901760
    %6790 = vmatpush1.msra.mxu0 %v6789
    %v6791 = vand.u32 %v5493, 4294901760
    %6792 = vmatprep.subr.mxu0 %v6791
    %v6793 = vand.u32 %v5492, 4294901760
    %6794 = vmatpush1.msra.mxu0 %v6793
    %v6795 = vand.u32 %v5495, 4294901760
    %6796 = vmatprep.subr.mxu0 %v6795
    %v6797 = vand.u32 %v5494, 4294901760
    %6798 = vmatpush1.msra.mxu0 %v6797
    %v6799 = vand.u32 %v5497, 4294901760
    %6800 = vmatprep.subr.mxu0 %v6799
    %v6801 = vand.u32 %v5496, 4294901760
    %6802 = vmatpush1.msra.mxu0 %v6801
    %v6803 = vand.u32 %v5499, 4294901760
    %6804 = vmatprep.subr.mxu0 %v6803
    %v6805 = vand.u32 %v5498, 4294901760
    %6806 = vmatpush1.msra.mxu0 %v6805
    %v6807 = vand.u32 %v5501, 4294901760
    %6808 = vmatprep.subr.mxu0 %v6807
    %v6809 = vand.u32 %v5500, 4294901760
    %6810 = vmatpush1.msra.mxu0 %v6809
    %v6811 = vand.u32 %v5503, 4294901760
    %6812 = vmatprep.subr.mxu0 %v6811
    %v6813 = vand.u32 %v5502, 4294901760
    %6814 = vmatpush1.msra.mxu0 %v6813
    %v6815 = vand.u32 %v5505, 4294901760
    %6816 = vmatprep.subr.mxu0 %v6815
    %v6817 = vand.u32 %v5504, 4294901760
    %6818 = vmatpush1.msra.mxu0 %v6817
    %v6819 = vand.u32 %v5507, 4294901760
    %6820 = vmatprep.subr.mxu0 %v6819
    %v6821 = vand.u32 %v5506, 4294901760
    %6822 = vmatpush1.msra.mxu0 %v6821
    %v6823 = vand.u32 %v5509, 4294901760
    %6824 = vmatprep.subr.mxu0 %v6823
    %v6825 = vand.u32 %v5508, 4294901760
    %6826 = vmatpush1.msra.mxu0 %v6825
    %v6827 = vand.u32 %v5511, 4294901760
    %6828 = vmatprep.subr.mxu0 %v6827
    %v6829 = vand.u32 %v5510, 4294901760
    %6830 = vmatpush1.msra.mxu0 %v6829
    %v6831 = vand.u32 %v5513, 4294901760
    %6832 = vmatprep.subr.mxu0 %v6831
    %v6833 = vand.u32 %v5512, 4294901760
    %6834 = vmatpush1.msra.mxu0 %v6833
    %v6835 = vand.u32 %v5515, 4294901760
    %6836 = vmatprep.subr.mxu0 %v6835
    %v6837 = vand.u32 %v5514, 4294901760
    %6838 = vmatpush1.msra.mxu0 %v6837
    %v6839 = vand.u32 %v5517, 4294901760
    %6840 = vmatprep.subr.mxu0 %v6839
    %v6841 = vand.u32 %v5516, 4294901760
    %6842 = vmatpush1.msra.mxu0 %v6841
    %v6843 = vand.u32 %v5519, 4294901760
    %6844 = vmatprep.subr.mxu0 %v6843
    %v6845 = vand.u32 %v5518, 4294901760
    %6846 = vmatpush1.msra.mxu0 %v6845
    %v6847 = vand.u32 %v5521, 4294901760
    %6848 = vmatprep.subr.mxu0 %v6847
    %v6849 = vand.u32 %v5520, 4294901760
    %6850 = vmatpush1.msra.mxu0 %v6849
    %v6851 = vand.u32 %v5523, 4294901760
    %6852 = vmatprep.subr.mxu0 %v6851
    %v6853 = vand.u32 %v5522, 4294901760
    %6854 = vmatpush1.msra.mxu0 %v6853
    %v6855 = vand.u32 %v5525, 4294901760
    %6856 = vmatprep.subr.mxu0 %v6855
    %v6857 = vand.u32 %v5524, 4294901760
    %6858 = vmatpush1.msra.mxu0 %v6857
    %v6859 = vand.u32 %v5527, 4294901760
    %6860 = vmatprep.subr.mxu0 %v6859
    %v6861 = vand.u32 %v5526, 4294901760
    %6862 = vmatpush1.msra.mxu0 %v6861
    %v6863 = vand.u32 %v5529, 4294901760
    %6864 = vmatprep.subr.mxu0 %v6863
    %v6865 = vand.u32 %v5528, 4294901760
    %6866 = vmatpush1.msra.mxu0 %v6865
    %v6867 = vand.u32 %v5531, 4294901760
    %6868 = vmatprep.subr.mxu0 %v6867
    %v6869 = vand.u32 %v5530, 4294901760
    %6870 = vmatpush1.msra.mxu0 %v6869
    %v6871 = vand.u32 %v5465, 4294901760
    %6872 = vmatprep.mubr.f32.mxu0 %v6871
    %v6873 = vand.u32 %v5464, 4294901760
    %6874 = vmatmul.mubr.f32.gmra.mrb[0].mxu0 %v6873
    %v6875 = vpop.f32.mrb[0].mxu0
    %v6876 = vadd.f32 %v6739, %v6875
    %v6877 = vpop.f32.mrb[0].mxu0
    %v6878 = vadd.f32 %v6741, %v6877
    %6879 = vdwg.mxu0
    %v6880 = vand.u32 %v5533, 4294901760
    %6881 = vmatprep.subr.mxu0 %v6880
    %v6882 = vand.u32 %v5532, 4294901760
    %6883 = vmatpush1.msra.mxu0 %v6882
    %v6884 = vand.u32 %v5535, 4294901760
    %6885 = vmatprep.subr.mxu0 %v6884
    %v6886 = vand.u32 %v5534, 4294901760
    %6887 = vmatpush1.msra.mxu0 %v6886
    %v6888 = vand.u32 %v5537, 4294901760
    %6889 = vmatprep.subr.mxu0 %v6888
    %v6890 = vand.u32 %v5536, 4294901760
    %6891 = vmatpush1.msra.mxu0 %v6890
    %v6892 = vand.u32 %v5539, 4294901760
    %6893 = vmatprep.subr.mxu0 %v6892
    %v6894 = vand.u32 %v5538, 4294901760
    %6895 = vmatpush1.msra.mxu0 %v6894
    %v6896 = vand.u32 %v5541, 4294901760
    %6897 = vmatprep.subr.mxu0 %v6896
    %v6898 = vand.u32 %v5540, 4294901760
    %6899 = vmatpush1.msra.mxu0 %v6898
    %v6900 = vand.u32 %v5543, 4294901760
    %6901 = vmatprep.subr.mxu0 %v6900
    %v6902 = vand.u32 %v5542, 4294901760
    %6903 = vmatpush1.msra.mxu0 %v6902
    %v6904 = vand.u32 %v5545, 4294901760
    %6905 = vmatprep.subr.mxu0 %v6904
    %v6906 = vand.u32 %v5544, 4294901760
    %6907 = vmatpush1.msra.mxu0 %v6906
    %v6908 = vand.u32 %v5547, 4294901760
    %6909 = vmatprep.subr.mxu0 %v6908
    %v6910 = vand.u32 %v5546, 4294901760
    %6911 = vmatpush1.msra.mxu0 %v6910
    %v6912 = vand.u32 %v5549, 4294901760
    %6913 = vmatprep.subr.mxu0 %v6912
    %v6914 = vand.u32 %v5548, 4294901760
    %6915 = vmatpush1.msra.mxu0 %v6914
    %v6916 = vand.u32 %v5551, 4294901760
    %6917 = vmatprep.subr.mxu0 %v6916
    %v6918 = vand.u32 %v5550, 4294901760
    %6919 = vmatpush1.msra.mxu0 %v6918
    %v6920 = vand.u32 %v5553, 4294901760
    %6921 = vmatprep.subr.mxu0 %v6920
    %v6922 = vand.u32 %v5552, 4294901760
    %6923 = vmatpush1.msra.mxu0 %v6922
    %v6924 = vand.u32 %v5555, 4294901760
    %6925 = vmatprep.subr.mxu0 %v6924
    %v6926 = vand.u32 %v5554, 4294901760
    %6927 = vmatpush1.msra.mxu0 %v6926
    %v6928 = vand.u32 %v5557, 4294901760
    %6929 = vmatprep.subr.mxu0 %v6928
    %v6930 = vand.u32 %v5556, 4294901760
    %6931 = vmatpush1.msra.mxu0 %v6930
    %v6932 = vand.u32 %v5559, 4294901760
    %6933 = vmatprep.subr.mxu0 %v6932
    %v6934 = vand.u32 %v5558, 4294901760
    %6935 = vmatpush1.msra.mxu0 %v6934
    %v6936 = vand.u32 %v5561, 4294901760
    %6937 = vmatprep.subr.mxu0 %v6936
    %v6938 = vand.u32 %v5560, 4294901760
    %6939 = vmatpush1.msra.mxu0 %v6938
    %v6940 = vand.u32 %v5563, 4294901760
    %6941 = vmatprep.subr.mxu0 %v6940
    %v6942 = vand.u32 %v5562, 4294901760
    %6943 = vmatpush1.msra.mxu0 %v6942
    %v6944 = vand.u32 %v5565, 4294901760
    %6945 = vmatprep.subr.mxu0 %v6944
    %v6946 = vand.u32 %v5564, 4294901760
    %6947 = vmatpush1.msra.mxu0 %v6946
    %v6948 = vand.u32 %v5567, 4294901760
    %6949 = vmatprep.subr.mxu0 %v6948
    %v6950 = vand.u32 %v5566, 4294901760
    %6951 = vmatpush1.msra.mxu0 %v6950
    %v6952 = vand.u32 %v5569, 4294901760
    %6953 = vmatprep.subr.mxu0 %v6952
    %v6954 = vand.u32 %v5568, 4294901760
    %6955 = vmatpush1.msra.mxu0 %v6954
    %v6956 = vand.u32 %v5571, 4294901760
    %6957 = vmatprep.subr.mxu0 %v6956
    %v6958 = vand.u32 %v5570, 4294901760
    %6959 = vmatpush1.msra.mxu0 %v6958
    %v6960 = vand.u32 %v5573, 4294901760
    %6961 = vmatprep.subr.mxu0 %v6960
    %v6962 = vand.u32 %v5572, 4294901760
    %6963 = vmatpush1.msra.mxu0 %v6962
    %v6964 = vand.u32 %v5575, 4294901760
    %6965 = vmatprep.subr.mxu0 %v6964
    %v6966 = vand.u32 %v5574, 4294901760
    %6967 = vmatpush1.msra.mxu0 %v6966
    %v6968 = vand.u32 %v5577, 4294901760
    %6969 = vmatprep.subr.mxu0 %v6968
    %v6970 = vand.u32 %v5576, 4294901760
    %6971 = vmatpush1.msra.mxu0 %v6970
    %v6972 = vand.u32 %v5579, 4294901760
    %6973 = vmatprep.subr.mxu0 %v6972
    %v6974 = vand.u32 %v5578, 4294901760
    %6975 = vmatpush1.msra.mxu0 %v6974
    %v6976 = vand.u32 %v5581, 4294901760
    %6977 = vmatprep.subr.mxu0 %v6976
    %v6978 = vand.u32 %v5580, 4294901760
    %6979 = vmatpush1.msra.mxu0 %v6978
    %v6980 = vand.u32 %v5583, 4294901760
    %6981 = vmatprep.subr.mxu0 %v6980
    %v6982 = vand.u32 %v5582, 4294901760
    %6983 = vmatpush1.msra.mxu0 %v6982
    %v6984 = vand.u32 %v5585, 4294901760
    %6985 = vmatprep.subr.mxu0 %v6984
    %v6986 = vand.u32 %v5584, 4294901760
    %6987 = vmatpush1.msra.mxu0 %v6986
    %v6988 = vand.u32 %v5587, 4294901760
    %6989 = vmatprep.subr.mxu0 %v6988
    %v6990 = vand.u32 %v5586, 4294901760
    %6991 = vmatpush1.msra.mxu0 %v6990
    %v6992 = vand.u32 %v5589, 4294901760
    %6993 = vmatprep.subr.mxu0 %v6992
    %v6994 = vand.u32 %v5588, 4294901760
    %6995 = vmatpush1.msra.mxu0 %v6994
    %v6996 = vand.u32 %v5591, 4294901760
    %6997 = vmatprep.subr.mxu0 %v6996
    %v6998 = vand.u32 %v5590, 4294901760
    %6999 = vmatpush1.msra.mxu0 %v6998
    %v7000 = vand.u32 %v5593, 4294901760
    %7001 = vmatprep.subr.mxu0 %v7000
    %v7002 = vand.u32 %v5592, 4294901760
    %7003 = vmatpush1.msra.mxu0 %v7002
    %v7004 = vand.u32 %v5595, 4294901760
    %7005 = vmatprep.subr.mxu0 %v7004
    %v7006 = vand.u32 %v5594, 4294901760
    %7007 = vmatpush1.msra.mxu0 %v7006
    %v7008 = vand.u32 %v5467, 4294901760
    %v7009 = vsub.f32 %v5467, %v7008
    %v7010 = vand.u32 %v7009, 4294901760
    %v7011 = vsub.f32 %v7009, %v7010
    %v7012 = vand.u32 %v7011, 4294901760
    %7013 = vmatprep.mubr.f32.mxu0 %v7012
    %v7014 = vand.u32 %v5466, 4294901760
    %v7015 = vsub.f32 %v5466, %v7014
    %v7016 = vand.u32 %v7015, 4294901760
    %v7017 = vsub.f32 %v7015, %v7016
    %v7018 = vand.u32 %v7017, 4294901760
    %7019 = vmatmul.mubr.f32.gmra.mrb[0].mxu0 %v7018
    %v7020 = vpop.f32.mrb[0].mxu0
    %v7021 = vadd.f32 %v6876, %v7020
    %v7022 = vpop.f32.mrb[0].mxu0
    %v7023 = vadd.f32 %v6878, %v7022
    %7024 = vdwg.mxu0
    %v7025 = vand.u32 %v5533, 4294901760
    %v7026 = vsub.f32 %v5533, %v7025
    %v7027 = vand.u32 %v7026, 4294901760
    %v7028 = vsub.f32 %v7026, %v7027
    %v7029 = vand.u32 %v7028, 4294901760
    %7030 = vmatprep.subr.mxu0 %v7029
    %v7031 = vand.u32 %v5532, 4294901760
    %v7032 = vsub.f32 %v5532, %v7031
    %v7033 = vand.u32 %v7032, 4294901760
    %v7034 = vsub.f32 %v7032, %v7033
    %v7035 = vand.u32 %v7034, 4294901760
    %7036 = vmatpush1.msra.mxu0 %v7035
    %v7037 = vand.u32 %v5535, 4294901760
    %v7038 = vsub.f32 %v5535, %v7037
    %v7039 = vand.u32 %v7038, 4294901760
    %v7040 = vsub.f32 %v7038, %v7039
    %v7041 = vand.u32 %v7040, 4294901760
    %7042 = vmatprep.subr.mxu0 %v7041
    %v7043 = vand.u32 %v5534, 4294901760
    %v7044 = vsub.f32 %v5534, %v7043
    %v7045 = vand.u32 %v7044, 4294901760
    %v7046 = vsub.f32 %v7044, %v7045
    %v7047 = vand.u32 %v7046, 4294901760
    %7048 = vmatpush1.msra.mxu0 %v7047
    %v7049 = vand.u32 %v5537, 4294901760
    %v7050 = vsub.f32 %v5537, %v7049
    %v7051 = vand.u32 %v7050, 4294901760
    %v7052 = vsub.f32 %v7050, %v7051
    %v7053 = vand.u32 %v7052, 4294901760
    %7054 = vmatprep.subr.mxu0 %v7053
    %v7055 = vand.u32 %v5536, 4294901760
    %v7056 = vsub.f32 %v5536, %v7055
    %v7057 = vand.u32 %v7056, 4294901760
    %v7058 = vsub.f32 %v7056, %v7057
    %v7059 = vand.u32 %v7058, 4294901760
    %7060 = vmatpush1.msra.mxu0 %v7059
    %v7061 = vand.u32 %v5539, 4294901760
    %v7062 = vsub.f32 %v5539, %v7061
    %v7063 = vand.u32 %v7062, 4294901760
    %v7064 = vsub.f32 %v7062, %v7063
    %v7065 = vand.u32 %v7064, 4294901760
    %7066 = vmatprep.subr.mxu0 %v7065
    %v7067 = vand.u32 %v5538, 4294901760
    %v7068 = vsub.f32 %v5538, %v7067
    %v7069 = vand.u32 %v7068, 4294901760
    %v7070 = vsub.f32 %v7068, %v7069
    %v7071 = vand.u32 %v7070, 4294901760
    %7072 = vmatpush1.msra.mxu0 %v7071
    %v7073 = vand.u32 %v5541, 4294901760
    %v7074 = vsub.f32 %v5541, %v7073
    %v7075 = vand.u32 %v7074, 4294901760
    %v7076 = vsub.f32 %v7074, %v7075
    %v7077 = vand.u32 %v7076, 4294901760
    %7078 = vmatprep.subr.mxu0 %v7077
    %v7079 = vand.u32 %v5540, 4294901760
    %v7080 = vsub.f32 %v5540, %v7079
    %v7081 = vand.u32 %v7080, 4294901760
    %v7082 = vsub.f32 %v7080, %v7081
    %v7083 = vand.u32 %v7082, 4294901760
    %7084 = vmatpush1.msra.mxu0 %v7083
    %v7085 = vand.u32 %v5543, 4294901760
    %v7086 = vsub.f32 %v5543, %v7085
    %v7087 = vand.u32 %v7086, 4294901760
    %v7088 = vsub.f32 %v7086, %v7087
    %v7089 = vand.u32 %v7088, 4294901760
    %7090 = vmatprep.subr.mxu0 %v7089
    %v7091 = vand.u32 %v5542, 4294901760
    %v7092 = vsub.f32 %v5542, %v7091
    %v7093 = vand.u32 %v7092, 4294901760
    %v7094 = vsub.f32 %v7092, %v7093
    %v7095 = vand.u32 %v7094, 4294901760
    %7096 = vmatpush1.msra.mxu0 %v7095
    %v7097 = vand.u32 %v5545, 4294901760
    %v7098 = vsub.f32 %v5545, %v7097
    %v7099 = vand.u32 %v7098, 4294901760
    %v7100 = vsub.f32 %v7098, %v7099
    %v7101 = vand.u32 %v7100, 4294901760
    %7102 = vmatprep.subr.mxu0 %v7101
    %v7103 = vand.u32 %v5544, 4294901760
    %v7104 = vsub.f32 %v5544, %v7103
    %v7105 = vand.u32 %v7104, 4294901760
    %v7106 = vsub.f32 %v7104, %v7105
    %v7107 = vand.u32 %v7106, 4294901760
    %7108 = vmatpush1.msra.mxu0 %v7107
    %v7109 = vand.u32 %v5547, 4294901760
    %v7110 = vsub.f32 %v5547, %v7109
    %v7111 = vand.u32 %v7110, 4294901760
    %v7112 = vsub.f32 %v7110, %v7111
    %v7113 = vand.u32 %v7112, 4294901760
    %7114 = vmatprep.subr.mxu0 %v7113
    %v7115 = vand.u32 %v5546, 4294901760
    %v7116 = vsub.f32 %v5546, %v7115
    %v7117 = vand.u32 %v7116, 4294901760
    %v7118 = vsub.f32 %v7116, %v7117
    %v7119 = vand.u32 %v7118, 4294901760
    %7120 = vmatpush1.msra.mxu0 %v7119
    %v7121 = vand.u32 %v5549, 4294901760
    %v7122 = vsub.f32 %v5549, %v7121
    %v7123 = vand.u32 %v7122, 4294901760
    %v7124 = vsub.f32 %v7122, %v7123
    %v7125 = vand.u32 %v7124, 4294901760
    %7126 = vmatprep.subr.mxu0 %v7125
    %v7127 = vand.u32 %v5548, 4294901760
    %v7128 = vsub.f32 %v5548, %v7127
    %v7129 = vand.u32 %v7128, 4294901760
    %v7130 = vsub.f32 %v7128, %v7129
    %v7131 = vand.u32 %v7130, 4294901760
    %7132 = vmatpush1.msra.mxu0 %v7131
    %v7133 = vand.u32 %v5551, 4294901760
    %v7134 = vsub.f32 %v5551, %v7133
    %v7135 = vand.u32 %v7134, 4294901760
    %v7136 = vsub.f32 %v7134, %v7135
    %v7137 = vand.u32 %v7136, 4294901760
    %7138 = vmatprep.subr.mxu0 %v7137
    %v7139 = vand.u32 %v5550, 4294901760
    %v7140 = vsub.f32 %v5550, %v7139
    %v7141 = vand.u32 %v7140, 4294901760
    %v7142 = vsub.f32 %v7140, %v7141
    %v7143 = vand.u32 %v7142, 4294901760
    %7144 = vmatpush1.msra.mxu0 %v7143
    %v7145 = vand.u32 %v5553, 4294901760
    %v7146 = vsub.f32 %v5553, %v7145
    %v7147 = vand.u32 %v7146, 4294901760
    %v7148 = vsub.f32 %v7146, %v7147
    %v7149 = vand.u32 %v7148, 4294901760
    %7150 = vmatprep.subr.mxu0 %v7149
    %v7151 = vand.u32 %v5552, 4294901760
    %v7152 = vsub.f32 %v5552, %v7151
    %v7153 = vand.u32 %v7152, 4294901760
    %v7154 = vsub.f32 %v7152, %v7153
    %v7155 = vand.u32 %v7154, 4294901760
    %7156 = vmatpush1.msra.mxu0 %v7155
    %v7157 = vand.u32 %v5555, 4294901760
    %v7158 = vsub.f32 %v5555, %v7157
    %v7159 = vand.u32 %v7158, 4294901760
    %v7160 = vsub.f32 %v7158, %v7159
    %v7161 = vand.u32 %v7160, 4294901760
    %7162 = vmatprep.subr.mxu0 %v7161
    %v7163 = vand.u32 %v5554, 4294901760
    %v7164 = vsub.f32 %v5554, %v7163
    %v7165 = vand.u32 %v7164, 4294901760
    %v7166 = vsub.f32 %v7164, %v7165
    %v7167 = vand.u32 %v7166, 4294901760
    %7168 = vmatpush1.msra.mxu0 %v7167
    %v7169 = vand.u32 %v5557, 4294901760
    %v7170 = vsub.f32 %v5557, %v7169
    %v7171 = vand.u32 %v7170, 4294901760
    %v7172 = vsub.f32 %v7170, %v7171
    %v7173 = vand.u32 %v7172, 4294901760
    %7174 = vmatprep.subr.mxu0 %v7173
    %v7175 = vand.u32 %v5556, 4294901760
    %v7176 = vsub.f32 %v5556, %v7175
    %v7177 = vand.u32 %v7176, 4294901760
    %v7178 = vsub.f32 %v7176, %v7177
    %v7179 = vand.u32 %v7178, 4294901760
    %7180 = vmatpush1.msra.mxu0 %v7179
    %v7181 = vand.u32 %v5559, 4294901760
    %v7182 = vsub.f32 %v5559, %v7181
    %v7183 = vand.u32 %v7182, 4294901760
    %v7184 = vsub.f32 %v7182, %v7183
    %v7185 = vand.u32 %v7184, 4294901760
    %7186 = vmatprep.subr.mxu0 %v7185
    %v7187 = vand.u32 %v5558, 4294901760
    %v7188 = vsub.f32 %v5558, %v7187
    %v7189 = vand.u32 %v7188, 4294901760
    %v7190 = vsub.f32 %v7188, %v7189
    %v7191 = vand.u32 %v7190, 4294901760
    %7192 = vmatpush1.msra.mxu0 %v7191
    %v7193 = vand.u32 %v5561, 4294901760
    %v7194 = vsub.f32 %v5561, %v7193
    %v7195 = vand.u32 %v7194, 4294901760
    %v7196 = vsub.f32 %v7194, %v7195
    %v7197 = vand.u32 %v7196, 4294901760
    %7198 = vmatprep.subr.mxu0 %v7197
    %v7199 = vand.u32 %v5560, 4294901760
    %v7200 = vsub.f32 %v5560, %v7199
    %v7201 = vand.u32 %v7200, 4294901760
    %v7202 = vsub.f32 %v7200, %v7201
    %v7203 = vand.u32 %v7202, 4294901760
    %7204 = vmatpush1.msra.mxu0 %v7203
    %v7205 = vand.u32 %v5563, 4294901760
    %v7206 = vsub.f32 %v5563, %v7205
    %v7207 = vand.u32 %v7206, 4294901760
    %v7208 = vsub.f32 %v7206, %v7207
    %v7209 = vand.u32 %v7208, 4294901760
    %7210 = vmatprep.subr.mxu0 %v7209
    %v7211 = vand.u32 %v5562, 4294901760
    %v7212 = vsub.f32 %v5562, %v7211
    %v7213 = vand.u32 %v7212, 4294901760
    %v7214 = vsub.f32 %v7212, %v7213
    %v7215 = vand.u32 %v7214, 4294901760
    %7216 = vmatpush1.msra.mxu0 %v7215
    %v7217 = vand.u32 %v5565, 4294901760
    %v7218 = vsub.f32 %v5565, %v7217
    %v7219 = vand.u32 %v7218, 4294901760
    %v7220 = vsub.f32 %v7218, %v7219
    %v7221 = vand.u32 %v7220, 4294901760
    %7222 = vmatprep.subr.mxu0 %v7221
    %v7223 = vand.u32 %v5564, 4294901760
    %v7224 = vsub.f32 %v5564, %v7223
    %v7225 = vand.u32 %v7224, 4294901760
    %v7226 = vsub.f32 %v7224, %v7225
    %v7227 = vand.u32 %v7226, 4294901760
    %7228 = vmatpush1.msra.mxu0 %v7227
    %v7229 = vand.u32 %v5567, 4294901760
    %v7230 = vsub.f32 %v5567, %v7229
    %v7231 = vand.u32 %v7230, 4294901760
    %v7232 = vsub.f32 %v7230, %v7231
    %v7233 = vand.u32 %v7232, 4294901760
    %7234 = vmatprep.subr.mxu0 %v7233
    %v7235 = vand.u32 %v5566, 4294901760
    %v7236 = vsub.f32 %v5566, %v7235
    %v7237 = vand.u32 %v7236, 4294901760
    %v7238 = vsub.f32 %v7236, %v7237
    %v7239 = vand.u32 %v7238, 4294901760
    %7240 = vmatpush1.msra.mxu0 %v7239
    %v7241 = vand.u32 %v5569, 4294901760
    %v7242 = vsub.f32 %v5569, %v7241
    %v7243 = vand.u32 %v7242, 4294901760
    %v7244 = vsub.f32 %v7242, %v7243
    %v7245 = vand.u32 %v7244, 4294901760
    %7246 = vmatprep.subr.mxu0 %v7245
    %v7247 = vand.u32 %v5568, 4294901760
    %v7248 = vsub.f32 %v5568, %v7247
    %v7249 = vand.u32 %v7248, 4294901760
    %v7250 = vsub.f32 %v7248, %v7249
    %v7251 = vand.u32 %v7250, 4294901760
    %7252 = vmatpush1.msra.mxu0 %v7251
    %v7253 = vand.u32 %v5571, 4294901760
    %v7254 = vsub.f32 %v5571, %v7253
    %v7255 = vand.u32 %v7254, 4294901760
    %v7256 = vsub.f32 %v7254, %v7255
    %v7257 = vand.u32 %v7256, 4294901760
    %7258 = vmatprep.subr.mxu0 %v7257
    %v7259 = vand.u32 %v5570, 4294901760
    %v7260 = vsub.f32 %v5570, %v7259
    %v7261 = vand.u32 %v7260, 4294901760
    %v7262 = vsub.f32 %v7260, %v7261
    %v7263 = vand.u32 %v7262, 4294901760
    %7264 = vmatpush1.msra.mxu0 %v7263
    %v7265 = vand.u32 %v5573, 4294901760
    %v7266 = vsub.f32 %v5573, %v7265
    %v7267 = vand.u32 %v7266, 4294901760
    %v7268 = vsub.f32 %v7266, %v7267
    %v7269 = vand.u32 %v7268, 4294901760
    %7270 = vmatprep.subr.mxu0 %v7269
    %v7271 = vand.u32 %v5572, 4294901760
    %v7272 = vsub.f32 %v5572, %v7271
    %v7273 = vand.u32 %v7272, 4294901760
    %v7274 = vsub.f32 %v7272, %v7273
    %v7275 = vand.u32 %v7274, 4294901760
    %7276 = vmatpush1.msra.mxu0 %v7275
    %v7277 = vand.u32 %v5575, 4294901760
    %v7278 = vsub.f32 %v5575, %v7277
    %v7279 = vand.u32 %v7278, 4294901760
    %v7280 = vsub.f32 %v7278, %v7279
    %v7281 = vand.u32 %v7280, 4294901760
    %7282 = vmatprep.subr.mxu0 %v7281
    %v7283 = vand.u32 %v5574, 4294901760
    %v7284 = vsub.f32 %v5574, %v7283
    %v7285 = vand.u32 %v7284, 4294901760
    %v7286 = vsub.f32 %v7284, %v7285
    %v7287 = vand.u32 %v7286, 4294901760
    %7288 = vmatpush1.msra.mxu0 %v7287
    %v7289 = vand.u32 %v5577, 4294901760
    %v7290 = vsub.f32 %v5577, %v7289
    %v7291 = vand.u32 %v7290, 4294901760
    %v7292 = vsub.f32 %v7290, %v7291
    %v7293 = vand.u32 %v7292, 4294901760
    %7294 = vmatprep.subr.mxu0 %v7293
    %v7295 = vand.u32 %v5576, 4294901760
    %v7296 = vsub.f32 %v5576, %v7295
    %v7297 = vand.u32 %v7296, 4294901760
    %v7298 = vsub.f32 %v7296, %v7297
    %v7299 = vand.u32 %v7298, 4294901760
    %7300 = vmatpush1.msra.mxu0 %v7299
    %v7301 = vand.u32 %v5579, 4294901760
    %v7302 = vsub.f32 %v5579, %v7301
    %v7303 = vand.u32 %v7302, 4294901760
    %v7304 = vsub.f32 %v7302, %v7303
    %v7305 = vand.u32 %v7304, 4294901760
    %7306 = vmatprep.subr.mxu0 %v7305
    %v7307 = vand.u32 %v5578, 4294901760
    %v7308 = vsub.f32 %v5578, %v7307
    %v7309 = vand.u32 %v7308, 4294901760
    %v7310 = vsub.f32 %v7308, %v7309
    %v7311 = vand.u32 %v7310, 4294901760
    %7312 = vmatpush1.msra.mxu0 %v7311
    %v7313 = vand.u32 %v5581, 4294901760
    %v7314 = vsub.f32 %v5581, %v7313
    %v7315 = vand.u32 %v7314, 4294901760
    %v7316 = vsub.f32 %v7314, %v7315
    %v7317 = vand.u32 %v7316, 4294901760
    %7318 = vmatprep.subr.mxu0 %v7317
    %v7319 = vand.u32 %v5580, 4294901760
    %v7320 = vsub.f32 %v5580, %v7319
    %v7321 = vand.u32 %v7320, 4294901760
    %v7322 = vsub.f32 %v7320, %v7321
    %v7323 = vand.u32 %v7322, 4294901760
    %7324 = vmatpush1.msra.mxu0 %v7323
    %v7325 = vand.u32 %v5583, 4294901760
    %v7326 = vsub.f32 %v5583, %v7325
    %v7327 = vand.u32 %v7326, 4294901760
    %v7328 = vsub.f32 %v7326, %v7327
    %v7329 = vand.u32 %v7328, 4294901760
    %7330 = vmatprep.subr.mxu0 %v7329
    %v7331 = vand.u32 %v5582, 4294901760
    %v7332 = vsub.f32 %v5582, %v7331
    %v7333 = vand.u32 %v7332, 4294901760
    %v7334 = vsub.f32 %v7332, %v7333
    %v7335 = vand.u32 %v7334, 4294901760
    %7336 = vmatpush1.msra.mxu0 %v7335
    %v7337 = vand.u32 %v5585, 4294901760
    %v7338 = vsub.f32 %v5585, %v7337
    %v7339 = vand.u32 %v7338, 4294901760
    %v7340 = vsub.f32 %v7338, %v7339
    %v7341 = vand.u32 %v7340, 4294901760
    %7342 = vmatprep.subr.mxu0 %v7341
    %v7343 = vand.u32 %v5584, 4294901760
    %v7344 = vsub.f32 %v5584, %v7343
    %v7345 = vand.u32 %v7344, 4294901760
    %v7346 = vsub.f32 %v7344, %v7345
    %v7347 = vand.u32 %v7346, 4294901760
    %7348 = vmatpush1.msra.mxu0 %v7347
    %v7349 = vand.u32 %v5587, 4294901760
    %v7350 = vsub.f32 %v5587, %v7349
    %v7351 = vand.u32 %v7350, 4294901760
    %v7352 = vsub.f32 %v7350, %v7351
    %v7353 = vand.u32 %v7352, 4294901760
    %7354 = vmatprep.subr.mxu0 %v7353
    %v7355 = vand.u32 %v5586, 4294901760
    %v7356 = vsub.f32 %v5586, %v7355
    %v7357 = vand.u32 %v7356, 4294901760
    %v7358 = vsub.f32 %v7356, %v7357
    %v7359 = vand.u32 %v7358, 4294901760
    %7360 = vmatpush1.msra.mxu0 %v7359
    %v7361 = vand.u32 %v5589, 4294901760
    %v7362 = vsub.f32 %v5589, %v7361
    %v7363 = vand.u32 %v7362, 4294901760
    %v7364 = vsub.f32 %v7362, %v7363
    %v7365 = vand.u32 %v7364, 4294901760
    %7366 = vmatprep.subr.mxu0 %v7365
    %v7367 = vand.u32 %v5588, 4294901760
    %v7368 = vsub.f32 %v5588, %v7367
    %v7369 = vand.u32 %v7368, 4294901760
    %v7370 = vsub.f32 %v7368, %v7369
    %v7371 = vand.u32 %v7370, 4294901760
    %7372 = vmatpush1.msra.mxu0 %v7371
    %v7373 = vand.u32 %v5591, 4294901760
    %v7374 = vsub.f32 %v5591, %v7373
    %v7375 = vand.u32 %v7374, 4294901760
    %v7376 = vsub.f32 %v7374, %v7375
    %v7377 = vand.u32 %v7376, 4294901760
    %7378 = vmatprep.subr.mxu0 %v7377
    %v7379 = vand.u32 %v5590, 4294901760
    %v7380 = vsub.f32 %v5590, %v7379
    %v7381 = vand.u32 %v7380, 4294901760
    %v7382 = vsub.f32 %v7380, %v7381
    %v7383 = vand.u32 %v7382, 4294901760
    %7384 = vmatpush1.msra.mxu0 %v7383
    %v7385 = vand.u32 %v5593, 4294901760
    %v7386 = vsub.f32 %v5593, %v7385
    %v7387 = vand.u32 %v7386, 4294901760
    %v7388 = vsub.f32 %v7386, %v7387
    %v7389 = vand.u32 %v7388, 4294901760
    %7390 = vmatprep.subr.mxu0 %v7389
    %v7391 = vand.u32 %v5592, 4294901760
    %v7392 = vsub.f32 %v5592, %v7391
    %v7393 = vand.u32 %v7392, 4294901760
    %v7394 = vsub.f32 %v7392, %v7393
    %v7395 = vand.u32 %v7394, 4294901760
    %7396 = vmatpush1.msra.mxu0 %v7395
    %v7397 = vand.u32 %v5595, 4294901760
    %v7398 = vsub.f32 %v5595, %v7397
    %v7399 = vand.u32 %v7398, 4294901760
    %v7400 = vsub.f32 %v7398, %v7399
    %v7401 = vand.u32 %v7400, 4294901760
    %7402 = vmatprep.subr.mxu0 %v7401
    %v7403 = vand.u32 %v5594, 4294901760
    %v7404 = vsub.f32 %v5594, %v7403
    %v7405 = vand.u32 %v7404, 4294901760
    %v7406 = vsub.f32 %v7404, %v7405
    %v7407 = vand.u32 %v7406, 4294901760
    %7408 = vmatpush1.msra.mxu0 %v7407
    %v7409 = vand.u32 %v5467, 4294901760
    %7410 = vmatprep.mubr.f32.mxu0 %v7409
    %v7411 = vand.u32 %v5466, 4294901760
    %7412 = vmatmul.mubr.f32.gmra.mrb[0].mxu0 %v7411
    %v7413 = vpop.f32.mrb[0].mxu0
    %v7414 = vadd.f32 %v7021, %v7413
    %v7415 = vpop.f32.mrb[0].mxu0
    %v7416 = vadd.f32 %v7023, %v7415
    %7417 = vdwg.mxu0
    %v7418 = vand.u32 %v5533, 4294901760
    %v7419 = vsub.f32 %v5533, %v7418
    %7420 = vmatprep.subr.mxu0 %v7419
    %v7421 = vand.u32 %v5532, 4294901760
    %v7422 = vsub.f32 %v5532, %v7421
    %7423 = vmatpush1.msra.mxu0 %v7422
    %v7424 = vand.u32 %v5535, 4294901760
    %v7425 = vsub.f32 %v5535, %v7424
    %7426 = vmatprep.subr.mxu0 %v7425
    %v7427 = vand.u32 %v5534, 4294901760
    %v7428 = vsub.f32 %v5534, %v7427
    %7429 = vmatpush1.msra.mxu0 %v7428
    %v7430 = vand.u32 %v5537, 4294901760
    %v7431 = vsub.f32 %v5537, %v7430
    %7432 = vmatprep.subr.mxu0 %v7431
    %v7433 = vand.u32 %v5536, 4294901760
    %v7434 = vsub.f32 %v5536, %v7433
    %7435 = vmatpush1.msra.mxu0 %v7434
    %v7436 = vand.u32 %v5539, 4294901760
    %v7437 = vsub.f32 %v5539, %v7436
    %7438 = vmatprep.subr.mxu0 %v7437
    %v7439 = vand.u32 %v5538, 4294901760
    %v7440 = vsub.f32 %v5538, %v7439
    %7441 = vmatpush1.msra.mxu0 %v7440
    %v7442 = vand.u32 %v5541, 4294901760
    %v7443 = vsub.f32 %v5541, %v7442
    %7444 = vmatprep.subr.mxu0 %v7443
    %v7445 = vand.u32 %v5540, 4294901760
    %v7446 = vsub.f32 %v5540, %v7445
    %7447 = vmatpush1.msra.mxu0 %v7446
    %v7448 = vand.u32 %v5543, 4294901760
    %v7449 = vsub.f32 %v5543, %v7448
    %7450 = vmatprep.subr.mxu0 %v7449
    %v7451 = vand.u32 %v5542, 4294901760
    %v7452 = vsub.f32 %v5542, %v7451
    %7453 = vmatpush1.msra.mxu0 %v7452
    %v7454 = vand.u32 %v5545, 4294901760
    %v7455 = vsub.f32 %v5545, %v7454
    %7456 = vmatprep.subr.mxu0 %v7455
    %v7457 = vand.u32 %v5544, 4294901760
    %v7458 = vsub.f32 %v5544, %v7457
    %7459 = vmatpush1.msra.mxu0 %v7458
    %v7460 = vand.u32 %v5547, 4294901760
    %v7461 = vsub.f32 %v5547, %v7460
    %7462 = vmatprep.subr.mxu0 %v7461
    %v7463 = vand.u32 %v5546, 4294901760
    %v7464 = vsub.f32 %v5546, %v7463
    %7465 = vmatpush1.msra.mxu0 %v7464
    %v7466 = vand.u32 %v5549, 4294901760
    %v7467 = vsub.f32 %v5549, %v7466
    %7468 = vmatprep.subr.mxu0 %v7467
    %v7469 = vand.u32 %v5548, 4294901760
    %v7470 = vsub.f32 %v5548, %v7469
    %7471 = vmatpush1.msra.mxu0 %v7470
    %v7472 = vand.u32 %v5551, 4294901760
    %v7473 = vsub.f32 %v5551, %v7472
    %7474 = vmatprep.subr.mxu0 %v7473
    %v7475 = vand.u32 %v5550, 4294901760
    %v7476 = vsub.f32 %v5550, %v7475
    %7477 = vmatpush1.msra.mxu0 %v7476
    %v7478 = vand.u32 %v5553, 4294901760
    %v7479 = vsub.f32 %v5553, %v7478
    %7480 = vmatprep.subr.mxu0 %v7479
    %v7481 = vand.u32 %v5552, 4294901760
    %v7482 = vsub.f32 %v5552, %v7481
    %7483 = vmatpush1.msra.mxu0 %v7482
    %v7484 = vand.u32 %v5555, 4294901760
    %v7485 = vsub.f32 %v5555, %v7484
    %7486 = vmatprep.subr.mxu0 %v7485
    %v7487 = vand.u32 %v5554, 4294901760
    %v7488 = vsub.f32 %v5554, %v7487
    %7489 = vmatpush1.msra.mxu0 %v7488
    %v7490 = vand.u32 %v5557, 4294901760
    %v7491 = vsub.f32 %v5557, %v7490
    %7492 = vmatprep.subr.mxu0 %v7491
    %v7493 = vand.u32 %v5556, 4294901760
    %v7494 = vsub.f32 %v5556, %v7493
    %7495 = vmatpush1.msra.mxu0 %v7494
    %v7496 = vand.u32 %v5559, 4294901760
    %v7497 = vsub.f32 %v5559, %v7496
    %7498 = vmatprep.subr.mxu0 %v7497
    %v7499 = vand.u32 %v5558, 4294901760
    %v7500 = vsub.f32 %v5558, %v7499
    %7501 = vmatpush1.msra.mxu0 %v7500
    %v7502 = vand.u32 %v5561, 4294901760
    %v7503 = vsub.f32 %v5561, %v7502
    %7504 = vmatprep.subr.mxu0 %v7503
    %v7505 = vand.u32 %v5560, 4294901760
    %v7506 = vsub.f32 %v5560, %v7505
    %7507 = vmatpush1.msra.mxu0 %v7506
    %v7508 = vand.u32 %v5563, 4294901760
    %v7509 = vsub.f32 %v5563, %v7508
    %7510 = vmatprep.subr.mxu0 %v7509
    %v7511 = vand.u32 %v5562, 4294901760
    %v7512 = vsub.f32 %v5562, %v7511
    %7513 = vmatpush1.msra.mxu0 %v7512
    %v7514 = vand.u32 %v5565, 4294901760
    %v7515 = vsub.f32 %v5565, %v7514
    %7516 = vmatprep.subr.mxu0 %v7515
    %v7517 = vand.u32 %v5564, 4294901760
    %v7518 = vsub.f32 %v5564, %v7517
    %7519 = vmatpush1.msra.mxu0 %v7518
    %v7520 = vand.u32 %v5567, 4294901760
    %v7521 = vsub.f32 %v5567, %v7520
    %7522 = vmatprep.subr.mxu0 %v7521
    %v7523 = vand.u32 %v5566, 4294901760
    %v7524 = vsub.f32 %v5566, %v7523
    %7525 = vmatpush1.msra.mxu0 %v7524
    %v7526 = vand.u32 %v5569, 4294901760
    %v7527 = vsub.f32 %v5569, %v7526
    %7528 = vmatprep.subr.mxu0 %v7527
    %v7529 = vand.u32 %v5568, 4294901760
    %v7530 = vsub.f32 %v5568, %v7529
    %7531 = vmatpush1.msra.mxu0 %v7530
    %v7532 = vand.u32 %v5571, 4294901760
    %v7533 = vsub.f32 %v5571, %v7532
    %7534 = vmatprep.subr.mxu0 %v7533
    %v7535 = vand.u32 %v5570, 4294901760
    %v7536 = vsub.f32 %v5570, %v7535
    %7537 = vmatpush1.msra.mxu0 %v7536
    %v7538 = vand.u32 %v5573, 4294901760
    %v7539 = vsub.f32 %v5573, %v7538
    %7540 = vmatprep.subr.mxu0 %v7539
    %v7541 = vand.u32 %v5572, 4294901760
    %v7542 = vsub.f32 %v5572, %v7541
    %7543 = vmatpush1.msra.mxu0 %v7542
    %v7544 = vand.u32 %v5575, 4294901760
    %v7545 = vsub.f32 %v5575, %v7544
    %7546 = vmatprep.subr.mxu0 %v7545
    %v7547 = vand.u32 %v5574, 4294901760
    %v7548 = vsub.f32 %v5574, %v7547
    %7549 = vmatpush1.msra.mxu0 %v7548
    %v7550 = vand.u32 %v5577, 4294901760
    %v7551 = vsub.f32 %v5577, %v7550
    %7552 = vmatprep.subr.mxu0 %v7551
    %v7553 = vand.u32 %v5576, 4294901760
    %v7554 = vsub.f32 %v5576, %v7553
    %7555 = vmatpush1.msra.mxu0 %v7554
    %v7556 = vand.u32 %v5579, 4294901760
    %v7557 = vsub.f32 %v5579, %v7556
    %7558 = vmatprep.subr.mxu0 %v7557
    %v7559 = vand.u32 %v5578, 4294901760
    %v7560 = vsub.f32 %v5578, %v7559
    %7561 = vmatpush1.msra.mxu0 %v7560
    %v7562 = vand.u32 %v5581, 4294901760
    %v7563 = vsub.f32 %v5581, %v7562
    %7564 = vmatprep.subr.mxu0 %v7563
    %v7565 = vand.u32 %v5580, 4294901760
    %v7566 = vsub.f32 %v5580, %v7565
    %7567 = vmatpush1.msra.mxu0 %v7566
    %v7568 = vand.u32 %v5583, 4294901760
    %v7569 = vsub.f32 %v5583, %v7568
    %7570 = vmatprep.subr.mxu0 %v7569
    %v7571 = vand.u32 %v5582, 4294901760
    %v7572 = vsub.f32 %v5582, %v7571
    %7573 = vmatpush1.msra.mxu0 %v7572
    %v7574 = vand.u32 %v5585, 4294901760
    %v7575 = vsub.f32 %v5585, %v7574
    %7576 = vmatprep.subr.mxu0 %v7575
    %v7577 = vand.u32 %v5584, 4294901760
    %v7578 = vsub.f32 %v5584, %v7577
    %7579 = vmatpush1.msra.mxu0 %v7578
    %v7580 = vand.u32 %v5587, 4294901760
    %v7581 = vsub.f32 %v5587, %v7580
    %7582 = vmatprep.subr.mxu0 %v7581
    %v7583 = vand.u32 %v5586, 4294901760
    %v7584 = vsub.f32 %v5586, %v7583
    %7585 = vmatpush1.msra.mxu0 %v7584
    %v7586 = vand.u32 %v5589, 4294901760
    %v7587 = vsub.f32 %v5589, %v7586
    %7588 = vmatprep.subr.mxu0 %v7587
    %v7589 = vand.u32 %v5588, 4294901760
    %v7590 = vsub.f32 %v5588, %v7589
    %7591 = vmatpush1.msra.mxu0 %v7590
    %v7592 = vand.u32 %v5591, 4294901760
    %v7593 = vsub.f32 %v5591, %v7592
    %7594 = vmatprep.subr.mxu0 %v7593
    %v7595 = vand.u32 %v5590, 4294901760
    %v7596 = vsub.f32 %v5590, %v7595
    %7597 = vmatpush1.msra.mxu0 %v7596
    %v7598 = vand.u32 %v5593, 4294901760
    %v7599 = vsub.f32 %v5593, %v7598
    %7600 = vmatprep.subr.mxu0 %v7599
    %v7601 = vand.u32 %v5592, 4294901760
    %v7602 = vsub.f32 %v5592, %v7601
    %7603 = vmatpush1.msra.mxu0 %v7602
    %v7604 = vand.u32 %v5595, 4294901760
    %v7605 = vsub.f32 %v5595, %v7604
    %7606 = vmatprep.subr.mxu0 %v7605
    %v7607 = vand.u32 %v5594, 4294901760
    %v7608 = vsub.f32 %v5594, %v7607
    %7609 = vmatpush1.msra.mxu0 %v7608
    %v7610 = vand.u32 %v5467, 4294901760
    %v7611 = vsub.f32 %v5467, %v7610
    %7612 = vmatprep.mubr.f32.mxu0 %v7611
    %v7613 = vand.u32 %v5466, 4294901760
    %v7614 = vsub.f32 %v5466, %v7613
    %7615 = vmatmul.mubr.f32.gmra.mrb[0].mxu0 %v7614
    %v7616 = vpop.f32.mrb[0].mxu0
    %v7617 = vadd.f32 %v7414, %v7616
    %v7618 = vpop.f32.mrb[0].mxu0
    %v7619 = vadd.f32 %v7416, %v7618
    %7620 = vdwg.mxu0
    %v7621 = vand.u32 %v5533, 4294901760
    %7622 = vmatprep.subr.mxu0 %v7621
    %v7623 = vand.u32 %v5532, 4294901760
    %7624 = vmatpush1.msra.mxu0 %v7623
    %v7625 = vand.u32 %v5535, 4294901760
    %7626 = vmatprep.subr.mxu0 %v7625
    %v7627 = vand.u32 %v5534, 4294901760
    %7628 = vmatpush1.msra.mxu0 %v7627
    %v7629 = vand.u32 %v5537, 4294901760
    %7630 = vmatprep.subr.mxu0 %v7629
    %v7631 = vand.u32 %v5536, 4294901760
    %7632 = vmatpush1.msra.mxu0 %v7631
    %v7633 = vand.u32 %v5539, 4294901760
    %7634 = vmatprep.subr.mxu0 %v7633
    %v7635 = vand.u32 %v5538, 4294901760
    %7636 = vmatpush1.msra.mxu0 %v7635
    %v7637 = vand.u32 %v5541, 4294901760
    %7638 = vmatprep.subr.mxu0 %v7637
    %v7639 = vand.u32 %v5540, 4294901760
    %7640 = vmatpush1.msra.mxu0 %v7639
    %v7641 = vand.u32 %v5543, 4294901760
    %7642 = vmatprep.subr.mxu0 %v7641
    %v7643 = vand.u32 %v5542, 4294901760
    %7644 = vmatpush1.msra.mxu0 %v7643
    %v7645 = vand.u32 %v5545, 4294901760
    %7646 = vmatprep.subr.mxu0 %v7645
    %v7647 = vand.u32 %v5544, 4294901760
    %7648 = vmatpush1.msra.mxu0 %v7647
    %v7649 = vand.u32 %v5547, 4294901760
    %7650 = vmatprep.subr.mxu0 %v7649
    %v7651 = vand.u32 %v5546, 4294901760
    %7652 = vmatpush1.msra.mxu0 %v7651
    %v7653 = vand.u32 %v5549, 4294901760
    %7654 = vmatprep.subr.mxu0 %v7653
    %v7655 = vand.u32 %v5548, 4294901760
    %7656 = vmatpush1.msra.mxu0 %v7655
    %v7657 = vand.u32 %v5551, 4294901760
    %7658 = vmatprep.subr.mxu0 %v7657
    %v7659 = vand.u32 %v5550, 4294901760
    %7660 = vmatpush1.msra.mxu0 %v7659
    %v7661 = vand.u32 %v5553, 4294901760
    %7662 = vmatprep.subr.mxu0 %v7661
    %v7663 = vand.u32 %v5552, 4294901760
    %7664 = vmatpush1.msra.mxu0 %v7663
    %v7665 = vand.u32 %v5555, 4294901760
    %7666 = vmatprep.subr.mxu0 %v7665
    %v7667 = vand.u32 %v5554, 4294901760
    %7668 = vmatpush1.msra.mxu0 %v7667
    %v7669 = vand.u32 %v5557, 4294901760
    %7670 = vmatprep.subr.mxu0 %v7669
    %v7671 = vand.u32 %v5556, 4294901760
    %7672 = vmatpush1.msra.mxu0 %v7671
    %v7673 = vand.u32 %v5559, 4294901760
    %7674 = vmatprep.subr.mxu0 %v7673
    %v7675 = vand.u32 %v5558, 4294901760
    %7676 = vmatpush1.msra.mxu0 %v7675
    %v7677 = vand.u32 %v5561, 4294901760
    %7678 = vmatprep.subr.mxu0 %v7677
    %v7679 = vand.u32 %v5560, 4294901760
    %7680 = vmatpush1.msra.mxu0 %v7679
    %v7681 = vand.u32 %v5563, 4294901760
    %7682 = vmatprep.subr.mxu0 %v7681
    %v7683 = vand.u32 %v5562, 4294901760
    %7684 = vmatpush1.msra.mxu0 %v7683
    %v7685 = vand.u32 %v5565, 4294901760
    %7686 = vmatprep.subr.mxu0 %v7685
    %v7687 = vand.u32 %v5564, 4294901760
    %7688 = vmatpush1.msra.mxu0 %v7687
    %v7689 = vand.u32 %v5567, 4294901760
    %7690 = vmatprep.subr.mxu0 %v7689
    %v7691 = vand.u32 %v5566, 4294901760
    %7692 = vmatpush1.msra.mxu0 %v7691
    %v7693 = vand.u32 %v5569, 4294901760
    %7694 = vmatprep.subr.mxu0 %v7693
    %v7695 = vand.u32 %v5568, 4294901760
    %7696 = vmatpush1.msra.mxu0 %v7695
    %v7697 = vand.u32 %v5571, 4294901760
    %7698 = vmatprep.subr.mxu0 %v7697
    %v7699 = vand.u32 %v5570, 4294901760
    %7700 = vmatpush1.msra.mxu0 %v7699
    %v7701 = vand.u32 %v5573, 4294901760
    %7702 = vmatprep.subr.mxu0 %v7701
    %v7703 = vand.u32 %v5572, 4294901760
    %7704 = vmatpush1.msra.mxu0 %v7703
    %v7705 = vand.u32 %v5575, 4294901760
    %7706 = vmatprep.subr.mxu0 %v7705
    %v7707 = vand.u32 %v5574, 4294901760
    %7708 = vmatpush1.msra.mxu0 %v7707
    %v7709 = vand.u32 %v5577, 4294901760
    %7710 = vmatprep.subr.mxu0 %v7709
    %v7711 = vand.u32 %v5576, 4294901760
    %7712 = vmatpush1.msra.mxu0 %v7711
    %v7713 = vand.u32 %v5579, 4294901760
    %7714 = vmatprep.subr.mxu0 %v7713
    %v7715 = vand.u32 %v5578, 4294901760
    %7716 = vmatpush1.msra.mxu0 %v7715
    %v7717 = vand.u32 %v5581, 4294901760
    %7718 = vmatprep.subr.mxu0 %v7717
    %v7719 = vand.u32 %v5580, 4294901760
    %7720 = vmatpush1.msra.mxu0 %v7719
    %v7721 = vand.u32 %v5583, 4294901760
    %7722 = vmatprep.subr.mxu0 %v7721
    %v7723 = vand.u32 %v5582, 4294901760
    %7724 = vmatpush1.msra.mxu0 %v7723
    %v7725 = vand.u32 %v5585, 4294901760
    %7726 = vmatprep.subr.mxu0 %v7725
    %v7727 = vand.u32 %v5584, 4294901760
    %7728 = vmatpush1.msra.mxu0 %v7727
    %v7729 = vand.u32 %v5587, 4294901760
    %7730 = vmatprep.subr.mxu0 %v7729
    %v7731 = vand.u32 %v5586, 4294901760
    %7732 = vmatpush1.msra.mxu0 %v7731
    %v7733 = vand.u32 %v5589, 4294901760
    %7734 = vmatprep.subr.mxu0 %v7733
    %v7735 = vand.u32 %v5588, 4294901760
    %7736 = vmatpush1.msra.mxu0 %v7735
    %v7737 = vand.u32 %v5591, 4294901760
    %7738 = vmatprep.subr.mxu0 %v7737
    %v7739 = vand.u32 %v5590, 4294901760
    %7740 = vmatpush1.msra.mxu0 %v7739
    %v7741 = vand.u32 %v5593, 4294901760
    %7742 = vmatprep.subr.mxu0 %v7741
    %v7743 = vand.u32 %v5592, 4294901760
    %7744 = vmatpush1.msra.mxu0 %v7743
    %v7745 = vand.u32 %v5595, 4294901760
    %7746 = vmatprep.subr.mxu0 %v7745
    %v7747 = vand.u32 %v5594, 4294901760
    %7748 = vmatpush1.msra.mxu0 %v7747
    %v7749 = vand.u32 %v5467, 4294901760
    %v7750 = vsub.f32 %v5467, %v7749
    %v7751 = vand.u32 %v7750, 4294901760
    %7752 = vmatprep.mubr.f32.mxu0 %v7751
    %v7753 = vand.u32 %v5466, 4294901760
    %v7754 = vsub.f32 %v5466, %v7753
    %v7755 = vand.u32 %v7754, 4294901760
    %7756 = vmatmul.mubr.f32.gmra.mrb[0].mxu0 %v7755
    %v7757 = vpop.f32.mrb[0].mxu0
    %v7758 = vadd.f32 %v7617, %v7757
    %v7759 = vpop.f32.mrb[0].mxu0
    %v7760 = vadd.f32 %v7619, %v7759
    %7761 = vdwg.mxu0
    %v7762 = vand.u32 %v5533, 4294901760
    %v7763 = vsub.f32 %v5533, %v7762
    %v7764 = vand.u32 %v7763, 4294901760
    %7765 = vmatprep.subr.mxu0 %v7764
    %v7766 = vand.u32 %v5532, 4294901760
    %v7767 = vsub.f32 %v5532, %v7766
    %v7768 = vand.u32 %v7767, 4294901760
    %7769 = vmatpush1.msra.mxu0 %v7768
    %v7770 = vand.u32 %v5535, 4294901760
    %v7771 = vsub.f32 %v5535, %v7770
    %v7772 = vand.u32 %v7771, 4294901760
    %7773 = vmatprep.subr.mxu0 %v7772
    %v7774 = vand.u32 %v5534, 4294901760
    %v7775 = vsub.f32 %v5534, %v7774
    %v7776 = vand.u32 %v7775, 4294901760
    %7777 = vmatpush1.msra.mxu0 %v7776
    %v7778 = vand.u32 %v5537, 4294901760
    %v7779 = vsub.f32 %v5537, %v7778
    %v7780 = vand.u32 %v7779, 4294901760
    %7781 = vmatprep.subr.mxu0 %v7780
    %v7782 = vand.u32 %v5536, 4294901760
    %v7783 = vsub.f32 %v5536, %v7782
    %v7784 = vand.u32 %v7783, 4294901760
    %7785 = vmatpush1.msra.mxu0 %v7784
    %v7786 = vand.u32 %v5539, 4294901760
    %v7787 = vsub.f32 %v5539, %v7786
    %v7788 = vand.u32 %v7787, 4294901760
    %7789 = vmatprep.subr.mxu0 %v7788
    %v7790 = vand.u32 %v5538, 4294901760
    %v7791 = vsub.f32 %v5538, %v7790
    %v7792 = vand.u32 %v7791, 4294901760
    %7793 = vmatpush1.msra.mxu0 %v7792
    %v7794 = vand.u32 %v5541, 4294901760
    %v7795 = vsub.f32 %v5541, %v7794
    %v7796 = vand.u32 %v7795, 4294901760
    %7797 = vmatprep.subr.mxu0 %v7796
    %v7798 = vand.u32 %v5540, 4294901760
    %v7799 = vsub.f32 %v5540, %v7798
    %v7800 = vand.u32 %v7799, 4294901760
    %7801 = vmatpush1.msra.mxu0 %v7800
    %v7802 = vand.u32 %v5543, 4294901760
    %v7803 = vsub.f32 %v5543, %v7802
    %v7804 = vand.u32 %v7803, 4294901760
    %7805 = vmatprep.subr.mxu0 %v7804
    %v7806 = vand.u32 %v5542, 4294901760
    %v7807 = vsub.f32 %v5542, %v7806
    %v7808 = vand.u32 %v7807, 4294901760
    %7809 = vmatpush1.msra.mxu0 %v7808
    %v7810 = vand.u32 %v5545, 4294901760
    %v7811 = vsub.f32 %v5545, %v7810
    %v7812 = vand.u32 %v7811, 4294901760
    %7813 = vmatprep.subr.mxu0 %v7812
    %v7814 = vand.u32 %v5544, 4294901760
    %v7815 = vsub.f32 %v5544, %v7814
    %v7816 = vand.u32 %v7815, 4294901760
    %7817 = vmatpush1.msra.mxu0 %v7816
    %v7818 = vand.u32 %v5547, 4294901760
    %v7819 = vsub.f32 %v5547, %v7818
    %v7820 = vand.u32 %v7819, 4294901760
    %7821 = vmatprep.subr.mxu0 %v7820
    %v7822 = vand.u32 %v5546, 4294901760
    %v7823 = vsub.f32 %v5546, %v7822
    %v7824 = vand.u32 %v7823, 4294901760
    %7825 = vmatpush1.msra.mxu0 %v7824
    %v7826 = vand.u32 %v5549, 4294901760
    %v7827 = vsub.f32 %v5549, %v7826
    %v7828 = vand.u32 %v7827, 4294901760
    %7829 = vmatprep.subr.mxu0 %v7828
    %v7830 = vand.u32 %v5548, 4294901760
    %v7831 = vsub.f32 %v5548, %v7830
    %v7832 = vand.u32 %v7831, 4294901760
    %7833 = vmatpush1.msra.mxu0 %v7832
    %v7834 = vand.u32 %v5551, 4294901760
    %v7835 = vsub.f32 %v5551, %v7834
    %v7836 = vand.u32 %v7835, 4294901760
    %7837 = vmatprep.subr.mxu0 %v7836
    %v7838 = vand.u32 %v5550, 4294901760
    %v7839 = vsub.f32 %v5550, %v7838
    %v7840 = vand.u32 %v7839, 4294901760
    %7841 = vmatpush1.msra.mxu0 %v7840
    %v7842 = vand.u32 %v5553, 4294901760
    %v7843 = vsub.f32 %v5553, %v7842
    %v7844 = vand.u32 %v7843, 4294901760
    %7845 = vmatprep.subr.mxu0 %v7844
    %v7846 = vand.u32 %v5552, 4294901760
    %v7847 = vsub.f32 %v5552, %v7846
    %v7848 = vand.u32 %v7847, 4294901760
    %7849 = vmatpush1.msra.mxu0 %v7848
    %v7850 = vand.u32 %v5555, 4294901760
    %v7851 = vsub.f32 %v5555, %v7850
    %v7852 = vand.u32 %v7851, 4294901760
    %7853 = vmatprep.subr.mxu0 %v7852
    %v7854 = vand.u32 %v5554, 4294901760
    %v7855 = vsub.f32 %v5554, %v7854
    %v7856 = vand.u32 %v7855, 4294901760
    %7857 = vmatpush1.msra.mxu0 %v7856
    %v7858 = vand.u32 %v5557, 4294901760
    %v7859 = vsub.f32 %v5557, %v7858
    %v7860 = vand.u32 %v7859, 4294901760
    %7861 = vmatprep.subr.mxu0 %v7860
    %v7862 = vand.u32 %v5556, 4294901760
    %v7863 = vsub.f32 %v5556, %v7862
    %v7864 = vand.u32 %v7863, 4294901760
    %7865 = vmatpush1.msra.mxu0 %v7864
    %v7866 = vand.u32 %v5559, 4294901760
    %v7867 = vsub.f32 %v5559, %v7866
    %v7868 = vand.u32 %v7867, 4294901760
    %7869 = vmatprep.subr.mxu0 %v7868
    %v7870 = vand.u32 %v5558, 4294901760
    %v7871 = vsub.f32 %v5558, %v7870
    %v7872 = vand.u32 %v7871, 4294901760
    %7873 = vmatpush1.msra.mxu0 %v7872
    %v7874 = vand.u32 %v5561, 4294901760
    %v7875 = vsub.f32 %v5561, %v7874
    %v7876 = vand.u32 %v7875, 4294901760
    %7877 = vmatprep.subr.mxu0 %v7876
    %v7878 = vand.u32 %v5560, 4294901760
    %v7879 = vsub.f32 %v5560, %v7878
    %v7880 = vand.u32 %v7879, 4294901760
    %7881 = vmatpush1.msra.mxu0 %v7880
    %v7882 = vand.u32 %v5563, 4294901760
    %v7883 = vsub.f32 %v5563, %v7882
    %v7884 = vand.u32 %v7883, 4294901760
    %7885 = vmatprep.subr.mxu0 %v7884
    %v7886 = vand.u32 %v5562, 4294901760
    %v7887 = vsub.f32 %v5562, %v7886
    %v7888 = vand.u32 %v7887, 4294901760
    %7889 = vmatpush1.msra.mxu0 %v7888
    %v7890 = vand.u32 %v5565, 4294901760
    %v7891 = vsub.f32 %v5565, %v7890
    %v7892 = vand.u32 %v7891, 4294901760
    %7893 = vmatprep.subr.mxu0 %v7892
    %v7894 = vand.u32 %v5564, 4294901760
    %v7895 = vsub.f32 %v5564, %v7894
    %v7896 = vand.u32 %v7895, 4294901760
    %7897 = vmatpush1.msra.mxu0 %v7896
    %v7898 = vand.u32 %v5567, 4294901760
    %v7899 = vsub.f32 %v5567, %v7898
    %v7900 = vand.u32 %v7899, 4294901760
    %7901 = vmatprep.subr.mxu0 %v7900
    %v7902 = vand.u32 %v5566, 4294901760
    %v7903 = vsub.f32 %v5566, %v7902
    %v7904 = vand.u32 %v7903, 4294901760
    %7905 = vmatpush1.msra.mxu0 %v7904
    %v7906 = vand.u32 %v5569, 4294901760
    %v7907 = vsub.f32 %v5569, %v7906
    %v7908 = vand.u32 %v7907, 4294901760
    %7909 = vmatprep.subr.mxu0 %v7908
    %v7910 = vand.u32 %v5568, 4294901760
    %v7911 = vsub.f32 %v5568, %v7910
    %v7912 = vand.u32 %v7911, 4294901760
    %7913 = vmatpush1.msra.mxu0 %v7912
    %v7914 = vand.u32 %v5571, 4294901760
    %v7915 = vsub.f32 %v5571, %v7914
    %v7916 = vand.u32 %v7915, 4294901760
    %7917 = vmatprep.subr.mxu0 %v7916
    %v7918 = vand.u32 %v5570, 4294901760
    %v7919 = vsub.f32 %v5570, %v7918
    %v7920 = vand.u32 %v7919, 4294901760
    %7921 = vmatpush1.msra.mxu0 %v7920
    %v7922 = vand.u32 %v5573, 4294901760
    %v7923 = vsub.f32 %v5573, %v7922
    %v7924 = vand.u32 %v7923, 4294901760
    %7925 = vmatprep.subr.mxu0 %v7924
    %v7926 = vand.u32 %v5572, 4294901760
    %v7927 = vsub.f32 %v5572, %v7926
    %v7928 = vand.u32 %v7927, 4294901760
    %7929 = vmatpush1.msra.mxu0 %v7928
    %v7930 = vand.u32 %v5575, 4294901760
    %v7931 = vsub.f32 %v5575, %v7930
    %v7932 = vand.u32 %v7931, 4294901760
    %7933 = vmatprep.subr.mxu0 %v7932
    %v7934 = vand.u32 %v5574, 4294901760
    %v7935 = vsub.f32 %v5574, %v7934
    %v7936 = vand.u32 %v7935, 4294901760
    %7937 = vmatpush1.msra.mxu0 %v7936
    %v7938 = vand.u32 %v5577, 4294901760
    %v7939 = vsub.f32 %v5577, %v7938
    %v7940 = vand.u32 %v7939, 4294901760
    %7941 = vmatprep.subr.mxu0 %v7940
    %v7942 = vand.u32 %v5576, 4294901760
    %v7943 = vsub.f32 %v5576, %v7942
    %v7944 = vand.u32 %v7943, 4294901760
    %7945 = vmatpush1.msra.mxu0 %v7944
    %v7946 = vand.u32 %v5579, 4294901760
    %v7947 = vsub.f32 %v5579, %v7946
    %v7948 = vand.u32 %v7947, 4294901760
    %7949 = vmatprep.subr.mxu0 %v7948
    %v7950 = vand.u32 %v5578, 4294901760
    %v7951 = vsub.f32 %v5578, %v7950
    %v7952 = vand.u32 %v7951, 4294901760
    %7953 = vmatpush1.msra.mxu0 %v7952
    %v7954 = vand.u32 %v5581, 4294901760
    %v7955 = vsub.f32 %v5581, %v7954
    %v7956 = vand.u32 %v7955, 4294901760
    %7957 = vmatprep.subr.mxu0 %v7956
    %v7958 = vand.u32 %v5580, 4294901760
    %v7959 = vsub.f32 %v5580, %v7958
    %v7960 = vand.u32 %v7959, 4294901760
    %7961 = vmatpush1.msra.mxu0 %v7960
    %v7962 = vand.u32 %v5583, 4294901760
    %v7963 = vsub.f32 %v5583, %v7962
    %v7964 = vand.u32 %v7963, 4294901760
    %7965 = vmatprep.subr.mxu0 %v7964
    %v7966 = vand.u32 %v5582, 4294901760
    %v7967 = vsub.f32 %v5582, %v7966
    %v7968 = vand.u32 %v7967, 4294901760
    %7969 = vmatpush1.msra.mxu0 %v7968
    %v7970 = vand.u32 %v5585, 4294901760
    %v7971 = vsub.f32 %v5585, %v7970
    %v7972 = vand.u32 %v7971, 4294901760
    %7973 = vmatprep.subr.mxu0 %v7972
    %v7974 = vand.u32 %v5584, 4294901760
    %v7975 = vsub.f32 %v5584, %v7974
    %v7976 = vand.u32 %v7975, 4294901760
    %7977 = vmatpush1.msra.mxu0 %v7976
    %v7978 = vand.u32 %v5587, 4294901760
    %v7979 = vsub.f32 %v5587, %v7978
    %v7980 = vand.u32 %v7979, 4294901760
    %7981 = vmatprep.subr.mxu0 %v7980
    %v7982 = vand.u32 %v5586, 4294901760
    %v7983 = vsub.f32 %v5586, %v7982
    %v7984 = vand.u32 %v7983, 4294901760
    %7985 = vmatpush1.msra.mxu0 %v7984
    %v7986 = vand.u32 %v5589, 4294901760
    %v7987 = vsub.f32 %v5589, %v7986
    %v7988 = vand.u32 %v7987, 4294901760
    %7989 = vmatprep.subr.mxu0 %v7988
    %v7990 = vand.u32 %v5588, 4294901760
    %v7991 = vsub.f32 %v5588, %v7990
    %v7992 = vand.u32 %v7991, 4294901760
    %7993 = vmatpush1.msra.mxu0 %v7992
    %v7994 = vand.u32 %v5591, 4294901760
    %v7995 = vsub.f32 %v5591, %v7994
    %v7996 = vand.u32 %v7995, 4294901760
    %7997 = vmatprep.subr.mxu0 %v7996
    %v7998 = vand.u32 %v5590, 4294901760
    %v7999 = vsub.f32 %v5590, %v7998
    %v8000 = vand.u32 %v7999, 4294901760
    %8001 = vmatpush1.msra.mxu0 %v8000
    %v8002 = vand.u32 %v5593, 4294901760
    %v8003 = vsub.f32 %v5593, %v8002
    %v8004 = vand.u32 %v8003, 4294901760
    %8005 = vmatprep.subr.mxu0 %v8004
    %v8006 = vand.u32 %v5592, 4294901760
    %v8007 = vsub.f32 %v5592, %v8006
    %v8008 = vand.u32 %v8007, 4294901760
    %8009 = vmatpush1.msra.mxu0 %v8008
    %v8010 = vand.u32 %v5595, 4294901760
    %v8011 = vsub.f32 %v5595, %v8010
    %v8012 = vand.u32 %v8011, 4294901760
    %8013 = vmatprep.subr.mxu0 %v8012
    %v8014 = vand.u32 %v5594, 4294901760
    %v8015 = vsub.f32 %v5594, %v8014
    %v8016 = vand.u32 %v8015, 4294901760
    %8017 = vmatpush1.msra.mxu0 %v8016
    %v8018 = vand.u32 %v5467, 4294901760
    %8019 = vmatprep.mubr.f32.mxu0 %v8018
    %v8020 = vand.u32 %v5466, 4294901760
    %8021 = vmatmul.mubr.f32.gmra.mrb[0].mxu0 %v8020
    %v8022 = vpop.f32.mrb[0].mxu0
    %v8023 = vadd.f32 %v7758, %v8022
    %v8024 = vpop.f32.mrb[0].mxu0
    %v8025 = vadd.f32 %v7760, %v8024
    %8026 = vdwg.mxu0
    %v8027 = vand.u32 %v5533, 4294901760
    %8028 = vmatprep.subr.mxu0 %v8027
    %v8029 = vand.u32 %v5532, 4294901760
    %8030 = vmatpush1.msra.mxu0 %v8029
    %v8031 = vand.u32 %v5535, 4294901760
    %8032 = vmatprep.subr.mxu0 %v8031
    %v8033 = vand.u32 %v5534, 4294901760
    %8034 = vmatpush1.msra.mxu0 %v8033
    %v8035 = vand.u32 %v5537, 4294901760
    %8036 = vmatprep.subr.mxu0 %v8035
    %v8037 = vand.u32 %v5536, 4294901760
    %8038 = vmatpush1.msra.mxu0 %v8037
    %v8039 = vand.u32 %v5539, 4294901760
    %8040 = vmatprep.subr.mxu0 %v8039
    %v8041 = vand.u32 %v5538, 4294901760
    %8042 = vmatpush1.msra.mxu0 %v8041
    %v8043 = vand.u32 %v5541, 4294901760
    %8044 = vmatprep.subr.mxu0 %v8043
    %v8045 = vand.u32 %v5540, 4294901760
    %8046 = vmatpush1.msra.mxu0 %v8045
    %v8047 = vand.u32 %v5543, 4294901760
    %8048 = vmatprep.subr.mxu0 %v8047
    %v8049 = vand.u32 %v5542, 4294901760
    %8050 = vmatpush1.msra.mxu0 %v8049
    %v8051 = vand.u32 %v5545, 4294901760
    %8052 = vmatprep.subr.mxu0 %v8051
    %v8053 = vand.u32 %v5544, 4294901760
    %8054 = vmatpush1.msra.mxu0 %v8053
    %v8055 = vand.u32 %v5547, 4294901760
    %8056 = vmatprep.subr.mxu0 %v8055
    %v8057 = vand.u32 %v5546, 4294901760
    %8058 = vmatpush1.msra.mxu0 %v8057
    %v8059 = vand.u32 %v5549, 4294901760
    %8060 = vmatprep.subr.mxu0 %v8059
    %v8061 = vand.u32 %v5548, 4294901760
    %8062 = vmatpush1.msra.mxu0 %v8061
    %v8063 = vand.u32 %v5551, 4294901760
    %8064 = vmatprep.subr.mxu0 %v8063
    %v8065 = vand.u32 %v5550, 4294901760
    %8066 = vmatpush1.msra.mxu0 %v8065
    %v8067 = vand.u32 %v5553, 4294901760
    %8068 = vmatprep.subr.mxu0 %v8067
    %v8069 = vand.u32 %v5552, 4294901760
    %8070 = vmatpush1.msra.mxu0 %v8069
    %v8071 = vand.u32 %v5555, 4294901760
    %8072 = vmatprep.subr.mxu0 %v8071
    %v8073 = vand.u32 %v5554, 4294901760
    %8074 = vmatpush1.msra.mxu0 %v8073
    %v8075 = vand.u32 %v5557, 4294901760
    %8076 = vmatprep.subr.mxu0 %v8075
    %v8077 = vand.u32 %v5556, 4294901760
    %8078 = vmatpush1.msra.mxu0 %v8077
    %v8079 = vand.u32 %v5559, 4294901760
    %8080 = vmatprep.subr.mxu0 %v8079
    %v8081 = vand.u32 %v5558, 4294901760
    %8082 = vmatpush1.msra.mxu0 %v8081
    %v8083 = vand.u32 %v5561, 4294901760
    %8084 = vmatprep.subr.mxu0 %v8083
    %v8085 = vand.u32 %v5560, 4294901760
    %8086 = vmatpush1.msra.mxu0 %v8085
    %v8087 = vand.u32 %v5563, 4294901760
    %8088 = vmatprep.subr.mxu0 %v8087
    %v8089 = vand.u32 %v5562, 4294901760
    %8090 = vmatpush1.msra.mxu0 %v8089
    %v8091 = vand.u32 %v5565, 4294901760
    %8092 = vmatprep.subr.mxu0 %v8091
    %v8093 = vand.u32 %v5564, 4294901760
    %8094 = vmatpush1.msra.mxu0 %v8093
    %v8095 = vand.u32 %v5567, 4294901760
    %8096 = vmatprep.subr.mxu0 %v8095
    %v8097 = vand.u32 %v5566, 4294901760
    %8098 = vmatpush1.msra.mxu0 %v8097
    %v8099 = vand.u32 %v5569, 4294901760
    %8100 = vmatprep.subr.mxu0 %v8099
    %v8101 = vand.u32 %v5568, 4294901760
    %8102 = vmatpush1.msra.mxu0 %v8101
    %v8103 = vand.u32 %v5571, 4294901760
    %8104 = vmatprep.subr.mxu0 %v8103
    %v8105 = vand.u32 %v5570, 4294901760
    %8106 = vmatpush1.msra.mxu0 %v8105
    %v8107 = vand.u32 %v5573, 4294901760
    %8108 = vmatprep.subr.mxu0 %v8107
    %v8109 = vand.u32 %v5572, 4294901760
    %8110 = vmatpush1.msra.mxu0 %v8109
    %v8111 = vand.u32 %v5575, 4294901760
    %8112 = vmatprep.subr.mxu0 %v8111
    %v8113 = vand.u32 %v5574, 4294901760
    %8114 = vmatpush1.msra.mxu0 %v8113
    %v8115 = vand.u32 %v5577, 4294901760
    %8116 = vmatprep.subr.mxu0 %v8115
    %v8117 = vand.u32 %v5576, 4294901760
    %8118 = vmatpush1.msra.mxu0 %v8117
    %v8119 = vand.u32 %v5579, 4294901760
    %8120 = vmatprep.subr.mxu0 %v8119
    %v8121 = vand.u32 %v5578, 4294901760
    %8122 = vmatpush1.msra.mxu0 %v8121
    %v8123 = vand.u32 %v5581, 4294901760
    %8124 = vmatprep.subr.mxu0 %v8123
    %v8125 = vand.u32 %v5580, 4294901760
    %8126 = vmatpush1.msra.mxu0 %v8125
    %v8127 = vand.u32 %v5583, 4294901760
    %8128 = vmatprep.subr.mxu0 %v8127
    %v8129 = vand.u32 %v5582, 4294901760
    %8130 = vmatpush1.msra.mxu0 %v8129
    %v8131 = vand.u32 %v5585, 4294901760
    %8132 = vmatprep.subr.mxu0 %v8131
    %v8133 = vand.u32 %v5584, 4294901760
    %8134 = vmatpush1.msra.mxu0 %v8133
    %v8135 = vand.u32 %v5587, 4294901760
    %8136 = vmatprep.subr.mxu0 %v8135
    %v8137 = vand.u32 %v5586, 4294901760
    %8138 = vmatpush1.msra.mxu0 %v8137
    %v8139 = vand.u32 %v5589, 4294901760
    %8140 = vmatprep.subr.mxu0 %v8139
    %v8141 = vand.u32 %v5588, 4294901760
    %8142 = vmatpush1.msra.mxu0 %v8141
    %v8143 = vand.u32 %v5591, 4294901760
    %8144 = vmatprep.subr.mxu0 %v8143
    %v8145 = vand.u32 %v5590, 4294901760
    %8146 = vmatpush1.msra.mxu0 %v8145
    %v8147 = vand.u32 %v5593, 4294901760
    %8148 = vmatprep.subr.mxu0 %v8147
    %v8149 = vand.u32 %v5592, 4294901760
    %8150 = vmatpush1.msra.mxu0 %v8149
    %v8151 = vand.u32 %v5595, 4294901760
    %8152 = vmatprep.subr.mxu0 %v8151
    %v8153 = vand.u32 %v5594, 4294901760
    %8154 = vmatpush1.msra.mxu0 %v8153
    %v8155 = vand.u32 %v5467, 4294901760
    %8156 = vmatprep.mubr.f32.mxu0 %v8155
    %v8157 = vand.u32 %v5466, 4294901760
    %8158 = vmatmul.mubr.f32.gmra.mrb[0].mxu0 %v8157
    %v8159 = vpop.f32.mrb[0].mxu0
    %v8160 = vadd.f32 %v8023, %v8159
    %v8161 = vpop.f32.mrb[0].mxu0
    %v8162 = vadd.f32 %v8025, %v8161
    %8163 = vdwg.mxu0
    %v8166 = vcombine.low %v8160, %v8162
    %v8168 = vunpack.c.l.s4 1983009808
    %v8169 = vunpack.c.0.s8 %v8168
    %v8170 = vlaneseq
    %v8171 = vshrl.u32 %v8170, 7
    %v8172 = vsub.s32 %v8169, %v8171
    %v8173 = vrot.slane %v8166, %v8172
    %vm8175 = vcmask 1041408
    %vm8176 = vcmask 257026
    %vm8177 = vmor %vm8176, %vm8175
    %8178 = vst.msk [vmem:[%s19] sm:$0xf] %vm8177, %v8173
    // Predicated region
    $region90: #{dccrn_decoder_forward.1} parent=1 // pred_check
      _
    $region91: #{dccrn_decoder_forward.1} parent=1 // pred_check_branch
      %8180 = sbr.rel (0) target = $region93
    $region92: #{dccrn_decoder_forward.1} parent=1 // pred_region
      _
    $region93: #{dccrn_decoder_forward.1} parent=1 // pred_fallthru
      _
    // Predicated region
    $region94: #{dccrn_decoder_forward.1} parent=1 // pred_check
      _
    $region95: #{dccrn_decoder_forward.1} parent=1 // pred_check_branch
      %8182 = sbr.rel (0) target = $region97
    $region96: #{dccrn_decoder_forward.1} parent=1 // pred_region
      _
    $region97: #{dccrn_decoder_forward.1} parent=1 // pred_fallthru
      _
    %8183 = vsyncpa [#allocation6], 1
    %8184 = vsyncpa [#allocation8], 1

</llo_original>
